<compile_context>
chip_gen: v6e
topology: v6e:2x2x1
jax: 0.10.0
libtpu: 0.0.40
codegen_flags: <defaults>
</compile_context>

<pallas_src>
import functools

import jax
import jax.numpy as jnp
from jax import lax
from jax.experimental import pallas as pl
from jax.experimental.pallas import tpu as pltpu

NEG_SLOPE = 0.1      # LeakyReLU(0.1)
BN_EPS = 2e-5
NEG_INF = -1e30      # finite: 0.0 * NEG_INF == 0.0 exactly in f32
LANES = 128          # lane-dense width of the logits tile


# -----------------------------------------------------------------------------
# Static per-layer geometry plan (all Python ints).
# -----------------------------------------------------------------------------
def _build_plan(conv_params, H0, W0, c0, pool_after=(2, 5)):
    metas = []
    H, W = H0, W0
    cmax, lmax = c0, 1
    kk_rows, nz_max = 8, 8
    for i, p in enumerate(conv_params):
        k, pad = p["k"], p["pad"]
        cin, cout = p["w"].shape[2], p["w"].shape[3]
        Hp, Wp = H + 2 * pad, W + 2 * pad
        Ho, Wo = Hp - k + 1, Wp - k + 1
        nz = (Ho - 1) * Wp + Wo
        m = dict(k=k, pad=pad, cin=cin, cout=cout,
                 Hp=Hp, Wp=Wp, Ho=Ho, Wo=Wo, nz=nz, pool=(i in pool_after))
        cmax, lmax = max(cmax, cin), max(lmax, Hp * Wp)
        if k > 1:
            kk_rows, nz_max = max(kk_rows, k * k * cin), max(nz_max, nz)
        H, W = Ho, Wo
        if i in pool_after:
            Hq, Wq = H + 2, W + 2
            m["Hq"], m["Wq"] = Hq, Wq
            cmax, lmax = max(cmax, cout), max(lmax, Hq * Wq)
            H, W = H // 2 + 1, W // 2 + 1
            m["Hpo"], m["Wpo"] = H, W
        metas.append(m)
    return metas, cmax, lmax, kk_rows, nz_max


# -----------------------------------------------------------------------------
# The fused kernel.  Activation representation between ops: channels-major
# canvas (c, Hp*Wp) in VMEM; position (i, j) lives at lane i*Wp + j; the halo
# (conv padding) is zero, the pool halo is NEG_INF.
# -----------------------------------------------------------------------------
def _make_kernel(metas, row_off, Kmax, feat, c0, H0, W0):
    nconv = len(metas)

    def _halo(canvas_ref, c, Ho, Wo, pad, Wp, Hp, fill):
        """Initialize only the halo (head rows + row gaps + tail rows)."""
        if pad == 0:
            return
        head = pad * Wp + pad
        canvas_ref[0:c, 0:head] = jnp.full((c, head), fill, jnp.float32)
        tail0 = (pad + Ho - 1) * Wp + pad + Wo
        canvas_ref[0:c, tail0:Hp * Wp] = jnp.full((c, Hp * Wp - tail0), fill,
                                                  jnp.float32)
        gap = Wp - Wo                       # == 2 * pad
        for io in range(Ho - 1):
            g0 = (io + pad) * Wp + pad + Wo
            canvas_ref[0:c, g0:g0 + gap] = jnp.full((c, gap), fill, jnp.float32)

    def _rows(canvas_ref, y, c, Ho, Wo, src_stride, pad, Wp):
        """Write the interior rows of the canvas from a (possibly strided) value."""
        if pad == 0 and src_stride == Wo and Wo == Wp:
            canvas_ref[0:c, 0:Ho * Wo] = y[:, 0:Ho * Wo]
            return
        for io in range(Ho):
            d0 = (io + pad) * Wp + pad
            s0 = io * src_stride
            canvas_ref[0:c, d0:d0 + Wo] = y[:, s0:s0 + Wo]

    def _stage(canvas_ref, y, c, Ho, Wo, src_stride, pad, Wp, Hp, fill):
        _rows(canvas_ref, y, c, Ho, Wo, src_stride, pad, Wp)
        _halo(canvas_ref, c, Ho, Wo, pad, Wp, Hp, fill)

    def kernel(x_ref, w_ref, head_ref, o_ref, canvas_ref, slab_ref):
        # ---- stage the input image (NCHW is already channels-major) --------
        m0 = metas[0]
        _stage(canvas_ref, x_ref[0], c0, H0, W0, W0,
               m0["pad"], m0["Wp"], m0["Hp"], 0.0)

        for i, m in enumerate(metas):
            k, pad = m["k"], m["pad"]
            cin, cout = m["cin"], m["cout"]
            Hp, Wp, Ho, Wo, nz = m["Hp"], m["Wp"], m["Ho"], m["Wo"], m["nz"]
            K = k * k * cin
            nxt = metas[i + 1] if i + 1 < nconv else None

            # ---- conv: fused im2col slab + ONE MXU dot ----------------------
            if k == 1:
                src = canvas_ref[0:cin, 0:Hp * Wp]          # already dense
            else:
                for dy in range(k):
                    for dx in range(k):
                        off = dy * Wp + dx
                        r0 = (dy * k + dx) * cin
                        slab_ref[r0:r0 + cin, 0:nz] = \
                            canvas_ref[0:cin, off:off + nz]
                src = slab_ref[0:K, 0:nz]

            wmat = w_ref[row_off[i]:row_off[i] + cout, 0:K]        # BN-folded
            shift = w_ref[row_off[i]:row_off[i] + cout, Kmax:Kmax + 1]
            y = jnp.dot(wmat, src, preferred_element_type=jnp.float32)
            y = y + shift                                   # folded-BN shift
            y = jnp.where(y > 0, y, NEG_SLOPE * y)          # LeakyReLU(0.1)
            # y[:, io*Wp + jo] is the activation at (io, jo); lanes with
            # jo in [Wo, Wp) are garbage and are never copied onward.

            if m["pool"]:
                # ---- MaxPool2d(2, 2, 1) fused with staging ------------------
                Hq, Wq = m["Hq"], m["Wq"]
                Hpo, Wpo = m["Hpo"], m["Wpo"]
                _stage(canvas_ref, y, cout, Ho, Wo, Wp, 1, Wq, Hq, NEG_INF)
                # exact 0/1 column subsample selector; keep this dot in f32
                # (NEG_INF pad values must multiply by 0.0 exactly).
                span = 2 * Wpo - 1
                t = lax.broadcasted_iota(jnp.int32, (span, Wpo), 0)
                j = lax.broadcasted_iota(jnp.int32, (span, Wpo), 1)
                selcol = (t == 2 * j).astype(jnp.float32)
                # pooled rows go straight into the next conv's canvas; the
                # writes (lane ~ Wp_next*io) stay behind the reads
                # (lane >= 2*io*Wq), so reusing the same buffer is safe.
                for io in range(Hpo):
                    r0 = (2 * io) * Wq
                    r1 = r0 + Wq
                    mrow = jnp.maximum(
                        jnp.maximum(canvas_ref[0:cout, r0:r0 + span],
                                    canvas_ref[0:cout, r0 + 1:r0 + 1 + span]),
                        jnp.maximum(canvas_ref[0:cout, r1:r1 + span],
                                    canvas_ref[0:cout, r1 + 1:r1 + 1 + span]))
                    prow = jnp.dot(mrow, selcol,
                                   preferred_element_type=jnp.float32)
                    d0 = (io + nxt["pad"]) * nxt["Wp"] + nxt["pad"]
                    canvas_ref[0:cout, d0:d0 + Wpo] = prow
                _halo(canvas_ref, cout, Hpo, Wpo,
                      nxt["pad"], nxt["Wp"], nxt["Hp"], 0.0)
                # TODO(synk): nn.Dropout2d after each pool is identity in eval
                # mode; training-mode random channel dropout is not implemented.
            elif nxt is not None:
                _stage(canvas_ref, y, cout, Ho, Wo, Wp,
                       nxt["pad"], nxt["Wp"], nxt["Hp"], 0.0)
            else:
                # ---- AdaptiveAvgPool2d((1,1)) + Linear head -----------------
                if Wo == Wp:                       # last conv is k=1 -> dense
                    rowsum = jnp.sum(y, axis=1, keepdims=True)
                else:
                    rowsum = jnp.zeros((cout, 1), jnp.float32)
                    for io in range(Ho):
                        rowsum = rowsum + jnp.sum(
                            y[:, io * Wp:io * Wp + Wo], axis=1, keepdims=True)
                mean = rowsum * (1.0 / float(Ho * Wo))          # (cout, 1)
                lwp = head_ref[0:feat, :]                       # (feat, 128)
                lbp = head_ref[feat:feat + 1, :]                # (1, 128)
                logits = lax.dot_general(
                    mean, lwp, (((0,), (0,)), ((), ())),
                    preferred_element_type=jnp.float32) + lbp   # (1, 128)
                o_ref[0] = logits

    return kernel


# -----------------------------------------------------------------------------
# Wrapper: parameter packing + pallas_call.
# -----------------------------------------------------------------------------
def cnn9b_forward(x_nchw, conv_params, lw, lb):
    """Eval-mode forward of CNN9b.  Input is NCHW like PyTorch."""
    N, C, H, W = x_nchw.shape
    x = x_nchw.reshape(N, C, H * W).astype(jnp.float32)   # channels-major, free

    metas, cmax, lmax, kk_rows, nz_max = _build_plan(conv_params, H, W, C)

    # ---- pack all conv weights (BN scale folded) + shifts into ONE array ----
    Kmax = max(m["k"] * m["k"] * m["cin"] for m in metas)
    rows = sum(m["cout"] for m in metas)
    w_all = jnp.zeros((rows, Kmax + 1), jnp.float32)
    row_off, off = [], 0
    for m, p in zip(metas, conv_params):
        k, cin, cout = m["k"], m["cin"], m["cout"]
        wm = p["w"].astype(jnp.float32) * p["scale"].astype(jnp.float32)[None, None, None, :]
        wm = jnp.transpose(wm, (3, 0, 1, 2)).reshape(cout, k * k * cin)
        w_all = w_all.at[off:off + cout, 0:k * k * cin].set(wm)
        w_all = w_all.at[off:off + cout, Kmax].set(p["shift"].astype(jnp.float32))
        row_off.append(off)
        off += cout

    feat, ncls = lw.shape
    head_all = jnp.zeros((feat + 1, LANES), jnp.float32)
    head_all = head_all.at[0:feat, 0:ncls].set(lw.astype(jnp.float32))
    head_all = head_all.at[feat, 0:ncls].set(lb.astype(jnp.float32))

    kernel = _make_kernel(metas, row_off, Kmax, feat, C, H, W)

    out = pl.pallas_call(
        kernel,
        out_shape=jax.ShapeDtypeStruct((N, 1, LANES), jnp.float32),
        grid=(N,),                 # one image per step; N>=2 fills both v7x TCs
        in_specs=[
            pl.BlockSpec((1, C, H * W), lambda n: (n, 0, 0)),
            pl.BlockSpec(w_all.shape, lambda n: (0, 0)),
            pl.BlockSpec(head_all.shape, lambda n: (0, 0)),
        ],
        out_specs=pl.BlockSpec((1, 1, LANES), lambda n: (n, 0, 0)),
        scratch_shapes=[
            pltpu.VMEM((cmax, lmax), jnp.float32),        # activation canvas
            pltpu.VMEM((kk_rows, nz_max), jnp.float32),   # fused-im2col slab
        ],
        compiler_params=pltpu.CompilerParams(
            dimension_semantics=("parallel",)),
    )(x, w_all, head_all)
    return out.reshape(N, LANES)[:, :ncls]
    # note: self.bn (BatchNorm1d) in the PyTorch module is never used in forward.


# -----------------------------------------------------------------------------
# Model parameters (eval-mode BatchNorm folded into affine scale/shift)
# -----------------------------------------------------------------------------
def init_params(key, in_ch=3, nc=16):
    """Deterministic synthetic parameters matching CNN9b's layer shapes."""
    conv_cfg = [
        (in_ch, nc, 3, 1), (nc, nc, 3, 1), (nc, nc, 3, 1),
        (nc, 2 * nc, 3, 1), (2 * nc, 2 * nc, 3, 1), (2 * nc, 2 * nc, 3, 1),
        (2 * nc, 2 * nc, 3, 0), (2 * nc, 2 * nc, 1, 1), (2 * nc, 192, 1, 1),
    ]
    conv_params = []
    for ci, co, k, p in conv_cfg:
        key, wk, gk, bk, mk, vk = jax.random.split(key, 6)
        w = jax.random.normal(wk, (k, k, ci, co), jnp.float32)
        w = w * (1.0 / (k * k * ci) ** 0.5)
        gamma = 1.0 + 0.1 * jax.random.normal(gk, (co,), jnp.float32)
        beta = 0.1 * jax.random.normal(bk, (co,), jnp.float32)
        rmean = 0.1 * jax.random.normal(mk, (co,), jnp.float32)
        rvar = 0.5 + jax.random.uniform(vk, (co,), jnp.float32)
        scale = gamma / jnp.sqrt(rvar + BN_EPS)
        shift = beta - rmean * scale
        conv_params.append(dict(w=w, scale=scale, shift=shift, k=k, pad=p))
    key, lwk, lbk = jax.random.split(key, 3)
    lw = jax.random.normal(lwk, (192, 10), jnp.float32) * (1.0 / 192 ** 0.5)
    lb = 0.1 * jax.random.normal(lbk, (10,), jnp.float32)
    return conv_params, lw, lb


# -----------------------------------------------------------------------------
# Pure-JAX reference (for correctness check)
# -----------------------------------------------------------------------------
def reference_forward(x_nchw, conv_params, lw, lb):
    h = jnp.transpose(x_nchw, (0, 2, 3, 1))
    for i, p in enumerate(conv_params):
        pad = p["pad"]
        y = lax.conv_general_dilated(
            h, p["w"], window_strides=(1, 1),
            padding=((pad, pad), (pad, pad)),
            dimension_numbers=("NHWC", "HWIO", "NHWC"),
            precision=lax.Precision.HIGHEST)
        y = y * p["scale"] + p["shift"]
        h = jnp.where(y > 0, y, NEG_SLOPE * y)
        if i in (2, 5):
            h = lax.reduce_window(
                h, -jnp.inf, lax.max,
                window_dimensions=(1, 2, 2, 1),
                window_strides=(1, 2, 2, 1),
                padding=((0, 0), (1, 1), (1, 1), (0, 0)))
    feat = jnp.mean(h, axis=(1, 2))
    return jnp.dot(feat, lw, precision=lax.Precision.HIGHEST) + lb


# -----------------------------------------------------------------------------
if __name__ == "__main__":
    key = jax.random.PRNGKey(0)
    key, xk, pk = jax.random.split(key, 3)

    # Small shapes: batch=2, 3 input channels, 16x16 spatial, num_conv=16
    # (final conv still maps to 192 channels, linear 192 -> 10 as in CNN9b).
    N, C, H, W = 2, 3, 16, 16
    x = jax.random.normal(xk, (N, C, H, W), jnp.float32)
    conv_params, lw, lb = init_params(pk, in_ch=C, nc=16)

    fwd = jax.jit(functools.partial(cnn9b_forward,
                                    conv_params=conv_params, lw=lw, lb=lb))
    out = jax.block_until_ready(fwd(x))

    assert out.shape == (N, 10), out.shape
    assert bool(jnp.all(jnp.isfinite(out)))

    ref = reference_forward(x, conv_params, lw, lb)
    err = float(jnp.max(jnp.abs(out - ref)))
    assert err < 5e-3, f"max abs error vs reference: {err}"

    print("KERNEL_OK")
</pallas_src>

<mosaic_0001>
module attributes {stable_mosaic.version = 11 : i64} {
  func.func @kernel(%arg0: i32, %arg1: memref<1x3x256xf32, #tpu.memory_space<vmem>>, %arg2: memref<400x289xf32, #tpu.memory_space<vmem>>, %arg3: memref<193x128xf32, #tpu.memory_space<vmem>>, %arg4: memref<1x1x128xf32, #tpu.memory_space<vmem>>, %arg5: memref<32x324xf32, #tpu.memory_space<vmem>>, %arg6: memref<288x286xf32, #tpu.memory_space<vmem>>) attributes {dimension_semantics = [#tpu.dimension_semantics<parallel>], iteration_bounds = array<i64: 2>, scalar_prefetch = 0 : i64, scratch_operands = 2 : i64, tpu.core_type = #tpu.core_type<tc>, window_params = [{transform_indices = @transform_0, window_bounds = array<i64: 1, 3, 256>}, {pipeline_mode = #tpu.pipeline_mode<synchronous>, transform_indices = @transform_1, window_bounds = array<i64: 400, 289>}, {pipeline_mode = #tpu.pipeline_mode<synchronous>, transform_indices = @transform_2, window_bounds = array<i64: 193, 128>}, {transform_indices = @transform_3, window_bounds = array<i64: 1, 1, 128>}]} {
    %c0 = arith.constant 0 : index
    %c0_0 = arith.constant 0 : index
    %c0_1 = arith.constant 0 : index
    %0 = vector.load %arg1[%c0, %c0_0, %c0_1] : memref<1x3x256xf32, #tpu.memory_space<vmem>>, vector<1x3x256xf32>
    %1 = vector.shape_cast %0 : vector<1x3x256xf32> to vector<3x256xf32>
    %2 = vector.extract_strided_slice %1 {offsets = [0, 0], sizes = [3, 16], strides = [1, 1]} : vector<3x256xf32> to vector<3x16xf32>
    %c0_2 = arith.constant 0 : index
    %c19 = arith.constant 19 : index
    %3 = vector.load %arg5[%c0_2, %c19] : memref<32x324xf32, #tpu.memory_space<vmem>>, vector<3x16xf32>
    tpu.vector_store %arg5[%c0_2, %c19], %2 {strides = array<i32>} : memref<32x324xf32, #tpu.memory_space<vmem>>, vector<3x16xf32>,
    %4 = vector.extract_strided_slice %1 {offsets = [0, 16], sizes = [3, 16], strides = [1, 1]} : vector<3x256xf32> to vector<3x16xf32>
    %c0_3 = arith.constant 0 : index
    %c37 = arith.constant 37 : index
    %5 = vector.load %arg5[%c0_3, %c37] : memref<32x324xf32, #tpu.memory_space<vmem>>, vector<3x16xf32>
    tpu.vector_store %arg5[%c0_3, %c37], %4 {strides = array<i32>} : memref<32x324xf32, #tpu.memory_space<vmem>>, vector<3x16xf32>,
    %6 = vector.extract_strided_slice %1 {offsets = [0, 32], sizes = [3, 16], strides = [1, 1]} : vector<3x256xf32> to vector<3x16xf32>
    %c0_4 = arith.constant 0 : index
    %c55 = arith.constant 55 : index
    %7 = vector.load %arg5[%c0_4, %c55] : memref<32x324xf32, #tpu.memory_space<vmem>>, vector<3x16xf32>
    tpu.vector_store %arg5[%c0_4, %c55], %6 {strides = array<i32>} : memref<32x324xf32, #tpu.memory_space<vmem>>, vector<3x16xf32>,
    %8 = vector.extract_strided_slice %1 {offsets = [0, 48], sizes = [3, 16], strides = [1, 1]} : vector<3x256xf32> to vector<3x16xf32>
    %c0_5 = arith.constant 0 : index
    %c73 = arith.constant 73 : index
    %9 = vector.load %arg5[%c0_5, %c73] : memref<32x324xf32, #tpu.memory_space<vmem>>, vector<3x16xf32>
    tpu.vector_store %arg5[%c0_5, %c73], %8 {strides = array<i32>} : memref<32x324xf32, #tpu.memory_space<vmem>>, vector<3x16xf32>,
    %10 = vector.extract_strided_slice %1 {offsets = [0, 64], sizes = [3, 16], strides = [1, 1]} : vector<3x256xf32> to vector<3x16xf32>
    %c0_6 = arith.constant 0 : index
    %c91 = arith.constant 91 : index
    %11 = vector.load %arg5[%c0_6, %c91] : memref<32x324xf32, #tpu.memory_space<vmem>>, vector<3x16xf32>
    tpu.vector_store %arg5[%c0_6, %c91], %10 {strides = array<i32>} : memref<32x324xf32, #tpu.memory_space<vmem>>, vector<3x16xf32>,
    %12 = vector.extract_strided_slice %1 {offsets = [0, 80], sizes = [3, 16], strides = [1, 1]} : vector<3x256xf32> to vector<3x16xf32>
    %c0_7 = arith.constant 0 : index
    %c109 = arith.constant 109 : index
    %13 = vector.load %arg5[%c0_7, %c109] : memref<32x324xf32, #tpu.memory_space<vmem>>, vector<3x16xf32>
    tpu.vector_store %arg5[%c0_7, %c109], %12 {strides = array<i32>} : memref<32x324xf32, #tpu.memory_space<vmem>>, vector<3x16xf32>,
    %14 = vector.extract_strided_slice %1 {offsets = [0, 96], sizes = [3, 16], strides = [1, 1]} : vector<3x256xf32> to vector<3x16xf32>
    %c0_8 = arith.constant 0 : index
    %c127 = arith.constant 127 : index
    %15 = vector.load %arg5[%c0_8, %c127] : memref<32x324xf32, #tpu.memory_space<vmem>>, vector<3x16xf32>
    tpu.vector_store %arg5[%c0_8, %c127], %14 {strides = array<i32>} : memref<32x324xf32, #tpu.memory_space<vmem>>, vector<3x16xf32>,
    %16 = vector.extract_strided_slice %1 {offsets = [0, 112], sizes = [3, 16], strides = [1, 1]} : vector<3x256xf32> to vector<3x16xf32>
    %c0_9 = arith.constant 0 : index
    %c145 = arith.constant 145 : index
    %17 = vector.load %arg5[%c0_9, %c145] : memref<32x324xf32, #tpu.memory_space<vmem>>, vector<3x16xf32>
    tpu.vector_store %arg5[%c0_9, %c145], %16 {strides = array<i32>} : memref<32x324xf32, #tpu.memory_space<vmem>>, vector<3x16xf32>,
    %18 = vector.extract_strided_slice %1 {offsets = [0, 128], sizes = [3, 16], strides = [1, 1]} : vector<3x256xf32> to vector<3x16xf32>
    %c0_10 = arith.constant 0 : index
    %c163 = arith.constant 163 : index
    %19 = vector.load %arg5[%c0_10, %c163] : memref<32x324xf32, #tpu.memory_space<vmem>>, vector<3x16xf32>
    tpu.vector_store %arg5[%c0_10, %c163], %18 {strides = array<i32>} : memref<32x324xf32, #tpu.memory_space<vmem>>, vector<3x16xf32>,
    %20 = vector.extract_strided_slice %1 {offsets = [0, 144], sizes = [3, 16], strides = [1, 1]} : vector<3x256xf32> to vector<3x16xf32>
    %c0_11 = arith.constant 0 : index
    %c181 = arith.constant 181 : index
    %21 = vector.load %arg5[%c0_11, %c181] : memref<32x324xf32, #tpu.memory_space<vmem>>, vector<3x16xf32>
    tpu.vector_store %arg5[%c0_11, %c181], %20 {strides = array<i32>} : memref<32x324xf32, #tpu.memory_space<vmem>>, vector<3x16xf32>,
    %22 = vector.extract_strided_slice %1 {offsets = [0, 160], sizes = [3, 16], strides = [1, 1]} : vector<3x256xf32> to vector<3x16xf32>
    %c0_12 = arith.constant 0 : index
    %c199 = arith.constant 199 : index
    %23 = vector.load %arg5[%c0_12, %c199] : memref<32x324xf32, #tpu.memory_space<vmem>>, vector<3x16xf32>
    tpu.vector_store %arg5[%c0_12, %c199], %22 {strides = array<i32>} : memref<32x324xf32, #tpu.memory_space<vmem>>, vector<3x16xf32>,
    %24 = vector.extract_strided_slice %1 {offsets = [0, 176], sizes = [3, 16], strides = [1, 1]} : vector<3x256xf32> to vector<3x16xf32>
    %c0_13 = arith.constant 0 : index
    %c217 = arith.constant 217 : index
    %25 = vector.load %arg5[%c0_13, %c217] : memref<32x324xf32, #tpu.memory_space<vmem>>, vector<3x16xf32>
    tpu.vector_store %arg5[%c0_13, %c217], %24 {strides = array<i32>} : memref<32x324xf32, #tpu.memory_space<vmem>>, vector<3x16xf32>,
    %26 = vector.extract_strided_slice %1 {offsets = [0, 192], sizes = [3, 16], strides = [1, 1]} : vector<3x256xf32> to vector<3x16xf32>
    %c0_14 = arith.constant 0 : index
    %c235 = arith.constant 235 : index
    %27 = vector.load %arg5[%c0_14, %c235] : memref<32x324xf32, #tpu.memory_space<vmem>>, vector<3x16xf32>
    tpu.vector_store %arg5[%c0_14, %c235], %26 {strides = array<i32>} : memref<32x324xf32, #tpu.memory_space<vmem>>, vector<3x16xf32>,
    %28 = vector.extract_strided_slice %1 {offsets = [0, 208], sizes = [3, 16], strides = [1, 1]} : vector<3x256xf32> to vector<3x16xf32>
    %c0_15 = arith.constant 0 : index
    %c253 = arith.constant 253 : index
    %29 = vector.load %arg5[%c0_15, %c253] : memref<32x324xf32, #tpu.memory_space<vmem>>, vector<3x16xf32>
    tpu.vector_store %arg5[%c0_15, %c253], %28 {strides = array<i32>} : memref<32x324xf32, #tpu.memory_space<vmem>>, vector<3x16xf32>,
    %30 = vector.extract_strided_slice %1 {offsets = [0, 224], sizes = [3, 16], strides = [1, 1]} : vector<3x256xf32> to vector<3x16xf32>
    %c0_16 = arith.constant 0 : index
    %c271 = arith.constant 271 : index
    %31 = vector.load %arg5[%c0_16, %c271] : memref<32x324xf32, #tpu.memory_space<vmem>>, vector<3x16xf32>
    tpu.vector_store %arg5[%c0_16, %c271], %30 {strides = array<i32>} : memref<32x324xf32, #tpu.memory_space<vmem>>, vector<3x16xf32>,
    %32 = vector.extract_strided_slice %1 {offsets = [0, 240], sizes = [3, 16], strides = [1, 1]} : vector<3x256xf32> to vector<3x16xf32>
    %c0_17 = arith.constant 0 : index
    %c289 = arith.constant 289 : index
    %33 = vector.load %arg5[%c0_17, %c289] : memref<32x324xf32, #tpu.memory_space<vmem>>, vector<3x16xf32>
    tpu.vector_store %arg5[%c0_17, %c289], %32 {strides = array<i32>} : memref<32x324xf32, #tpu.memory_space<vmem>>, vector<3x16xf32>,
    %cst = arith.constant 0.000000e+00 : f32
    %34 = vector.broadcast %cst : f32 to vector<3x19xf32>
    %c0_18 = arith.constant 0 : index
    %c0_19 = arith.constant 0 : index
    %35 = vector.load %arg5[%c0_18, %c0_19] : memref<32x324xf32, #tpu.memory_space<vmem>>, vector<3x19xf32>
    tpu.vector_store %arg5[%c0_18, %c0_19], %34 {strides = array<i32>} : memref<32x324xf32, #tpu.memory_space<vmem>>, vector<3x19xf32>,
    %cst_20 = arith.constant 0.000000e+00 : f32
    %36 = vector.broadcast %cst_20 : f32 to vector<3x19xf32>
    %c0_21 = arith.constant 0 : index
    %c305 = arith.constant 305 : index
    %37 = vector.load %arg5[%c0_21, %c305] : memref<32x324xf32, #tpu.memory_space<vmem>>, vector<3x19xf32>
    tpu.vector_store %arg5[%c0_21, %c305], %36 {strides = array<i32>} : memref<32x324xf32, #tpu.memory_space<vmem>>, vector<3x19xf32>,
    %cst_22 = arith.constant 0.000000e+00 : f32
    %38 = vector.broadcast %cst_22 : f32 to vector<3x2xf32>
    %c0_23 = arith.constant 0 : index
    %c35 = arith.constant 35 : index
    %39 = vector.load %arg5[%c0_23, %c35] : memref<32x324xf32, #tpu.memory_space<vmem>>, vector<3x2xf32>
    tpu.vector_store %arg5[%c0_23, %c35], %38 {strides = array<i32>} : memref<32x324xf32, #tpu.memory_space<vmem>>, vector<3x2xf32>,
    %cst_24 = arith.constant 0.000000e+00 : f32
    %40 = vector.broadcast %cst_24 : f32 to vector<3x2xf32>
    %c0_25 = arith.constant 0 : index
    %c53 = arith.constant 53 : index
    %41 = vector.load %arg5[%c0_25, %c53] : memref<32x324xf32, #tpu.memory_space<vmem>>, vector<3x2xf32>
    tpu.vector_store %arg5[%c0_25, %c53], %40 {strides = array<i32>} : memref<32x324xf32, #tpu.memory_space<vmem>>, vector<3x2xf32>,
    %cst_26 = arith.constant 0.000000e+00 : f32
    %42 = vector.broadcast %cst_26 : f32 to vector<3x2xf32>
    %c0_27 = arith.constant 0 : index
    %c71 = arith.constant 71 : index
    %43 = vector.load %arg5[%c0_27, %c71] : memref<32x324xf32, #tpu.memory_space<vmem>>, vector<3x2xf32>
    tpu.vector_store %arg5[%c0_27, %c71], %42 {strides = array<i32>} : memref<32x324xf32, #tpu.memory_space<vmem>>, vector<3x2xf32>,
    %cst_28 = arith.constant 0.000000e+00 : f32
    %44 = vector.broadcast %cst_28 : f32 to vector<3x2xf32>
    %c0_29 = arith.constant 0 : index
    %c89 = arith.constant 89 : index
    %45 = vector.load %arg5[%c0_29, %c89] : memref<32x324xf32, #tpu.memory_space<vmem>>, vector<3x2xf32>
    tpu.vector_store %arg5[%c0_29, %c89], %44 {strides = array<i32>} : memref<32x324xf32, #tpu.memory_space<vmem>>, vector<3x2xf32>,
    %cst_30 = arith.constant 0.000000e+00 : f32
    %46 = vector.broadcast %cst_30 : f32 to vector<3x2xf32>
    %c0_31 = arith.constant 0 : index
    %c107 = arith.constant 107 : index
    %47 = vector.load %arg5[%c0_31, %c107] : memref<32x324xf32, #tpu.memory_space<vmem>>, vector<3x2xf32>
    tpu.vector_store %arg5[%c0_31, %c107], %46 {strides = array<i32>} : memref<32x324xf32, #tpu.memory_space<vmem>>, vector<3x2xf32>,
    %cst_32 = arith.constant 0.000000e+00 : f32
    %48 = vector.broadcast %cst_32 : f32 to vector<3x2xf32>
    %c0_33 = arith.constant 0 : index
    %c125 = arith.constant 125 : index
    %49 = vector.load %arg5[%c0_33, %c125] : memref<32x324xf32, #tpu.memory_space<vmem>>, vector<3x2xf32>
    tpu.vector_store %arg5[%c0_33, %c125], %48 {strides = array<i32>} : memref<32x324xf32, #tpu.memory_space<vmem>>, vector<3x2xf32>,
    %cst_34 = arith.constant 0.000000e+00 : f32
    %50 = vector.broadcast %cst_34 : f32 to vector<3x2xf32>
    %c0_35 = arith.constant 0 : index
    %c143 = arith.constant 143 : index
    %51 = vector.load %arg5[%c0_35, %c143] : memref<32x324xf32, #tpu.memory_space<vmem>>, vector<3x2xf32>
    tpu.vector_store %arg5[%c0_35, %c143], %50 {strides = array<i32>} : memref<32x324xf32, #tpu.memory_space<vmem>>, vector<3x2xf32>,
    %cst_36 = arith.constant 0.000000e+00 : f32
    %52 = vector.broadcast %cst_36 : f32 to vector<3x2xf32>
    %c0_37 = arith.constant 0 : index
    %c161 = arith.constant 161 : index
    %53 = vector.load %arg5[%c0_37, %c161] : memref<32x324xf32, #tpu.memory_space<vmem>>, vector<3x2xf32>
    tpu.vector_store %arg5[%c0_37, %c161], %52 {strides = array<i32>} : memref<32x324xf32, #tpu.memory_space<vmem>>, vector<3x2xf32>,
    %cst_38 = arith.constant 0.000000e+00 : f32
    %54 = vector.broadcast %cst_38 : f32 to vector<3x2xf32>
    %c0_39 = arith.constant 0 : index
    %c179 = arith.constant 179 : index
    %55 = vector.load %arg5[%c0_39, %c179] : memref<32x324xf32, #tpu.memory_space<vmem>>, vector<3x2xf32>
    tpu.vector_store %arg5[%c0_39, %c179], %54 {strides = array<i32>} : memref<32x324xf32, #tpu.memory_space<vmem>>, vector<3x2xf32>,
    %cst_40 = arith.constant 0.000000e+00 : f32
    %56 = vector.broadcast %cst_40 : f32 to vector<3x2xf32>
    %c0_41 = arith.constant 0 : index
    %c197 = arith.constant 197 : index
    %57 = vector.load %arg5[%c0_41, %c197] : memref<32x324xf32, #tpu.memory_space<vmem>>, vector<3x2xf32>
    tpu.vector_store %arg5[%c0_41, %c197], %56 {strides = array<i32>} : memref<32x324xf32, #tpu.memory_space<vmem>>, vector<3x2xf32>,
    %cst_42 = arith.constant 0.000000e+00 : f32
    %58 = vector.broadcast %cst_42 : f32 to vector<3x2xf32>
    %c0_43 = arith.constant 0 : index
    %c215 = arith.constant 215 : index
    %59 = vector.load %arg5[%c0_43, %c215] : memref<32x324xf32, #tpu.memory_space<vmem>>, vector<3x2xf32>
    tpu.vector_store %arg5[%c0_43, %c215], %58 {strides = array<i32>} : memref<32x324xf32, #tpu.memory_space<vmem>>, vector<3x2xf32>,
    %cst_44 = arith.constant 0.000000e+00 : f32
    %60 = vector.broadcast %cst_44 : f32 to vector<3x2xf32>
    %c0_45 = arith.constant 0 : index
    %c233 = arith.constant 233 : index
    %61 = vector.load %arg5[%c0_45, %c233] : memref<32x324xf32, #tpu.memory_space<vmem>>, vector<3x2xf32>
    tpu.vector_store %arg5[%c0_45, %c233], %60 {strides = array<i32>} : memref<32x324xf32, #tpu.memory_space<vmem>>, vector<3x2xf32>,
    %cst_46 = arith.constant 0.000000e+00 : f32
    %62 = vector.broadcast %cst_46 : f32 to vector<3x2xf32>
    %c0_47 = arith.constant 0 : index
    %c251 = arith.constant 251 : index
    %63 = vector.load %arg5[%c0_47, %c251] : memref<32x324xf32, #tpu.memory_space<vmem>>, vector<3x2xf32>
    tpu.vector_store %arg5[%c0_47, %c251], %62 {strides = array<i32>} : memref<32x324xf32, #tpu.memory_space<vmem>>, vector<3x2xf32>,
    %cst_48 = arith.constant 0.000000e+00 : f32
    %64 = vector.broadcast %cst_48 : f32 to vector<3x2xf32>
    %c0_49 = arith.constant 0 : index
    %c269 = arith.constant 269 : index
    %65 = vector.load %arg5[%c0_49, %c269] : memref<32x324xf32, #tpu.memory_space<vmem>>, vector<3x2xf32>
    tpu.vector_store %arg5[%c0_49, %c269], %64 {strides = array<i32>} : memref<32x324xf32, #tpu.memory_space<vmem>>, vector<3x2xf32>,
    %cst_50 = arith.constant 0.000000e+00 : f32
    %66 = vector.broadcast %cst_50 : f32 to vector<3x2xf32>
    %c0_51 = arith.constant 0 : index
    %c287 = arith.constant 287 : index
    %67 = vector.load %arg5[%c0_51, %c287] : memref<32x324xf32, #tpu.memory_space<vmem>>, vector<3x2xf32>
    tpu.vector_store %arg5[%c0_51, %c287], %66 {strides = array<i32>} : memref<32x324xf32, #tpu.memory_space<vmem>>, vector<3x2xf32>,
    %c0_52 = arith.constant 0 : index
    %c0_53 = arith.constant 0 : index
    %68 = vector.load %arg5[%c0_52, %c0_53] : memref<32x324xf32, #tpu.memory_space<vmem>>, vector<3x286xf32>
    %c0_54 = arith.constant 0 : index
    %c0_55 = arith.constant 0 : index
    %69 = vector.load %arg6[%c0_54, %c0_55] : memref<288x286xf32, #tpu.memory_space<vmem>>, vector<3x286xf32>
    tpu.vector_store %arg6[%c0_54, %c0_55], %68 {strides = array<i32>} : memref<288x286xf32, #tpu.memory_space<vmem>>, vector<3x286xf32>,
    %c0_56 = arith.constant 0 : index
    %c1 = arith.constant 1 : index
    %70 = vector.load %arg5[%c0_56, %c1] : memref<32x324xf32, #tpu.memory_space<vmem>>, vector<3x286xf32>
    %c3 = arith.constant 3 : index
    %c0_57 = arith.constant 0 : index
    %71 = vector.load %arg6[%c3, %c0_57] : memref<288x286xf32, #tpu.memory_space<vmem>>, vector<3x286xf32>
    tpu.vector_store %arg6[%c3, %c0_57], %70 {strides = array<i32>} : memref<288x286xf32, #tpu.memory_space<vmem>>, vector<3x286xf32>,
    %c0_58 = arith.constant 0 : index
    %c2 = arith.constant 2 : index
    %72 = vector.load %arg5[%c0_58, %c2] : memref<32x324xf32, #tpu.memory_space<vmem>>, vector<3x286xf32>
    %c6 = arith.constant 6 : index
    %c0_59 = arith.constant 0 : index
    %73 = vector.load %arg6[%c6, %c0_59] : memref<288x286xf32, #tpu.memory_space<vmem>>, vector<3x286xf32>
    tpu.vector_store %arg6[%c6, %c0_59], %72 {strides = array<i32>} : memref<288x286xf32, #tpu.memory_space<vmem>>, vector<3x286xf32>,
    %c0_60 = arith.constant 0 : index
    %c18 = arith.constant 18 : index
    %74 = vector.load %arg5[%c0_60, %c18] : memref<32x324xf32, #tpu.memory_space<vmem>>, vector<3x286xf32>
    %c9 = arith.constant 9 : index
    %c0_61 = arith.constant 0 : index
    %75 = vector.load %arg6[%c9, %c0_61] : memref<288x286xf32, #tpu.memory_space<vmem>>, vector<3x286xf32>
    tpu.vector_store %arg6[%c9, %c0_61], %74 {strides = array<i32>} : memref<288x286xf32, #tpu.memory_space<vmem>>, vector<3x286xf32>,
    %c0_62 = arith.constant 0 : index
    %c19_63 = arith.constant 19 : index
    %76 = vector.load %arg5[%c0_62, %c19_63] : memref<32x324xf32, #tpu.memory_space<vmem>>, vector<3x286xf32>
    %c12 = arith.constant 12 : index
    %c0_64 = arith.constant 0 : index
    %77 = vector.load %arg6[%c12, %c0_64] : memref<288x286xf32, #tpu.memory_space<vmem>>, vector<3x286xf32>
    tpu.vector_store %arg6[%c12, %c0_64], %76 {strides = array<i32>} : memref<288x286xf32, #tpu.memory_space<vmem>>, vector<3x286xf32>,
    %c0_65 = arith.constant 0 : index
    %c20 = arith.constant 20 : index
    %78 = vector.load %arg5[%c0_65, %c20] : memref<32x324xf32, #tpu.memory_space<vmem>>, vector<3x286xf32>
    %c15 = arith.constant 15 : index
    %c0_66 = arith.constant 0 : index
    %79 = vector.load %arg6[%c15, %c0_66] : memref<288x286xf32, #tpu.memory_space<vmem>>, vector<3x286xf32>
    tpu.vector_store %arg6[%c15, %c0_66], %78 {strides = array<i32>} : memref<288x286xf32, #tpu.memory_space<vmem>>, vector<3x286xf32>,
    %c0_67 = arith.constant 0 : index
    %c36 = arith.constant 36 : index
    %80 = vector.load %arg5[%c0_67, %c36] : memref<32x324xf32, #tpu.memory_space<vmem>>, vector<3x286xf32>
    %c18_68 = arith.constant 18 : index
    %c0_69 = arith.constant 0 : index
    %81 = vector.load %arg6[%c18_68, %c0_69] : memref<288x286xf32, #tpu.memory_space<vmem>>, vector<3x286xf32>
    tpu.vector_store %arg6[%c18_68, %c0_69], %80 {strides = array<i32>} : memref<288x286xf32, #tpu.memory_space<vmem>>, vector<3x286xf32>,
    %c0_70 = arith.constant 0 : index
    %c37_71 = arith.constant 37 : index
    %82 = vector.load %arg5[%c0_70, %c37_71] : memref<32x324xf32, #tpu.memory_space<vmem>>, vector<3x286xf32>
    %c21 = arith.constant 21 : index
    %c0_72 = arith.constant 0 : index
    %83 = vector.load %arg6[%c21, %c0_72] : memref<288x286xf32, #tpu.memory_space<vmem>>, vector<3x286xf32>
    tpu.vector_store %arg6[%c21, %c0_72], %82 {strides = array<i32>} : memref<288x286xf32, #tpu.memory_space<vmem>>, vector<3x286xf32>,
    %c0_73 = arith.constant 0 : index
    %c38 = arith.constant 38 : index
    %84 = vector.load %arg5[%c0_73, %c38] : memref<32x324xf32, #tpu.memory_space<vmem>>, vector<3x286xf32>
    %c24 = arith.constant 24 : index
    %c0_74 = arith.constant 0 : index
    %85 = vector.load %arg6[%c24, %c0_74] : memref<288x286xf32, #tpu.memory_space<vmem>>, vector<3x286xf32>
    tpu.vector_store %arg6[%c24, %c0_74], %84 {strides = array<i32>} : memref<288x286xf32, #tpu.memory_space<vmem>>, vector<3x286xf32>,
    %c0_75 = arith.constant 0 : index
    %c0_76 = arith.constant 0 : index
    %86 = vector.load %arg6[%c0_75, %c0_76] : memref<288x286xf32, #tpu.memory_space<vmem>>, vector<27x286xf32>
    %c0_77 = arith.constant 0 : index
    %c0_78 = arith.constant 0 : index
    %87 = vector.load %arg2[%c0_77, %c0_78] : memref<400x289xf32, #tpu.memory_space<vmem>>, vector<16x27xf32>
    %c0_79 = arith.constant 0 : index
    %c288 = arith.constant 288 : index
    %88 = vector.load %arg2[%c0_79, %c288] : memref<400x289xf32, #tpu.memory_space<vmem>>, vector<16x1xf32>
    %cst_80 = arith.constant dense<0.000000e+00> : vector<16x286xf32>
    %89 = tpu.matmul %87, %86, %cst_80 {dimension_numbers = #tpu.dot_dimension_numbers<[1], [0], [0], [1], [0, 0, 1, 1], [], []>} : vector<16x27xf32>, vector<27x286xf32>, vector<16x286xf32> -> vector<16x286xf32>
    %90 = vector.broadcast %88 : vector<16x1xf32> to vector<16x286xf32>
    %91 = arith.addf %89, %90 : vector<16x286xf32>
    %cst_81 = arith.constant 0.000000e+00 : f32
    %92 = vector.broadcast %cst_81 : f32 to vector<16x286xf32>
    %93 = arith.cmpf ogt, %91, %92 : vector<16x286xf32>
    %cst_82 = arith.constant 1.000000e-01 : f32
    %94 = vector.broadcast %cst_82 : f32 to vector<16x286xf32>
    %95 = arith.mulf %94, %91 : vector<16x286xf32>
    %96 = arith.select %93, %91, %95 : vector<16x286xi1>, vector<16x286xf32>
    %97 = vector.extract_strided_slice %96 {offsets = [0, 0], sizes = [16, 16], strides = [1, 1]} : vector<16x286xf32> to vector<16x16xf32>
    %c0_83 = arith.constant 0 : index
    %c19_84 = arith.constant 19 : index
    %98 = vector.load %arg5[%c0_83, %c19_84] : memref<32x324xf32, #tpu.memory_space<vmem>>, vector<16x16xf32>
    tpu.vector_store %arg5[%c0_83, %c19_84], %97 {strides = array<i32>} : memref<32x324xf32, #tpu.memory_space<vmem>>, vector<16x16xf32>,
    %99 = vector.extract_strided_slice %96 {offsets = [0, 18], sizes = [16, 16], strides = [1, 1]} : vector<16x286xf32> to vector<16x16xf32>
    %c0_85 = arith.constant 0 : index
    %c37_86 = arith.constant 37 : index
    %100 = vector.load %arg5[%c0_85, %c37_86] : memref<32x324xf32, #tpu.memory_space<vmem>>, vector<16x16xf32>
    tpu.vector_store %arg5[%c0_85, %c37_86], %99 {strides = array<i32>} : memref<32x324xf32, #tpu.memory_space<vmem>>, vector<16x16xf32>,
    %101 = vector.extract_strided_slice %96 {offsets = [0, 36], sizes = [16, 16], strides = [1, 1]} : vector<16x286xf32> to vector<16x16xf32>
    %c0_87 = arith.constant 0 : index
    %c55_88 = arith.constant 55 : index
    %102 = vector.load %arg5[%c0_87, %c55_88] : memref<32x324xf32, #tpu.memory_space<vmem>>, vector<16x16xf32>
    tpu.vector_store %arg5[%c0_87, %c55_88], %101 {strides = array<i32>} : memref<32x324xf32, #tpu.memory_space<vmem>>, vector<16x16xf32>,
    %103 = vector.extract_strided_slice %96 {offsets = [0, 54], sizes = [16, 16], strides = [1, 1]} : vector<16x286xf32> to vector<16x16xf32>
    %c0_89 = arith.constant 0 : index
    %c73_90 = arith.constant 73 : index
    %104 = vector.load %arg5[%c0_89, %c73_90] : memref<32x324xf32, #tpu.memory_space<vmem>>, vector<16x16xf32>
    tpu.vector_store %arg5[%c0_89, %c73_90], %103 {strides = array<i32>} : memref<32x324xf32, #tpu.memory_space<vmem>>, vector<16x16xf32>,
    %105 = vector.extract_strided_slice %96 {offsets = [0, 72], sizes = [16, 16], strides = [1, 1]} : vector<16x286xf32> to vector<16x16xf32>
    %c0_91 = arith.constant 0 : index
    %c91_92 = arith.constant 91 : index
    %106 = vector.load %arg5[%c0_91, %c91_92] : memref<32x324xf32, #tpu.memory_space<vmem>>, vector<16x16xf32>
    tpu.vector_store %arg5[%c0_91, %c91_92], %105 {strides = array<i32>} : memref<32x324xf32, #tpu.memory_space<vmem>>, vector<16x16xf32>,
    %107 = vector.extract_strided_slice %96 {offsets = [0, 90], sizes = [16, 16], strides = [1, 1]} : vector<16x286xf32> to vector<16x16xf32>
    %c0_93 = arith.constant 0 : index
    %c109_94 = arith.constant 109 : index
    %108 = vector.load %arg5[%c0_93, %c109_94] : memref<32x324xf32, #tpu.memory_space<vmem>>, vector<16x16xf32>
    tpu.vector_store %arg5[%c0_93, %c109_94], %107 {strides = array<i32>} : memref<32x324xf32, #tpu.memory_space<vmem>>, vector<16x16xf32>,
    %109 = vector.extract_strided_slice %96 {offsets = [0, 108], sizes = [16, 16], strides = [1, 1]} : vector<16x286xf32> to vector<16x16xf32>
    %c0_95 = arith.constant 0 : index
    %c127_96 = arith.constant 127 : index
    %110 = vector.load %arg5[%c0_95, %c127_96] : memref<32x324xf32, #tpu.memory_space<vmem>>, vector<16x16xf32>
    tpu.vector_store %arg5[%c0_95, %c127_96], %109 {strides = array<i32>} : memref<32x324xf32, #tpu.memory_space<vmem>>, vector<16x16xf32>,
    %111 = vector.extract_strided_slice %96 {offsets = [0, 126], sizes = [16, 16], strides = [1, 1]} : vector<16x286xf32> to vector<16x16xf32>
    %c0_97 = arith.constant 0 : index
    %c145_98 = arith.constant 145 : index
    %112 = vector.load %arg5[%c0_97, %c145_98] : memref<32x324xf32, #tpu.memory_space<vmem>>, vector<16x16xf32>
    tpu.vector_store %arg5[%c0_97, %c145_98], %111 {strides = array<i32>} : memref<32x324xf32, #tpu.memory_space<vmem>>, vector<16x16xf32>,
    %113 = vector.extract_strided_slice %96 {offsets = [0, 144], sizes = [16, 16], strides = [1, 1]} : vector<16x286xf32> to vector<16x16xf32>
    %c0_99 = arith.constant 0 : index
    %c163_100 = arith.constant 163 : index
    %114 = vector.load %arg5[%c0_99, %c163_100] : memref<32x324xf32, #tpu.memory_space<vmem>>, vector<16x16xf32>
    tpu.vector_store %arg5[%c0_99, %c163_100], %113 {strides = array<i32>} : memref<32x324xf32, #tpu.memory_space<vmem>>, vector<16x16xf32>,
    %115 = vector.extract_strided_slice %96 {offsets = [0, 162], sizes = [16, 16], strides = [1, 1]} : vector<16x286xf32> to vector<16x16xf32>
    %c0_101 = arith.constant 0 : index
    %c181_102 = arith.constant 181 : index
    %116 = vector.load %arg5[%c0_101, %c181_102] : memref<32x324xf32, #tpu.memory_space<vmem>>, vector<16x16xf32>
    tpu.vector_store %arg5[%c0_101, %c181_102], %115 {strides = array<i32>} : memref<32x324xf32, #tpu.memory_space<vmem>>, vector<16x16xf32>,
    %117 = vector.extract_strided_slice %96 {offsets = [0, 180], sizes = [16, 16], strides = [1, 1]} : vector<16x286xf32> to vector<16x16xf32>
    %c0_103 = arith.constant 0 : index
    %c199_104 = arith.constant 199 : index
    %118 = vector.load %arg5[%c0_103, %c199_104] : memref<32x324xf32, #tpu.memory_space<vmem>>, vector<16x16xf32>
    tpu.vector_store %arg5[%c0_103, %c199_104], %117 {strides = array<i32>} : memref<32x324xf32, #tpu.memory_space<vmem>>, vector<16x16xf32>,
    %119 = vector.extract_strided_slice %96 {offsets = [0, 198], sizes = [16, 16], strides = [1, 1]} : vector<16x286xf32> to vector<16x16xf32>
    %c0_105 = arith.constant 0 : index
    %c217_106 = arith.constant 217 : index
    %120 = vector.load %arg5[%c0_105, %c217_106] : memref<32x324xf32, #tpu.memory_space<vmem>>, vector<16x16xf32>
    tpu.vector_store %arg5[%c0_105, %c217_106], %119 {strides = array<i32>} : memref<32x324xf32, #tpu.memory_space<vmem>>, vector<16x16xf32>,
    %121 = vector.extract_strided_slice %96 {offsets = [0, 216], sizes = [16, 16], strides = [1, 1]} : vector<16x286xf32> to vector<16x16xf32>
    %c0_107 = arith.constant 0 : index
    %c235_108 = arith.constant 235 : index
    %122 = vector.load %arg5[%c0_107, %c235_108] : memref<32x324xf32, #tpu.memory_space<vmem>>, vector<16x16xf32>
    tpu.vector_store %arg5[%c0_107, %c235_108], %121 {strides = array<i32>} : memref<32x324xf32, #tpu.memory_space<vmem>>, vector<16x16xf32>,
    %123 = vector.extract_strided_slice %96 {offsets = [0, 234], sizes = [16, 16], strides = [1, 1]} : vector<16x286xf32> to vector<16x16xf32>
    %c0_109 = arith.constant 0 : index
    %c253_110 = arith.constant 253 : index
    %124 = vector.load %arg5[%c0_109, %c253_110] : memref<32x324xf32, #tpu.memory_space<vmem>>, vector<16x16xf32>
    tpu.vector_store %arg5[%c0_109, %c253_110], %123 {strides = array<i32>} : memref<32x324xf32, #tpu.memory_space<vmem>>, vector<16x16xf32>,
    %125 = vector.extract_strided_slice %96 {offsets = [0, 252], sizes = [16, 16], strides = [1, 1]} : vector<16x286xf32> to vector<16x16xf32>
    %c0_111 = arith.constant 0 : index
    %c271_112 = arith.constant 271 : index
    %126 = vector.load %arg5[%c0_111, %c271_112] : memref<32x324xf32, #tpu.memory_space<vmem>>, vector<16x16xf32>
    tpu.vector_store %arg5[%c0_111, %c271_112], %125 {strides = array<i32>} : memref<32x324xf32, #tpu.memory_space<vmem>>, vector<16x16xf32>,
    %127 = vector.extract_strided_slice %96 {offsets = [0, 270], sizes = [16, 16], strides = [1, 1]} : vector<16x286xf32> to vector<16x16xf32>
    %c0_113 = arith.constant 0 : index
    %c289_114 = arith.constant 289 : index
    %128 = vector.load %arg5[%c0_113, %c289_114] : memref<32x324xf32, #tpu.memory_space<vmem>>, vector<16x16xf32>
    tpu.vector_store %arg5[%c0_113, %c289_114], %127 {strides = array<i32>} : memref<32x324xf32, #tpu.memory_space<vmem>>, vector<16x16xf32>,
    %cst_115 = arith.constant 0.000000e+00 : f32
    %129 = vector.broadcast %cst_115 : f32 to vector<16x19xf32>
    %c0_116 = arith.constant 0 : index
    %c0_117 = arith.constant 0 : index
    %130 = vector.load %arg5[%c0_116, %c0_117] : memref<32x324xf32, #tpu.memory_space<vmem>>, vector<16x19xf32>
    tpu.vector_store %arg5[%c0_116, %c0_117], %129 {strides = array<i32>} : memref<32x324xf32, #tpu.memory_space<vmem>>, vector<16x19xf32>,
    %cst_118 = arith.constant 0.000000e+00 : f32
    %131 = vector.broadcast %cst_118 : f32 to vector<16x19xf32>
    %c0_119 = arith.constant 0 : index
    %c305_120 = arith.constant 305 : index
    %132 = vector.load %arg5[%c0_119, %c305_120] : memref<32x324xf32, #tpu.memory_space<vmem>>, vector<16x19xf32>
    tpu.vector_store %arg5[%c0_119, %c305_120], %131 {strides = array<i32>} : memref<32x324xf32, #tpu.memory_space<vmem>>, vector<16x19xf32>,
    %cst_121 = arith.constant 0.000000e+00 : f32
    %133 = vector.broadcast %cst_121 : f32 to vector<16x2xf32>
    %c0_122 = arith.constant 0 : index
    %c35_123 = arith.constant 35 : index
    %134 = vector.load %arg5[%c0_122, %c35_123] : memref<32x324xf32, #tpu.memory_space<vmem>>, vector<16x2xf32>
    tpu.vector_store %arg5[%c0_122, %c35_123], %133 {strides = array<i32>} : memref<32x324xf32, #tpu.memory_space<vmem>>, vector<16x2xf32>,
    %cst_124 = arith.constant 0.000000e+00 : f32
    %135 = vector.broadcast %cst_124 : f32 to vector<16x2xf32>
    %c0_125 = arith.constant 0 : index
    %c53_126 = arith.constant 53 : index
    %136 = vector.load %arg5[%c0_125, %c53_126] : memref<32x324xf32, #tpu.memory_space<vmem>>, vector<16x2xf32>
    tpu.vector_store %arg5[%c0_125, %c53_126], %135 {strides = array<i32>} : memref<32x324xf32, #tpu.memory_space<vmem>>, vector<16x2xf32>,
    %cst_127 = arith.constant 0.000000e+00 : f32
    %137 = vector.broadcast %cst_127 : f32 to vector<16x2xf32>
    %c0_128 = arith.constant 0 : index
    %c71_129 = arith.constant 71 : index
    %138 = vector.load %arg5[%c0_128, %c71_129] : memref<32x324xf32, #tpu.memory_space<vmem>>, vector<16x2xf32>
    tpu.vector_store %arg5[%c0_128, %c71_129], %137 {strides = array<i32>} : memref<32x324xf32, #tpu.memory_space<vmem>>, vector<16x2xf32>,
    %cst_130 = arith.constant 0.000000e+00 : f32
    %139 = vector.broadcast %cst_130 : f32 to vector<16x2xf32>
    %c0_131 = arith.constant 0 : index
    %c89_132 = arith.constant 89 : index
    %140 = vector.load %arg5[%c0_131, %c89_132] : memref<32x324xf32, #tpu.memory_space<vmem>>, vector<16x2xf32>
    tpu.vector_store %arg5[%c0_131, %c89_132], %139 {strides = array<i32>} : memref<32x324xf32, #tpu.memory_space<vmem>>, vector<16x2xf32>,
    %cst_133 = arith.constant 0.000000e+00 : f32
    %141 = vector.broadcast %cst_133 : f32 to vector<16x2xf32>
    %c0_134 = arith.constant 0 : index
    %c107_135 = arith.constant 107 : index
    %142 = vector.load %arg5[%c0_134, %c107_135] : memref<32x324xf32, #tpu.memory_space<vmem>>, vector<16x2xf32>
    tpu.vector_store %arg5[%c0_134, %c107_135], %141 {strides = array<i32>} : memref<32x324xf32, #tpu.memory_space<vmem>>, vector<16x2xf32>,
    %cst_136 = arith.constant 0.000000e+00 : f32
    %143 = vector.broadcast %cst_136 : f32 to vector<16x2xf32>
    %c0_137 = arith.constant 0 : index
    %c125_138 = arith.constant 125 : index
    %144 = vector.load %arg5[%c0_137, %c125_138] : memref<32x324xf32, #tpu.memory_space<vmem>>, vector<16x2xf32>
    tpu.vector_store %arg5[%c0_137, %c125_138], %143 {strides = array<i32>} : memref<32x324xf32, #tpu.memory_space<vmem>>, vector<16x2xf32>,
    %cst_139 = arith.constant 0.000000e+00 : f32
    %145 = vector.broadcast %cst_139 : f32 to vector<16x2xf32>
    %c0_140 = arith.constant 0 : index
    %c143_141 = arith.constant 143 : index
    %146 = vector.load %arg5[%c0_140, %c143_141] : memref<32x324xf32, #tpu.memory_space<vmem>>, vector<16x2xf32>
    tpu.vector_store %arg5[%c0_140, %c143_141], %145 {strides = array<i32>} : memref<32x324xf32, #tpu.memory_space<vmem>>, vector<16x2xf32>,
    %cst_142 = arith.constant 0.000000e+00 : f32
    %147 = vector.broadcast %cst_142 : f32 to vector<16x2xf32>
    %c0_143 = arith.constant 0 : index
    %c161_144 = arith.constant 161 : index
    %148 = vector.load %arg5[%c0_143, %c161_144] : memref<32x324xf32, #tpu.memory_space<vmem>>, vector<16x2xf32>
    tpu.vector_store %arg5[%c0_143, %c161_144], %147 {strides = array<i32>} : memref<32x324xf32, #tpu.memory_space<vmem>>, vector<16x2xf32>,
    %cst_145 = arith.constant 0.000000e+00 : f32
    %149 = vector.broadcast %cst_145 : f32 to vector<16x2xf32>
    %c0_146 = arith.constant 0 : index
    %c179_147 = arith.constant 179 : index
    %150 = vector.load %arg5[%c0_146, %c179_147] : memref<32x324xf32, #tpu.memory_space<vmem>>, vector<16x2xf32>
    tpu.vector_store %arg5[%c0_146, %c179_147], %149 {strides = array<i32>} : memref<32x324xf32, #tpu.memory_space<vmem>>, vector<16x2xf32>,
    %cst_148 = arith.constant 0.000000e+00 : f32
    %151 = vector.broadcast %cst_148 : f32 to vector<16x2xf32>
    %c0_149 = arith.constant 0 : index
    %c197_150 = arith.constant 197 : index
    %152 = vector.load %arg5[%c0_149, %c197_150] : memref<32x324xf32, #tpu.memory_space<vmem>>, vector<16x2xf32>
    tpu.vector_store %arg5[%c0_149, %c197_150], %151 {strides = array<i32>} : memref<32x324xf32, #tpu.memory_space<vmem>>, vector<16x2xf32>,
    %cst_151 = arith.constant 0.000000e+00 : f32
    %153 = vector.broadcast %cst_151 : f32 to vector<16x2xf32>
    %c0_152 = arith.constant 0 : index
    %c215_153 = arith.constant 215 : index
    %154 = vector.load %arg5[%c0_152, %c215_153] : memref<32x324xf32, #tpu.memory_space<vmem>>, vector<16x2xf32>
    tpu.vector_store %arg5[%c0_152, %c215_153], %153 {strides = array<i32>} : memref<32x324xf32, #tpu.memory_space<vmem>>, vector<16x2xf32>,
    %cst_154 = arith.constant 0.000000e+00 : f32
    %155 = vector.broadcast %cst_154 : f32 to vector<16x2xf32>
    %c0_155 = arith.constant 0 : index
    %c233_156 = arith.constant 233 : index
    %156 = vector.load %arg5[%c0_155, %c233_156] : memref<32x324xf32, #tpu.memory_space<vmem>>, vector<16x2xf32>
    tpu.vector_store %arg5[%c0_155, %c233_156], %155 {strides = array<i32>} : memref<32x324xf32, #tpu.memory_space<vmem>>, vector<16x2xf32>,
    %cst_157 = arith.constant 0.000000e+00 : f32
    %157 = vector.broadcast %cst_157 : f32 to vector<16x2xf32>
    %c0_158 = arith.constant 0 : index
    %c251_159 = arith.constant 251 : index
    %158 = vector.load %arg5[%c0_158, %c251_159] : memref<32x324xf32, #tpu.memory_space<vmem>>, vector<16x2xf32>
    tpu.vector_store %arg5[%c0_158, %c251_159], %157 {strides = array<i32>} : memref<32x324xf32, #tpu.memory_space<vmem>>, vector<16x2xf32>,
    %cst_160 = arith.constant 0.000000e+00 : f32
    %159 = vector.broadcast %cst_160 : f32 to vector<16x2xf32>
    %c0_161 = arith.constant 0 : index
    %c269_162 = arith.constant 269 : index
    %160 = vector.load %arg5[%c0_161, %c269_162] : memref<32x324xf32, #tpu.memory_space<vmem>>, vector<16x2xf32>
    tpu.vector_store %arg5[%c0_161, %c269_162], %159 {strides = array<i32>} : memref<32x324xf32, #tpu.memory_space<vmem>>, vector<16x2xf32>,
    %cst_163 = arith.constant 0.000000e+00 : f32
    %161 = vector.broadcast %cst_163 : f32 to vector<16x2xf32>
    %c0_164 = arith.constant 0 : index
    %c287_165 = arith.constant 287 : index
    %162 = vector.load %arg5[%c0_164, %c287_165] : memref<32x324xf32, #tpu.memory_space<vmem>>, vector<16x2xf32>
    tpu.vector_store %arg5[%c0_164, %c287_165], %161 {strides = array<i32>} : memref<32x324xf32, #tpu.memory_space<vmem>>, vector<16x2xf32>,
    %c0_166 = arith.constant 0 : index
    %c0_167 = arith.constant 0 : index
    %163 = vector.load %arg5[%c0_166, %c0_167] : memref<32x324xf32, #tpu.memory_space<vmem>>, vector<16x286xf32>
    %c0_168 = arith.constant 0 : index
    %c0_169 = arith.constant 0 : index
    %164 = vector.load %arg6[%c0_168, %c0_169] : memref<288x286xf32, #tpu.memory_space<vmem>>, vector<16x286xf32>
    tpu.vector_store %arg6[%c0_168, %c0_169], %163 {strides = array<i32>} : memref<288x286xf32, #tpu.memory_space<vmem>>, vector<16x286xf32>,
    %c0_170 = arith.constant 0 : index
    %c1_171 = arith.constant 1 : index
    %165 = vector.load %arg5[%c0_170, %c1_171] : memref<32x324xf32, #tpu.memory_space<vmem>>, vector<16x286xf32>
    %c16 = arith.constant 16 : index
    %c0_172 = arith.constant 0 : index
    %166 = vector.load %arg6[%c16, %c0_172] : memref<288x286xf32, #tpu.memory_space<vmem>>, vector<16x286xf32>
    tpu.vector_store %arg6[%c16, %c0_172], %165 {strides = array<i32>} : memref<288x286xf32, #tpu.memory_space<vmem>>, vector<16x286xf32>,
    %c0_173 = arith.constant 0 : index
    %c2_174 = arith.constant 2 : index
    %167 = vector.load %arg5[%c0_173, %c2_174] : memref<32x324xf32, #tpu.memory_space<vmem>>, vector<16x286xf32>
    %c32 = arith.constant 32 : index
    %c0_175 = arith.constant 0 : index
    %168 = vector.load %arg6[%c32, %c0_175] : memref<288x286xf32, #tpu.memory_space<vmem>>, vector<16x286xf32>
    tpu.vector_store %arg6[%c32, %c0_175], %167 {strides = array<i32>} : memref<288x286xf32, #tpu.memory_space<vmem>>, vector<16x286xf32>,
    %c0_176 = arith.constant 0 : index
    %c18_177 = arith.constant 18 : index
    %169 = vector.load %arg5[%c0_176, %c18_177] : memref<32x324xf32, #tpu.memory_space<vmem>>, vector<16x286xf32>
    %c48 = arith.constant 48 : index
    %c0_178 = arith.constant 0 : index
    %170 = vector.load %arg6[%c48, %c0_178] : memref<288x286xf32, #tpu.memory_space<vmem>>, vector<16x286xf32>
    tpu.vector_store %arg6[%c48, %c0_178], %169 {strides = array<i32>} : memref<288x286xf32, #tpu.memory_space<vmem>>, vector<16x286xf32>,
    %c0_179 = arith.constant 0 : index
    %c19_180 = arith.constant 19 : index
    %171 = vector.load %arg5[%c0_179, %c19_180] : memref<32x324xf32, #tpu.memory_space<vmem>>, vector<16x286xf32>
    %c64 = arith.constant 64 : index
    %c0_181 = arith.constant 0 : index
    %172 = vector.load %arg6[%c64, %c0_181] : memref<288x286xf32, #tpu.memory_space<vmem>>, vector<16x286xf32>
    tpu.vector_store %arg6[%c64, %c0_181], %171 {strides = array<i32>} : memref<288x286xf32, #tpu.memory_space<vmem>>, vector<16x286xf32>,
    %c0_182 = arith.constant 0 : index
    %c20_183 = arith.constant 20 : index
    %173 = vector.load %arg5[%c0_182, %c20_183] : memref<32x324xf32, #tpu.memory_space<vmem>>, vector<16x286xf32>
    %c80 = arith.constant 80 : index
    %c0_184 = arith.constant 0 : index
    %174 = vector.load %arg6[%c80, %c0_184] : memref<288x286xf32, #tpu.memory_space<vmem>>, vector<16x286xf32>
    tpu.vector_store %arg6[%c80, %c0_184], %173 {strides = array<i32>} : memref<288x286xf32, #tpu.memory_space<vmem>>, vector<16x286xf32>,
    %c0_185 = arith.constant 0 : index
    %c36_186 = arith.constant 36 : index
    %175 = vector.load %arg5[%c0_185, %c36_186] : memref<32x324xf32, #tpu.memory_space<vmem>>, vector<16x286xf32>
    %c96 = arith.constant 96 : index
    %c0_187 = arith.constant 0 : index
    %176 = vector.load %arg6[%c96, %c0_187] : memref<288x286xf32, #tpu.memory_space<vmem>>, vector<16x286xf32>
    tpu.vector_store %arg6[%c96, %c0_187], %175 {strides = array<i32>} : memref<288x286xf32, #tpu.memory_space<vmem>>, vector<16x286xf32>,
    %c0_188 = arith.constant 0 : index
    %c37_189 = arith.constant 37 : index
    %177 = vector.load %arg5[%c0_188, %c37_189] : memref<32x324xf32, #tpu.memory_space<vmem>>, vector<16x286xf32>
    %c112 = arith.constant 112 : index
    %c0_190 = arith.constant 0 : index
    %178 = vector.load %arg6[%c112, %c0_190] : memref<288x286xf32, #tpu.memory_space<vmem>>, vector<16x286xf32>
    tpu.vector_store %arg6[%c112, %c0_190], %177 {strides = array<i32>} : memref<288x286xf32, #tpu.memory_space<vmem>>, vector<16x286xf32>,
    %c0_191 = arith.constant 0 : index
    %c38_192 = arith.constant 38 : index
    %179 = vector.load %arg5[%c0_191, %c38_192] : memref<32x324xf32, #tpu.memory_space<vmem>>, vector<16x286xf32>
    %c128 = arith.constant 128 : index
    %c0_193 = arith.constant 0 : index
    %180 = vector.load %arg6[%c128, %c0_193] : memref<288x286xf32, #tpu.memory_space<vmem>>, vector<16x286xf32>
    tpu.vector_store %arg6[%c128, %c0_193], %179 {strides = array<i32>} : memref<288x286xf32, #tpu.memory_space<vmem>>, vector<16x286xf32>,
    %c0_194 = arith.constant 0 : index
    %c0_195 = arith.constant 0 : index
    %181 = vector.load %arg6[%c0_194, %c0_195] : memref<288x286xf32, #tpu.memory_space<vmem>>, vector<144x286xf32>
    %c16_196 = arith.constant 16 : index
    %c0_197 = arith.constant 0 : index
    %182 = vector.load %arg2[%c16_196, %c0_197] : memref<400x289xf32, #tpu.memory_space<vmem>>, vector<16x144xf32>
    %c16_198 = arith.constant 16 : index
    %c288_199 = arith.constant 288 : index
    %183 = vector.load %arg2[%c16_198, %c288_199] : memref<400x289xf32, #tpu.memory_space<vmem>>, vector<16x1xf32>
    %cst_200 = arith.constant dense<0.000000e+00> : vector<16x286xf32>
    %184 = tpu.matmul %182, %181, %cst_200 {dimension_numbers = #tpu.dot_dimension_numbers<[1], [0], [0], [1], [0, 0, 1, 1], [], []>} : vector<16x144xf32>, vector<144x286xf32>, vector<16x286xf32> -> vector<16x286xf32>
    %185 = vector.broadcast %183 : vector<16x1xf32> to vector<16x286xf32>
    %186 = arith.addf %184, %185 : vector<16x286xf32>
    %cst_201 = arith.constant 0.000000e+00 : f32
    %187 = vector.broadcast %cst_201 : f32 to vector<16x286xf32>
    %188 = arith.cmpf ogt, %186, %187 : vector<16x286xf32>
    %cst_202 = arith.constant 1.000000e-01 : f32
    %189 = vector.broadcast %cst_202 : f32 to vector<16x286xf32>
    %190 = arith.mulf %189, %186 : vector<16x286xf32>
    %191 = arith.select %188, %186, %190 : vector<16x286xi1>, vector<16x286xf32>
    %192 = vector.extract_strided_slice %191 {offsets = [0, 0], sizes = [16, 16], strides = [1, 1]} : vector<16x286xf32> to vector<16x16xf32>
    %c0_203 = arith.constant 0 : index
    %c19_204 = arith.constant 19 : index
    %193 = vector.load %arg5[%c0_203, %c19_204] : memref<32x324xf32, #tpu.memory_space<vmem>>, vector<16x16xf32>
    tpu.vector_store %arg5[%c0_203, %c19_204], %192 {strides = array<i32>} : memref<32x324xf32, #tpu.memory_space<vmem>>, vector<16x16xf32>,
    %194 = vector.extract_strided_slice %191 {offsets = [0, 18], sizes = [16, 16], strides = [1, 1]} : vector<16x286xf32> to vector<16x16xf32>
    %c0_205 = arith.constant 0 : index
    %c37_206 = arith.constant 37 : index
    %195 = vector.load %arg5[%c0_205, %c37_206] : memref<32x324xf32, #tpu.memory_space<vmem>>, vector<16x16xf32>
    tpu.vector_store %arg5[%c0_205, %c37_206], %194 {strides = array<i32>} : memref<32x324xf32, #tpu.memory_space<vmem>>, vector<16x16xf32>,
    %196 = vector.extract_strided_slice %191 {offsets = [0, 36], sizes = [16, 16], strides = [1, 1]} : vector<16x286xf32> to vector<16x16xf32>
    %c0_207 = arith.constant 0 : index
    %c55_208 = arith.constant 55 : index
    %197 = vector.load %arg5[%c0_207, %c55_208] : memref<32x324xf32, #tpu.memory_space<vmem>>, vector<16x16xf32>
    tpu.vector_store %arg5[%c0_207, %c55_208], %196 {strides = array<i32>} : memref<32x324xf32, #tpu.memory_space<vmem>>, vector<16x16xf32>,
    %198 = vector.extract_strided_slice %191 {offsets = [0, 54], sizes = [16, 16], strides = [1, 1]} : vector<16x286xf32> to vector<16x16xf32>
    %c0_209 = arith.constant 0 : index
    %c73_210 = arith.constant 73 : index
    %199 = vector.load %arg5[%c0_209, %c73_210] : memref<32x324xf32, #tpu.memory_space<vmem>>, vector<16x16xf32>
    tpu.vector_store %arg5[%c0_209, %c73_210], %198 {strides = array<i32>} : memref<32x324xf32, #tpu.memory_space<vmem>>, vector<16x16xf32>,
    %200 = vector.extract_strided_slice %191 {offsets = [0, 72], sizes = [16, 16], strides = [1, 1]} : vector<16x286xf32> to vector<16x16xf32>
    %c0_211 = arith.constant 0 : index
    %c91_212 = arith.constant 91 : index
    %201 = vector.load %arg5[%c0_211, %c91_212] : memref<32x324xf32, #tpu.memory_space<vmem>>, vector<16x16xf32>
    tpu.vector_store %arg5[%c0_211, %c91_212], %200 {strides = array<i32>} : memref<32x324xf32, #tpu.memory_space<vmem>>, vector<16x16xf32>,
    %202 = vector.extract_strided_slice %191 {offsets = [0, 90], sizes = [16, 16], strides = [1, 1]} : vector<16x286xf32> to vector<16x16xf32>
    %c0_213 = arith.constant 0 : index
    %c109_214 = arith.constant 109 : index
    %203 = vector.load %arg5[%c0_213, %c109_214] : memref<32x324xf32, #tpu.memory_space<vmem>>, vector<16x16xf32>
    tpu.vector_store %arg5[%c0_213, %c109_214], %202 {strides = array<i32>} : memref<32x324xf32, #tpu.memory_space<vmem>>, vector<16x16xf32>,
    %204 = vector.extract_strided_slice %191 {offsets = [0, 108], sizes = [16, 16], strides = [1, 1]} : vector<16x286xf32> to vector<16x16xf32>
    %c0_215 = arith.constant 0 : index
    %c127_216 = arith.constant 127 : index
    %205 = vector.load %arg5[%c0_215, %c127_216] : memref<32x324xf32, #tpu.memory_space<vmem>>, vector<16x16xf32>
    tpu.vector_store %arg5[%c0_215, %c127_216], %204 {strides = array<i32>} : memref<32x324xf32, #tpu.memory_space<vmem>>, vector<16x16xf32>,
    %206 = vector.extract_strided_slice %191 {offsets = [0, 126], sizes = [16, 16], strides = [1, 1]} : vector<16x286xf32> to vector<16x16xf32>
    %c0_217 = arith.constant 0 : index
    %c145_218 = arith.constant 145 : index
    %207 = vector.load %arg5[%c0_217, %c145_218] : memref<32x324xf32, #tpu.memory_space<vmem>>, vector<16x16xf32>
    tpu.vector_store %arg5[%c0_217, %c145_218], %206 {strides = array<i32>} : memref<32x324xf32, #tpu.memory_space<vmem>>, vector<16x16xf32>,
    %208 = vector.extract_strided_slice %191 {offsets = [0, 144], sizes = [16, 16], strides = [1, 1]} : vector<16x286xf32> to vector<16x16xf32>
    %c0_219 = arith.constant 0 : index
    %c163_220 = arith.constant 163 : index
    %209 = vector.load %arg5[%c0_219, %c163_220] : memref<32x324xf32, #tpu.memory_space<vmem>>, vector<16x16xf32>
    tpu.vector_store %arg5[%c0_219, %c163_220], %208 {strides = array<i32>} : memref<32x324xf32, #tpu.memory_space<vmem>>, vector<16x16xf32>,
    %210 = vector.extract_strided_slice %191 {offsets = [0, 162], sizes = [16, 16], strides = [1, 1]} : vector<16x286xf32> to vector<16x16xf32>
    %c0_221 = arith.constant 0 : index
    %c181_222 = arith.constant 181 : index
    %211 = vector.load %arg5[%c0_221, %c181_222] : memref<32x324xf32, #tpu.memory_space<vmem>>, vector<16x16xf32>
    tpu.vector_store %arg5[%c0_221, %c181_222], %210 {strides = array<i32>} : memref<32x324xf32, #tpu.memory_space<vmem>>, vector<16x16xf32>,
    %212 = vector.extract_strided_slice %191 {offsets = [0, 180], sizes = [16, 16], strides = [1, 1]} : vector<16x286xf32> to vector<16x16xf32>
    %c0_223 = arith.constant 0 : index
    %c199_224 = arith.constant 199 : index
    %213 = vector.load %arg5[%c0_223, %c199_224] : memref<32x324xf32, #tpu.memory_space<vmem>>, vector<16x16xf32>
    tpu.vector_store %arg5[%c0_223, %c199_224], %212 {strides = array<i32>} : memref<32x324xf32, #tpu.memory_space<vmem>>, vector<16x16xf32>,
    %214 = vector.extract_strided_slice %191 {offsets = [0, 198], sizes = [16, 16], strides = [1, 1]} : vector<16x286xf32> to vector<16x16xf32>
    %c0_225 = arith.constant 0 : index
    %c217_226 = arith.constant 217 : index
    %215 = vector.load %arg5[%c0_225, %c217_226] : memref<32x324xf32, #tpu.memory_space<vmem>>, vector<16x16xf32>
    tpu.vector_store %arg5[%c0_225, %c217_226], %214 {strides = array<i32>} : memref<32x324xf32, #tpu.memory_space<vmem>>, vector<16x16xf32>,
    %216 = vector.extract_strided_slice %191 {offsets = [0, 216], sizes = [16, 16], strides = [1, 1]} : vector<16x286xf32> to vector<16x16xf32>
    %c0_227 = arith.constant 0 : index
    %c235_228 = arith.constant 235 : index
    %217 = vector.load %arg5[%c0_227, %c235_228] : memref<32x324xf32, #tpu.memory_space<vmem>>, vector<16x16xf32>
    tpu.vector_store %arg5[%c0_227, %c235_228], %216 {strides = array<i32>} : memref<32x324xf32, #tpu.memory_space<vmem>>, vector<16x16xf32>,
    %218 = vector.extract_strided_slice %191 {offsets = [0, 234], sizes = [16, 16], strides = [1, 1]} : vector<16x286xf32> to vector<16x16xf32>
    %c0_229 = arith.constant 0 : index
    %c253_230 = arith.constant 253 : index
    %219 = vector.load %arg5[%c0_229, %c253_230] : memref<32x324xf32, #tpu.memory_space<vmem>>, vector<16x16xf32>
    tpu.vector_store %arg5[%c0_229, %c253_230], %218 {strides = array<i32>} : memref<32x324xf32, #tpu.memory_space<vmem>>, vector<16x16xf32>,
    %220 = vector.extract_strided_slice %191 {offsets = [0, 252], sizes = [16, 16], strides = [1, 1]} : vector<16x286xf32> to vector<16x16xf32>
    %c0_231 = arith.constant 0 : index
    %c271_232 = arith.constant 271 : index
    %221 = vector.load %arg5[%c0_231, %c271_232] : memref<32x324xf32, #tpu.memory_space<vmem>>, vector<16x16xf32>
    tpu.vector_store %arg5[%c0_231, %c271_232], %220 {strides = array<i32>} : memref<32x324xf32, #tpu.memory_space<vmem>>, vector<16x16xf32>,
    %222 = vector.extract_strided_slice %191 {offsets = [0, 270], sizes = [16, 16], strides = [1, 1]} : vector<16x286xf32> to vector<16x16xf32>
    %c0_233 = arith.constant 0 : index
    %c289_234 = arith.constant 289 : index
    %223 = vector.load %arg5[%c0_233, %c289_234] : memref<32x324xf32, #tpu.memory_space<vmem>>, vector<16x16xf32>
    tpu.vector_store %arg5[%c0_233, %c289_234], %222 {strides = array<i32>} : memref<32x324xf32, #tpu.memory_space<vmem>>, vector<16x16xf32>,
    %cst_235 = arith.constant 0.000000e+00 : f32
    %224 = vector.broadcast %cst_235 : f32 to vector<16x19xf32>
    %c0_236 = arith.constant 0 : index
    %c0_237 = arith.constant 0 : index
    %225 = vector.load %arg5[%c0_236, %c0_237] : memref<32x324xf32, #tpu.memory_space<vmem>>, vector<16x19xf32>
    tpu.vector_store %arg5[%c0_236, %c0_237], %224 {strides = array<i32>} : memref<32x324xf32, #tpu.memory_space<vmem>>, vector<16x19xf32>,
    %cst_238 = arith.constant 0.000000e+00 : f32
    %226 = vector.broadcast %cst_238 : f32 to vector<16x19xf32>
    %c0_239 = arith.constant 0 : index
    %c305_240 = arith.constant 305 : index
    %227 = vector.load %arg5[%c0_239, %c305_240] : memref<32x324xf32, #tpu.memory_space<vmem>>, vector<16x19xf32>
    tpu.vector_store %arg5[%c0_239, %c305_240], %226 {strides = array<i32>} : memref<32x324xf32, #tpu.memory_space<vmem>>, vector<16x19xf32>,
    %cst_241 = arith.constant 0.000000e+00 : f32
    %228 = vector.broadcast %cst_241 : f32 to vector<16x2xf32>
    %c0_242 = arith.constant 0 : index
    %c35_243 = arith.constant 35 : index
    %229 = vector.load %arg5[%c0_242, %c35_243] : memref<32x324xf32, #tpu.memory_space<vmem>>, vector<16x2xf32>
    tpu.vector_store %arg5[%c0_242, %c35_243], %228 {strides = array<i32>} : memref<32x324xf32, #tpu.memory_space<vmem>>, vector<16x2xf32>,
    %cst_244 = arith.constant 0.000000e+00 : f32
    %230 = vector.broadcast %cst_244 : f32 to vector<16x2xf32>
    %c0_245 = arith.constant 0 : index
    %c53_246 = arith.constant 53 : index
    %231 = vector.load %arg5[%c0_245, %c53_246] : memref<32x324xf32, #tpu.memory_space<vmem>>, vector<16x2xf32>
    tpu.vector_store %arg5[%c0_245, %c53_246], %230 {strides = array<i32>} : memref<32x324xf32, #tpu.memory_space<vmem>>, vector<16x2xf32>,
    %cst_247 = arith.constant 0.000000e+00 : f32
    %232 = vector.broadcast %cst_247 : f32 to vector<16x2xf32>
    %c0_248 = arith.constant 0 : index
    %c71_249 = arith.constant 71 : index
    %233 = vector.load %arg5[%c0_248, %c71_249] : memref<32x324xf32, #tpu.memory_space<vmem>>, vector<16x2xf32>
    tpu.vector_store %arg5[%c0_248, %c71_249], %232 {strides = array<i32>} : memref<32x324xf32, #tpu.memory_space<vmem>>, vector<16x2xf32>,
    %cst_250 = arith.constant 0.000000e+00 : f32
    %234 = vector.broadcast %cst_250 : f32 to vector<16x2xf32>
    %c0_251 = arith.constant 0 : index
    %c89_252 = arith.constant 89 : index
    %235 = vector.load %arg5[%c0_251, %c89_252] : memref<32x324xf32, #tpu.memory_space<vmem>>, vector<16x2xf32>
    tpu.vector_store %arg5[%c0_251, %c89_252], %234 {strides = array<i32>} : memref<32x324xf32, #tpu.memory_space<vmem>>, vector<16x2xf32>,
    %cst_253 = arith.constant 0.000000e+00 : f32
    %236 = vector.broadcast %cst_253 : f32 to vector<16x2xf32>
    %c0_254 = arith.constant 0 : index
    %c107_255 = arith.constant 107 : index
    %237 = vector.load %arg5[%c0_254, %c107_255] : memref<32x324xf32, #tpu.memory_space<vmem>>, vector<16x2xf32>
    tpu.vector_store %arg5[%c0_254, %c107_255], %236 {strides = array<i32>} : memref<32x324xf32, #tpu.memory_space<vmem>>, vector<16x2xf32>,
    %cst_256 = arith.constant 0.000000e+00 : f32
    %238 = vector.broadcast %cst_256 : f32 to vector<16x2xf32>
    %c0_257 = arith.constant 0 : index
    %c125_258 = arith.constant 125 : index
    %239 = vector.load %arg5[%c0_257, %c125_258] : memref<32x324xf32, #tpu.memory_space<vmem>>, vector<16x2xf32>
    tpu.vector_store %arg5[%c0_257, %c125_258], %238 {strides = array<i32>} : memref<32x324xf32, #tpu.memory_space<vmem>>, vector<16x2xf32>,
    %cst_259 = arith.constant 0.000000e+00 : f32
    %240 = vector.broadcast %cst_259 : f32 to vector<16x2xf32>
    %c0_260 = arith.constant 0 : index
    %c143_261 = arith.constant 143 : index
    %241 = vector.load %arg5[%c0_260, %c143_261] : memref<32x324xf32, #tpu.memory_space<vmem>>, vector<16x2xf32>
    tpu.vector_store %arg5[%c0_260, %c143_261], %240 {strides = array<i32>} : memref<32x324xf32, #tpu.memory_space<vmem>>, vector<16x2xf32>,
    %cst_262 = arith.constant 0.000000e+00 : f32
    %242 = vector.broadcast %cst_262 : f32 to vector<16x2xf32>
    %c0_263 = arith.constant 0 : index
    %c161_264 = arith.constant 161 : index
    %243 = vector.load %arg5[%c0_263, %c161_264] : memref<32x324xf32, #tpu.memory_space<vmem>>, vector<16x2xf32>
    tpu.vector_store %arg5[%c0_263, %c161_264], %242 {strides = array<i32>} : memref<32x324xf32, #tpu.memory_space<vmem>>, vector<16x2xf32>,
    %cst_265 = arith.constant 0.000000e+00 : f32
    %244 = vector.broadcast %cst_265 : f32 to vector<16x2xf32>
    %c0_266 = arith.constant 0 : index
    %c179_267 = arith.constant 179 : index
    %245 = vector.load %arg5[%c0_266, %c179_267] : memref<32x324xf32, #tpu.memory_space<vmem>>, vector<16x2xf32>
    tpu.vector_store %arg5[%c0_266, %c179_267], %244 {strides = array<i32>} : memref<32x324xf32, #tpu.memory_space<vmem>>, vector<16x2xf32>,
    %cst_268 = arith.constant 0.000000e+00 : f32
    %246 = vector.broadcast %cst_268 : f32 to vector<16x2xf32>
    %c0_269 = arith.constant 0 : index
    %c197_270 = arith.constant 197 : index
    %247 = vector.load %arg5[%c0_269, %c197_270] : memref<32x324xf32, #tpu.memory_space<vmem>>, vector<16x2xf32>
    tpu.vector_store %arg5[%c0_269, %c197_270], %246 {strides = array<i32>} : memref<32x324xf32, #tpu.memory_space<vmem>>, vector<16x2xf32>,
    %cst_271 = arith.constant 0.000000e+00 : f32
    %248 = vector.broadcast %cst_271 : f32 to vector<16x2xf32>
    %c0_272 = arith.constant 0 : index
    %c215_273 = arith.constant 215 : index
    %249 = vector.load %arg5[%c0_272, %c215_273] : memref<32x324xf32, #tpu.memory_space<vmem>>, vector<16x2xf32>
    tpu.vector_store %arg5[%c0_272, %c215_273], %248 {strides = array<i32>} : memref<32x324xf32, #tpu.memory_space<vmem>>, vector<16x2xf32>,
    %cst_274 = arith.constant 0.000000e+00 : f32
    %250 = vector.broadcast %cst_274 : f32 to vector<16x2xf32>
    %c0_275 = arith.constant 0 : index
    %c233_276 = arith.constant 233 : index
    %251 = vector.load %arg5[%c0_275, %c233_276] : memref<32x324xf32, #tpu.memory_space<vmem>>, vector<16x2xf32>
    tpu.vector_store %arg5[%c0_275, %c233_276], %250 {strides = array<i32>} : memref<32x324xf32, #tpu.memory_space<vmem>>, vector<16x2xf32>,
    %cst_277 = arith.constant 0.000000e+00 : f32
    %252 = vector.broadcast %cst_277 : f32 to vector<16x2xf32>
    %c0_278 = arith.constant 0 : index
    %c251_279 = arith.constant 251 : index
    %253 = vector.load %arg5[%c0_278, %c251_279] : memref<32x324xf32, #tpu.memory_space<vmem>>, vector<16x2xf32>
    tpu.vector_store %arg5[%c0_278, %c251_279], %252 {strides = array<i32>} : memref<32x324xf32, #tpu.memory_space<vmem>>, vector<16x2xf32>,
    %cst_280 = arith.constant 0.000000e+00 : f32
    %254 = vector.broadcast %cst_280 : f32 to vector<16x2xf32>
    %c0_281 = arith.constant 0 : index
    %c269_282 = arith.constant 269 : index
    %255 = vector.load %arg5[%c0_281, %c269_282] : memref<32x324xf32, #tpu.memory_space<vmem>>, vector<16x2xf32>
    tpu.vector_store %arg5[%c0_281, %c269_282], %254 {strides = array<i32>} : memref<32x324xf32, #tpu.memory_space<vmem>>, vector<16x2xf32>,
    %cst_283 = arith.constant 0.000000e+00 : f32
    %256 = vector.broadcast %cst_283 : f32 to vector<16x2xf32>
    %c0_284 = arith.constant 0 : index
    %c287_285 = arith.constant 287 : index
    %257 = vector.load %arg5[%c0_284, %c287_285] : memref<32x324xf32, #tpu.memory_space<vmem>>, vector<16x2xf32>
    tpu.vector_store %arg5[%c0_284, %c287_285], %256 {strides = array<i32>} : memref<32x324xf32, #tpu.memory_space<vmem>>, vector<16x2xf32>,
    %c0_286 = arith.constant 0 : index
    %c0_287 = arith.constant 0 : index
    %258 = vector.load %arg5[%c0_286, %c0_287] : memref<32x324xf32, #tpu.memory_space<vmem>>, vector<16x286xf32>
    %c0_288 = arith.constant 0 : index
    %c0_289 = arith.constant 0 : index
    %259 = vector.load %arg6[%c0_288, %c0_289] : memref<288x286xf32, #tpu.memory_space<vmem>>, vector<16x286xf32>
    tpu.vector_store %arg6[%c0_288, %c0_289], %258 {strides = array<i32>} : memref<288x286xf32, #tpu.memory_space<vmem>>, vector<16x286xf32>,
    %c0_290 = arith.constant 0 : index
    %c1_291 = arith.constant 1 : index
    %260 = vector.load %arg5[%c0_290, %c1_291] : memref<32x324xf32, #tpu.memory_space<vmem>>, vector<16x286xf32>
    %c16_292 = arith.constant 16 : index
    %c0_293 = arith.constant 0 : index
    %261 = vector.load %arg6[%c16_292, %c0_293] : memref<288x286xf32, #tpu.memory_space<vmem>>, vector<16x286xf32>
    tpu.vector_store %arg6[%c16_292, %c0_293], %260 {strides = array<i32>} : memref<288x286xf32, #tpu.memory_space<vmem>>, vector<16x286xf32>,
    %c0_294 = arith.constant 0 : index
    %c2_295 = arith.constant 2 : index
    %262 = vector.load %arg5[%c0_294, %c2_295] : memref<32x324xf32, #tpu.memory_space<vmem>>, vector<16x286xf32>
    %c32_296 = arith.constant 32 : index
    %c0_297 = arith.constant 0 : index
    %263 = vector.load %arg6[%c32_296, %c0_297] : memref<288x286xf32, #tpu.memory_space<vmem>>, vector<16x286xf32>
    tpu.vector_store %arg6[%c32_296, %c0_297], %262 {strides = array<i32>} : memref<288x286xf32, #tpu.memory_space<vmem>>, vector<16x286xf32>,
    %c0_298 = arith.constant 0 : index
    %c18_299 = arith.constant 18 : index
    %264 = vector.load %arg5[%c0_298, %c18_299] : memref<32x324xf32, #tpu.memory_space<vmem>>, vector<16x286xf32>
    %c48_300 = arith.constant 48 : index
    %c0_301 = arith.constant 0 : index
    %265 = vector.load %arg6[%c48_300, %c0_301] : memref<288x286xf32, #tpu.memory_space<vmem>>, vector<16x286xf32>
    tpu.vector_store %arg6[%c48_300, %c0_301], %264 {strides = array<i32>} : memref<288x286xf32, #tpu.memory_space<vmem>>, vector<16x286xf32>,
    %c0_302 = arith.constant 0 : index
    %c19_303 = arith.constant 19 : index
    %266 = vector.load %arg5[%c0_302, %c19_303] : memref<32x324xf32, #tpu.memory_space<vmem>>, vector<16x286xf32>
    %c64_304 = arith.constant 64 : index
    %c0_305 = arith.constant 0 : index
    %267 = vector.load %arg6[%c64_304, %c0_305] : memref<288x286xf32, #tpu.memory_space<vmem>>, vector<16x286xf32>
    tpu.vector_store %arg6[%c64_304, %c0_305], %266 {strides = array<i32>} : memref<288x286xf32, #tpu.memory_space<vmem>>, vector<16x286xf32>,
    %c0_306 = arith.constant 0 : index
    %c20_307 = arith.constant 20 : index
    %268 = vector.load %arg5[%c0_306, %c20_307] : memref<32x324xf32, #tpu.memory_space<vmem>>, vector<16x286xf32>
    %c80_308 = arith.constant 80 : index
    %c0_309 = arith.constant 0 : index
    %269 = vector.load %arg6[%c80_308, %c0_309] : memref<288x286xf32, #tpu.memory_space<vmem>>, vector<16x286xf32>
    tpu.vector_store %arg6[%c80_308, %c0_309], %268 {strides = array<i32>} : memref<288x286xf32, #tpu.memory_space<vmem>>, vector<16x286xf32>,
    %c0_310 = arith.constant 0 : index
    %c36_311 = arith.constant 36 : index
    %270 = vector.load %arg5[%c0_310, %c36_311] : memref<32x324xf32, #tpu.memory_space<vmem>>, vector<16x286xf32>
    %c96_312 = arith.constant 96 : index
    %c0_313 = arith.constant 0 : index
    %271 = vector.load %arg6[%c96_312, %c0_313] : memref<288x286xf32, #tpu.memory_space<vmem>>, vector<16x286xf32>
    tpu.vector_store %arg6[%c96_312, %c0_313], %270 {strides = array<i32>} : memref<288x286xf32, #tpu.memory_space<vmem>>, vector<16x286xf32>,
    %c0_314 = arith.constant 0 : index
    %c37_315 = arith.constant 37 : index
    %272 = vector.load %arg5[%c0_314, %c37_315] : memref<32x324xf32, #tpu.memory_space<vmem>>, vector<16x286xf32>
    %c112_316 = arith.constant 112 : index
    %c0_317 = arith.constant 0 : index
    %273 = vector.load %arg6[%c112_316, %c0_317] : memref<288x286xf32, #tpu.memory_space<vmem>>, vector<16x286xf32>
    tpu.vector_store %arg6[%c112_316, %c0_317], %272 {strides = array<i32>} : memref<288x286xf32, #tpu.memory_space<vmem>>, vector<16x286xf32>,
    %c0_318 = arith.constant 0 : index
    %c38_319 = arith.constant 38 : index
    %274 = vector.load %arg5[%c0_318, %c38_319] : memref<32x324xf32, #tpu.memory_space<vmem>>, vector<16x286xf32>
    %c128_320 = arith.constant 128 : index
    %c0_321 = arith.constant 0 : index
    %275 = vector.load %arg6[%c128_320, %c0_321] : memref<288x286xf32, #tpu.memory_space<vmem>>, vector<16x286xf32>
    tpu.vector_store %arg6[%c128_320, %c0_321], %274 {strides = array<i32>} : memref<288x286xf32, #tpu.memory_space<vmem>>, vector<16x286xf32>,
    %c0_322 = arith.constant 0 : index
    %c0_323 = arith.constant 0 : index
    %276 = vector.load %arg6[%c0_322, %c0_323] : memref<288x286xf32, #tpu.memory_space<vmem>>, vector<144x286xf32>
    %c32_324 = arith.constant 32 : index
    %c0_325 = arith.constant 0 : index
    %277 = vector.load %arg2[%c32_324, %c0_325] : memref<400x289xf32, #tpu.memory_space<vmem>>, vector<16x144xf32>
    %c32_326 = arith.constant 32 : index
    %c288_327 = arith.constant 288 : index
    %278 = vector.load %arg2[%c32_326, %c288_327] : memref<400x289xf32, #tpu.memory_space<vmem>>, vector<16x1xf32>
    %cst_328 = arith.constant dense<0.000000e+00> : vector<16x286xf32>
    %279 = tpu.matmul %277, %276, %cst_328 {dimension_numbers = #tpu.dot_dimension_numbers<[1], [0], [0], [1], [0, 0, 1, 1], [], []>} : vector<16x144xf32>, vector<144x286xf32>, vector<16x286xf32> -> vector<16x286xf32>
    %280 = vector.broadcast %278 : vector<16x1xf32> to vector<16x286xf32>
    %281 = arith.addf %279, %280 : vector<16x286xf32>
    %cst_329 = arith.constant 0.000000e+00 : f32
    %282 = vector.broadcast %cst_329 : f32 to vector<16x286xf32>
    %283 = arith.cmpf ogt, %281, %282 : vector<16x286xf32>
    %cst_330 = arith.constant 1.000000e-01 : f32
    %284 = vector.broadcast %cst_330 : f32 to vector<16x286xf32>
    %285 = arith.mulf %284, %281 : vector<16x286xf32>
    %286 = arith.select %283, %281, %285 : vector<16x286xi1>, vector<16x286xf32>
    %287 = vector.extract_strided_slice %286 {offsets = [0, 0], sizes = [16, 16], strides = [1, 1]} : vector<16x286xf32> to vector<16x16xf32>
    %c0_331 = arith.constant 0 : index
    %c19_332 = arith.constant 19 : index
    %288 = vector.load %arg5[%c0_331, %c19_332] : memref<32x324xf32, #tpu.memory_space<vmem>>, vector<16x16xf32>
    tpu.vector_store %arg5[%c0_331, %c19_332], %287 {strides = array<i32>} : memref<32x324xf32, #tpu.memory_space<vmem>>, vector<16x16xf32>,
    %289 = vector.extract_strided_slice %286 {offsets = [0, 18], sizes = [16, 16], strides = [1, 1]} : vector<16x286xf32> to vector<16x16xf32>
    %c0_333 = arith.constant 0 : index
    %c37_334 = arith.constant 37 : index
    %290 = vector.load %arg5[%c0_333, %c37_334] : memref<32x324xf32, #tpu.memory_space<vmem>>, vector<16x16xf32>
    tpu.vector_store %arg5[%c0_333, %c37_334], %289 {strides = array<i32>} : memref<32x324xf32, #tpu.memory_space<vmem>>, vector<16x16xf32>,
    %291 = vector.extract_strided_slice %286 {offsets = [0, 36], sizes = [16, 16], strides = [1, 1]} : vector<16x286xf32> to vector<16x16xf32>
    %c0_335 = arith.constant 0 : index
    %c55_336 = arith.constant 55 : index
    %292 = vector.load %arg5[%c0_335, %c55_336] : memref<32x324xf32, #tpu.memory_space<vmem>>, vector<16x16xf32>
    tpu.vector_store %arg5[%c0_335, %c55_336], %291 {strides = array<i32>} : memref<32x324xf32, #tpu.memory_space<vmem>>, vector<16x16xf32>,
    %293 = vector.extract_strided_slice %286 {offsets = [0, 54], sizes = [16, 16], strides = [1, 1]} : vector<16x286xf32> to vector<16x16xf32>
    %c0_337 = arith.constant 0 : index
    %c73_338 = arith.constant 73 : index
    %294 = vector.load %arg5[%c0_337, %c73_338] : memref<32x324xf32, #tpu.memory_space<vmem>>, vector<16x16xf32>
    tpu.vector_store %arg5[%c0_337, %c73_338], %293 {strides = array<i32>} : memref<32x324xf32, #tpu.memory_space<vmem>>, vector<16x16xf32>,
    %295 = vector.extract_strided_slice %286 {offsets = [0, 72], sizes = [16, 16], strides = [1, 1]} : vector<16x286xf32> to vector<16x16xf32>
    %c0_339 = arith.constant 0 : index
    %c91_340 = arith.constant 91 : index
    %296 = vector.load %arg5[%c0_339, %c91_340] : memref<32x324xf32, #tpu.memory_space<vmem>>, vector<16x16xf32>
    tpu.vector_store %arg5[%c0_339, %c91_340], %295 {strides = array<i32>} : memref<32x324xf32, #tpu.memory_space<vmem>>, vector<16x16xf32>,
    %297 = vector.extract_strided_slice %286 {offsets = [0, 90], sizes = [16, 16], strides = [1, 1]} : vector<16x286xf32> to vector<16x16xf32>
    %c0_341 = arith.constant 0 : index
    %c109_342 = arith.constant 109 : index
    %298 = vector.load %arg5[%c0_341, %c109_342] : memref<32x324xf32, #tpu.memory_space<vmem>>, vector<16x16xf32>
    tpu.vector_store %arg5[%c0_341, %c109_342], %297 {strides = array<i32>} : memref<32x324xf32, #tpu.memory_space<vmem>>, vector<16x16xf32>,
    %299 = vector.extract_strided_slice %286 {offsets = [0, 108], sizes = [16, 16], strides = [1, 1]} : vector<16x286xf32> to vector<16x16xf32>
    %c0_343 = arith.constant 0 : index
    %c127_344 = arith.constant 127 : index
    %300 = vector.load %arg5[%c0_343, %c127_344] : memref<32x324xf32, #tpu.memory_space<vmem>>, vector<16x16xf32>
    tpu.vector_store %arg5[%c0_343, %c127_344], %299 {strides = array<i32>} : memref<32x324xf32, #tpu.memory_space<vmem>>, vector<16x16xf32>,
    %301 = vector.extract_strided_slice %286 {offsets = [0, 126], sizes = [16, 16], strides = [1, 1]} : vector<16x286xf32> to vector<16x16xf32>
    %c0_345 = arith.constant 0 : index
    %c145_346 = arith.constant 145 : index
    %302 = vector.load %arg5[%c0_345, %c145_346] : memref<32x324xf32, #tpu.memory_space<vmem>>, vector<16x16xf32>
    tpu.vector_store %arg5[%c0_345, %c145_346], %301 {strides = array<i32>} : memref<32x324xf32, #tpu.memory_space<vmem>>, vector<16x16xf32>,
    %303 = vector.extract_strided_slice %286 {offsets = [0, 144], sizes = [16, 16], strides = [1, 1]} : vector<16x286xf32> to vector<16x16xf32>
    %c0_347 = arith.constant 0 : index
    %c163_348 = arith.constant 163 : index
    %304 = vector.load %arg5[%c0_347, %c163_348] : memref<32x324xf32, #tpu.memory_space<vmem>>, vector<16x16xf32>
    tpu.vector_store %arg5[%c0_347, %c163_348], %303 {strides = array<i32>} : memref<32x324xf32, #tpu.memory_space<vmem>>, vector<16x16xf32>,
    %305 = vector.extract_strided_slice %286 {offsets = [0, 162], sizes = [16, 16], strides = [1, 1]} : vector<16x286xf32> to vector<16x16xf32>
    %c0_349 = arith.constant 0 : index
    %c181_350 = arith.constant 181 : index
    %306 = vector.load %arg5[%c0_349, %c181_350] : memref<32x324xf32, #tpu.memory_space<vmem>>, vector<16x16xf32>
    tpu.vector_store %arg5[%c0_349, %c181_350], %305 {strides = array<i32>} : memref<32x324xf32, #tpu.memory_space<vmem>>, vector<16x16xf32>,
    %307 = vector.extract_strided_slice %286 {offsets = [0, 180], sizes = [16, 16], strides = [1, 1]} : vector<16x286xf32> to vector<16x16xf32>
    %c0_351 = arith.constant 0 : index
    %c199_352 = arith.constant 199 : index
    %308 = vector.load %arg5[%c0_351, %c199_352] : memref<32x324xf32, #tpu.memory_space<vmem>>, vector<16x16xf32>
    tpu.vector_store %arg5[%c0_351, %c199_352], %307 {strides = array<i32>} : memref<32x324xf32, #tpu.memory_space<vmem>>, vector<16x16xf32>,
    %309 = vector.extract_strided_slice %286 {offsets = [0, 198], sizes = [16, 16], strides = [1, 1]} : vector<16x286xf32> to vector<16x16xf32>
    %c0_353 = arith.constant 0 : index
    %c217_354 = arith.constant 217 : index
    %310 = vector.load %arg5[%c0_353, %c217_354] : memref<32x324xf32, #tpu.memory_space<vmem>>, vector<16x16xf32>
    tpu.vector_store %arg5[%c0_353, %c217_354], %309 {strides = array<i32>} : memref<32x324xf32, #tpu.memory_space<vmem>>, vector<16x16xf32>,
    %311 = vector.extract_strided_slice %286 {offsets = [0, 216], sizes = [16, 16], strides = [1, 1]} : vector<16x286xf32> to vector<16x16xf32>
    %c0_355 = arith.constant 0 : index
    %c235_356 = arith.constant 235 : index
    %312 = vector.load %arg5[%c0_355, %c235_356] : memref<32x324xf32, #tpu.memory_space<vmem>>, vector<16x16xf32>
    tpu.vector_store %arg5[%c0_355, %c235_356], %311 {strides = array<i32>} : memref<32x324xf32, #tpu.memory_space<vmem>>, vector<16x16xf32>,
    %313 = vector.extract_strided_slice %286 {offsets = [0, 234], sizes = [16, 16], strides = [1, 1]} : vector<16x286xf32> to vector<16x16xf32>
    %c0_357 = arith.constant 0 : index
    %c253_358 = arith.constant 253 : index
    %314 = vector.load %arg5[%c0_357, %c253_358] : memref<32x324xf32, #tpu.memory_space<vmem>>, vector<16x16xf32>
    tpu.vector_store %arg5[%c0_357, %c253_358], %313 {strides = array<i32>} : memref<32x324xf32, #tpu.memory_space<vmem>>, vector<16x16xf32>,
    %315 = vector.extract_strided_slice %286 {offsets = [0, 252], sizes = [16, 16], strides = [1, 1]} : vector<16x286xf32> to vector<16x16xf32>
    %c0_359 = arith.constant 0 : index
    %c271_360 = arith.constant 271 : index
    %316 = vector.load %arg5[%c0_359, %c271_360] : memref<32x324xf32, #tpu.memory_space<vmem>>, vector<16x16xf32>
    tpu.vector_store %arg5[%c0_359, %c271_360], %315 {strides = array<i32>} : memref<32x324xf32, #tpu.memory_space<vmem>>, vector<16x16xf32>,
    %317 = vector.extract_strided_slice %286 {offsets = [0, 270], sizes = [16, 16], strides = [1, 1]} : vector<16x286xf32> to vector<16x16xf32>
    %c0_361 = arith.constant 0 : index
    %c289_362 = arith.constant 289 : index
    %318 = vector.load %arg5[%c0_361, %c289_362] : memref<32x324xf32, #tpu.memory_space<vmem>>, vector<16x16xf32>
    tpu.vector_store %arg5[%c0_361, %c289_362], %317 {strides = array<i32>} : memref<32x324xf32, #tpu.memory_space<vmem>>, vector<16x16xf32>,
    %cst_363 = arith.constant -1.000000e+30 : f32
    %319 = vector.broadcast %cst_363 : f32 to vector<16x19xf32>
    %c0_364 = arith.constant 0 : index
    %c0_365 = arith.constant 0 : index
    %320 = vector.load %arg5[%c0_364, %c0_365] : memref<32x324xf32, #tpu.memory_space<vmem>>, vector<16x19xf32>
    tpu.vector_store %arg5[%c0_364, %c0_365], %319 {strides = array<i32>} : memref<32x324xf32, #tpu.memory_space<vmem>>, vector<16x19xf32>,
    %cst_366 = arith.constant -1.000000e+30 : f32
    %321 = vector.broadcast %cst_366 : f32 to vector<16x19xf32>
    %c0_367 = arith.constant 0 : index
    %c305_368 = arith.constant 305 : index
    %322 = vector.load %arg5[%c0_367, %c305_368] : memref<32x324xf32, #tpu.memory_space<vmem>>, vector<16x19xf32>
    tpu.vector_store %arg5[%c0_367, %c305_368], %321 {strides = array<i32>} : memref<32x324xf32, #tpu.memory_space<vmem>>, vector<16x19xf32>,
    %cst_369 = arith.constant -1.000000e+30 : f32
    %323 = vector.broadcast %cst_369 : f32 to vector<16x2xf32>
    %c0_370 = arith.constant 0 : index
    %c35_371 = arith.constant 35 : index
    %324 = vector.load %arg5[%c0_370, %c35_371] : memref<32x324xf32, #tpu.memory_space<vmem>>, vector<16x2xf32>
    tpu.vector_store %arg5[%c0_370, %c35_371], %323 {strides = array<i32>} : memref<32x324xf32, #tpu.memory_space<vmem>>, vector<16x2xf32>,
    %cst_372 = arith.constant -1.000000e+30 : f32
    %325 = vector.broadcast %cst_372 : f32 to vector<16x2xf32>
    %c0_373 = arith.constant 0 : index
    %c53_374 = arith.constant 53 : index
    %326 = vector.load %arg5[%c0_373, %c53_374] : memref<32x324xf32, #tpu.memory_space<vmem>>, vector<16x2xf32>
    tpu.vector_store %arg5[%c0_373, %c53_374], %325 {strides = array<i32>} : memref<32x324xf32, #tpu.memory_space<vmem>>, vector<16x2xf32>,
    %cst_375 = arith.constant -1.000000e+30 : f32
    %327 = vector.broadcast %cst_375 : f32 to vector<16x2xf32>
    %c0_376 = arith.constant 0 : index
    %c71_377 = arith.constant 71 : index
    %328 = vector.load %arg5[%c0_376, %c71_377] : memref<32x324xf32, #tpu.memory_space<vmem>>, vector<16x2xf32>
    tpu.vector_store %arg5[%c0_376, %c71_377], %327 {strides = array<i32>} : memref<32x324xf32, #tpu.memory_space<vmem>>, vector<16x2xf32>,
    %cst_378 = arith.constant -1.000000e+30 : f32
    %329 = vector.broadcast %cst_378 : f32 to vector<16x2xf32>
    %c0_379 = arith.constant 0 : index
    %c89_380 = arith.constant 89 : index
    %330 = vector.load %arg5[%c0_379, %c89_380] : memref<32x324xf32, #tpu.memory_space<vmem>>, vector<16x2xf32>
    tpu.vector_store %arg5[%c0_379, %c89_380], %329 {strides = array<i32>} : memref<32x324xf32, #tpu.memory_space<vmem>>, vector<16x2xf32>,
    %cst_381 = arith.constant -1.000000e+30 : f32
    %331 = vector.broadcast %cst_381 : f32 to vector<16x2xf32>
    %c0_382 = arith.constant 0 : index
    %c107_383 = arith.constant 107 : index
    %332 = vector.load %arg5[%c0_382, %c107_383] : memref<32x324xf32, #tpu.memory_space<vmem>>, vector<16x2xf32>
    tpu.vector_store %arg5[%c0_382, %c107_383], %331 {strides = array<i32>} : memref<32x324xf32, #tpu.memory_space<vmem>>, vector<16x2xf32>,
    %cst_384 = arith.constant -1.000000e+30 : f32
    %333 = vector.broadcast %cst_384 : f32 to vector<16x2xf32>
    %c0_385 = arith.constant 0 : index
    %c125_386 = arith.constant 125 : index
    %334 = vector.load %arg5[%c0_385, %c125_386] : memref<32x324xf32, #tpu.memory_space<vmem>>, vector<16x2xf32>
    tpu.vector_store %arg5[%c0_385, %c125_386], %333 {strides = array<i32>} : memref<32x324xf32, #tpu.memory_space<vmem>>, vector<16x2xf32>,
    %cst_387 = arith.constant -1.000000e+30 : f32
    %335 = vector.broadcast %cst_387 : f32 to vector<16x2xf32>
    %c0_388 = arith.constant 0 : index
    %c143_389 = arith.constant 143 : index
    %336 = vector.load %arg5[%c0_388, %c143_389] : memref<32x324xf32, #tpu.memory_space<vmem>>, vector<16x2xf32>
    tpu.vector_store %arg5[%c0_388, %c143_389], %335 {strides = array<i32>} : memref<32x324xf32, #tpu.memory_space<vmem>>, vector<16x2xf32>,
    %cst_390 = arith.constant -1.000000e+30 : f32
    %337 = vector.broadcast %cst_390 : f32 to vector<16x2xf32>
    %c0_391 = arith.constant 0 : index
    %c161_392 = arith.constant 161 : index
    %338 = vector.load %arg5[%c0_391, %c161_392] : memref<32x324xf32, #tpu.memory_space<vmem>>, vector<16x2xf32>
    tpu.vector_store %arg5[%c0_391, %c161_392], %337 {strides = array<i32>} : memref<32x324xf32, #tpu.memory_space<vmem>>, vector<16x2xf32>,
    %cst_393 = arith.constant -1.000000e+30 : f32
    %339 = vector.broadcast %cst_393 : f32 to vector<16x2xf32>
    %c0_394 = arith.constant 0 : index
    %c179_395 = arith.constant 179 : index
    %340 = vector.load %arg5[%c0_394, %c179_395] : memref<32x324xf32, #tpu.memory_space<vmem>>, vector<16x2xf32>
    tpu.vector_store %arg5[%c0_394, %c179_395], %339 {strides = array<i32>} : memref<32x324xf32, #tpu.memory_space<vmem>>, vector<16x2xf32>,
    %cst_396 = arith.constant -1.000000e+30 : f32
    %341 = vector.broadcast %cst_396 : f32 to vector<16x2xf32>
    %c0_397 = arith.constant 0 : index
    %c197_398 = arith.constant 197 : index
    %342 = vector.load %arg5[%c0_397, %c197_398] : memref<32x324xf32, #tpu.memory_space<vmem>>, vector<16x2xf32>
    tpu.vector_store %arg5[%c0_397, %c197_398], %341 {strides = array<i32>} : memref<32x324xf32, #tpu.memory_space<vmem>>, vector<16x2xf32>,
    %cst_399 = arith.constant -1.000000e+30 : f32
    %343 = vector.broadcast %cst_399 : f32 to vector<16x2xf32>
    %c0_400 = arith.constant 0 : index
    %c215_401 = arith.constant 215 : index
    %344 = vector.load %arg5[%c0_400, %c215_401] : memref<32x324xf32, #tpu.memory_space<vmem>>, vector<16x2xf32>
    tpu.vector_store %arg5[%c0_400, %c215_401], %343 {strides = array<i32>} : memref<32x324xf32, #tpu.memory_space<vmem>>, vector<16x2xf32>,
    %cst_402 = arith.constant -1.000000e+30 : f32
    %345 = vector.broadcast %cst_402 : f32 to vector<16x2xf32>
    %c0_403 = arith.constant 0 : index
    %c233_404 = arith.constant 233 : index
    %346 = vector.load %arg5[%c0_403, %c233_404] : memref<32x324xf32, #tpu.memory_space<vmem>>, vector<16x2xf32>
    tpu.vector_store %arg5[%c0_403, %c233_404], %345 {strides = array<i32>} : memref<32x324xf32, #tpu.memory_space<vmem>>, vector<16x2xf32>,
    %cst_405 = arith.constant -1.000000e+30 : f32
    %347 = vector.broadcast %cst_405 : f32 to vector<16x2xf32>
    %c0_406 = arith.constant 0 : index
    %c251_407 = arith.constant 251 : index
    %348 = vector.load %arg5[%c0_406, %c251_407] : memref<32x324xf32, #tpu.memory_space<vmem>>, vector<16x2xf32>
    tpu.vector_store %arg5[%c0_406, %c251_407], %347 {strides = array<i32>} : memref<32x324xf32, #tpu.memory_space<vmem>>, vector<16x2xf32>,
    %cst_408 = arith.constant -1.000000e+30 : f32
    %349 = vector.broadcast %cst_408 : f32 to vector<16x2xf32>
    %c0_409 = arith.constant 0 : index
    %c269_410 = arith.constant 269 : index
    %350 = vector.load %arg5[%c0_409, %c269_410] : memref<32x324xf32, #tpu.memory_space<vmem>>, vector<16x2xf32>
    tpu.vector_store %arg5[%c0_409, %c269_410], %349 {strides = array<i32>} : memref<32x324xf32, #tpu.memory_space<vmem>>, vector<16x2xf32>,
    %cst_411 = arith.constant -1.000000e+30 : f32
    %351 = vector.broadcast %cst_411 : f32 to vector<16x2xf32>
    %c0_412 = arith.constant 0 : index
    %c287_413 = arith.constant 287 : index
    %352 = vector.load %arg5[%c0_412, %c287_413] : memref<32x324xf32, #tpu.memory_space<vmem>>, vector<16x2xf32>
    tpu.vector_store %arg5[%c0_412, %c287_413], %351 {strides = array<i32>} : memref<32x324xf32, #tpu.memory_space<vmem>>, vector<16x2xf32>,
    %353 = tpu.iota {dimensions = array<i32: 0>} : vector<17x9xi32>
    %354 = tpu.iota {dimensions = array<i32: 1>} : vector<17x9xi32>
    %c2_i32 = arith.constant 2 : i32
    %355 = vector.broadcast %c2_i32 : i32 to vector<17x9xi32>
    %356 = arith.muli %355, %354 : vector<17x9xi32>
    %357 = arith.cmpi eq, %353, %356 : vector<17x9xi32>
    %358 = arith.extui %357 : vector<17x9xi1> to vector<17x9xi32>
    %359 = arith.sitofp %358 : vector<17x9xi32> to vector<17x9xf32>
    %c0_414 = arith.constant 0 : index
    %c0_415 = arith.constant 0 : index
    %360 = vector.load %arg5[%c0_414, %c0_415] : memref<32x324xf32, #tpu.memory_space<vmem>>, vector<16x17xf32>
    %c0_416 = arith.constant 0 : index
    %c1_417 = arith.constant 1 : index
    %361 = vector.load %arg5[%c0_416, %c1_417] : memref<32x324xf32, #tpu.memory_space<vmem>>, vector<16x17xf32>
    %362 = arith.maximumf %360, %361 : vector<16x17xf32>
    %c0_418 = arith.constant 0 : index
    %c18_419 = arith.constant 18 : index
    %363 = vector.load %arg5[%c0_418, %c18_419] : memref<32x324xf32, #tpu.memory_space<vmem>>, vector<16x17xf32>
    %c0_420 = arith.constant 0 : index
    %c19_421 = arith.constant 19 : index
    %364 = vector.load %arg5[%c0_420, %c19_421] : memref<32x324xf32, #tpu.memory_space<vmem>>, vector<16x17xf32>
    %365 = arith.maximumf %363, %364 : vector<16x17xf32>
    %366 = arith.maximumf %362, %365 : vector<16x17xf32>
    %cst_422 = arith.constant dense<0.000000e+00> : vector<16x9xf32>
    %367 = tpu.matmul %366, %359, %cst_422 {dimension_numbers = #tpu.dot_dimension_numbers<[1], [0], [0], [1], [0, 0, 1, 1], [], []>} : vector<16x17xf32>, vector<17x9xf32>, vector<16x9xf32> -> vector<16x9xf32>
    %c0_423 = arith.constant 0 : index
    %c12_424 = arith.constant 12 : index
    %368 = vector.load %arg5[%c0_423, %c12_424] : memref<32x324xf32, #tpu.memory_space<vmem>>, vector<16x9xf32>
    tpu.vector_store %arg5[%c0_423, %c12_424], %367 {strides = array<i32>} : memref<32x324xf32, #tpu.memory_space<vmem>>, vector<16x9xf32>,
    %c0_425 = arith.constant 0 : index
    %c36_426 = arith.constant 36 : index
    %369 = vector.load %arg5[%c0_425, %c36_426] : memref<32x324xf32, #tpu.memory_space<vmem>>, vector<16x17xf32>
    %c0_427 = arith.constant 0 : index
    %c37_428 = arith.constant 37 : index
    %370 = vector.load %arg5[%c0_427, %c37_428] : memref<32x324xf32, #tpu.memory_space<vmem>>, vector<16x17xf32>
    %371 = arith.maximumf %369, %370 : vector<16x17xf32>
    %c0_429 = arith.constant 0 : index
    %c54 = arith.constant 54 : index
    %372 = vector.load %arg5[%c0_429, %c54] : memref<32x324xf32, #tpu.memory_space<vmem>>, vector<16x17xf32>
    %c0_430 = arith.constant 0 : index
    %c55_431 = arith.constant 55 : index
    %373 = vector.load %arg5[%c0_430, %c55_431] : memref<32x324xf32, #tpu.memory_space<vmem>>, vector<16x17xf32>
    %374 = arith.maximumf %372, %373 : vector<16x17xf32>
    %375 = arith.maximumf %371, %374 : vector<16x17xf32>
    %cst_432 = arith.constant dense<0.000000e+00> : vector<16x9xf32>
    %376 = tpu.matmul %375, %359, %cst_432 {dimension_numbers = #tpu.dot_dimension_numbers<[1], [0], [0], [1], [0, 0, 1, 1], [], []>} : vector<16x17xf32>, vector<17x9xf32>, vector<16x9xf32> -> vector<16x9xf32>
    %c0_433 = arith.constant 0 : index
    %c23 = arith.constant 23 : index
    %377 = vector.load %arg5[%c0_433, %c23] : memref<32x324xf32, #tpu.memory_space<vmem>>, vector<16x9xf32>
    tpu.vector_store %arg5[%c0_433, %c23], %376 {strides = array<i32>} : memref<32x324xf32, #tpu.memory_space<vmem>>, vector<16x9xf32>,
    %c0_434 = arith.constant 0 : index
    %c72 = arith.constant 72 : index
    %378 = vector.load %arg5[%c0_434, %c72] : memref<32x324xf32, #tpu.memory_space<vmem>>, vector<16x17xf32>
    %c0_435 = arith.constant 0 : index
    %c73_436 = arith.constant 73 : index
    %379 = vector.load %arg5[%c0_435, %c73_436] : memref<32x324xf32, #tpu.memory_space<vmem>>, vector<16x17xf32>
    %380 = arith.maximumf %378, %379 : vector<16x17xf32>
    %c0_437 = arith.constant 0 : index
    %c90 = arith.constant 90 : index
    %381 = vector.load %arg5[%c0_437, %c90] : memref<32x324xf32, #tpu.memory_space<vmem>>, vector<16x17xf32>
    %c0_438 = arith.constant 0 : index
    %c91_439 = arith.constant 91 : index
    %382 = vector.load %arg5[%c0_438, %c91_439] : memref<32x324xf32, #tpu.memory_space<vmem>>, vector<16x17xf32>
    %383 = arith.maximumf %381, %382 : vector<16x17xf32>
    %384 = arith.maximumf %380, %383 : vector<16x17xf32>
    %cst_440 = arith.constant dense<0.000000e+00> : vector<16x9xf32>
    %385 = tpu.matmul %384, %359, %cst_440 {dimension_numbers = #tpu.dot_dimension_numbers<[1], [0], [0], [1], [0, 0, 1, 1], [], []>} : vector<16x17xf32>, vector<17x9xf32>, vector<16x9xf32> -> vector<16x9xf32>
    %c0_441 = arith.constant 0 : index
    %c34 = arith.constant 34 : index
    %386 = vector.load %arg5[%c0_441, %c34] : memref<32x324xf32, #tpu.memory_space<vmem>>, vector<16x9xf32>
    tpu.vector_store %arg5[%c0_441, %c34], %385 {strides = array<i32>} : memref<32x324xf32, #tpu.memory_space<vmem>>, vector<16x9xf32>,
    %c0_442 = arith.constant 0 : index
    %c108 = arith.constant 108 : index
    %387 = vector.load %arg5[%c0_442, %c108] : memref<32x324xf32, #tpu.memory_space<vmem>>, vector<16x17xf32>
    %c0_443 = arith.constant 0 : index
    %c109_444 = arith.constant 109 : index
    %388 = vector.load %arg5[%c0_443, %c109_444] : memref<32x324xf32, #tpu.memory_space<vmem>>, vector<16x17xf32>
    %389 = arith.maximumf %387, %388 : vector<16x17xf32>
    %c0_445 = arith.constant 0 : index
    %c126 = arith.constant 126 : index
    %390 = vector.load %arg5[%c0_445, %c126] : memref<32x324xf32, #tpu.memory_space<vmem>>, vector<16x17xf32>
    %c0_446 = arith.constant 0 : index
    %c127_447 = arith.constant 127 : index
    %391 = vector.load %arg5[%c0_446, %c127_447] : memref<32x324xf32, #tpu.memory_space<vmem>>, vector<16x17xf32>
    %392 = arith.maximumf %390, %391 : vector<16x17xf32>
    %393 = arith.maximumf %389, %392 : vector<16x17xf32>
    %cst_448 = arith.constant dense<0.000000e+00> : vector<16x9xf32>
    %394 = tpu.matmul %393, %359, %cst_448 {dimension_numbers = #tpu.dot_dimension_numbers<[1], [0], [0], [1], [0, 0, 1, 1], [], []>} : vector<16x17xf32>, vector<17x9xf32>, vector<16x9xf32> -> vector<16x9xf32>
    %c0_449 = arith.constant 0 : index
    %c45 = arith.constant 45 : index
    %395 = vector.load %arg5[%c0_449, %c45] : memref<32x324xf32, #tpu.memory_space<vmem>>, vector<16x9xf32>
    tpu.vector_store %arg5[%c0_449, %c45], %394 {strides = array<i32>} : memref<32x324xf32, #tpu.memory_space<vmem>>, vector<16x9xf32>,
    %c0_450 = arith.constant 0 : index
    %c144 = arith.constant 144 : index
    %396 = vector.load %arg5[%c0_450, %c144] : memref<32x324xf32, #tpu.memory_space<vmem>>, vector<16x17xf32>
    %c0_451 = arith.constant 0 : index
    %c145_452 = arith.constant 145 : index
    %397 = vector.load %arg5[%c0_451, %c145_452] : memref<32x324xf32, #tpu.memory_space<vmem>>, vector<16x17xf32>
    %398 = arith.maximumf %396, %397 : vector<16x17xf32>
    %c0_453 = arith.constant 0 : index
    %c162 = arith.constant 162 : index
    %399 = vector.load %arg5[%c0_453, %c162] : memref<32x324xf32, #tpu.memory_space<vmem>>, vector<16x17xf32>
    %c0_454 = arith.constant 0 : index
    %c163_455 = arith.constant 163 : index
    %400 = vector.load %arg5[%c0_454, %c163_455] : memref<32x324xf32, #tpu.memory_space<vmem>>, vector<16x17xf32>
    %401 = arith.maximumf %399, %400 : vector<16x17xf32>
    %402 = arith.maximumf %398, %401 : vector<16x17xf32>
    %cst_456 = arith.constant dense<0.000000e+00> : vector<16x9xf32>
    %403 = tpu.matmul %402, %359, %cst_456 {dimension_numbers = #tpu.dot_dimension_numbers<[1], [0], [0], [1], [0, 0, 1, 1], [], []>} : vector<16x17xf32>, vector<17x9xf32>, vector<16x9xf32> -> vector<16x9xf32>
    %c0_457 = arith.constant 0 : index
    %c56 = arith.constant 56 : index
    %404 = vector.load %arg5[%c0_457, %c56] : memref<32x324xf32, #tpu.memory_space<vmem>>, vector<16x9xf32>
    tpu.vector_store %arg5[%c0_457, %c56], %403 {strides = array<i32>} : memref<32x324xf32, #tpu.memory_space<vmem>>, vector<16x9xf32>,
    %c0_458 = arith.constant 0 : index
    %c180 = arith.constant 180 : index
    %405 = vector.load %arg5[%c0_458, %c180] : memref<32x324xf32, #tpu.memory_space<vmem>>, vector<16x17xf32>
    %c0_459 = arith.constant 0 : index
    %c181_460 = arith.constant 181 : index
    %406 = vector.load %arg5[%c0_459, %c181_460] : memref<32x324xf32, #tpu.memory_space<vmem>>, vector<16x17xf32>
    %407 = arith.maximumf %405, %406 : vector<16x17xf32>
    %c0_461 = arith.constant 0 : index
    %c198 = arith.constant 198 : index
    %408 = vector.load %arg5[%c0_461, %c198] : memref<32x324xf32, #tpu.memory_space<vmem>>, vector<16x17xf32>
    %c0_462 = arith.constant 0 : index
    %c199_463 = arith.constant 199 : index
    %409 = vector.load %arg5[%c0_462, %c199_463] : memref<32x324xf32, #tpu.memory_space<vmem>>, vector<16x17xf32>
    %410 = arith.maximumf %408, %409 : vector<16x17xf32>
    %411 = arith.maximumf %407, %410 : vector<16x17xf32>
    %cst_464 = arith.constant dense<0.000000e+00> : vector<16x9xf32>
    %412 = tpu.matmul %411, %359, %cst_464 {dimension_numbers = #tpu.dot_dimension_numbers<[1], [0], [0], [1], [0, 0, 1, 1], [], []>} : vector<16x17xf32>, vector<17x9xf32>, vector<16x9xf32> -> vector<16x9xf32>
    %c0_465 = arith.constant 0 : index
    %c67 = arith.constant 67 : index
    %413 = vector.load %arg5[%c0_465, %c67] : memref<32x324xf32, #tpu.memory_space<vmem>>, vector<16x9xf32>
    tpu.vector_store %arg5[%c0_465, %c67], %412 {strides = array<i32>} : memref<32x324xf32, #tpu.memory_space<vmem>>, vector<16x9xf32>,
    %c0_466 = arith.constant 0 : index
    %c216 = arith.constant 216 : index
    %414 = vector.load %arg5[%c0_466, %c216] : memref<32x324xf32, #tpu.memory_space<vmem>>, vector<16x17xf32>
    %c0_467 = arith.constant 0 : index
    %c217_468 = arith.constant 217 : index
    %415 = vector.load %arg5[%c0_467, %c217_468] : memref<32x324xf32, #tpu.memory_space<vmem>>, vector<16x17xf32>
    %416 = arith.maximumf %414, %415 : vector<16x17xf32>
    %c0_469 = arith.constant 0 : index
    %c234 = arith.constant 234 : index
    %417 = vector.load %arg5[%c0_469, %c234] : memref<32x324xf32, #tpu.memory_space<vmem>>, vector<16x17xf32>
    %c0_470 = arith.constant 0 : index
    %c235_471 = arith.constant 235 : index
    %418 = vector.load %arg5[%c0_470, %c235_471] : memref<32x324xf32, #tpu.memory_space<vmem>>, vector<16x17xf32>
    %419 = arith.maximumf %417, %418 : vector<16x17xf32>
    %420 = arith.maximumf %416, %419 : vector<16x17xf32>
    %cst_472 = arith.constant dense<0.000000e+00> : vector<16x9xf32>
    %421 = tpu.matmul %420, %359, %cst_472 {dimension_numbers = #tpu.dot_dimension_numbers<[1], [0], [0], [1], [0, 0, 1, 1], [], []>} : vector<16x17xf32>, vector<17x9xf32>, vector<16x9xf32> -> vector<16x9xf32>
    %c0_473 = arith.constant 0 : index
    %c78 = arith.constant 78 : index
    %422 = vector.load %arg5[%c0_473, %c78] : memref<32x324xf32, #tpu.memory_space<vmem>>, vector<16x9xf32>
    tpu.vector_store %arg5[%c0_473, %c78], %421 {strides = array<i32>} : memref<32x324xf32, #tpu.memory_space<vmem>>, vector<16x9xf32>,
    %c0_474 = arith.constant 0 : index
    %c252 = arith.constant 252 : index
    %423 = vector.load %arg5[%c0_474, %c252] : memref<32x324xf32, #tpu.memory_space<vmem>>, vector<16x17xf32>
    %c0_475 = arith.constant 0 : index
    %c253_476 = arith.constant 253 : index
    %424 = vector.load %arg5[%c0_475, %c253_476] : memref<32x324xf32, #tpu.memory_space<vmem>>, vector<16x17xf32>
    %425 = arith.maximumf %423, %424 : vector<16x17xf32>
    %c0_477 = arith.constant 0 : index
    %c270 = arith.constant 270 : index
    %426 = vector.load %arg5[%c0_477, %c270] : memref<32x324xf32, #tpu.memory_space<vmem>>, vector<16x17xf32>
    %c0_478 = arith.constant 0 : index
    %c271_479 = arith.constant 271 : index
    %427 = vector.load %arg5[%c0_478, %c271_479] : memref<32x324xf32, #tpu.memory_space<vmem>>, vector<16x17xf32>
    %428 = arith.maximumf %426, %427 : vector<16x17xf32>
    %429 = arith.maximumf %425, %428 : vector<16x17xf32>
    %cst_480 = arith.constant dense<0.000000e+00> : vector<16x9xf32>
    %430 = tpu.matmul %429, %359, %cst_480 {dimension_numbers = #tpu.dot_dimension_numbers<[1], [0], [0], [1], [0, 0, 1, 1], [], []>} : vector<16x17xf32>, vector<17x9xf32>, vector<16x9xf32> -> vector<16x9xf32>
    %c0_481 = arith.constant 0 : index
    %c89_482 = arith.constant 89 : index
    %431 = vector.load %arg5[%c0_481, %c89_482] : memref<32x324xf32, #tpu.memory_space<vmem>>, vector<16x9xf32>
    tpu.vector_store %arg5[%c0_481, %c89_482], %430 {strides = array<i32>} : memref<32x324xf32, #tpu.memory_space<vmem>>, vector<16x9xf32>,
    %c0_483 = arith.constant 0 : index
    %c288_484 = arith.constant 288 : index
    %432 = vector.load %arg5[%c0_483, %c288_484] : memref<32x324xf32, #tpu.memory_space<vmem>>, vector<16x17xf32>
    %c0_485 = arith.constant 0 : index
    %c289_486 = arith.constant 289 : index
    %433 = vector.load %arg5[%c0_485, %c289_486] : memref<32x324xf32, #tpu.memory_space<vmem>>, vector<16x17xf32>
    %434 = arith.maximumf %432, %433 : vector<16x17xf32>
    %c0_487 = arith.constant 0 : index
    %c306 = arith.constant 306 : index
    %435 = vector.load %arg5[%c0_487, %c306] : memref<32x324xf32, #tpu.memory_space<vmem>>, vector<16x17xf32>
    %c0_488 = arith.constant 0 : index
    %c307 = arith.constant 307 : index
    %436 = vector.load %arg5[%c0_488, %c307] : memref<32x324xf32, #tpu.memory_space<vmem>>, vector<16x17xf32>
    %437 = arith.maximumf %435, %436 : vector<16x17xf32>
    %438 = arith.maximumf %434, %437 : vector<16x17xf32>
    %cst_489 = arith.constant dense<0.000000e+00> : vector<16x9xf32>
    %439 = tpu.matmul %438, %359, %cst_489 {dimension_numbers = #tpu.dot_dimension_numbers<[1], [0], [0], [1], [0, 0, 1, 1], [], []>} : vector<16x17xf32>, vector<17x9xf32>, vector<16x9xf32> -> vector<16x9xf32>
    %c0_490 = arith.constant 0 : index
    %c100 = arith.constant 100 : index
    %440 = vector.load %arg5[%c0_490, %c100] : memref<32x324xf32, #tpu.memory_space<vmem>>, vector<16x9xf32>
    tpu.vector_store %arg5[%c0_490, %c100], %439 {strides = array<i32>} : memref<32x324xf32, #tpu.memory_space<vmem>>, vector<16x9xf32>,
    %cst_491 = arith.constant 0.000000e+00 : f32
    %441 = vector.broadcast %cst_491 : f32 to vector<16x12xf32>
    %c0_492 = arith.constant 0 : index
    %c0_493 = arith.constant 0 : index
    %442 = vector.load %arg5[%c0_492, %c0_493] : memref<32x324xf32, #tpu.memory_space<vmem>>, vector<16x12xf32>
    tpu.vector_store %arg5[%c0_492, %c0_493], %441 {strides = array<i32>} : memref<32x324xf32, #tpu.memory_space<vmem>>, vector<16x12xf32>,
    %cst_494 = arith.constant 0.000000e+00 : f32
    %443 = vector.broadcast %cst_494 : f32 to vector<16x12xf32>
    %c0_495 = arith.constant 0 : index
    %c109_496 = arith.constant 109 : index
    %444 = vector.load %arg5[%c0_495, %c109_496] : memref<32x324xf32, #tpu.memory_space<vmem>>, vector<16x12xf32>
    tpu.vector_store %arg5[%c0_495, %c109_496], %443 {strides = array<i32>} : memref<32x324xf32, #tpu.memory_space<vmem>>, vector<16x12xf32>,
    %cst_497 = arith.constant 0.000000e+00 : f32
    %445 = vector.broadcast %cst_497 : f32 to vector<16x2xf32>
    %c0_498 = arith.constant 0 : index
    %c21_499 = arith.constant 21 : index
    %446 = vector.load %arg5[%c0_498, %c21_499] : memref<32x324xf32, #tpu.memory_space<vmem>>, vector<16x2xf32>
    tpu.vector_store %arg5[%c0_498, %c21_499], %445 {strides = array<i32>} : memref<32x324xf32, #tpu.memory_space<vmem>>, vector<16x2xf32>,
    %cst_500 = arith.constant 0.000000e+00 : f32
    %447 = vector.broadcast %cst_500 : f32 to vector<16x2xf32>
    %c0_501 = arith.constant 0 : index
    %c32_502 = arith.constant 32 : index
    %448 = vector.load %arg5[%c0_501, %c32_502] : memref<32x324xf32, #tpu.memory_space<vmem>>, vector<16x2xf32>
    tpu.vector_store %arg5[%c0_501, %c32_502], %447 {strides = array<i32>} : memref<32x324xf32, #tpu.memory_space<vmem>>, vector<16x2xf32>,
    %cst_503 = arith.constant 0.000000e+00 : f32
    %449 = vector.broadcast %cst_503 : f32 to vector<16x2xf32>
    %c0_504 = arith.constant 0 : index
    %c43 = arith.constant 43 : index
    %450 = vector.load %arg5[%c0_504, %c43] : memref<32x324xf32, #tpu.memory_space<vmem>>, vector<16x2xf32>
    tpu.vector_store %arg5[%c0_504, %c43], %449 {strides = array<i32>} : memref<32x324xf32, #tpu.memory_space<vmem>>, vector<16x2xf32>,
    %cst_505 = arith.constant 0.000000e+00 : f32
    %451 = vector.broadcast %cst_505 : f32 to vector<16x2xf32>
    %c0_506 = arith.constant 0 : index
    %c54_507 = arith.constant 54 : index
    %452 = vector.load %arg5[%c0_506, %c54_507] : memref<32x324xf32, #tpu.memory_space<vmem>>, vector<16x2xf32>
    tpu.vector_store %arg5[%c0_506, %c54_507], %451 {strides = array<i32>} : memref<32x324xf32, #tpu.memory_space<vmem>>, vector<16x2xf32>,
    %cst_508 = arith.constant 0.000000e+00 : f32
    %453 = vector.broadcast %cst_508 : f32 to vector<16x2xf32>
    %c0_509 = arith.constant 0 : index
    %c65 = arith.constant 65 : index
    %454 = vector.load %arg5[%c0_509, %c65] : memref<32x324xf32, #tpu.memory_space<vmem>>, vector<16x2xf32>
    tpu.vector_store %arg5[%c0_509, %c65], %453 {strides = array<i32>} : memref<32x324xf32, #tpu.memory_space<vmem>>, vector<16x2xf32>,
    %cst_510 = arith.constant 0.000000e+00 : f32
    %455 = vector.broadcast %cst_510 : f32 to vector<16x2xf32>
    %c0_511 = arith.constant 0 : index
    %c76 = arith.constant 76 : index
    %456 = vector.load %arg5[%c0_511, %c76] : memref<32x324xf32, #tpu.memory_space<vmem>>, vector<16x2xf32>
    tpu.vector_store %arg5[%c0_511, %c76], %455 {strides = array<i32>} : memref<32x324xf32, #tpu.memory_space<vmem>>, vector<16x2xf32>,
    %cst_512 = arith.constant 0.000000e+00 : f32
    %457 = vector.broadcast %cst_512 : f32 to vector<16x2xf32>
    %c0_513 = arith.constant 0 : index
    %c87 = arith.constant 87 : index
    %458 = vector.load %arg5[%c0_513, %c87] : memref<32x324xf32, #tpu.memory_space<vmem>>, vector<16x2xf32>
    tpu.vector_store %arg5[%c0_513, %c87], %457 {strides = array<i32>} : memref<32x324xf32, #tpu.memory_space<vmem>>, vector<16x2xf32>,
    %cst_514 = arith.constant 0.000000e+00 : f32
    %459 = vector.broadcast %cst_514 : f32 to vector<16x2xf32>
    %c0_515 = arith.constant 0 : index
    %c98 = arith.constant 98 : index
    %460 = vector.load %arg5[%c0_515, %c98] : memref<32x324xf32, #tpu.memory_space<vmem>>, vector<16x2xf32>
    tpu.vector_store %arg5[%c0_515, %c98], %459 {strides = array<i32>} : memref<32x324xf32, #tpu.memory_space<vmem>>, vector<16x2xf32>,
    %c0_516 = arith.constant 0 : index
    %c0_517 = arith.constant 0 : index
    %461 = vector.load %arg5[%c0_516, %c0_517] : memref<32x324xf32, #tpu.memory_space<vmem>>, vector<16x97xf32>
    %c0_518 = arith.constant 0 : index
    %c0_519 = arith.constant 0 : index
    %462 = vector.load %arg6[%c0_518, %c0_519] : memref<288x286xf32, #tpu.memory_space<vmem>>, vector<16x97xf32>
    tpu.vector_store %arg6[%c0_518, %c0_519], %461 {strides = array<i32>} : memref<288x286xf32, #tpu.memory_space<vmem>>, vector<16x97xf32>,
    %c0_520 = arith.constant 0 : index
    %c1_521 = arith.constant 1 : index
    %463 = vector.load %arg5[%c0_520, %c1_521] : memref<32x324xf32, #tpu.memory_space<vmem>>, vector<16x97xf32>
    %c16_522 = arith.constant 16 : index
    %c0_523 = arith.constant 0 : index
    %464 = vector.load %arg6[%c16_522, %c0_523] : memref<288x286xf32, #tpu.memory_space<vmem>>, vector<16x97xf32>
    tpu.vector_store %arg6[%c16_522, %c0_523], %463 {strides = array<i32>} : memref<288x286xf32, #tpu.memory_space<vmem>>, vector<16x97xf32>,
    %c0_524 = arith.constant 0 : index
    %c2_525 = arith.constant 2 : index
    %465 = vector.load %arg5[%c0_524, %c2_525] : memref<32x324xf32, #tpu.memory_space<vmem>>, vector<16x97xf32>
    %c32_526 = arith.constant 32 : index
    %c0_527 = arith.constant 0 : index
    %466 = vector.load %arg6[%c32_526, %c0_527] : memref<288x286xf32, #tpu.memory_space<vmem>>, vector<16x97xf32>
    tpu.vector_store %arg6[%c32_526, %c0_527], %465 {strides = array<i32>} : memref<288x286xf32, #tpu.memory_space<vmem>>, vector<16x97xf32>,
    %c0_528 = arith.constant 0 : index
    %c11 = arith.constant 11 : index
    %467 = vector.load %arg5[%c0_528, %c11] : memref<32x324xf32, #tpu.memory_space<vmem>>, vector<16x97xf32>
    %c48_529 = arith.constant 48 : index
    %c0_530 = arith.constant 0 : index
    %468 = vector.load %arg6[%c48_529, %c0_530] : memref<288x286xf32, #tpu.memory_space<vmem>>, vector<16x97xf32>
    tpu.vector_store %arg6[%c48_529, %c0_530], %467 {strides = array<i32>} : memref<288x286xf32, #tpu.memory_space<vmem>>, vector<16x97xf32>,
    %c0_531 = arith.constant 0 : index
    %c12_532 = arith.constant 12 : index
    %469 = vector.load %arg5[%c0_531, %c12_532] : memref<32x324xf32, #tpu.memory_space<vmem>>, vector<16x97xf32>
    %c64_533 = arith.constant 64 : index
    %c0_534 = arith.constant 0 : index
    %470 = vector.load %arg6[%c64_533, %c0_534] : memref<288x286xf32, #tpu.memory_space<vmem>>, vector<16x97xf32>
    tpu.vector_store %arg6[%c64_533, %c0_534], %469 {strides = array<i32>} : memref<288x286xf32, #tpu.memory_space<vmem>>, vector<16x97xf32>,
    %c0_535 = arith.constant 0 : index
    %c13 = arith.constant 13 : index
    %471 = vector.load %arg5[%c0_535, %c13] : memref<32x324xf32, #tpu.memory_space<vmem>>, vector<16x97xf32>
    %c80_536 = arith.constant 80 : index
    %c0_537 = arith.constant 0 : index
    %472 = vector.load %arg6[%c80_536, %c0_537] : memref<288x286xf32, #tpu.memory_space<vmem>>, vector<16x97xf32>
    tpu.vector_store %arg6[%c80_536, %c0_537], %471 {strides = array<i32>} : memref<288x286xf32, #tpu.memory_space<vmem>>, vector<16x97xf32>,
    %c0_538 = arith.constant 0 : index
    %c22 = arith.constant 22 : index
    %473 = vector.load %arg5[%c0_538, %c22] : memref<32x324xf32, #tpu.memory_space<vmem>>, vector<16x97xf32>
    %c96_539 = arith.constant 96 : index
    %c0_540 = arith.constant 0 : index
    %474 = vector.load %arg6[%c96_539, %c0_540] : memref<288x286xf32, #tpu.memory_space<vmem>>, vector<16x97xf32>
    tpu.vector_store %arg6[%c96_539, %c0_540], %473 {strides = array<i32>} : memref<288x286xf32, #tpu.memory_space<vmem>>, vector<16x97xf32>,
    %c0_541 = arith.constant 0 : index
    %c23_542 = arith.constant 23 : index
    %475 = vector.load %arg5[%c0_541, %c23_542] : memref<32x324xf32, #tpu.memory_space<vmem>>, vector<16x97xf32>
    %c112_543 = arith.constant 112 : index
    %c0_544 = arith.constant 0 : index
    %476 = vector.load %arg6[%c112_543, %c0_544] : memref<288x286xf32, #tpu.memory_space<vmem>>, vector<16x97xf32>
    tpu.vector_store %arg6[%c112_543, %c0_544], %475 {strides = array<i32>} : memref<288x286xf32, #tpu.memory_space<vmem>>, vector<16x97xf32>,
    %c0_545 = arith.constant 0 : index
    %c24_546 = arith.constant 24 : index
    %477 = vector.load %arg5[%c0_545, %c24_546] : memref<32x324xf32, #tpu.memory_space<vmem>>, vector<16x97xf32>
    %c128_547 = arith.constant 128 : index
    %c0_548 = arith.constant 0 : index
    %478 = vector.load %arg6[%c128_547, %c0_548] : memref<288x286xf32, #tpu.memory_space<vmem>>, vector<16x97xf32>
    tpu.vector_store %arg6[%c128_547, %c0_548], %477 {strides = array<i32>} : memref<288x286xf32, #tpu.memory_space<vmem>>, vector<16x97xf32>,
    %c0_549 = arith.constant 0 : index
    %c0_550 = arith.constant 0 : index
    %479 = vector.load %arg6[%c0_549, %c0_550] : memref<288x286xf32, #tpu.memory_space<vmem>>, vector<144x97xf32>
    %c48_551 = arith.constant 48 : index
    %c0_552 = arith.constant 0 : index
    %480 = vector.load %arg2[%c48_551, %c0_552] : memref<400x289xf32, #tpu.memory_space<vmem>>, vector<32x144xf32>
    %c48_553 = arith.constant 48 : index
    %c288_554 = arith.constant 288 : index
    %481 = vector.load %arg2[%c48_553, %c288_554] : memref<400x289xf32, #tpu.memory_space<vmem>>, vector<32x1xf32>
    %cst_555 = arith.constant dense<0.000000e+00> : vector<32x97xf32>
    %482 = tpu.matmul %480, %479, %cst_555 {dimension_numbers = #tpu.dot_dimension_numbers<[1], [0], [0], [1], [0, 0, 1, 1], [], []>} : vector<32x144xf32>, vector<144x97xf32>, vector<32x97xf32> -> vector<32x97xf32>
    %483 = vector.broadcast %481 : vector<32x1xf32> to vector<32x97xf32>
    %484 = arith.addf %482, %483 : vector<32x97xf32>
    %cst_556 = arith.constant 0.000000e+00 : f32
    %485 = vector.broadcast %cst_556 : f32 to vector<32x97xf32>
    %486 = arith.cmpf ogt, %484, %485 : vector<32x97xf32>
    %cst_557 = arith.constant 1.000000e-01 : f32
    %487 = vector.broadcast %cst_557 : f32 to vector<32x97xf32>
    %488 = arith.mulf %487, %484 : vector<32x97xf32>
    %489 = arith.select %486, %484, %488 : vector<32x97xi1>, vector<32x97xf32>
    %490 = vector.extract_strided_slice %489 {offsets = [0, 0], sizes = [32, 9], strides = [1, 1]} : vector<32x97xf32> to vector<32x9xf32>
    %c0_558 = arith.constant 0 : index
    %c12_559 = arith.constant 12 : index
    %491 = vector.load %arg5[%c0_558, %c12_559] : memref<32x324xf32, #tpu.memory_space<vmem>>, vector<32x9xf32>
    tpu.vector_store %arg5[%c0_558, %c12_559], %490 {strides = array<i32>} : memref<32x324xf32, #tpu.memory_space<vmem>>, vector<32x9xf32>,
    %492 = vector.extract_strided_slice %489 {offsets = [0, 11], sizes = [32, 9], strides = [1, 1]} : vector<32x97xf32> to vector<32x9xf32>
    %c0_560 = arith.constant 0 : index
    %c23_561 = arith.constant 23 : index
    %493 = vector.load %arg5[%c0_560, %c23_561] : memref<32x324xf32, #tpu.memory_space<vmem>>, vector<32x9xf32>
    tpu.vector_store %arg5[%c0_560, %c23_561], %492 {strides = array<i32>} : memref<32x324xf32, #tpu.memory_space<vmem>>, vector<32x9xf32>,
    %494 = vector.extract_strided_slice %489 {offsets = [0, 22], sizes = [32, 9], strides = [1, 1]} : vector<32x97xf32> to vector<32x9xf32>
    %c0_562 = arith.constant 0 : index
    %c34_563 = arith.constant 34 : index
    %495 = vector.load %arg5[%c0_562, %c34_563] : memref<32x324xf32, #tpu.memory_space<vmem>>, vector<32x9xf32>
    tpu.vector_store %arg5[%c0_562, %c34_563], %494 {strides = array<i32>} : memref<32x324xf32, #tpu.memory_space<vmem>>, vector<32x9xf32>,
    %496 = vector.extract_strided_slice %489 {offsets = [0, 33], sizes = [32, 9], strides = [1, 1]} : vector<32x97xf32> to vector<32x9xf32>
    %c0_564 = arith.constant 0 : index
    %c45_565 = arith.constant 45 : index
    %497 = vector.load %arg5[%c0_564, %c45_565] : memref<32x324xf32, #tpu.memory_space<vmem>>, vector<32x9xf32>
    tpu.vector_store %arg5[%c0_564, %c45_565], %496 {strides = array<i32>} : memref<32x324xf32, #tpu.memory_space<vmem>>, vector<32x9xf32>,
    %498 = vector.extract_strided_slice %489 {offsets = [0, 44], sizes = [32, 9], strides = [1, 1]} : vector<32x97xf32> to vector<32x9xf32>
    %c0_566 = arith.constant 0 : index
    %c56_567 = arith.constant 56 : index
    %499 = vector.load %arg5[%c0_566, %c56_567] : memref<32x324xf32, #tpu.memory_space<vmem>>, vector<32x9xf32>
    tpu.vector_store %arg5[%c0_566, %c56_567], %498 {strides = array<i32>} : memref<32x324xf32, #tpu.memory_space<vmem>>, vector<32x9xf32>,
    %500 = vector.extract_strided_slice %489 {offsets = [0, 55], sizes = [32, 9], strides = [1, 1]} : vector<32x97xf32> to vector<32x9xf32>
    %c0_568 = arith.constant 0 : index
    %c67_569 = arith.constant 67 : index
    %501 = vector.load %arg5[%c0_568, %c67_569] : memref<32x324xf32, #tpu.memory_space<vmem>>, vector<32x9xf32>
    tpu.vector_store %arg5[%c0_568, %c67_569], %500 {strides = array<i32>} : memref<32x324xf32, #tpu.memory_space<vmem>>, vector<32x9xf32>,
    %502 = vector.extract_strided_slice %489 {offsets = [0, 66], sizes = [32, 9], strides = [1, 1]} : vector<32x97xf32> to vector<32x9xf32>
    %c0_570 = arith.constant 0 : index
    %c78_571 = arith.constant 78 : index
    %503 = vector.load %arg5[%c0_570, %c78_571] : memref<32x324xf32, #tpu.memory_space<vmem>>, vector<32x9xf32>
    tpu.vector_store %arg5[%c0_570, %c78_571], %502 {strides = array<i32>} : memref<32x324xf32, #tpu.memory_space<vmem>>, vector<32x9xf32>,
    %504 = vector.extract_strided_slice %489 {offsets = [0, 77], sizes = [32, 9], strides = [1, 1]} : vector<32x97xf32> to vector<32x9xf32>
    %c0_572 = arith.constant 0 : index
    %c89_573 = arith.constant 89 : index
    %505 = vector.load %arg5[%c0_572, %c89_573] : memref<32x324xf32, #tpu.memory_space<vmem>>, vector<32x9xf32>
    tpu.vector_store %arg5[%c0_572, %c89_573], %504 {strides = array<i32>} : memref<32x324xf32, #tpu.memory_space<vmem>>, vector<32x9xf32>,
    %506 = vector.extract_strided_slice %489 {offsets = [0, 88], sizes = [32, 9], strides = [1, 1]} : vector<32x97xf32> to vector<32x9xf32>
    %c0_574 = arith.constant 0 : index
    %c100_575 = arith.constant 100 : index
    %507 = vector.load %arg5[%c0_574, %c100_575] : memref<32x324xf32, #tpu.memory_space<vmem>>, vector<32x9xf32>
    tpu.vector_store %arg5[%c0_574, %c100_575], %506 {strides = array<i32>} : memref<32x324xf32, #tpu.memory_space<vmem>>, vector<32x9xf32>,
    %cst_576 = arith.constant 0.000000e+00 : f32
    %508 = vector.broadcast %cst_576 : f32 to vector<32x12xf32>
    %c0_577 = arith.constant 0 : index
    %c0_578 = arith.constant 0 : index
    %509 = vector.load %arg5[%c0_577, %c0_578] : memref<32x324xf32, #tpu.memory_space<vmem>>, vector<32x12xf32>
    tpu.vector_store %arg5[%c0_577, %c0_578], %508 {strides = array<i32>} : memref<32x324xf32, #tpu.memory_space<vmem>>, vector<32x12xf32>,
    %cst_579 = arith.constant 0.000000e+00 : f32
    %510 = vector.broadcast %cst_579 : f32 to vector<32x12xf32>
    %c0_580 = arith.constant 0 : index
    %c109_581 = arith.constant 109 : index
    %511 = vector.load %arg5[%c0_580, %c109_581] : memref<32x324xf32, #tpu.memory_space<vmem>>, vector<32x12xf32>
    tpu.vector_store %arg5[%c0_580, %c109_581], %510 {strides = array<i32>} : memref<32x324xf32, #tpu.memory_space<vmem>>, vector<32x12xf32>,
    %cst_582 = arith.constant 0.000000e+00 : f32
    %512 = vector.broadcast %cst_582 : f32 to vector<32x2xf32>
    %c0_583 = arith.constant 0 : index
    %c21_584 = arith.constant 21 : index
    %513 = vector.load %arg5[%c0_583, %c21_584] : memref<32x324xf32, #tpu.memory_space<vmem>>, vector<32x2xf32>
    tpu.vector_store %arg5[%c0_583, %c21_584], %512 {strides = array<i32>} : memref<32x324xf32, #tpu.memory_space<vmem>>, vector<32x2xf32>,
    %cst_585 = arith.constant 0.000000e+00 : f32
    %514 = vector.broadcast %cst_585 : f32 to vector<32x2xf32>
    %c0_586 = arith.constant 0 : index
    %c32_587 = arith.constant 32 : index
    %515 = vector.load %arg5[%c0_586, %c32_587] : memref<32x324xf32, #tpu.memory_space<vmem>>, vector<32x2xf32>
    tpu.vector_store %arg5[%c0_586, %c32_587], %514 {strides = array<i32>} : memref<32x324xf32, #tpu.memory_space<vmem>>, vector<32x2xf32>,
    %cst_588 = arith.constant 0.000000e+00 : f32
    %516 = vector.broadcast %cst_588 : f32 to vector<32x2xf32>
    %c0_589 = arith.constant 0 : index
    %c43_590 = arith.constant 43 : index
    %517 = vector.load %arg5[%c0_589, %c43_590] : memref<32x324xf32, #tpu.memory_space<vmem>>, vector<32x2xf32>
    tpu.vector_store %arg5[%c0_589, %c43_590], %516 {strides = array<i32>} : memref<32x324xf32, #tpu.memory_space<vmem>>, vector<32x2xf32>,
    %cst_591 = arith.constant 0.000000e+00 : f32
    %518 = vector.broadcast %cst_591 : f32 to vector<32x2xf32>
    %c0_592 = arith.constant 0 : index
    %c54_593 = arith.constant 54 : index
    %519 = vector.load %arg5[%c0_592, %c54_593] : memref<32x324xf32, #tpu.memory_space<vmem>>, vector<32x2xf32>
    tpu.vector_store %arg5[%c0_592, %c54_593], %518 {strides = array<i32>} : memref<32x324xf32, #tpu.memory_space<vmem>>, vector<32x2xf32>,
    %cst_594 = arith.constant 0.000000e+00 : f32
    %520 = vector.broadcast %cst_594 : f32 to vector<32x2xf32>
    %c0_595 = arith.constant 0 : index
    %c65_596 = arith.constant 65 : index
    %521 = vector.load %arg5[%c0_595, %c65_596] : memref<32x324xf32, #tpu.memory_space<vmem>>, vector<32x2xf32>
    tpu.vector_store %arg5[%c0_595, %c65_596], %520 {strides = array<i32>} : memref<32x324xf32, #tpu.memory_space<vmem>>, vector<32x2xf32>,
    %cst_597 = arith.constant 0.000000e+00 : f32
    %522 = vector.broadcast %cst_597 : f32 to vector<32x2xf32>
    %c0_598 = arith.constant 0 : index
    %c76_599 = arith.constant 76 : index
    %523 = vector.load %arg5[%c0_598, %c76_599] : memref<32x324xf32, #tpu.memory_space<vmem>>, vector<32x2xf32>
    tpu.vector_store %arg5[%c0_598, %c76_599], %522 {strides = array<i32>} : memref<32x324xf32, #tpu.memory_space<vmem>>, vector<32x2xf32>,
    %cst_600 = arith.constant 0.000000e+00 : f32
    %524 = vector.broadcast %cst_600 : f32 to vector<32x2xf32>
    %c0_601 = arith.constant 0 : index
    %c87_602 = arith.constant 87 : index
    %525 = vector.load %arg5[%c0_601, %c87_602] : memref<32x324xf32, #tpu.memory_space<vmem>>, vector<32x2xf32>
    tpu.vector_store %arg5[%c0_601, %c87_602], %524 {strides = array<i32>} : memref<32x324xf32, #tpu.memory_space<vmem>>, vector<32x2xf32>,
    %cst_603 = arith.constant 0.000000e+00 : f32
    %526 = vector.broadcast %cst_603 : f32 to vector<32x2xf32>
    %c0_604 = arith.constant 0 : index
    %c98_605 = arith.constant 98 : index
    %527 = vector.load %arg5[%c0_604, %c98_605] : memref<32x324xf32, #tpu.memory_space<vmem>>, vector<32x2xf32>
    tpu.vector_store %arg5[%c0_604, %c98_605], %526 {strides = array<i32>} : memref<32x324xf32, #tpu.memory_space<vmem>>, vector<32x2xf32>,
    %c0_606 = arith.constant 0 : index
    %c0_607 = arith.constant 0 : index
    %528 = vector.load %arg5[%c0_606, %c0_607] : memref<32x324xf32, #tpu.memory_space<vmem>>, vector<32x97xf32>
    %c0_608 = arith.constant 0 : index
    %c0_609 = arith.constant 0 : index
    %529 = vector.load %arg6[%c0_608, %c0_609] : memref<288x286xf32, #tpu.memory_space<vmem>>, vector<32x97xf32>
    tpu.vector_store %arg6[%c0_608, %c0_609], %528 {strides = array<i32>} : memref<288x286xf32, #tpu.memory_space<vmem>>, vector<32x97xf32>,
    %c0_610 = arith.constant 0 : index
    %c1_611 = arith.constant 1 : index
    %530 = vector.load %arg5[%c0_610, %c1_611] : memref<32x324xf32, #tpu.memory_space<vmem>>, vector<32x97xf32>
    %c32_612 = arith.constant 32 : index
    %c0_613 = arith.constant 0 : index
    %531 = vector.load %arg6[%c32_612, %c0_613] : memref<288x286xf32, #tpu.memory_space<vmem>>, vector<32x97xf32>
    tpu.vector_store %arg6[%c32_612, %c0_613], %530 {strides = array<i32>} : memref<288x286xf32, #tpu.memory_space<vmem>>, vector<32x97xf32>,
    %c0_614 = arith.constant 0 : index
    %c2_615 = arith.constant 2 : index
    %532 = vector.load %arg5[%c0_614, %c2_615] : memref<32x324xf32, #tpu.memory_space<vmem>>, vector<32x97xf32>
    %c64_616 = arith.constant 64 : index
    %c0_617 = arith.constant 0 : index
    %533 = vector.load %arg6[%c64_616, %c0_617] : memref<288x286xf32, #tpu.memory_space<vmem>>, vector<32x97xf32>
    tpu.vector_store %arg6[%c64_616, %c0_617], %532 {strides = array<i32>} : memref<288x286xf32, #tpu.memory_space<vmem>>, vector<32x97xf32>,
    %c0_618 = arith.constant 0 : index
    %c11_619 = arith.constant 11 : index
    %534 = vector.load %arg5[%c0_618, %c11_619] : memref<32x324xf32, #tpu.memory_space<vmem>>, vector<32x97xf32>
    %c96_620 = arith.constant 96 : index
    %c0_621 = arith.constant 0 : index
    %535 = vector.load %arg6[%c96_620, %c0_621] : memref<288x286xf32, #tpu.memory_space<vmem>>, vector<32x97xf32>
    tpu.vector_store %arg6[%c96_620, %c0_621], %534 {strides = array<i32>} : memref<288x286xf32, #tpu.memory_space<vmem>>, vector<32x97xf32>,
    %c0_622 = arith.constant 0 : index
    %c12_623 = arith.constant 12 : index
    %536 = vector.load %arg5[%c0_622, %c12_623] : memref<32x324xf32, #tpu.memory_space<vmem>>, vector<32x97xf32>
    %c128_624 = arith.constant 128 : index
    %c0_625 = arith.constant 0 : index
    %537 = vector.load %arg6[%c128_624, %c0_625] : memref<288x286xf32, #tpu.memory_space<vmem>>, vector<32x97xf32>
    tpu.vector_store %arg6[%c128_624, %c0_625], %536 {strides = array<i32>} : memref<288x286xf32, #tpu.memory_space<vmem>>, vector<32x97xf32>,
    %c0_626 = arith.constant 0 : index
    %c13_627 = arith.constant 13 : index
    %538 = vector.load %arg5[%c0_626, %c13_627] : memref<32x324xf32, #tpu.memory_space<vmem>>, vector<32x97xf32>
    %c160 = arith.constant 160 : index
    %c0_628 = arith.constant 0 : index
    %539 = vector.load %arg6[%c160, %c0_628] : memref<288x286xf32, #tpu.memory_space<vmem>>, vector<32x97xf32>
    tpu.vector_store %arg6[%c160, %c0_628], %538 {strides = array<i32>} : memref<288x286xf32, #tpu.memory_space<vmem>>, vector<32x97xf32>,
    %c0_629 = arith.constant 0 : index
    %c22_630 = arith.constant 22 : index
    %540 = vector.load %arg5[%c0_629, %c22_630] : memref<32x324xf32, #tpu.memory_space<vmem>>, vector<32x97xf32>
    %c192 = arith.constant 192 : index
    %c0_631 = arith.constant 0 : index
    %541 = vector.load %arg6[%c192, %c0_631] : memref<288x286xf32, #tpu.memory_space<vmem>>, vector<32x97xf32>
    tpu.vector_store %arg6[%c192, %c0_631], %540 {strides = array<i32>} : memref<288x286xf32, #tpu.memory_space<vmem>>, vector<32x97xf32>,
    %c0_632 = arith.constant 0 : index
    %c23_633 = arith.constant 23 : index
    %542 = vector.load %arg5[%c0_632, %c23_633] : memref<32x324xf32, #tpu.memory_space<vmem>>, vector<32x97xf32>
    %c224 = arith.constant 224 : index
    %c0_634 = arith.constant 0 : index
    %543 = vector.load %arg6[%c224, %c0_634] : memref<288x286xf32, #tpu.memory_space<vmem>>, vector<32x97xf32>
    tpu.vector_store %arg6[%c224, %c0_634], %542 {strides = array<i32>} : memref<288x286xf32, #tpu.memory_space<vmem>>, vector<32x97xf32>,
    %c0_635 = arith.constant 0 : index
    %c24_636 = arith.constant 24 : index
    %544 = vector.load %arg5[%c0_635, %c24_636] : memref<32x324xf32, #tpu.memory_space<vmem>>, vector<32x97xf32>
    %c256 = arith.constant 256 : index
    %c0_637 = arith.constant 0 : index
    %545 = vector.load %arg6[%c256, %c0_637] : memref<288x286xf32, #tpu.memory_space<vmem>>, vector<32x97xf32>
    tpu.vector_store %arg6[%c256, %c0_637], %544 {strides = array<i32>} : memref<288x286xf32, #tpu.memory_space<vmem>>, vector<32x97xf32>,
    %c0_638 = arith.constant 0 : index
    %c0_639 = arith.constant 0 : index
    %546 = vector.load %arg6[%c0_638, %c0_639] : memref<288x286xf32, #tpu.memory_space<vmem>>, vector<288x97xf32>
    %c80_640 = arith.constant 80 : index
    %c0_641 = arith.constant 0 : index
    %547 = vector.load %arg2[%c80_640, %c0_641] : memref<400x289xf32, #tpu.memory_space<vmem>>, vector<32x288xf32>
    %c80_642 = arith.constant 80 : index
    %c288_643 = arith.constant 288 : index
    %548 = vector.load %arg2[%c80_642, %c288_643] : memref<400x289xf32, #tpu.memory_space<vmem>>, vector<32x1xf32>
    %cst_644 = arith.constant dense<0.000000e+00> : vector<32x97xf32>
    %549 = tpu.matmul %547, %546, %cst_644 {dimension_numbers = #tpu.dot_dimension_numbers<[1], [0], [0], [1], [0, 0, 1, 1], [], []>} : vector<32x288xf32>, vector<288x97xf32>, vector<32x97xf32> -> vector<32x97xf32>
    %550 = vector.broadcast %548 : vector<32x1xf32> to vector<32x97xf32>
    %551 = arith.addf %549, %550 : vector<32x97xf32>
    %cst_645 = arith.constant 0.000000e+00 : f32
    %552 = vector.broadcast %cst_645 : f32 to vector<32x97xf32>
    %553 = arith.cmpf ogt, %551, %552 : vector<32x97xf32>
    %cst_646 = arith.constant 1.000000e-01 : f32
    %554 = vector.broadcast %cst_646 : f32 to vector<32x97xf32>
    %555 = arith.mulf %554, %551 : vector<32x97xf32>
    %556 = arith.select %553, %551, %555 : vector<32x97xi1>, vector<32x97xf32>
    %557 = vector.extract_strided_slice %556 {offsets = [0, 0], sizes = [32, 9], strides = [1, 1]} : vector<32x97xf32> to vector<32x9xf32>
    %c0_647 = arith.constant 0 : index
    %c12_648 = arith.constant 12 : index
    %558 = vector.load %arg5[%c0_647, %c12_648] : memref<32x324xf32, #tpu.memory_space<vmem>>, vector<32x9xf32>
    tpu.vector_store %arg5[%c0_647, %c12_648], %557 {strides = array<i32>} : memref<32x324xf32, #tpu.memory_space<vmem>>, vector<32x9xf32>,
    %559 = vector.extract_strided_slice %556 {offsets = [0, 11], sizes = [32, 9], strides = [1, 1]} : vector<32x97xf32> to vector<32x9xf32>
    %c0_649 = arith.constant 0 : index
    %c23_650 = arith.constant 23 : index
    %560 = vector.load %arg5[%c0_649, %c23_650] : memref<32x324xf32, #tpu.memory_space<vmem>>, vector<32x9xf32>
    tpu.vector_store %arg5[%c0_649, %c23_650], %559 {strides = array<i32>} : memref<32x324xf32, #tpu.memory_space<vmem>>, vector<32x9xf32>,
    %561 = vector.extract_strided_slice %556 {offsets = [0, 22], sizes = [32, 9], strides = [1, 1]} : vector<32x97xf32> to vector<32x9xf32>
    %c0_651 = arith.constant 0 : index
    %c34_652 = arith.constant 34 : index
    %562 = vector.load %arg5[%c0_651, %c34_652] : memref<32x324xf32, #tpu.memory_space<vmem>>, vector<32x9xf32>
    tpu.vector_store %arg5[%c0_651, %c34_652], %561 {strides = array<i32>} : memref<32x324xf32, #tpu.memory_space<vmem>>, vector<32x9xf32>,
    %563 = vector.extract_strided_slice %556 {offsets = [0, 33], sizes = [32, 9], strides = [1, 1]} : vector<32x97xf32> to vector<32x9xf32>
    %c0_653 = arith.constant 0 : index
    %c45_654 = arith.constant 45 : index
    %564 = vector.load %arg5[%c0_653, %c45_654] : memref<32x324xf32, #tpu.memory_space<vmem>>, vector<32x9xf32>
    tpu.vector_store %arg5[%c0_653, %c45_654], %563 {strides = array<i32>} : memref<32x324xf32, #tpu.memory_space<vmem>>, vector<32x9xf32>,
    %565 = vector.extract_strided_slice %556 {offsets = [0, 44], sizes = [32, 9], strides = [1, 1]} : vector<32x97xf32> to vector<32x9xf32>
    %c0_655 = arith.constant 0 : index
    %c56_656 = arith.constant 56 : index
    %566 = vector.load %arg5[%c0_655, %c56_656] : memref<32x324xf32, #tpu.memory_space<vmem>>, vector<32x9xf32>
    tpu.vector_store %arg5[%c0_655, %c56_656], %565 {strides = array<i32>} : memref<32x324xf32, #tpu.memory_space<vmem>>, vector<32x9xf32>,
    %567 = vector.extract_strided_slice %556 {offsets = [0, 55], sizes = [32, 9], strides = [1, 1]} : vector<32x97xf32> to vector<32x9xf32>
    %c0_657 = arith.constant 0 : index
    %c67_658 = arith.constant 67 : index
    %568 = vector.load %arg5[%c0_657, %c67_658] : memref<32x324xf32, #tpu.memory_space<vmem>>, vector<32x9xf32>
    tpu.vector_store %arg5[%c0_657, %c67_658], %567 {strides = array<i32>} : memref<32x324xf32, #tpu.memory_space<vmem>>, vector<32x9xf32>,
    %569 = vector.extract_strided_slice %556 {offsets = [0, 66], sizes = [32, 9], strides = [1, 1]} : vector<32x97xf32> to vector<32x9xf32>
    %c0_659 = arith.constant 0 : index
    %c78_660 = arith.constant 78 : index
    %570 = vector.load %arg5[%c0_659, %c78_660] : memref<32x324xf32, #tpu.memory_space<vmem>>, vector<32x9xf32>
    tpu.vector_store %arg5[%c0_659, %c78_660], %569 {strides = array<i32>} : memref<32x324xf32, #tpu.memory_space<vmem>>, vector<32x9xf32>,
    %571 = vector.extract_strided_slice %556 {offsets = [0, 77], sizes = [32, 9], strides = [1, 1]} : vector<32x97xf32> to vector<32x9xf32>
    %c0_661 = arith.constant 0 : index
    %c89_662 = arith.constant 89 : index
    %572 = vector.load %arg5[%c0_661, %c89_662] : memref<32x324xf32, #tpu.memory_space<vmem>>, vector<32x9xf32>
    tpu.vector_store %arg5[%c0_661, %c89_662], %571 {strides = array<i32>} : memref<32x324xf32, #tpu.memory_space<vmem>>, vector<32x9xf32>,
    %573 = vector.extract_strided_slice %556 {offsets = [0, 88], sizes = [32, 9], strides = [1, 1]} : vector<32x97xf32> to vector<32x9xf32>
    %c0_663 = arith.constant 0 : index
    %c100_664 = arith.constant 100 : index
    %574 = vector.load %arg5[%c0_663, %c100_664] : memref<32x324xf32, #tpu.memory_space<vmem>>, vector<32x9xf32>
    tpu.vector_store %arg5[%c0_663, %c100_664], %573 {strides = array<i32>} : memref<32x324xf32, #tpu.memory_space<vmem>>, vector<32x9xf32>,
    %cst_665 = arith.constant 0.000000e+00 : f32
    %575 = vector.broadcast %cst_665 : f32 to vector<32x12xf32>
    %c0_666 = arith.constant 0 : index
    %c0_667 = arith.constant 0 : index
    %576 = vector.load %arg5[%c0_666, %c0_667] : memref<32x324xf32, #tpu.memory_space<vmem>>, vector<32x12xf32>
    tpu.vector_store %arg5[%c0_666, %c0_667], %575 {strides = array<i32>} : memref<32x324xf32, #tpu.memory_space<vmem>>, vector<32x12xf32>,
    %cst_668 = arith.constant 0.000000e+00 : f32
    %577 = vector.broadcast %cst_668 : f32 to vector<32x12xf32>
    %c0_669 = arith.constant 0 : index
    %c109_670 = arith.constant 109 : index
    %578 = vector.load %arg5[%c0_669, %c109_670] : memref<32x324xf32, #tpu.memory_space<vmem>>, vector<32x12xf32>
    tpu.vector_store %arg5[%c0_669, %c109_670], %577 {strides = array<i32>} : memref<32x324xf32, #tpu.memory_space<vmem>>, vector<32x12xf32>,
    %cst_671 = arith.constant 0.000000e+00 : f32
    %579 = vector.broadcast %cst_671 : f32 to vector<32x2xf32>
    %c0_672 = arith.constant 0 : index
    %c21_673 = arith.constant 21 : index
    %580 = vector.load %arg5[%c0_672, %c21_673] : memref<32x324xf32, #tpu.memory_space<vmem>>, vector<32x2xf32>
    tpu.vector_store %arg5[%c0_672, %c21_673], %579 {strides = array<i32>} : memref<32x324xf32, #tpu.memory_space<vmem>>, vector<32x2xf32>,
    %cst_674 = arith.constant 0.000000e+00 : f32
    %581 = vector.broadcast %cst_674 : f32 to vector<32x2xf32>
    %c0_675 = arith.constant 0 : index
    %c32_676 = arith.constant 32 : index
    %582 = vector.load %arg5[%c0_675, %c32_676] : memref<32x324xf32, #tpu.memory_space<vmem>>, vector<32x2xf32>
    tpu.vector_store %arg5[%c0_675, %c32_676], %581 {strides = array<i32>} : memref<32x324xf32, #tpu.memory_space<vmem>>, vector<32x2xf32>,
    %cst_677 = arith.constant 0.000000e+00 : f32
    %583 = vector.broadcast %cst_677 : f32 to vector<32x2xf32>
    %c0_678 = arith.constant 0 : index
    %c43_679 = arith.constant 43 : index
    %584 = vector.load %arg5[%c0_678, %c43_679] : memref<32x324xf32, #tpu.memory_space<vmem>>, vector<32x2xf32>
    tpu.vector_store %arg5[%c0_678, %c43_679], %583 {strides = array<i32>} : memref<32x324xf32, #tpu.memory_space<vmem>>, vector<32x2xf32>,
    %cst_680 = arith.constant 0.000000e+00 : f32
    %585 = vector.broadcast %cst_680 : f32 to vector<32x2xf32>
    %c0_681 = arith.constant 0 : index
    %c54_682 = arith.constant 54 : index
    %586 = vector.load %arg5[%c0_681, %c54_682] : memref<32x324xf32, #tpu.memory_space<vmem>>, vector<32x2xf32>
    tpu.vector_store %arg5[%c0_681, %c54_682], %585 {strides = array<i32>} : memref<32x324xf32, #tpu.memory_space<vmem>>, vector<32x2xf32>,
    %cst_683 = arith.constant 0.000000e+00 : f32
    %587 = vector.broadcast %cst_683 : f32 to vector<32x2xf32>
    %c0_684 = arith.constant 0 : index
    %c65_685 = arith.constant 65 : index
    %588 = vector.load %arg5[%c0_684, %c65_685] : memref<32x324xf32, #tpu.memory_space<vmem>>, vector<32x2xf32>
    tpu.vector_store %arg5[%c0_684, %c65_685], %587 {strides = array<i32>} : memref<32x324xf32, #tpu.memory_space<vmem>>, vector<32x2xf32>,
    %cst_686 = arith.constant 0.000000e+00 : f32
    %589 = vector.broadcast %cst_686 : f32 to vector<32x2xf32>
    %c0_687 = arith.constant 0 : index
    %c76_688 = arith.constant 76 : index
    %590 = vector.load %arg5[%c0_687, %c76_688] : memref<32x324xf32, #tpu.memory_space<vmem>>, vector<32x2xf32>
    tpu.vector_store %arg5[%c0_687, %c76_688], %589 {strides = array<i32>} : memref<32x324xf32, #tpu.memory_space<vmem>>, vector<32x2xf32>,
    %cst_689 = arith.constant 0.000000e+00 : f32
    %591 = vector.broadcast %cst_689 : f32 to vector<32x2xf32>
    %c0_690 = arith.constant 0 : index
    %c87_691 = arith.constant 87 : index
    %592 = vector.load %arg5[%c0_690, %c87_691] : memref<32x324xf32, #tpu.memory_space<vmem>>, vector<32x2xf32>
    tpu.vector_store %arg5[%c0_690, %c87_691], %591 {strides = array<i32>} : memref<32x324xf32, #tpu.memory_space<vmem>>, vector<32x2xf32>,
    %cst_692 = arith.constant 0.000000e+00 : f32
    %593 = vector.broadcast %cst_692 : f32 to vector<32x2xf32>
    %c0_693 = arith.constant 0 : index
    %c98_694 = arith.constant 98 : index
    %594 = vector.load %arg5[%c0_693, %c98_694] : memref<32x324xf32, #tpu.memory_space<vmem>>, vector<32x2xf32>
    tpu.vector_store %arg5[%c0_693, %c98_694], %593 {strides = array<i32>} : memref<32x324xf32, #tpu.memory_space<vmem>>, vector<32x2xf32>,
    %c0_695 = arith.constant 0 : index
    %c0_696 = arith.constant 0 : index
    %595 = vector.load %arg5[%c0_695, %c0_696] : memref<32x324xf32, #tpu.memory_space<vmem>>, vector<32x97xf32>
    %c0_697 = arith.constant 0 : index
    %c0_698 = arith.constant 0 : index
    %596 = vector.load %arg6[%c0_697, %c0_698] : memref<288x286xf32, #tpu.memory_space<vmem>>, vector<32x97xf32>
    tpu.vector_store %arg6[%c0_697, %c0_698], %595 {strides = array<i32>} : memref<288x286xf32, #tpu.memory_space<vmem>>, vector<32x97xf32>,
    %c0_699 = arith.constant 0 : index
    %c1_700 = arith.constant 1 : index
    %597 = vector.load %arg5[%c0_699, %c1_700] : memref<32x324xf32, #tpu.memory_space<vmem>>, vector<32x97xf32>
    %c32_701 = arith.constant 32 : index
    %c0_702 = arith.constant 0 : index
    %598 = vector.load %arg6[%c32_701, %c0_702] : memref<288x286xf32, #tpu.memory_space<vmem>>, vector<32x97xf32>
    tpu.vector_store %arg6[%c32_701, %c0_702], %597 {strides = array<i32>} : memref<288x286xf32, #tpu.memory_space<vmem>>, vector<32x97xf32>,
    %c0_703 = arith.constant 0 : index
    %c2_704 = arith.constant 2 : index
    %599 = vector.load %arg5[%c0_703, %c2_704] : memref<32x324xf32, #tpu.memory_space<vmem>>, vector<32x97xf32>
    %c64_705 = arith.constant 64 : index
    %c0_706 = arith.constant 0 : index
    %600 = vector.load %arg6[%c64_705, %c0_706] : memref<288x286xf32, #tpu.memory_space<vmem>>, vector<32x97xf32>
    tpu.vector_store %arg6[%c64_705, %c0_706], %599 {strides = array<i32>} : memref<288x286xf32, #tpu.memory_space<vmem>>, vector<32x97xf32>,
    %c0_707 = arith.constant 0 : index
    %c11_708 = arith.constant 11 : index
    %601 = vector.load %arg5[%c0_707, %c11_708] : memref<32x324xf32, #tpu.memory_space<vmem>>, vector<32x97xf32>
    %c96_709 = arith.constant 96 : index
    %c0_710 = arith.constant 0 : index
    %602 = vector.load %arg6[%c96_709, %c0_710] : memref<288x286xf32, #tpu.memory_space<vmem>>, vector<32x97xf32>
    tpu.vector_store %arg6[%c96_709, %c0_710], %601 {strides = array<i32>} : memref<288x286xf32, #tpu.memory_space<vmem>>, vector<32x97xf32>,
    %c0_711 = arith.constant 0 : index
    %c12_712 = arith.constant 12 : index
    %603 = vector.load %arg5[%c0_711, %c12_712] : memref<32x324xf32, #tpu.memory_space<vmem>>, vector<32x97xf32>
    %c128_713 = arith.constant 128 : index
    %c0_714 = arith.constant 0 : index
    %604 = vector.load %arg6[%c128_713, %c0_714] : memref<288x286xf32, #tpu.memory_space<vmem>>, vector<32x97xf32>
    tpu.vector_store %arg6[%c128_713, %c0_714], %603 {strides = array<i32>} : memref<288x286xf32, #tpu.memory_space<vmem>>, vector<32x97xf32>,
    %c0_715 = arith.constant 0 : index
    %c13_716 = arith.constant 13 : index
    %605 = vector.load %arg5[%c0_715, %c13_716] : memref<32x324xf32, #tpu.memory_space<vmem>>, vector<32x97xf32>
    %c160_717 = arith.constant 160 : index
    %c0_718 = arith.constant 0 : index
    %606 = vector.load %arg6[%c160_717, %c0_718] : memref<288x286xf32, #tpu.memory_space<vmem>>, vector<32x97xf32>
    tpu.vector_store %arg6[%c160_717, %c0_718], %605 {strides = array<i32>} : memref<288x286xf32, #tpu.memory_space<vmem>>, vector<32x97xf32>,
    %c0_719 = arith.constant 0 : index
    %c22_720 = arith.constant 22 : index
    %607 = vector.load %arg5[%c0_719, %c22_720] : memref<32x324xf32, #tpu.memory_space<vmem>>, vector<32x97xf32>
    %c192_721 = arith.constant 192 : index
    %c0_722 = arith.constant 0 : index
    %608 = vector.load %arg6[%c192_721, %c0_722] : memref<288x286xf32, #tpu.memory_space<vmem>>, vector<32x97xf32>
    tpu.vector_store %arg6[%c192_721, %c0_722], %607 {strides = array<i32>} : memref<288x286xf32, #tpu.memory_space<vmem>>, vector<32x97xf32>,
    %c0_723 = arith.constant 0 : index
    %c23_724 = arith.constant 23 : index
    %609 = vector.load %arg5[%c0_723, %c23_724] : memref<32x324xf32, #tpu.memory_space<vmem>>, vector<32x97xf32>
    %c224_725 = arith.constant 224 : index
    %c0_726 = arith.constant 0 : index
    %610 = vector.load %arg6[%c224_725, %c0_726] : memref<288x286xf32, #tpu.memory_space<vmem>>, vector<32x97xf32>
    tpu.vector_store %arg6[%c224_725, %c0_726], %609 {strides = array<i32>} : memref<288x286xf32, #tpu.memory_space<vmem>>, vector<32x97xf32>,
    %c0_727 = arith.constant 0 : index
    %c24_728 = arith.constant 24 : index
    %611 = vector.load %arg5[%c0_727, %c24_728] : memref<32x324xf32, #tpu.memory_space<vmem>>, vector<32x97xf32>
    %c256_729 = arith.constant 256 : index
    %c0_730 = arith.constant 0 : index
    %612 = vector.load %arg6[%c256_729, %c0_730] : memref<288x286xf32, #tpu.memory_space<vmem>>, vector<32x97xf32>
    tpu.vector_store %arg6[%c256_729, %c0_730], %611 {strides = array<i32>} : memref<288x286xf32, #tpu.memory_space<vmem>>, vector<32x97xf32>,
    %c0_731 = arith.constant 0 : index
    %c0_732 = arith.constant 0 : index
    %613 = vector.load %arg6[%c0_731, %c0_732] : memref<288x286xf32, #tpu.memory_space<vmem>>, vector<288x97xf32>
    %c112_733 = arith.constant 112 : index
    %c0_734 = arith.constant 0 : index
    %614 = vector.load %arg2[%c112_733, %c0_734] : memref<400x289xf32, #tpu.memory_space<vmem>>, vector<32x288xf32>
    %c112_735 = arith.constant 112 : index
    %c288_736 = arith.constant 288 : index
    %615 = vector.load %arg2[%c112_735, %c288_736] : memref<400x289xf32, #tpu.memory_space<vmem>>, vector<32x1xf32>
    %cst_737 = arith.constant dense<0.000000e+00> : vector<32x97xf32>
    %616 = tpu.matmul %614, %613, %cst_737 {dimension_numbers = #tpu.dot_dimension_numbers<[1], [0], [0], [1], [0, 0, 1, 1], [], []>} : vector<32x288xf32>, vector<288x97xf32>, vector<32x97xf32> -> vector<32x97xf32>
    %617 = vector.broadcast %615 : vector<32x1xf32> to vector<32x97xf32>
    %618 = arith.addf %616, %617 : vector<32x97xf32>
    %cst_738 = arith.constant 0.000000e+00 : f32
    %619 = vector.broadcast %cst_738 : f32 to vector<32x97xf32>
    %620 = arith.cmpf ogt, %618, %619 : vector<32x97xf32>
    %cst_739 = arith.constant 1.000000e-01 : f32
    %621 = vector.broadcast %cst_739 : f32 to vector<32x97xf32>
    %622 = arith.mulf %621, %618 : vector<32x97xf32>
    %623 = arith.select %620, %618, %622 : vector<32x97xi1>, vector<32x97xf32>
    %624 = vector.extract_strided_slice %623 {offsets = [0, 0], sizes = [32, 9], strides = [1, 1]} : vector<32x97xf32> to vector<32x9xf32>
    %c0_740 = arith.constant 0 : index
    %c12_741 = arith.constant 12 : index
    %625 = vector.load %arg5[%c0_740, %c12_741] : memref<32x324xf32, #tpu.memory_space<vmem>>, vector<32x9xf32>
    tpu.vector_store %arg5[%c0_740, %c12_741], %624 {strides = array<i32>} : memref<32x324xf32, #tpu.memory_space<vmem>>, vector<32x9xf32>,
    %626 = vector.extract_strided_slice %623 {offsets = [0, 11], sizes = [32, 9], strides = [1, 1]} : vector<32x97xf32> to vector<32x9xf32>
    %c0_742 = arith.constant 0 : index
    %c23_743 = arith.constant 23 : index
    %627 = vector.load %arg5[%c0_742, %c23_743] : memref<32x324xf32, #tpu.memory_space<vmem>>, vector<32x9xf32>
    tpu.vector_store %arg5[%c0_742, %c23_743], %626 {strides = array<i32>} : memref<32x324xf32, #tpu.memory_space<vmem>>, vector<32x9xf32>,
    %628 = vector.extract_strided_slice %623 {offsets = [0, 22], sizes = [32, 9], strides = [1, 1]} : vector<32x97xf32> to vector<32x9xf32>
    %c0_744 = arith.constant 0 : index
    %c34_745 = arith.constant 34 : index
    %629 = vector.load %arg5[%c0_744, %c34_745] : memref<32x324xf32, #tpu.memory_space<vmem>>, vector<32x9xf32>
    tpu.vector_store %arg5[%c0_744, %c34_745], %628 {strides = array<i32>} : memref<32x324xf32, #tpu.memory_space<vmem>>, vector<32x9xf32>,
    %630 = vector.extract_strided_slice %623 {offsets = [0, 33], sizes = [32, 9], strides = [1, 1]} : vector<32x97xf32> to vector<32x9xf32>
    %c0_746 = arith.constant 0 : index
    %c45_747 = arith.constant 45 : index
    %631 = vector.load %arg5[%c0_746, %c45_747] : memref<32x324xf32, #tpu.memory_space<vmem>>, vector<32x9xf32>
    tpu.vector_store %arg5[%c0_746, %c45_747], %630 {strides = array<i32>} : memref<32x324xf32, #tpu.memory_space<vmem>>, vector<32x9xf32>,
    %632 = vector.extract_strided_slice %623 {offsets = [0, 44], sizes = [32, 9], strides = [1, 1]} : vector<32x97xf32> to vector<32x9xf32>
    %c0_748 = arith.constant 0 : index
    %c56_749 = arith.constant 56 : index
    %633 = vector.load %arg5[%c0_748, %c56_749] : memref<32x324xf32, #tpu.memory_space<vmem>>, vector<32x9xf32>
    tpu.vector_store %arg5[%c0_748, %c56_749], %632 {strides = array<i32>} : memref<32x324xf32, #tpu.memory_space<vmem>>, vector<32x9xf32>,
    %634 = vector.extract_strided_slice %623 {offsets = [0, 55], sizes = [32, 9], strides = [1, 1]} : vector<32x97xf32> to vector<32x9xf32>
    %c0_750 = arith.constant 0 : index
    %c67_751 = arith.constant 67 : index
    %635 = vector.load %arg5[%c0_750, %c67_751] : memref<32x324xf32, #tpu.memory_space<vmem>>, vector<32x9xf32>
    tpu.vector_store %arg5[%c0_750, %c67_751], %634 {strides = array<i32>} : memref<32x324xf32, #tpu.memory_space<vmem>>, vector<32x9xf32>,
    %636 = vector.extract_strided_slice %623 {offsets = [0, 66], sizes = [32, 9], strides = [1, 1]} : vector<32x97xf32> to vector<32x9xf32>
    %c0_752 = arith.constant 0 : index
    %c78_753 = arith.constant 78 : index
    %637 = vector.load %arg5[%c0_752, %c78_753] : memref<32x324xf32, #tpu.memory_space<vmem>>, vector<32x9xf32>
    tpu.vector_store %arg5[%c0_752, %c78_753], %636 {strides = array<i32>} : memref<32x324xf32, #tpu.memory_space<vmem>>, vector<32x9xf32>,
    %638 = vector.extract_strided_slice %623 {offsets = [0, 77], sizes = [32, 9], strides = [1, 1]} : vector<32x97xf32> to vector<32x9xf32>
    %c0_754 = arith.constant 0 : index
    %c89_755 = arith.constant 89 : index
    %639 = vector.load %arg5[%c0_754, %c89_755] : memref<32x324xf32, #tpu.memory_space<vmem>>, vector<32x9xf32>
    tpu.vector_store %arg5[%c0_754, %c89_755], %638 {strides = array<i32>} : memref<32x324xf32, #tpu.memory_space<vmem>>, vector<32x9xf32>,
    %640 = vector.extract_strided_slice %623 {offsets = [0, 88], sizes = [32, 9], strides = [1, 1]} : vector<32x97xf32> to vector<32x9xf32>
    %c0_756 = arith.constant 0 : index
    %c100_757 = arith.constant 100 : index
    %641 = vector.load %arg5[%c0_756, %c100_757] : memref<32x324xf32, #tpu.memory_space<vmem>>, vector<32x9xf32>
    tpu.vector_store %arg5[%c0_756, %c100_757], %640 {strides = array<i32>} : memref<32x324xf32, #tpu.memory_space<vmem>>, vector<32x9xf32>,
    %cst_758 = arith.constant -1.000000e+30 : f32
    %642 = vector.broadcast %cst_758 : f32 to vector<32x12xf32>
    %c0_759 = arith.constant 0 : index
    %c0_760 = arith.constant 0 : index
    %643 = vector.load %arg5[%c0_759, %c0_760] : memref<32x324xf32, #tpu.memory_space<vmem>>, vector<32x12xf32>
    tpu.vector_store %arg5[%c0_759, %c0_760], %642 {strides = array<i32>} : memref<32x324xf32, #tpu.memory_space<vmem>>, vector<32x12xf32>,
    %cst_761 = arith.constant -1.000000e+30 : f32
    %644 = vector.broadcast %cst_761 : f32 to vector<32x12xf32>
    %c0_762 = arith.constant 0 : index
    %c109_763 = arith.constant 109 : index
    %645 = vector.load %arg5[%c0_762, %c109_763] : memref<32x324xf32, #tpu.memory_space<vmem>>, vector<32x12xf32>
    tpu.vector_store %arg5[%c0_762, %c109_763], %644 {strides = array<i32>} : memref<32x324xf32, #tpu.memory_space<vmem>>, vector<32x12xf32>,
    %cst_764 = arith.constant -1.000000e+30 : f32
    %646 = vector.broadcast %cst_764 : f32 to vector<32x2xf32>
    %c0_765 = arith.constant 0 : index
    %c21_766 = arith.constant 21 : index
    %647 = vector.load %arg5[%c0_765, %c21_766] : memref<32x324xf32, #tpu.memory_space<vmem>>, vector<32x2xf32>
    tpu.vector_store %arg5[%c0_765, %c21_766], %646 {strides = array<i32>} : memref<32x324xf32, #tpu.memory_space<vmem>>, vector<32x2xf32>,
    %cst_767 = arith.constant -1.000000e+30 : f32
    %648 = vector.broadcast %cst_767 : f32 to vector<32x2xf32>
    %c0_768 = arith.constant 0 : index
    %c32_769 = arith.constant 32 : index
    %649 = vector.load %arg5[%c0_768, %c32_769] : memref<32x324xf32, #tpu.memory_space<vmem>>, vector<32x2xf32>
    tpu.vector_store %arg5[%c0_768, %c32_769], %648 {strides = array<i32>} : memref<32x324xf32, #tpu.memory_space<vmem>>, vector<32x2xf32>,
    %cst_770 = arith.constant -1.000000e+30 : f32
    %650 = vector.broadcast %cst_770 : f32 to vector<32x2xf32>
    %c0_771 = arith.constant 0 : index
    %c43_772 = arith.constant 43 : index
    %651 = vector.load %arg5[%c0_771, %c43_772] : memref<32x324xf32, #tpu.memory_space<vmem>>, vector<32x2xf32>
    tpu.vector_store %arg5[%c0_771, %c43_772], %650 {strides = array<i32>} : memref<32x324xf32, #tpu.memory_space<vmem>>, vector<32x2xf32>,
    %cst_773 = arith.constant -1.000000e+30 : f32
    %652 = vector.broadcast %cst_773 : f32 to vector<32x2xf32>
    %c0_774 = arith.constant 0 : index
    %c54_775 = arith.constant 54 : index
    %653 = vector.load %arg5[%c0_774, %c54_775] : memref<32x324xf32, #tpu.memory_space<vmem>>, vector<32x2xf32>
    tpu.vector_store %arg5[%c0_774, %c54_775], %652 {strides = array<i32>} : memref<32x324xf32, #tpu.memory_space<vmem>>, vector<32x2xf32>,
    %cst_776 = arith.constant -1.000000e+30 : f32
    %654 = vector.broadcast %cst_776 : f32 to vector<32x2xf32>
    %c0_777 = arith.constant 0 : index
    %c65_778 = arith.constant 65 : index
    %655 = vector.load %arg5[%c0_777, %c65_778] : memref<32x324xf32, #tpu.memory_space<vmem>>, vector<32x2xf32>
    tpu.vector_store %arg5[%c0_777, %c65_778], %654 {strides = array<i32>} : memref<32x324xf32, #tpu.memory_space<vmem>>, vector<32x2xf32>,
    %cst_779 = arith.constant -1.000000e+30 : f32
    %656 = vector.broadcast %cst_779 : f32 to vector<32x2xf32>
    %c0_780 = arith.constant 0 : index
    %c76_781 = arith.constant 76 : index
    %657 = vector.load %arg5[%c0_780, %c76_781] : memref<32x324xf32, #tpu.memory_space<vmem>>, vector<32x2xf32>
    tpu.vector_store %arg5[%c0_780, %c76_781], %656 {strides = array<i32>} : memref<32x324xf32, #tpu.memory_space<vmem>>, vector<32x2xf32>,
    %cst_782 = arith.constant -1.000000e+30 : f32
    %658 = vector.broadcast %cst_782 : f32 to vector<32x2xf32>
    %c0_783 = arith.constant 0 : index
    %c87_784 = arith.constant 87 : index
    %659 = vector.load %arg5[%c0_783, %c87_784] : memref<32x324xf32, #tpu.memory_space<vmem>>, vector<32x2xf32>
    tpu.vector_store %arg5[%c0_783, %c87_784], %658 {strides = array<i32>} : memref<32x324xf32, #tpu.memory_space<vmem>>, vector<32x2xf32>,
    %cst_785 = arith.constant -1.000000e+30 : f32
    %660 = vector.broadcast %cst_785 : f32 to vector<32x2xf32>
    %c0_786 = arith.constant 0 : index
    %c98_787 = arith.constant 98 : index
    %661 = vector.load %arg5[%c0_786, %c98_787] : memref<32x324xf32, #tpu.memory_space<vmem>>, vector<32x2xf32>
    tpu.vector_store %arg5[%c0_786, %c98_787], %660 {strides = array<i32>} : memref<32x324xf32, #tpu.memory_space<vmem>>, vector<32x2xf32>,
    %662 = tpu.iota {dimensions = array<i32: 0>} : vector<9x5xi32>
    %663 = tpu.iota {dimensions = array<i32: 1>} : vector<9x5xi32>
    %c2_i32_788 = arith.constant 2 : i32
    %664 = vector.broadcast %c2_i32_788 : i32 to vector<9x5xi32>
    %665 = arith.muli %664, %663 : vector<9x5xi32>
    %666 = arith.cmpi eq, %662, %665 : vector<9x5xi32>
    %667 = arith.extui %666 : vector<9x5xi1> to vector<9x5xi32>
    %668 = arith.sitofp %667 : vector<9x5xi32> to vector<9x5xf32>
    %c0_789 = arith.constant 0 : index
    %c0_790 = arith.constant 0 : index
    %669 = vector.load %arg5[%c0_789, %c0_790] : memref<32x324xf32, #tpu.memory_space<vmem>>, vector<32x9xf32>
    %c0_791 = arith.constant 0 : index
    %c1_792 = arith.constant 1 : index
    %670 = vector.load %arg5[%c0_791, %c1_792] : memref<32x324xf32, #tpu.memory_space<vmem>>, vector<32x9xf32>
    %671 = arith.maximumf %669, %670 : vector<32x9xf32>
    %c0_793 = arith.constant 0 : index
    %c11_794 = arith.constant 11 : index
    %672 = vector.load %arg5[%c0_793, %c11_794] : memref<32x324xf32, #tpu.memory_space<vmem>>, vector<32x9xf32>
    %c0_795 = arith.constant 0 : index
    %c12_796 = arith.constant 12 : index
    %673 = vector.load %arg5[%c0_795, %c12_796] : memref<32x324xf32, #tpu.memory_space<vmem>>, vector<32x9xf32>
    %674 = arith.maximumf %672, %673 : vector<32x9xf32>
    %675 = arith.maximumf %671, %674 : vector<32x9xf32>
    %cst_797 = arith.constant dense<0.000000e+00> : vector<32x5xf32>
    %676 = tpu.matmul %675, %668, %cst_797 {dimension_numbers = #tpu.dot_dimension_numbers<[1], [0], [0], [1], [0, 0, 1, 1], [], []>} : vector<32x9xf32>, vector<9x5xf32>, vector<32x5xf32> -> vector<32x5xf32>
    %c0_798 = arith.constant 0 : index
    %c0_799 = arith.constant 0 : index
    %677 = vector.load %arg5[%c0_798, %c0_799] : memref<32x324xf32, #tpu.memory_space<vmem>>, vector<32x5xf32>
    tpu.vector_store %arg5[%c0_798, %c0_799], %676 {strides = array<i32>} : memref<32x324xf32, #tpu.memory_space<vmem>>, vector<32x5xf32>,
    %c0_800 = arith.constant 0 : index
    %c22_801 = arith.constant 22 : index
    %678 = vector.load %arg5[%c0_800, %c22_801] : memref<32x324xf32, #tpu.memory_space<vmem>>, vector<32x9xf32>
    %c0_802 = arith.constant 0 : index
    %c23_803 = arith.constant 23 : index
    %679 = vector.load %arg5[%c0_802, %c23_803] : memref<32x324xf32, #tpu.memory_space<vmem>>, vector<32x9xf32>
    %680 = arith.maximumf %678, %679 : vector<32x9xf32>
    %c0_804 = arith.constant 0 : index
    %c33 = arith.constant 33 : index
    %681 = vector.load %arg5[%c0_804, %c33] : memref<32x324xf32, #tpu.memory_space<vmem>>, vector<32x9xf32>
    %c0_805 = arith.constant 0 : index
    %c34_806 = arith.constant 34 : index
    %682 = vector.load %arg5[%c0_805, %c34_806] : memref<32x324xf32, #tpu.memory_space<vmem>>, vector<32x9xf32>
    %683 = arith.maximumf %681, %682 : vector<32x9xf32>
    %684 = arith.maximumf %680, %683 : vector<32x9xf32>
    %cst_807 = arith.constant dense<0.000000e+00> : vector<32x5xf32>
    %685 = tpu.matmul %684, %668, %cst_807 {dimension_numbers = #tpu.dot_dimension_numbers<[1], [0], [0], [1], [0, 0, 1, 1], [], []>} : vector<32x9xf32>, vector<9x5xf32>, vector<32x5xf32> -> vector<32x5xf32>
    %c0_808 = arith.constant 0 : index
    %c5 = arith.constant 5 : index
    %686 = vector.load %arg5[%c0_808, %c5] : memref<32x324xf32, #tpu.memory_space<vmem>>, vector<32x5xf32>
    tpu.vector_store %arg5[%c0_808, %c5], %685 {strides = array<i32>} : memref<32x324xf32, #tpu.memory_space<vmem>>, vector<32x5xf32>,
    %c0_809 = arith.constant 0 : index
    %c44 = arith.constant 44 : index
    %687 = vector.load %arg5[%c0_809, %c44] : memref<32x324xf32, #tpu.memory_space<vmem>>, vector<32x9xf32>
    %c0_810 = arith.constant 0 : index
    %c45_811 = arith.constant 45 : index
    %688 = vector.load %arg5[%c0_810, %c45_811] : memref<32x324xf32, #tpu.memory_space<vmem>>, vector<32x9xf32>
    %689 = arith.maximumf %687, %688 : vector<32x9xf32>
    %c0_812 = arith.constant 0 : index
    %c55_813 = arith.constant 55 : index
    %690 = vector.load %arg5[%c0_812, %c55_813] : memref<32x324xf32, #tpu.memory_space<vmem>>, vector<32x9xf32>
    %c0_814 = arith.constant 0 : index
    %c56_815 = arith.constant 56 : index
    %691 = vector.load %arg5[%c0_814, %c56_815] : memref<32x324xf32, #tpu.memory_space<vmem>>, vector<32x9xf32>
    %692 = arith.maximumf %690, %691 : vector<32x9xf32>
    %693 = arith.maximumf %689, %692 : vector<32x9xf32>
    %cst_816 = arith.constant dense<0.000000e+00> : vector<32x5xf32>
    %694 = tpu.matmul %693, %668, %cst_816 {dimension_numbers = #tpu.dot_dimension_numbers<[1], [0], [0], [1], [0, 0, 1, 1], [], []>} : vector<32x9xf32>, vector<9x5xf32>, vector<32x5xf32> -> vector<32x5xf32>
    %c0_817 = arith.constant 0 : index
    %c10 = arith.constant 10 : index
    %695 = vector.load %arg5[%c0_817, %c10] : memref<32x324xf32, #tpu.memory_space<vmem>>, vector<32x5xf32>
    tpu.vector_store %arg5[%c0_817, %c10], %694 {strides = array<i32>} : memref<32x324xf32, #tpu.memory_space<vmem>>, vector<32x5xf32>,
    %c0_818 = arith.constant 0 : index
    %c66 = arith.constant 66 : index
    %696 = vector.load %arg5[%c0_818, %c66] : memref<32x324xf32, #tpu.memory_space<vmem>>, vector<32x9xf32>
    %c0_819 = arith.constant 0 : index
    %c67_820 = arith.constant 67 : index
    %697 = vector.load %arg5[%c0_819, %c67_820] : memref<32x324xf32, #tpu.memory_space<vmem>>, vector<32x9xf32>
    %698 = arith.maximumf %696, %697 : vector<32x9xf32>
    %c0_821 = arith.constant 0 : index
    %c77 = arith.constant 77 : index
    %699 = vector.load %arg5[%c0_821, %c77] : memref<32x324xf32, #tpu.memory_space<vmem>>, vector<32x9xf32>
    %c0_822 = arith.constant 0 : index
    %c78_823 = arith.constant 78 : index
    %700 = vector.load %arg5[%c0_822, %c78_823] : memref<32x324xf32, #tpu.memory_space<vmem>>, vector<32x9xf32>
    %701 = arith.maximumf %699, %700 : vector<32x9xf32>
    %702 = arith.maximumf %698, %701 : vector<32x9xf32>
    %cst_824 = arith.constant dense<0.000000e+00> : vector<32x5xf32>
    %703 = tpu.matmul %702, %668, %cst_824 {dimension_numbers = #tpu.dot_dimension_numbers<[1], [0], [0], [1], [0, 0, 1, 1], [], []>} : vector<32x9xf32>, vector<9x5xf32>, vector<32x5xf32> -> vector<32x5xf32>
    %c0_825 = arith.constant 0 : index
    %c15_826 = arith.constant 15 : index
    %704 = vector.load %arg5[%c0_825, %c15_826] : memref<32x324xf32, #tpu.memory_space<vmem>>, vector<32x5xf32>
    tpu.vector_store %arg5[%c0_825, %c15_826], %703 {strides = array<i32>} : memref<32x324xf32, #tpu.memory_space<vmem>>, vector<32x5xf32>,
    %c0_827 = arith.constant 0 : index
    %c88 = arith.constant 88 : index
    %705 = vector.load %arg5[%c0_827, %c88] : memref<32x324xf32, #tpu.memory_space<vmem>>, vector<32x9xf32>
    %c0_828 = arith.constant 0 : index
    %c89_829 = arith.constant 89 : index
    %706 = vector.load %arg5[%c0_828, %c89_829] : memref<32x324xf32, #tpu.memory_space<vmem>>, vector<32x9xf32>
    %707 = arith.maximumf %705, %706 : vector<32x9xf32>
    %c0_830 = arith.constant 0 : index
    %c99 = arith.constant 99 : index
    %708 = vector.load %arg5[%c0_830, %c99] : memref<32x324xf32, #tpu.memory_space<vmem>>, vector<32x9xf32>
    %c0_831 = arith.constant 0 : index
    %c100_832 = arith.constant 100 : index
    %709 = vector.load %arg5[%c0_831, %c100_832] : memref<32x324xf32, #tpu.memory_space<vmem>>, vector<32x9xf32>
    %710 = arith.maximumf %708, %709 : vector<32x9xf32>
    %711 = arith.maximumf %707, %710 : vector<32x9xf32>
    %cst_833 = arith.constant dense<0.000000e+00> : vector<32x5xf32>
    %712 = tpu.matmul %711, %668, %cst_833 {dimension_numbers = #tpu.dot_dimension_numbers<[1], [0], [0], [1], [0, 0, 1, 1], [], []>} : vector<32x9xf32>, vector<9x5xf32>, vector<32x5xf32> -> vector<32x5xf32>
    %c0_834 = arith.constant 0 : index
    %c20_835 = arith.constant 20 : index
    %713 = vector.load %arg5[%c0_834, %c20_835] : memref<32x324xf32, #tpu.memory_space<vmem>>, vector<32x5xf32>
    tpu.vector_store %arg5[%c0_834, %c20_835], %712 {strides = array<i32>} : memref<32x324xf32, #tpu.memory_space<vmem>>, vector<32x5xf32>,
    %c0_836 = arith.constant 0 : index
    %c0_837 = arith.constant 0 : index
    %714 = vector.load %arg5[%c0_836, %c0_837] : memref<32x324xf32, #tpu.memory_space<vmem>>, vector<32x13xf32>
    %c0_838 = arith.constant 0 : index
    %c0_839 = arith.constant 0 : index
    %715 = vector.load %arg6[%c0_838, %c0_839] : memref<288x286xf32, #tpu.memory_space<vmem>>, vector<32x13xf32>
    tpu.vector_store %arg6[%c0_838, %c0_839], %714 {strides = array<i32>} : memref<288x286xf32, #tpu.memory_space<vmem>>, vector<32x13xf32>,
    %c0_840 = arith.constant 0 : index
    %c1_841 = arith.constant 1 : index
    %716 = vector.load %arg5[%c0_840, %c1_841] : memref<32x324xf32, #tpu.memory_space<vmem>>, vector<32x13xf32>
    %c32_842 = arith.constant 32 : index
    %c0_843 = arith.constant 0 : index
    %717 = vector.load %arg6[%c32_842, %c0_843] : memref<288x286xf32, #tpu.memory_space<vmem>>, vector<32x13xf32>
    tpu.vector_store %arg6[%c32_842, %c0_843], %716 {strides = array<i32>} : memref<288x286xf32, #tpu.memory_space<vmem>>, vector<32x13xf32>,
    %c0_844 = arith.constant 0 : index
    %c2_845 = arith.constant 2 : index
    %718 = vector.load %arg5[%c0_844, %c2_845] : memref<32x324xf32, #tpu.memory_space<vmem>>, vector<32x13xf32>
    %c64_846 = arith.constant 64 : index
    %c0_847 = arith.constant 0 : index
    %719 = vector.load %arg6[%c64_846, %c0_847] : memref<288x286xf32, #tpu.memory_space<vmem>>, vector<32x13xf32>
    tpu.vector_store %arg6[%c64_846, %c0_847], %718 {strides = array<i32>} : memref<288x286xf32, #tpu.memory_space<vmem>>, vector<32x13xf32>,
    %c0_848 = arith.constant 0 : index
    %c5_849 = arith.constant 5 : index
    %720 = vector.load %arg5[%c0_848, %c5_849] : memref<32x324xf32, #tpu.memory_space<vmem>>, vector<32x13xf32>
    %c96_850 = arith.constant 96 : index
    %c0_851 = arith.constant 0 : index
    %721 = vector.load %arg6[%c96_850, %c0_851] : memref<288x286xf32, #tpu.memory_space<vmem>>, vector<32x13xf32>
    tpu.vector_store %arg6[%c96_850, %c0_851], %720 {strides = array<i32>} : memref<288x286xf32, #tpu.memory_space<vmem>>, vector<32x13xf32>,
    %c0_852 = arith.constant 0 : index
    %c6_853 = arith.constant 6 : index
    %722 = vector.load %arg5[%c0_852, %c6_853] : memref<32x324xf32, #tpu.memory_space<vmem>>, vector<32x13xf32>
    %c128_854 = arith.constant 128 : index
    %c0_855 = arith.constant 0 : index
    %723 = vector.load %arg6[%c128_854, %c0_855] : memref<288x286xf32, #tpu.memory_space<vmem>>, vector<32x13xf32>
    tpu.vector_store %arg6[%c128_854, %c0_855], %722 {strides = array<i32>} : memref<288x286xf32, #tpu.memory_space<vmem>>, vector<32x13xf32>,
    %c0_856 = arith.constant 0 : index
    %c7 = arith.constant 7 : index
    %724 = vector.load %arg5[%c0_856, %c7] : memref<32x324xf32, #tpu.memory_space<vmem>>, vector<32x13xf32>
    %c160_857 = arith.constant 160 : index
    %c0_858 = arith.constant 0 : index
    %725 = vector.load %arg6[%c160_857, %c0_858] : memref<288x286xf32, #tpu.memory_space<vmem>>, vector<32x13xf32>
    tpu.vector_store %arg6[%c160_857, %c0_858], %724 {strides = array<i32>} : memref<288x286xf32, #tpu.memory_space<vmem>>, vector<32x13xf32>,
    %c0_859 = arith.constant 0 : index
    %c10_860 = arith.constant 10 : index
    %726 = vector.load %arg5[%c0_859, %c10_860] : memref<32x324xf32, #tpu.memory_space<vmem>>, vector<32x13xf32>
    %c192_861 = arith.constant 192 : index
    %c0_862 = arith.constant 0 : index
    %727 = vector.load %arg6[%c192_861, %c0_862] : memref<288x286xf32, #tpu.memory_space<vmem>>, vector<32x13xf32>
    tpu.vector_store %arg6[%c192_861, %c0_862], %726 {strides = array<i32>} : memref<288x286xf32, #tpu.memory_space<vmem>>, vector<32x13xf32>,
    %c0_863 = arith.constant 0 : index
    %c11_864 = arith.constant 11 : index
    %728 = vector.load %arg5[%c0_863, %c11_864] : memref<32x324xf32, #tpu.memory_space<vmem>>, vector<32x13xf32>
    %c224_865 = arith.constant 224 : index
    %c0_866 = arith.constant 0 : index
    %729 = vector.load %arg6[%c224_865, %c0_866] : memref<288x286xf32, #tpu.memory_space<vmem>>, vector<32x13xf32>
    tpu.vector_store %arg6[%c224_865, %c0_866], %728 {strides = array<i32>} : memref<288x286xf32, #tpu.memory_space<vmem>>, vector<32x13xf32>,
    %c0_867 = arith.constant 0 : index
    %c12_868 = arith.constant 12 : index
    %730 = vector.load %arg5[%c0_867, %c12_868] : memref<32x324xf32, #tpu.memory_space<vmem>>, vector<32x13xf32>
    %c256_869 = arith.constant 256 : index
    %c0_870 = arith.constant 0 : index
    %731 = vector.load %arg6[%c256_869, %c0_870] : memref<288x286xf32, #tpu.memory_space<vmem>>, vector<32x13xf32>
    tpu.vector_store %arg6[%c256_869, %c0_870], %730 {strides = array<i32>} : memref<288x286xf32, #tpu.memory_space<vmem>>, vector<32x13xf32>,
    %c0_871 = arith.constant 0 : index
    %c0_872 = arith.constant 0 : index
    %732 = vector.load %arg6[%c0_871, %c0_872] : memref<288x286xf32, #tpu.memory_space<vmem>>, vector<288x13xf32>
    %c144_873 = arith.constant 144 : index
    %c0_874 = arith.constant 0 : index
    %733 = vector.load %arg2[%c144_873, %c0_874] : memref<400x289xf32, #tpu.memory_space<vmem>>, vector<32x288xf32>
    %c144_875 = arith.constant 144 : index
    %c288_876 = arith.constant 288 : index
    %734 = vector.load %arg2[%c144_875, %c288_876] : memref<400x289xf32, #tpu.memory_space<vmem>>, vector<32x1xf32>
    %cst_877 = arith.constant dense<0.000000e+00> : vector<32x13xf32>
    %735 = tpu.matmul %733, %732, %cst_877 {dimension_numbers = #tpu.dot_dimension_numbers<[1], [0], [0], [1], [0, 0, 1, 1], [], []>} : vector<32x288xf32>, vector<288x13xf32>, vector<32x13xf32> -> vector<32x13xf32>
    %736 = vector.broadcast %734 : vector<32x1xf32> to vector<32x13xf32>
    %737 = arith.addf %735, %736 : vector<32x13xf32>
    %cst_878 = arith.constant 0.000000e+00 : f32
    %738 = vector.broadcast %cst_878 : f32 to vector<32x13xf32>
    %739 = arith.cmpf ogt, %737, %738 : vector<32x13xf32>
    %cst_879 = arith.constant 1.000000e-01 : f32
    %740 = vector.broadcast %cst_879 : f32 to vector<32x13xf32>
    %741 = arith.mulf %740, %737 : vector<32x13xf32>
    %742 = arith.select %739, %737, %741 : vector<32x13xi1>, vector<32x13xf32>
    %743 = vector.extract_strided_slice %742 {offsets = [0, 0], sizes = [32, 3], strides = [1, 1]} : vector<32x13xf32> to vector<32x3xf32>
    %c0_880 = arith.constant 0 : index
    %c6_881 = arith.constant 6 : index
    %744 = vector.load %arg5[%c0_880, %c6_881] : memref<32x324xf32, #tpu.memory_space<vmem>>, vector<32x3xf32>
    tpu.vector_store %arg5[%c0_880, %c6_881], %743 {strides = array<i32>} : memref<32x324xf32, #tpu.memory_space<vmem>>, vector<32x3xf32>,
    %745 = vector.extract_strided_slice %742 {offsets = [0, 5], sizes = [32, 3], strides = [1, 1]} : vector<32x13xf32> to vector<32x3xf32>
    %c0_882 = arith.constant 0 : index
    %c11_883 = arith.constant 11 : index
    %746 = vector.load %arg5[%c0_882, %c11_883] : memref<32x324xf32, #tpu.memory_space<vmem>>, vector<32x3xf32>
    tpu.vector_store %arg5[%c0_882, %c11_883], %745 {strides = array<i32>} : memref<32x324xf32, #tpu.memory_space<vmem>>, vector<32x3xf32>,
    %747 = vector.extract_strided_slice %742 {offsets = [0, 10], sizes = [32, 3], strides = [1, 1]} : vector<32x13xf32> to vector<32x3xf32>
    %c0_884 = arith.constant 0 : index
    %c16_885 = arith.constant 16 : index
    %748 = vector.load %arg5[%c0_884, %c16_885] : memref<32x324xf32, #tpu.memory_space<vmem>>, vector<32x3xf32>
    tpu.vector_store %arg5[%c0_884, %c16_885], %747 {strides = array<i32>} : memref<32x324xf32, #tpu.memory_space<vmem>>, vector<32x3xf32>,
    %cst_886 = arith.constant 0.000000e+00 : f32
    %749 = vector.broadcast %cst_886 : f32 to vector<32x6xf32>
    %c0_887 = arith.constant 0 : index
    %c0_888 = arith.constant 0 : index
    %750 = vector.load %arg5[%c0_887, %c0_888] : memref<32x324xf32, #tpu.memory_space<vmem>>, vector<32x6xf32>
    tpu.vector_store %arg5[%c0_887, %c0_888], %749 {strides = array<i32>} : memref<32x324xf32, #tpu.memory_space<vmem>>, vector<32x6xf32>,
    %cst_889 = arith.constant 0.000000e+00 : f32
    %751 = vector.broadcast %cst_889 : f32 to vector<32x6xf32>
    %c0_890 = arith.constant 0 : index
    %c19_891 = arith.constant 19 : index
    %752 = vector.load %arg5[%c0_890, %c19_891] : memref<32x324xf32, #tpu.memory_space<vmem>>, vector<32x6xf32>
    tpu.vector_store %arg5[%c0_890, %c19_891], %751 {strides = array<i32>} : memref<32x324xf32, #tpu.memory_space<vmem>>, vector<32x6xf32>,
    %cst_892 = arith.constant 0.000000e+00 : f32
    %753 = vector.broadcast %cst_892 : f32 to vector<32x2xf32>
    %c0_893 = arith.constant 0 : index
    %c9_894 = arith.constant 9 : index
    %754 = vector.load %arg5[%c0_893, %c9_894] : memref<32x324xf32, #tpu.memory_space<vmem>>, vector<32x2xf32>
    tpu.vector_store %arg5[%c0_893, %c9_894], %753 {strides = array<i32>} : memref<32x324xf32, #tpu.memory_space<vmem>>, vector<32x2xf32>,
    %cst_895 = arith.constant 0.000000e+00 : f32
    %755 = vector.broadcast %cst_895 : f32 to vector<32x2xf32>
    %c0_896 = arith.constant 0 : index
    %c14 = arith.constant 14 : index
    %756 = vector.load %arg5[%c0_896, %c14] : memref<32x324xf32, #tpu.memory_space<vmem>>, vector<32x2xf32>
    tpu.vector_store %arg5[%c0_896, %c14], %755 {strides = array<i32>} : memref<32x324xf32, #tpu.memory_space<vmem>>, vector<32x2xf32>,
    %c0_897 = arith.constant 0 : index
    %c0_898 = arith.constant 0 : index
    %757 = vector.load %arg5[%c0_897, %c0_898] : memref<32x324xf32, #tpu.memory_space<vmem>>, vector<32x25xf32>
    %c176 = arith.constant 176 : index
    %c0_899 = arith.constant 0 : index
    %758 = vector.load %arg2[%c176, %c0_899] : memref<400x289xf32, #tpu.memory_space<vmem>>, vector<32x32xf32>
    %c176_900 = arith.constant 176 : index
    %c288_901 = arith.constant 288 : index
    %759 = vector.load %arg2[%c176_900, %c288_901] : memref<400x289xf32, #tpu.memory_space<vmem>>, vector<32x1xf32>
    %cst_902 = arith.constant dense<0.000000e+00> : vector<32x25xf32>
    %760 = tpu.matmul %758, %757, %cst_902 {dimension_numbers = #tpu.dot_dimension_numbers<[1], [0], [0], [1], [0, 0, 1, 1], [], []>} : vector<32x32xf32>, vector<32x25xf32>, vector<32x25xf32> -> vector<32x25xf32>
    %761 = vector.broadcast %759 : vector<32x1xf32> to vector<32x25xf32>
    %762 = arith.addf %760, %761 : vector<32x25xf32>
    %cst_903 = arith.constant 0.000000e+00 : f32
    %763 = vector.broadcast %cst_903 : f32 to vector<32x25xf32>
    %764 = arith.cmpf ogt, %762, %763 : vector<32x25xf32>
    %cst_904 = arith.constant 1.000000e-01 : f32
    %765 = vector.broadcast %cst_904 : f32 to vector<32x25xf32>
    %766 = arith.mulf %765, %762 : vector<32x25xf32>
    %767 = arith.select %764, %762, %766 : vector<32x25xi1>, vector<32x25xf32>
    %768 = vector.extract_strided_slice %767 {offsets = [0, 0], sizes = [32, 5], strides = [1, 1]} : vector<32x25xf32> to vector<32x5xf32>
    %c0_905 = arith.constant 0 : index
    %c8 = arith.constant 8 : index
    %769 = vector.load %arg5[%c0_905, %c8] : memref<32x324xf32, #tpu.memory_space<vmem>>, vector<32x5xf32>
    tpu.vector_store %arg5[%c0_905, %c8], %768 {strides = array<i32>} : memref<32x324xf32, #tpu.memory_space<vmem>>, vector<32x5xf32>,
    %770 = vector.extract_strided_slice %767 {offsets = [0, 5], sizes = [32, 5], strides = [1, 1]} : vector<32x25xf32> to vector<32x5xf32>
    %c0_906 = arith.constant 0 : index
    %c15_907 = arith.constant 15 : index
    %771 = vector.load %arg5[%c0_906, %c15_907] : memref<32x324xf32, #tpu.memory_space<vmem>>, vector<32x5xf32>
    tpu.vector_store %arg5[%c0_906, %c15_907], %770 {strides = array<i32>} : memref<32x324xf32, #tpu.memory_space<vmem>>, vector<32x5xf32>,
    %772 = vector.extract_strided_slice %767 {offsets = [0, 10], sizes = [32, 5], strides = [1, 1]} : vector<32x25xf32> to vector<32x5xf32>
    %c0_908 = arith.constant 0 : index
    %c22_909 = arith.constant 22 : index
    %773 = vector.load %arg5[%c0_908, %c22_909] : memref<32x324xf32, #tpu.memory_space<vmem>>, vector<32x5xf32>
    tpu.vector_store %arg5[%c0_908, %c22_909], %772 {strides = array<i32>} : memref<32x324xf32, #tpu.memory_space<vmem>>, vector<32x5xf32>,
    %774 = vector.extract_strided_slice %767 {offsets = [0, 15], sizes = [32, 5], strides = [1, 1]} : vector<32x25xf32> to vector<32x5xf32>
    %c0_910 = arith.constant 0 : index
    %c29 = arith.constant 29 : index
    %775 = vector.load %arg5[%c0_910, %c29] : memref<32x324xf32, #tpu.memory_space<vmem>>, vector<32x5xf32>
    tpu.vector_store %arg5[%c0_910, %c29], %774 {strides = array<i32>} : memref<32x324xf32, #tpu.memory_space<vmem>>, vector<32x5xf32>,
    %776 = vector.extract_strided_slice %767 {offsets = [0, 20], sizes = [32, 5], strides = [1, 1]} : vector<32x25xf32> to vector<32x5xf32>
    %c0_911 = arith.constant 0 : index
    %c36_912 = arith.constant 36 : index
    %777 = vector.load %arg5[%c0_911, %c36_912] : memref<32x324xf32, #tpu.memory_space<vmem>>, vector<32x5xf32>
    tpu.vector_store %arg5[%c0_911, %c36_912], %776 {strides = array<i32>} : memref<32x324xf32, #tpu.memory_space<vmem>>, vector<32x5xf32>,
    %cst_913 = arith.constant 0.000000e+00 : f32
    %778 = vector.broadcast %cst_913 : f32 to vector<32x8xf32>
    %c0_914 = arith.constant 0 : index
    %c0_915 = arith.constant 0 : index
    %779 = vector.load %arg5[%c0_914, %c0_915] : memref<32x324xf32, #tpu.memory_space<vmem>>, vector<32x8xf32>
    tpu.vector_store %arg5[%c0_914, %c0_915], %778 {strides = array<i32>} : memref<32x324xf32, #tpu.memory_space<vmem>>, vector<32x8xf32>,
    %cst_916 = arith.constant 0.000000e+00 : f32
    %780 = vector.broadcast %cst_916 : f32 to vector<32x8xf32>
    %c0_917 = arith.constant 0 : index
    %c41 = arith.constant 41 : index
    %781 = vector.load %arg5[%c0_917, %c41] : memref<32x324xf32, #tpu.memory_space<vmem>>, vector<32x8xf32>
    tpu.vector_store %arg5[%c0_917, %c41], %780 {strides = array<i32>} : memref<32x324xf32, #tpu.memory_space<vmem>>, vector<32x8xf32>,
    %cst_918 = arith.constant 0.000000e+00 : f32
    %782 = vector.broadcast %cst_918 : f32 to vector<32x2xf32>
    %c0_919 = arith.constant 0 : index
    %c13_920 = arith.constant 13 : index
    %783 = vector.load %arg5[%c0_919, %c13_920] : memref<32x324xf32, #tpu.memory_space<vmem>>, vector<32x2xf32>
    tpu.vector_store %arg5[%c0_919, %c13_920], %782 {strides = array<i32>} : memref<32x324xf32, #tpu.memory_space<vmem>>, vector<32x2xf32>,
    %cst_921 = arith.constant 0.000000e+00 : f32
    %784 = vector.broadcast %cst_921 : f32 to vector<32x2xf32>
    %c0_922 = arith.constant 0 : index
    %c20_923 = arith.constant 20 : index
    %785 = vector.load %arg5[%c0_922, %c20_923] : memref<32x324xf32, #tpu.memory_space<vmem>>, vector<32x2xf32>
    tpu.vector_store %arg5[%c0_922, %c20_923], %784 {strides = array<i32>} : memref<32x324xf32, #tpu.memory_space<vmem>>, vector<32x2xf32>,
    %cst_924 = arith.constant 0.000000e+00 : f32
    %786 = vector.broadcast %cst_924 : f32 to vector<32x2xf32>
    %c0_925 = arith.constant 0 : index
    %c27 = arith.constant 27 : index
    %787 = vector.load %arg5[%c0_925, %c27] : memref<32x324xf32, #tpu.memory_space<vmem>>, vector<32x2xf32>
    tpu.vector_store %arg5[%c0_925, %c27], %786 {strides = array<i32>} : memref<32x324xf32, #tpu.memory_space<vmem>>, vector<32x2xf32>,
    %cst_926 = arith.constant 0.000000e+00 : f32
    %788 = vector.broadcast %cst_926 : f32 to vector<32x2xf32>
    %c0_927 = arith.constant 0 : index
    %c34_928 = arith.constant 34 : index
    %789 = vector.load %arg5[%c0_927, %c34_928] : memref<32x324xf32, #tpu.memory_space<vmem>>, vector<32x2xf32>
    tpu.vector_store %arg5[%c0_927, %c34_928], %788 {strides = array<i32>} : memref<32x324xf32, #tpu.memory_space<vmem>>, vector<32x2xf32>,
    %c0_929 = arith.constant 0 : index
    %c0_930 = arith.constant 0 : index
    %790 = vector.load %arg5[%c0_929, %c0_930] : memref<32x324xf32, #tpu.memory_space<vmem>>, vector<32x49xf32>
    %c208 = arith.constant 208 : index
    %c0_931 = arith.constant 0 : index
    %791 = vector.load %arg2[%c208, %c0_931] : memref<400x289xf32, #tpu.memory_space<vmem>>, vector<192x32xf32>
    %c208_932 = arith.constant 208 : index
    %c288_933 = arith.constant 288 : index
    %792 = vector.load %arg2[%c208_932, %c288_933] : memref<400x289xf32, #tpu.memory_space<vmem>>, vector<192x1xf32>
    %cst_934 = arith.constant dense<0.000000e+00> : vector<192x49xf32>
    %793 = tpu.matmul %791, %790, %cst_934 {dimension_numbers = #tpu.dot_dimension_numbers<[1], [0], [0], [1], [0, 0, 1, 1], [], []>} : vector<192x32xf32>, vector<32x49xf32>, vector<192x49xf32> -> vector<192x49xf32>
    %794 = vector.broadcast %792 : vector<192x1xf32> to vector<192x49xf32>
    %795 = arith.addf %793, %794 : vector<192x49xf32>
    %cst_935 = arith.constant 0.000000e+00 : f32
    %796 = vector.broadcast %cst_935 : f32 to vector<192x49xf32>
    %797 = arith.cmpf ogt, %795, %796 : vector<192x49xf32>
    %cst_936 = arith.constant 1.000000e-01 : f32
    %798 = vector.broadcast %cst_936 : f32 to vector<192x49xf32>
    %799 = arith.mulf %798, %795 : vector<192x49xf32>
    %800 = arith.select %797, %795, %799 : vector<192x49xi1>, vector<192x49xf32>
    %cst_937 = arith.constant dense<0.000000e+00> : vector<192xf32>
    %801 = vector.multi_reduction <add>, %800, %cst_937 [1] : vector<192x49xf32> to vector<192xf32>
    %802 = vector.shape_cast %801 : vector<192xf32> to vector<192x1xf32>
    %cst_938 = arith.constant 0.0204081628 : f32
    %803 = vector.broadcast %cst_938 : f32 to vector<192x1xf32>
    %804 = arith.mulf %802, %803 : vector<192x1xf32>
    %c0_939 = arith.constant 0 : index
    %c0_940 = arith.constant 0 : index
    %805 = vector.load %arg3[%c0_939, %c0_940] : memref<193x128xf32, #tpu.memory_space<vmem>>, vector<192x128xf32>
    %c192_941 = arith.constant 192 : index
    %c0_942 = arith.constant 0 : index
    %806 = vector.load %arg3[%c192_941, %c0_942] : memref<193x128xf32, #tpu.memory_space<vmem>>, vector<1x128xf32>
    %cst_943 = arith.constant dense<0.000000e+00> : vector<1x128xf32>
    %807 = tpu.matmul %804, %805, %cst_943 {dimension_numbers = #tpu.dot_dimension_numbers<[0], [0], [1], [1], [0, 1, 1, 1], [], []>} : vector<192x1xf32>, vector<192x128xf32>, vector<1x128xf32> -> vector<1x128xf32>
    %808 = arith.addf %807, %806 : vector<1x128xf32>
    %c0_944 = arith.constant 0 : index
    %c0_945 = arith.constant 0 : index
    %c0_946 = arith.constant 0 : index
    %809 = vector.load %arg4[%c0_944, %c0_945, %c0_946] : memref<1x1x128xf32, #tpu.memory_space<vmem>>, vector<1x1x128xf32>
    %810 = vector.shape_cast %809 : vector<1x1x128xf32> to vector<1x128xf32>
    %811 = vector.shape_cast %808 : vector<1x128xf32> to vector<1x1x128xf32>
    tpu.vector_store %arg4[%c0_944, %c0_945, %c0_946], %811 {strides = array<i32>} : memref<1x1x128xf32, #tpu.memory_space<vmem>>, vector<1x1x128xf32>,
    return
  }
  func.func @transform_0(%arg0: i32) -> (i32, i32, i32) {
    %c0_i32 = arith.constant 0 : i32
    %c0_i32_0 = arith.constant 0 : i32
    %c0_i32_1 = arith.constant 0 : i32
    return %arg0, %c0_i32, %c0_i32_0 : i32, i32, i32
  }
  func.func @transform_1(%arg0: i32) -> (i32, i32) {
    %c0_i32 = arith.constant 0 : i32
    %c0_i32_0 = arith.constant 0 : i32
    %c0_i32_1 = arith.constant 0 : i32
    return %c0_i32, %c0_i32_0 : i32, i32
  }
  func.func @transform_2(%arg0: i32) -> (i32, i32) {
    %c0_i32 = arith.constant 0 : i32
    %c0_i32_0 = arith.constant 0 : i32
    %c0_i32_1 = arith.constant 0 : i32
    return %c0_i32, %c0_i32_0 : i32, i32
  }
  func.func @transform_3(%arg0: i32) -> (i32, i32, i32) {
    %c0_i32 = arith.constant 0 : i32
    %c0_i32_0 = arith.constant 0 : i32
    %c0_i32_1 = arith.constant 0 : i32
    return %arg0, %c0_i32, %c0_i32_0 : i32, i32, i32
  }
}

</mosaic_0001>

<llo_original>
// kernel: cnn9b_forward.1
$region0: #{cnn9b_forward.1}
  #allocation0 [shape = 'u32[]', space=smem, size = 0x4, offset = 0x4, fixed_abs, tag = 'smem constant byte address 0x4 - core index']
  #allocation1 [shape = 'u32[144,128]{1,0:T(1,128)}', space=vmem, size = 0x12000, scoped, tag = 'internal scratch']
  #allocation2 [shape = 'f32[32,324]{1,0:T(8,128)}', space=vmem, size = 0xc000, scoped, tag = 'scratch operand']
  #allocation3 [shape = 'f32[288,286]{1,0:T(8,128)}', space=vmem, size = 0x6c000, scoped, tag = 'scratch operand']
  %s0 = inlined_call_operand.vmem [shape: f32[2,3,256], index: 0, kind: input, shape index: {}]
  %s1 = inlined_call_operand.vmem [shape: f32[400,289], index: 1, kind: input, shape index: {}]
  %s2 = inlined_call_operand.vmem [shape: f32[193,128], index: 2, kind: input, shape index: {}]
  %s3 = inlined_call_operand.hbm [shape: f32[2,1,128], index: 3, kind: output, shape index: {}]
  %s4 = sld [smem:[#allocation0]]
  $region45: #{cnn9b_forward.1} parent=0
    _
  %s6 = ssub.s32 1, %s4
  %s7 = scalar_select 0, %s6, %s4
  $region1: #{cnn9b_forward.1} parent=0
    #allocation4 [shape = 'u8[1024]{0}', space=vmem, size = 0x400, scoped, tag = 'output window, operand 0']
    #allocation5 [shape = 's32[2]{0}', space=sflag, size = 0x8, scoped, tag = 'scoped memory for cnn9b_forward.1']
    %8 = vsyncpa [#allocation5], 0
    %s9 = scalar_lea.sflag [#allocation5], 1
    %10 = vsyncpa %s9, 0
    loop: start=0, step=1, limit=4
    $region2: #{cnn9b_forward.1} parent=1 // loop_pre_header
      _
    $region3: #{cnn9b_forward.1} parent=1 // loop_header
      %s12 = sphi 0, %s16
      %p13 = scmp.ge.s32.totalorder %s12, 4
      %s22 = sphi 0, %s24
      %s25 = sphi 0, %s22
      %s26 = sphi 0, %s25
      %s42 = sphi 0, %s26
      %s46 = sphi 0, %s46
      %s48 = sphi 0, %s46
      %s49 = sphi 0, %s48
      %s63 = sphi 0, %s49
      %s67 = sphi 0, %s67
      %s69 = sphi 0, %s67
      %s70 = sphi 0, %s69
      %s84 = sphi 0, %s70
      %s90 = sphi 0, %s92
      %s93 = sphi 0, %s90
      %s94 = sphi 0, %s93
      %s110 = sphi 0, %s94
    $region4: #{cnn9b_forward.1} parent=1 // loop_header_branch
      %15 = sbr.rel (%p13) target = $region8
    $region5: #{cnn9b_forward.1} parent=1 // loop_body
      %s17 = ssub.s32 %s12, 1
      %s18 = ssub.s32 %s12, 2
      %s19 = sadd.s32 %s12, 1
      %s20 = ssub.s32 %s12, %s19
      %p21 = scmp.eq.s32.totalorder %s20, 0
      %s23 = sadd.s32 %s22, 1
      %s24 = scalar_select %p21, %s22, %s23
      %p27 = pneg %p21
      %p28 = scmp.eq.s32.totalorder %s12, 1
      %p29 = por %p27, %p28
      %p30 = scmp.ne.s32.totalorder %s22, %s25
      %p31 = scmp.eq.s32.totalorder %s12, 0
      %p32 = por %p30, %p31
      %p33 = scmp.ne.s32.totalorder %s22, %s25
      %p34 = scmp.eq.s32.totalorder %s17, 1
      %p35 = por %p33, %p34
      %p36 = scmp.ne.s32.totalorder %s25, %s26
      %p37 = scmp.eq.s32.totalorder %s17, 0
      %p38 = por %p36, %p37
      %p39 = scmp.ne.s32.totalorder %s25, %s26
      %p40 = scmp.eq.s32.totalorder %s18, 1
      %p41 = por %p39, %p40
      %p43 = scmp.ne.s32.totalorder %s26, %s42
      %p44 = scmp.eq.s32.totalorder %s18, 0
      %p45 = por %p43, %p44
      %s47 = sadd.s32 %s46, 1
      %p50 = scmp.eq.s32.totalorder %s12, 1
      %p51 = scmp.ne.s32.totalorder %s46, %s48
      %p52 = scmp.eq.s32.totalorder %s12, 0
      %p53 = por %p51, %p52
      %p54 = scmp.ne.s32.totalorder %s46, %s48
      %p55 = scmp.eq.s32.totalorder %s17, 1
      %p56 = por %p54, %p55
      %p57 = scmp.ne.s32.totalorder %s48, %s49
      %p58 = scmp.eq.s32.totalorder %s17, 0
      %p59 = por %p57, %p58
      %p60 = scmp.ne.s32.totalorder %s48, %s49
      %p61 = scmp.eq.s32.totalorder %s18, 1
      %p62 = por %p60, %p61
      %p64 = scmp.ne.s32.totalorder %s49, %s63
      %p65 = scmp.eq.s32.totalorder %s18, 0
      %p66 = por %p64, %p65
      %s68 = sadd.s32 %s67, 1
      %p71 = scmp.eq.s32.totalorder %s12, 1
      %p72 = scmp.ne.s32.totalorder %s67, %s69
      %p73 = scmp.eq.s32.totalorder %s12, 0
      %p74 = por %p72, %p73
      %p75 = scmp.ne.s32.totalorder %s67, %s69
      %p76 = scmp.eq.s32.totalorder %s17, 1
      %p77 = por %p75, %p76
      %p78 = scmp.ne.s32.totalorder %s69, %s70
      %p79 = scmp.eq.s32.totalorder %s17, 0
      %p80 = por %p78, %p79
      %p81 = scmp.ne.s32.totalorder %s69, %s70
      %p82 = scmp.eq.s32.totalorder %s18, 1
      %p83 = por %p81, %p82
      %p85 = scmp.ne.s32.totalorder %s70, %s84
      %p86 = scmp.eq.s32.totalorder %s18, 0
      %p87 = por %p85, %p86
      %s88 = ssub.s32 %s12, %s19
      %p89 = scmp.eq.s32.totalorder %s88, 0
      %s91 = sadd.s32 %s90, 1
      %s92 = scalar_select %p89, %s90, %s91
      %p95 = pneg %p89
      %p96 = scmp.eq.s32.totalorder %s12, 1
      %p97 = por %p95, %p96
      %p98 = scmp.ne.s32.totalorder %s90, %s93
      %p99 = scmp.eq.s32.totalorder %s12, 0
      %p100 = por %p98, %p99
      %p101 = scmp.ne.s32.totalorder %s90, %s93
      %p102 = scmp.eq.s32.totalorder %s17, 1
      %p103 = por %p101, %p102
      %p104 = scmp.ne.s32.totalorder %s93, %s94
      %p105 = scmp.eq.s32.totalorder %s17, 0
      %p106 = por %p104, %p105
      %p107 = scmp.ne.s32.totalorder %s93, %s94
      %p108 = scmp.eq.s32.totalorder %s18, 1
      %p109 = por %p107, %p108
      %p111 = scmp.ne.s32.totalorder %s94, %s110
      %p112 = scmp.eq.s32.totalorder %s18, 0
      %p113 = por %p111, %p112
      %p114 = scmp.le.s32.totalorder 1, %s12
      %p115 = scmp.lt.s32.totalorder %s12, 3
      %p116 = pnand %p114, %p115
      %p117 = pneg %p116
      // Predicated region
      $region9: #{cnn9b_forward.1} parent=5 // pred_check
        _
      $region10: #{cnn9b_forward.1} parent=5 // pred_check_branch
        %119 = sbr.rel (%p116) target = $region12
      $region11: #{cnn9b_forward.1} parent=5 // pred_region
        %s120 = ssub.s32 %s12, 1
        // Predicated region
        $region13: #{cnn9b_forward.1} parent=11 // pred_check
          %p121 = pneg %p59
        $region14: #{cnn9b_forward.1} parent=11 // pred_check_branch
          %123 = sbr.rel (%p121) target = $region16
        $region15: #{cnn9b_forward.1} parent=11 // pred_region
          _
        $region16: #{cnn9b_forward.1} parent=11 // pred_fallthru
          _
        // Predicated region
        $region17: #{cnn9b_forward.1} parent=11 // pred_check
          %p124 = pneg %p80
        $region18: #{cnn9b_forward.1} parent=11 // pred_check_branch
          %126 = sbr.rel (%p124) target = $region20
        $region19: #{cnn9b_forward.1} parent=11 // pred_region
          _
        $region20: #{cnn9b_forward.1} parent=11 // pred_fallthru
          _
      $region12: #{cnn9b_forward.1} parent=5 // pred_fallthru
        _
      %p127 = scmp.lt.s32.totalorder %s12, 2
      // Predicated region
      $region21: #{cnn9b_forward.1} parent=5 // pred_check
        %p128 = pneg %p127
      $region22: #{cnn9b_forward.1} parent=5 // pred_check_branch
        %130 = sbr.rel (%p128) target = $region24
      $region23: #{cnn9b_forward.1} parent=5 // pred_region
        // Predicated region
        $region25: #{cnn9b_forward.1} parent=23 // pred_check
          %p131 = pneg %p32
        $region26: #{cnn9b_forward.1} parent=23 // pred_check_branch
          %133 = sbr.rel (%p131) target = $region28
        $region27: #{cnn9b_forward.1} parent=23 // pred_region
          %p134 = scmp.lt.s32.totalorder %s12, 1
          %s135 = scalar_select %p134, %s12, 1
          %s136 = smul.addr %s135, 2
          %s137 = smul.addr %s136, 4
          %s138 = scalar_lea.vmem %s0, %s137
        $region28: #{cnn9b_forward.1} parent=23 // pred_fallthru
          _
      $region24: #{cnn9b_forward.1} parent=5 // pred_fallthru
        _
      %p139 = scmp.le.s32.totalorder 1, %s12
      %p140 = scmp.lt.s32.totalorder %s12, 3
      %p141 = pnand %p139, %p140
      %p142 = pneg %p141
      // Predicated region
      $region29: #{cnn9b_forward.1} parent=5 // pred_check
        _
      $region30: #{cnn9b_forward.1} parent=5 // pred_check_branch
        %144 = sbr.rel (%p141) target = $region32
      $region31: #{cnn9b_forward.1} parent=5 // pred_region
        %s145 = ssub.s32 %s12, 1
        %p146 = scmp.lt.s32.totalorder %s17, 1
        %s147 = scalar_select %p146, %s17, 1
        %s148 = smul.addr %s147, 2
        %s149 = smul.addr %s148, 4
        %s150 = scalar_lea.vmem %s0, %s149
        %p151 = pneg %p38
        %p152 = pneg %p35
        %p153 = pneg %p59
        %p154 = pneg %p56
        %p155 = pneg %p80
        %p156 = pneg %p77
        %p157 = pneg %p106
        %p158 = pneg %p103
        %s159 = sand.u32 %s93, 1
        %s160 = scalar_lea.sflag [#allocation5], %s159
        %s161 = sand.u32 %s93, 1
        %s162 = scalar_lea.vmem [#allocation4], %s161
        %p163 = scmp.lt.s32.totalorder %s17, 1
        %s164 = scalar_select %p163, %s17, 1
        %s165 = smul.addr %s164, 2
        %s166 = smul.addr %s165, 4
        %s167 = scalar_lea.vmem %s0, %s166
        %v168 = vld [vmem:[%s167] sm:$0x77]
        %170 = vrot.lane.b32.xlu0 %v168, 19
        %v171 = vpop.permute.xlu0 %170
        %vm173 = vcmask 280728
        %174 = vst.msk [vmem:[#allocation2] sm:$0x7] %vm173, %v171
        %175 = vrot.lane.b32.xlu0 %v168, 21
        %v176 = vpop.permute.xlu0 %175
        %vm178 = vcmask 428328
        %179 = vst.msk [vmem:[#allocation2] sm:$0x7] %vm178, %v176
        %180 = vrot.lane.b32.xlu0 %v168, 23
        %v181 = vpop.permute.xlu0 %180
        %vm183 = vcmask 575928
        %184 = vst.msk [vmem:[#allocation2] sm:$0x7] %vm183, %v181
        %185 = vrot.lane.b32.xlu0 %v168, 25
        %v186 = vpop.permute.xlu0 %185
        %vm188 = vcmask 723528
        %189 = vst.msk [vmem:[#allocation2] sm:$0x7] %vm188, %v186
        %190 = vrot.lane.b32.xlu0 %v168, 27
        %v191 = vpop.permute.xlu0 %190
        %vm193 = vcmask 871128
        %194 = vst.msk [vmem:[#allocation2] sm:$0x7] %vm193, %v191
        %195 = vrot.lane.b32.xlu0 %v168, 29
        %v196 = vpop.permute.xlu0 %195
        %vm198 = vcmask 1018728
        %199 = vst.msk [vmem:[#allocation2] sm:$0x7] %vm198, %v196
        %200 = vrot.lane.b32.xlu0 %v168, 31
        %v201 = vpop.permute.xlu0 %200
        %vm203 = vcmask 1043448
        %204 = vst.msk [vmem:[#allocation2] sm:$0x7] %vm203, %v201
        %vm205 = vcmask 116736
        %206 = vst.msk [vmem:[#allocation2 + $0x8] sm:$0x7] %vm205, %v201
        %207 = vrot.lane.b32.xlu0 %v168, 33
        %v208 = vpop.permute.xlu0 %207
        %vm210 = vcmask 264328
        %211 = vst.msk [vmem:[#allocation2 + $0x8] sm:$0x7] %vm210, %v208
        %v212 = vcombine.high %v168, %v168
        %213 = vrot.lane.b32.xlu0 %v212, 35
        %v214 = vpop.permute.xlu0 %213
        %vm216 = vcmask 411928
        %217 = vst.msk [vmem:[#allocation2 + $0x8] sm:$0x7] %vm216, %v214
        %218 = vrot.lane.b32.xlu0 %v212, 37
        %v219 = vpop.permute.xlu0 %218
        %vm221 = vcmask 559528
        %222 = vst.msk [vmem:[#allocation2 + $0x8] sm:$0x7] %vm221, %v219
        %223 = vrot.lane.b32.xlu0 %v212, 39
        %v224 = vpop.permute.xlu0 %223
        %vm226 = vcmask 707128
        %227 = vst.msk [vmem:[#allocation2 + $0x8] sm:$0x7] %vm226, %v224
        %228 = vrot.lane.b32.xlu0 %v212, 41
        %v229 = vpop.permute.xlu0 %228
        %vm231 = vcmask 854728
        %232 = vst.msk [vmem:[#allocation2 + $0x8] sm:$0x7] %vm231, %v229
        %233 = vrot.lane.b32.xlu0 %v212, 43
        %v234 = vpop.permute.xlu0 %233
        %vm236 = vcmask 1002328
        %237 = vst.msk [vmem:[#allocation2 + $0x8] sm:$0x7] %vm236, %v234
        %238 = vrot.lane.b32.xlu0 %v212, 45
        %v239 = vpop.permute.xlu0 %238
        %vm241 = vcmask 1043432
        %242 = vst.msk [vmem:[#allocation2 + $0x8] sm:$0x7] %vm241, %v239
        %vm243 = vcmask 100352
        %244 = vst.msk [vmem:[#allocation2 + $0x10] sm:$0x7] %vm243, %v239
        %245 = vrot.lane.b32.xlu0 %v212, 47
        %v246 = vpop.permute.xlu0 %245
        %vm248 = vcmask 247928
        %249 = vst.msk [vmem:[#allocation2 + $0x10] sm:$0x7] %vm248, %v246
        %250 = vrot.lane.b32.xlu0 %v212, 49
        %v251 = vpop.permute.xlu0 %250
        %vm253 = vcmask 395528
        %254 = vst.msk [vmem:[#allocation2 + $0x10] sm:$0x7] %vm253, %v251
        %vm255 = vcmask 149504
        %256 = vst.msk [vmem:[#allocation2] sm:$0x7] %vm255, 0.0
        %vm257 = vcmask 551304
        %258 = vst.msk [vmem:[#allocation2 + $0x10] sm:$0x7] %vm257, 0.0
        %vm259 = vcmask 297240
        %260 = vst.msk [vmem:[#allocation2] sm:$0x7] %vm259, 0.0
        %vm261 = vcmask 444840
        %262 = vst.msk [vmem:[#allocation2] sm:$0x7] %vm261, 0.0
        %vm263 = vcmask 592440
        %264 = vst.msk [vmem:[#allocation2] sm:$0x7] %vm263, 0.0
        %vm265 = vcmask 740040
        %266 = vst.msk [vmem:[#allocation2] sm:$0x7] %vm265, 0.0
        %vm267 = vcmask 887640
        %268 = vst.msk [vmem:[#allocation2] sm:$0x7] %vm267, 0.0
        %vm269 = vcmask 1035240
        %270 = vst.msk [vmem:[#allocation2] sm:$0x7] %vm269, 0.0
        %vm271 = vcmask 133240
        %272 = vst.msk [vmem:[#allocation2 + $0x8] sm:$0x7] %vm271, 0.0
        %vm273 = vcmask 280840
        %274 = vst.msk [vmem:[#allocation2 + $0x8] sm:$0x7] %vm273, 0.0
        %vm275 = vcmask 428440
        %276 = vst.msk [vmem:[#allocation2 + $0x8] sm:$0x7] %vm275, 0.0
        %vm277 = vcmask 576040
        %278 = vst.msk [vmem:[#allocation2 + $0x8] sm:$0x7] %vm277, 0.0
        %vm279 = vcmask 723640
        %280 = vst.msk [vmem:[#allocation2 + $0x8] sm:$0x7] %vm279, 0.0
        %vm281 = vcmask 871240
        %282 = vst.msk [vmem:[#allocation2 + $0x8] sm:$0x7] %vm281, 0.0
        %vm283 = vcmask 1018840
        %284 = vst.msk [vmem:[#allocation2 + $0x8] sm:$0x7] %vm283, 0.0
        %vm285 = vcmask 116840
        %286 = vst.msk [vmem:[#allocation2 + $0x10] sm:$0x7] %vm285, 0.0
        %vm287 = vcmask 264440
        %288 = vst.msk [vmem:[#allocation2 + $0x10] sm:$0x7] %vm287, 0.0
        %v289 = vld [vmem:[#allocation2] sm:$0x7]
        %v290 = vld [vmem:[#allocation2 + $0x8] sm:$0x7]
        %v291 = vld [vmem:[#allocation2 + $0x10] sm:$0x7]
        %292 = vst [vmem:[#allocation3] sm:$0x7] %v289
        %293 = vst [vmem:[#allocation3 + $0x8] sm:$0x7] %v290
        %vm294 = vcmask 239616
        %295 = vst.msk [vmem:[#allocation3 + $0x10] sm:$0x7] %vm294, %v291
        %v296 = vld [vmem:[#allocation2] sm:$0x7]
        %v297 = vld [vmem:[#allocation2 + $0x8] sm:$0x7]
        %v298 = vld [vmem:[#allocation2 + $0x10] sm:$0x7]
        %v302 = vrot.slane %v296, 5
        %v303 = vrot.slane %v297, 5
        %v304 = vrot.slane %v298, 5
        %305 = vrot.lane.b32.xlu0 %v302, 127
        %v306 = vpop.permute.xlu0 %305
        %307 = vrot.lane.b32.xlu0 %v303, 127
        %v308 = vpop.permute.xlu0 %307
        %309 = vrot.lane.b32.xlu0 %v304, 127
        %v310 = vpop.permute.xlu0 %309
        %vm311 = vcmask 1039360
        %v312 = vsel %vm311, %v306, %v308
        %v313 = vsel %vm311, %v308, %v310
        %317 = vst [vmem:[#allocation3] sm:$0x38] %v312
        %318 = vst [vmem:[#allocation3 + $0x8] sm:$0x38] %v313
        %vm319 = vcmask 242691
        %320 = vst.msk [vmem:[#allocation3 + $0x10] sm:$0x38] %vm319, %v310
        %v321 = vld [vmem:[#allocation2] sm:$0x7]
        %v322 = vld [vmem:[#allocation2 + $0x8] sm:$0x7]
        %v323 = vld [vmem:[#allocation2 + $0x10] sm:$0x7]
        %v327 = vrot.slane %v321, 2
        %v328 = vrot.slane %v322, 2
        %v329 = vrot.slane %v323, 2
        %330 = vrot.lane.b32.xlu0 %v327, 126
        %v331 = vpop.permute.xlu0 %330
        %332 = vrot.lane.b32.xlu0 %v328, 126
        %v333 = vpop.permute.xlu0 %332
        %334 = vrot.lane.b32.xlu0 %v329, 126
        %v335 = vpop.permute.xlu0 %334
        %vm336 = vcmask 1031168
        %v337 = vsel %vm336, %v331, %v333
        %v338 = vsel %vm336, %v333, %v335
        %342 = vst [vmem:[#allocation3] sm:$0xc0] %v337
        %343 = vst [vmem:[#allocation3 + $0x8] sm:$0xc0] %v338
        %vm344 = vcmask 244742
        %345 = vst.msk [vmem:[#allocation3 + $0x10] sm:$0xc0] %vm344, %v335
        %346 = vst [vmem:[#allocation3 + $0x18] sm:$0x1] %v337
        %347 = vst [vmem:[#allocation3 + $0x20] sm:$0x1] %v338
        %vm348 = vcmask 237568
        %349 = vst.msk [vmem:[#allocation3 + $0x28] sm:$0x1] %vm348, %v335
        %v350 = vld [vmem:[#allocation2] sm:$0x7]
        %v351 = vld [vmem:[#allocation2 + $0x8] sm:$0x7]
        %v352 = vld [vmem:[#allocation2 + $0x10] sm:$0x7]
        %v356 = vrot.slane %v350, 7
        %v357 = vrot.slane %v351, 7
        %v358 = vrot.slane %v352, 7
        %359 = vrot.lane.b32.xlu0 %v356, 110
        %v360 = vpop.permute.xlu0 %359
        %361 = vrot.lane.b32.xlu0 %v357, 110
        %v362 = vpop.permute.xlu0 %361
        %363 = vrot.lane.b32.xlu0 %v358, 110
        %v364 = vpop.permute.xlu0 %363
        %vm365 = vcmask 900096
        %v366 = vsel %vm365, %v360, %v362
        %v367 = vsel %vm365, %v362, %v364
        %371 = vst [vmem:[#allocation3 + $0x18] sm:$0xe] %v366
        %372 = vst [vmem:[#allocation3 + $0x20] sm:$0xe] %v367
        %vm373 = vcmask 240641
        %374 = vst.msk [vmem:[#allocation3 + $0x28] sm:$0xe] %vm373, %v364
        %v375 = vld [vmem:[#allocation2] sm:$0x7]
        %v376 = vld [vmem:[#allocation2 + $0x8] sm:$0x7]
        %v377 = vld [vmem:[#allocation2 + $0x10] sm:$0x7]
        %v381 = vrot.slane %v375, 4
        %v382 = vrot.slane %v376, 4
        %v383 = vrot.slane %v377, 4
        %384 = vrot.lane.b32.xlu0 %v381, 109
        %v385 = vpop.permute.xlu0 %384
        %386 = vrot.lane.b32.xlu0 %v382, 109
        %v387 = vpop.permute.xlu0 %386
        %388 = vrot.lane.b32.xlu0 %v383, 109
        %v389 = vpop.permute.xlu0 %388
        %vm390 = vcmask 891904
        %v391 = vsel %vm390, %v385, %v387
        %v392 = vsel %vm390, %v387, %v389
        %396 = vst [vmem:[#allocation3 + $0x18] sm:$0x70] %v391
        %397 = vst [vmem:[#allocation3 + $0x20] sm:$0x70] %v392
        %vm398 = vcmask 243716
        %399 = vst.msk [vmem:[#allocation3 + $0x28] sm:$0x70] %vm398, %v389
        %v400 = vld [vmem:[#allocation2] sm:$0x7]
        %v401 = vld [vmem:[#allocation2 + $0x8] sm:$0x7]
        %v402 = vld [vmem:[#allocation2 + $0x10] sm:$0x7]
        %v406 = vrot.slane %v400, 1
        %v407 = vrot.slane %v401, 1
        %v408 = vrot.slane %v402, 1
        %409 = vrot.lane.b32.xlu0 %v406, 108
        %v410 = vpop.permute.xlu0 %409
        %411 = vrot.lane.b32.xlu0 %v407, 108
        %v412 = vpop.permute.xlu0 %411
        %413 = vrot.lane.b32.xlu0 %v408, 108
        %v414 = vpop.permute.xlu0 %413
        %vm415 = vcmask 883712
        %v416 = vsel %vm415, %v410, %v412
        %v417 = vsel %vm415, %v412, %v414
        %421 = vst [vmem:[#allocation3 + $0x18] sm:$0x80] %v416
        %422 = vst [vmem:[#allocation3 + $0x20] sm:$0x80] %v417
        %vm423 = vcmask 244743
        %424 = vst.msk [vmem:[#allocation3 + $0x28] sm:$0x80] %vm423, %v414
        %425 = vst [vmem:[#allocation3 + $0x30] sm:$0x3] %v416
        %426 = vst [vmem:[#allocation3 + $0x38] sm:$0x3] %v417
        %vm427 = vcmask 238592
        %428 = vst.msk [vmem:[#allocation3 + $0x40] sm:$0x3] %vm427, %v414
        %v429 = vld [vmem:[#allocation2] sm:$0x7]
        %v430 = vld [vmem:[#allocation2 + $0x8] sm:$0x7]
        %v431 = vld [vmem:[#allocation2 + $0x10] sm:$0x7]
        %v435 = vrot.slane %v429, 6
        %v436 = vrot.slane %v430, 6
        %v437 = vrot.slane %v431, 6
        %438 = vrot.lane.b32.xlu0 %v435, 92
        %v439 = vpop.permute.xlu0 %438
        %440 = vrot.lane.b32.xlu0 %v436, 92
        %v441 = vpop.permute.xlu0 %440
        %442 = vrot.lane.b32.xlu0 %v437, 92
        %v443 = vpop.permute.xlu0 %442
        %vm444 = vcmask 752640
        %v445 = vsel %vm444, %v439, %v441
        %v446 = vsel %vm444, %v441, %v443
        %450 = vst [vmem:[#allocation3 + $0x30] sm:$0x1c] %v445
        %451 = vst [vmem:[#allocation3 + $0x38] sm:$0x1c] %v446
        %vm452 = vcmask 241666
        %453 = vst.msk [vmem:[#allocation3 + $0x40] sm:$0x1c] %vm452, %v443
        %v454 = vld [vmem:[#allocation2] sm:$0x7]
        %v455 = vld [vmem:[#allocation2 + $0x8] sm:$0x7]
        %v456 = vld [vmem:[#allocation2 + $0x10] sm:$0x7]
        %v460 = vrot.slane %v454, 3
        %v461 = vrot.slane %v455, 3
        %v462 = vrot.slane %v456, 3
        %463 = vrot.lane.b32.xlu0 %v460, 91
        %v464 = vpop.permute.xlu0 %463
        %465 = vrot.lane.b32.xlu0 %v461, 91
        %v466 = vpop.permute.xlu0 %465
        %467 = vrot.lane.b32.xlu0 %v462, 91
        %v468 = vpop.permute.xlu0 %467
        %vm469 = vcmask 744448
        %v470 = vsel %vm469, %v464, %v466
        %v471 = vsel %vm469, %v466, %v468
        %475 = vst [vmem:[#allocation3 + $0x30] sm:$0xe0] %v470
        %476 = vst [vmem:[#allocation3 + $0x38] sm:$0xe0] %v471
        %vm477 = vcmask 244741
        %478 = vst.msk [vmem:[#allocation3 + $0x40] sm:$0xe0] %vm477, %v468
        %v479 = vld [vmem:[#allocation2] sm:$0x7]
        %v480 = vld [vmem:[#allocation2 + $0x8] sm:$0x7]
        %v481 = vld [vmem:[#allocation2 + $0x10] sm:$0x7]
        %485 = vrot.lane.b32.xlu0 %v479, 90
        %v486 = vpop.permute.xlu0 %485
        %487 = vrot.lane.b32.xlu0 %v480, 90
        %v488 = vpop.permute.xlu0 %487
        %489 = vrot.lane.b32.xlu0 %v481, 90
        %v490 = vpop.permute.xlu0 %489
        %vm491 = vcmask 736256
        %v492 = vsel %vm491, %v486, %v488
        %v493 = vsel %vm491, %v488, %v490
        %497 = vst [vmem:[#allocation3 + $0x48] sm:$0x7] %v492
        %498 = vst [vmem:[#allocation3 + $0x50] sm:$0x7] %v493
        %499 = vst.msk [vmem:[#allocation3 + $0x58] sm:$0x7] %vm294, %v490
        %v500 = vld [vmem:[#allocation3] sm:$0xff]
        %v501 = vld [vmem:[#allocation3 + $0x8] sm:$0xff]
        %v502 = vld [vmem:[#allocation3 + $0x10] sm:$0xff]
        %v503 = vld [vmem:[#allocation3 + $0x18] sm:$0xff]
        %v504 = vld [vmem:[#allocation3 + $0x20] sm:$0xff]
        %v505 = vld [vmem:[#allocation3 + $0x28] sm:$0xff]
        %v506 = vld [vmem:[#allocation3 + $0x30] sm:$0xff]
        %v507 = vld [vmem:[#allocation3 + $0x38] sm:$0xff]
        %v508 = vld [vmem:[#allocation3 + $0x40] sm:$0xff]
        %v509 = vld [vmem:[#allocation3 + $0x48] sm:$0x7]
        %v510 = vld [vmem:[#allocation3 + $0x50] sm:$0x7]
        %v511 = vld [vmem:[#allocation3 + $0x58] sm:$0x7]
        %v512 = vld [vmem:[%s1] sm:$0xff]
        %v513 = vld [vmem:[%s1 + $0x18] sm:$0xff]
        %v514 = vld [vmem:[%s1 + $0x10] sm:$0xff]
        %v515 = vld [vmem:[%s1 + $0x28] sm:$0xff]
        %517 = vset.pattern.permute.xlu0 32
        %518 = vperm.xlu0 %517, %v514
        %v519 = vpop.permute.xlu0 %518
        %522 = vset.pattern.permute.xlu0 32
        %523 = vperm.xlu0 %522, %v515
        %v524 = vpop.permute.xlu0 %523
        %vm526 = vcmask 220160
        %v528 = vsel %vm526, %v512, 0
        %v531 = vsel %vm526, %v513, 0
        %vm533 = vcmask 1042432
        %v535 = vsel %vm533, %v509, 0
        %v538 = vsel %vm533, %v510, 0
        %v541 = vsel %vm533, %v511, 0
        %543 = vmatprep.subr.mxu0 0.0
        %544 = vmatpush1.msra.mxu0 0.0
        %545 = vmatprep.subr.mxu0 0.0
        %546 = vmatpush1.msra.mxu0 0.0
        %547 = vmatprep.subr.mxu0 0.0
        %548 = vmatpush1.msra.mxu0 0.0
        %549 = vmatprep.subr.mxu0 0.0
        %550 = vmatpush1.msra.mxu0 0.0
        %551 = vmatprep.subr.mxu0 0.0
        %552 = vmatpush1.msra.mxu0 0.0
        %553 = vmatprep.subr.mxu0 0.0
        %554 = vmatpush1.msra.mxu0 0.0
        %555 = vmatprep.subr.mxu0 0.0
        %556 = vmatpush1.msra.mxu0 0.0
        %557 = vmatprep.subr.mxu0 0.0
        %558 = vmatpush1.msra.mxu0 0.0
        %559 = vmatprep.subr.mxu0 0.0
        %560 = vmatpush1.msra.mxu0 0.0
        %561 = vmatprep.subr.mxu0 0.0
        %562 = vmatpush1.msra.mxu0 0.0
        %563 = vmatprep.subr.mxu0 0.0
        %564 = vmatpush1.msra.mxu0 0.0
        %565 = vmatprep.subr.mxu0 0.0
        %566 = vmatpush1.msra.mxu0 0.0
        %567 = vmatprep.subr.mxu0 %v538
        %568 = vmatpush1.msra.mxu0 %v535
        %569 = vmatprep.subr.mxu0 %v507
        %570 = vmatpush1.msra.mxu0 %v506
        %571 = vmatprep.subr.mxu0 %v504
        %572 = vmatpush1.msra.mxu0 %v503
        %573 = vmatprep.subr.mxu0 %v501
        %574 = vmatpush1.msra.mxu0 %v500
        %575 = vmatprep.subr.mxu0 0.0
        %576 = vmatpush2.msra.mxu0 0.0
        %577 = vmatprep.subr.mxu0 0.0
        %578 = vmatpush2.msra.mxu0 0.0
        %579 = vmatprep.subr.mxu0 0.0
        %580 = vmatpush2.msra.mxu0 0.0
        %581 = vmatprep.subr.mxu0 0.0
        %582 = vmatpush2.msra.mxu0 0.0
        %583 = vmatprep.subr.mxu0 0.0
        %584 = vmatpush2.msra.mxu0 0.0
        %585 = vmatprep.subr.mxu0 0.0
        %586 = vmatpush2.msra.mxu0 0.0
        %587 = vmatprep.subr.mxu0 0.0
        %588 = vmatpush2.msra.mxu0 0.0
        %589 = vmatprep.subr.mxu0 0.0
        %590 = vmatpush2.msra.mxu0 0.0
        %591 = vmatprep.subr.mxu0 0.0
        %592 = vmatpush2.msra.mxu0 0.0
        %593 = vmatprep.subr.mxu0 0.0
        %594 = vmatpush2.msra.mxu0 0.0
        %595 = vmatprep.subr.mxu0 0.0
        %596 = vmatpush2.msra.mxu0 0.0
        %597 = vmatprep.subr.mxu0 0.0
        %598 = vmatpush2.msra.mxu0 0.0
        %599 = vmatprep.subr.mxu0 0.0
        %600 = vmatpush2.msra.mxu0 0.0
        %601 = vmatprep.subr.mxu0 0.0
        %602 = vmatpush2.msra.mxu0 0.0
        %603 = vmatprep.subr.mxu0 0.0
        %604 = vmatpush2.msra.mxu0 0.0
        %605 = vmatprep.subr.mxu0 0.0
        %606 = vmatpush2.msra.mxu0 0.0
        %607 = vmatprep.mubr.f32.mxu0 0.0
        %608 = vmatmul.mubr.f32.gmra.mxu0 %v528
        %v609 = vpop.f32.mrf.mxu0
        %v610 = vadd.f32 %v519, %v609
        %v611 = vpop.f32.mrf.mxu0
        %v612 = vadd.f32 %v519, %v611
        %613 = vmatprep.mubr.f32.mxu0 0.0
        %614 = vmatmul.mubr.f32.gmra.mxu0 %v531
        %v615 = vpop.f32.mrf.mxu0
        %v616 = vadd.f32 %v524, %v615
        %v617 = vpop.f32.mrf.mxu0
        %v618 = vadd.f32 %v524, %v617
        %619 = vdwg.mxu0
        %620 = vmatprep.subr.mxu0 0.0
        %621 = vmatpush1.msra.mxu0 0.0
        %622 = vmatprep.subr.mxu0 0.0
        %623 = vmatpush1.msra.mxu0 0.0
        %624 = vmatprep.subr.mxu0 0.0
        %625 = vmatpush1.msra.mxu0 0.0
        %626 = vmatprep.subr.mxu0 0.0
        %627 = vmatpush1.msra.mxu0 0.0
        %628 = vmatprep.subr.mxu0 0.0
        %629 = vmatpush1.msra.mxu0 0.0
        %630 = vmatprep.subr.mxu0 0.0
        %631 = vmatpush1.msra.mxu0 0.0
        %632 = vmatprep.subr.mxu0 0.0
        %633 = vmatpush1.msra.mxu0 0.0
        %634 = vmatprep.subr.mxu0 0.0
        %635 = vmatpush1.msra.mxu0 0.0
        %636 = vmatprep.subr.mxu0 0.0
        %637 = vmatpush1.msra.mxu0 0.0
        %638 = vmatprep.subr.mxu0 0.0
        %639 = vmatpush1.msra.mxu0 0.0
        %640 = vmatprep.subr.mxu0 0.0
        %641 = vmatpush1.msra.mxu0 0.0
        %642 = vmatprep.subr.mxu0 0.0
        %643 = vmatpush1.msra.mxu0 0.0
        %644 = vmatprep.subr.mxu0 0.0
        %645 = vmatpush1.msra.mxu0 %v541
        %646 = vmatprep.subr.mxu0 0.0
        %647 = vmatpush1.msra.mxu0 %v508
        %648 = vmatprep.subr.mxu0 0.0
        %649 = vmatpush1.msra.mxu0 %v505
        %650 = vmatprep.subr.mxu0 0.0
        %651 = vmatpush1.msra.mxu0 %v502
        %652 = vmatprep.subr.mxu0 0.0
        %653 = vmatpush2.msra.mxu0 0.0
        %654 = vmatprep.subr.mxu0 0.0
        %655 = vmatpush2.msra.mxu0 0.0
        %656 = vmatprep.subr.mxu0 0.0
        %657 = vmatpush2.msra.mxu0 0.0
        %658 = vmatprep.subr.mxu0 0.0
        %659 = vmatpush2.msra.mxu0 0.0
        %660 = vmatprep.subr.mxu0 0.0
        %661 = vmatpush2.msra.mxu0 0.0
        %662 = vmatprep.subr.mxu0 0.0
        %663 = vmatpush2.msra.mxu0 0.0
        %664 = vmatprep.subr.mxu0 0.0
        %665 = vmatpush2.msra.mxu0 0.0
        %666 = vmatprep.subr.mxu0 0.0
        %667 = vmatpush2.msra.mxu0 0.0
        %668 = vmatprep.subr.mxu0 0.0
        %669 = vmatpush2.msra.mxu0 0.0
        %670 = vmatprep.subr.mxu0 0.0
        %671 = vmatpush2.msra.mxu0 0.0
        %672 = vmatprep.subr.mxu0 0.0
        %673 = vmatpush2.msra.mxu0 0.0
        %674 = vmatprep.subr.mxu0 0.0
        %675 = vmatpush2.msra.mxu0 0.0
        %676 = vmatprep.subr.mxu0 0.0
        %677 = vmatpush2.msra.mxu0 0.0
        %678 = vmatprep.subr.mxu0 0.0
        %679 = vmatpush2.msra.mxu0 0.0
        %680 = vmatprep.subr.mxu0 0.0
        %681 = vmatpush2.msra.mxu0 0.0
        %682 = vmatprep.subr.mxu0 0.0
        %683 = vmatpush2.msra.mxu0 0.0
        %684 = vmatprep.mubr.f32.mxu0 0.0
        %685 = vmatmul.mubr.f32.gmra.mxu0 %v528
        %v686 = vpop.f32.mrf.mxu0
        %v687 = vadd.f32 %v519, %v686
        %v688 = vpop.f32.mrf.mxu0
        %689 = vmatprep.mubr.f32.mxu0 0.0
        %690 = vmatmul.mubr.f32.gmra.mxu0 %v531
        %v691 = vpop.f32.mrf.mxu0
        %v692 = vadd.f32 %v524, %v691
        %v693 = vpop.f32.mrf.mxu0
        %694 = vdwg.mxu0
        %vm695 = vcmp.gt.f32.partialorder %v610, 0.0
        %vm696 = vcmp.gt.f32.partialorder %v612, 0.0
        %vm697 = vcmp.gt.f32.partialorder %v687, 0.0
        %vm698 = vcmp.gt.f32.partialorder %v616, 0.0
        %vm699 = vcmp.gt.f32.partialorder %v618, 0.0
        %vm700 = vcmp.gt.f32.partialorder %v692, 0.0
        %v701 = vmul.f32 %v610, 0.1
        %v702 = vmul.f32 %v612, 0.1
        %v703 = vmul.f32 %v687, 0.1
        %v704 = vmul.f32 %v616, 0.1
        %v705 = vmul.f32 %v618, 0.1
        %v706 = vmul.f32 %v692, 0.1
        %v707 = vsel %vm695, %v610, %v701
        %v708 = vsel %vm696, %v612, %v702
        %v709 = vsel %vm697, %v687, %v703
        %v710 = vsel %vm698, %v616, %v704
        %v711 = vsel %vm699, %v618, %v705
        %v712 = vsel %vm700, %v692, %v706
        %715 = vrot.lane.b32.xlu0 %v707, 19
        %v716 = vpop.permute.xlu0 %715
        %717 = vrot.lane.b32.xlu0 %v710, 19
        %v718 = vpop.permute.xlu0 %717
        %vm721 = vcmask 285848
        %722 = vst.msk [vmem:[#allocation2] sm:$0xff] %vm721, %v716
        %723 = vst.msk [vmem:[#allocation2 + $0x18] sm:$0xff] %vm721, %v718
        %vm724 = vcmask 433448
        %725 = vst.msk [vmem:[#allocation2] sm:$0xff] %vm724, %v716
        %726 = vst.msk [vmem:[#allocation2 + $0x18] sm:$0xff] %vm724, %v718
        %vm727 = vcmask 581048
        %728 = vst.msk [vmem:[#allocation2] sm:$0xff] %vm727, %v716
        %729 = vst.msk [vmem:[#allocation2 + $0x18] sm:$0xff] %vm727, %v718
        %vm730 = vcmask 728648
        %731 = vst.msk [vmem:[#allocation2] sm:$0xff] %vm730, %v716
        %732 = vst.msk [vmem:[#allocation2 + $0x18] sm:$0xff] %vm730, %v718
        %vm733 = vcmask 876248
        %734 = vst.msk [vmem:[#allocation2] sm:$0xff] %vm733, %v716
        %735 = vst.msk [vmem:[#allocation2 + $0x18] sm:$0xff] %vm733, %v718
        %vm736 = vcmask 1023848
        %737 = vst.msk [vmem:[#allocation2] sm:$0xff] %vm736, %v716
        %738 = vst.msk [vmem:[#allocation2 + $0x18] sm:$0xff] %vm736, %v718
        %vm739 = vcmask 1048568
        %740 = vst.msk [vmem:[#allocation2] sm:$0xff] %vm739, %v716
        %vm741 = vcmask 121856
        %742 = vst.msk [vmem:[#allocation2 + $0x8] sm:$0xff] %vm741, %v716
        %743 = vst.msk [vmem:[#allocation2 + $0x18] sm:$0xff] %vm739, %v718
        %744 = vst.msk [vmem:[#allocation2 + $0x20] sm:$0xff] %vm741, %v718
        %747 = vrot.lane.b32.xlu0 %v708, 19
        %v748 = vpop.permute.xlu0 %747
        %749 = vrot.lane.b32.xlu0 %v711, 19
        %v750 = vpop.permute.xlu0 %749
        %vm751 = vcmask 154624
        %v752 = vsel %vm751, %v716, %v748
        %v753 = vsel %vm751, %v718, %v750
        %vm756 = vcmask 269448
        %757 = vst.msk [vmem:[#allocation2 + $0x8] sm:$0xff] %vm756, %v752
        %758 = vst.msk [vmem:[#allocation2 + $0x20] sm:$0xff] %vm756, %v753
        %vm761 = vcmask 417048
        %762 = vst.msk [vmem:[#allocation2 + $0x8] sm:$0xff] %vm761, %v748
        %763 = vst.msk [vmem:[#allocation2 + $0x20] sm:$0xff] %vm761, %v750
        %vm764 = vcmask 564648
        %765 = vst.msk [vmem:[#allocation2 + $0x8] sm:$0xff] %vm764, %v748
        %766 = vst.msk [vmem:[#allocation2 + $0x20] sm:$0xff] %vm764, %v750
        %vm767 = vcmask 712248
        %768 = vst.msk [vmem:[#allocation2 + $0x8] sm:$0xff] %vm767, %v748
        %769 = vst.msk [vmem:[#allocation2 + $0x20] sm:$0xff] %vm767, %v750
        %vm770 = vcmask 859848
        %771 = vst.msk [vmem:[#allocation2 + $0x8] sm:$0xff] %vm770, %v748
        %772 = vst.msk [vmem:[#allocation2 + $0x20] sm:$0xff] %vm770, %v750
        %vm773 = vcmask 1007448
        %774 = vst.msk [vmem:[#allocation2 + $0x8] sm:$0xff] %vm773, %v748
        %775 = vst.msk [vmem:[#allocation2 + $0x20] sm:$0xff] %vm773, %v750
        %vm776 = vcmask 1048552
        %777 = vst.msk [vmem:[#allocation2 + $0x8] sm:$0xff] %vm776, %v748
        %vm778 = vcmask 105472
        %779 = vst.msk [vmem:[#allocation2 + $0x10] sm:$0xff] %vm778, %v748
        %780 = vst.msk [vmem:[#allocation2 + $0x20] sm:$0xff] %vm776, %v750
        %781 = vst.msk [vmem:[#allocation2 + $0x28] sm:$0xff] %vm778, %v750
        %784 = vrot.lane.b32.xlu0 %v709, 19
        %v785 = vpop.permute.xlu0 %784
        %786 = vrot.lane.b32.xlu0 %v712, 19
        %v787 = vpop.permute.xlu0 %786
        %v788 = vsel %vm751, %v748, %v785
        %v789 = vsel %vm751, %v750, %v787
        %vm792 = vcmask 253048
        %793 = vst.msk [vmem:[#allocation2 + $0x10] sm:$0xff] %vm792, %v788
        %794 = vst.msk [vmem:[#allocation2 + $0x28] sm:$0xff] %vm792, %v789
        %vm797 = vcmask 400648
        %798 = vst.msk [vmem:[#allocation2 + $0x10] sm:$0xff] %vm797, %v785
        %799 = vst.msk [vmem:[#allocation2 + $0x28] sm:$0xff] %vm797, %v787
        %800 = vst.msk [vmem:[#allocation2] sm:$0xff] %vm751, 0.0
        %801 = vst.msk [vmem:[#allocation2 + $0x18] sm:$0xff] %vm751, 0.0
        %vm802 = vcmask 556424
        %803 = vst.msk [vmem:[#allocation2 + $0x10] sm:$0xff] %vm802, 0.0
        %804 = vst.msk [vmem:[#allocation2 + $0x28] sm:$0xff] %vm802, 0.0
        %vm805 = vcmask 302360
        %806 = vst.msk [vmem:[#allocation2] sm:$0xff] %vm805, 0.0
        %807 = vst.msk [vmem:[#allocation2 + $0x18] sm:$0xff] %vm805, 0.0
        %vm808 = vcmask 449960
        %809 = vst.msk [vmem:[#allocation2] sm:$0xff] %vm808, 0.0
        %810 = vst.msk [vmem:[#allocation2 + $0x18] sm:$0xff] %vm808, 0.0
        %vm811 = vcmask 597560
        %812 = vst.msk [vmem:[#allocation2] sm:$0xff] %vm811, 0.0
        %813 = vst.msk [vmem:[#allocation2 + $0x18] sm:$0xff] %vm811, 0.0
        %vm814 = vcmask 745160
        %815 = vst.msk [vmem:[#allocation2] sm:$0xff] %vm814, 0.0
        %816 = vst.msk [vmem:[#allocation2 + $0x18] sm:$0xff] %vm814, 0.0
        %vm817 = vcmask 892760
        %818 = vst.msk [vmem:[#allocation2] sm:$0xff] %vm817, 0.0
        %819 = vst.msk [vmem:[#allocation2 + $0x18] sm:$0xff] %vm817, 0.0
        %vm820 = vcmask 1040360
        %821 = vst.msk [vmem:[#allocation2] sm:$0xff] %vm820, 0.0
        %822 = vst.msk [vmem:[#allocation2 + $0x18] sm:$0xff] %vm820, 0.0
        %vm823 = vcmask 138360
        %824 = vst.msk [vmem:[#allocation2 + $0x8] sm:$0xff] %vm823, 0.0
        %825 = vst.msk [vmem:[#allocation2 + $0x20] sm:$0xff] %vm823, 0.0
        %vm826 = vcmask 285960
        %827 = vst.msk [vmem:[#allocation2 + $0x8] sm:$0xff] %vm826, 0.0
        %828 = vst.msk [vmem:[#allocation2 + $0x20] sm:$0xff] %vm826, 0.0
        %vm829 = vcmask 433560
        %830 = vst.msk [vmem:[#allocation2 + $0x8] sm:$0xff] %vm829, 0.0
        %831 = vst.msk [vmem:[#allocation2 + $0x20] sm:$0xff] %vm829, 0.0
        %vm832 = vcmask 581160
        %833 = vst.msk [vmem:[#allocation2 + $0x8] sm:$0xff] %vm832, 0.0
        %834 = vst.msk [vmem:[#allocation2 + $0x20] sm:$0xff] %vm832, 0.0
        %vm835 = vcmask 728760
        %836 = vst.msk [vmem:[#allocation2 + $0x8] sm:$0xff] %vm835, 0.0
        %837 = vst.msk [vmem:[#allocation2 + $0x20] sm:$0xff] %vm835, 0.0
        %vm838 = vcmask 876360
        %839 = vst.msk [vmem:[#allocation2 + $0x8] sm:$0xff] %vm838, 0.0
        %840 = vst.msk [vmem:[#allocation2 + $0x20] sm:$0xff] %vm838, 0.0
        %vm841 = vcmask 1023960
        %842 = vst.msk [vmem:[#allocation2 + $0x8] sm:$0xff] %vm841, 0.0
        %843 = vst.msk [vmem:[#allocation2 + $0x20] sm:$0xff] %vm841, 0.0
        %vm844 = vcmask 121960
        %845 = vst.msk [vmem:[#allocation2 + $0x10] sm:$0xff] %vm844, 0.0
        %846 = vst.msk [vmem:[#allocation2 + $0x28] sm:$0xff] %vm844, 0.0
        %vm847 = vcmask 269560
        %848 = vst.msk [vmem:[#allocation2 + $0x10] sm:$0xff] %vm847, 0.0
        %849 = vst.msk [vmem:[#allocation2 + $0x28] sm:$0xff] %vm847, 0.0
        %v850 = vld [vmem:[#allocation2] sm:$0xff]
        %v851 = vld [vmem:[#allocation2 + $0x8] sm:$0xff]
        %v852 = vld [vmem:[#allocation2 + $0x10] sm:$0xff]
        %v853 = vld [vmem:[#allocation2 + $0x18] sm:$0xff]
        %v854 = vld [vmem:[#allocation2 + $0x20] sm:$0xff]
        %v855 = vld [vmem:[#allocation2 + $0x28] sm:$0xff]
        %856 = vst [vmem:[#allocation3] sm:$0xff] %v850
        %857 = vst [vmem:[#allocation3 + $0x8] sm:$0xff] %v851
        %vm858 = vcmask 244736
        %859 = vst.msk [vmem:[#allocation3 + $0x10] sm:$0xff] %vm858, %v852
        %860 = vst [vmem:[#allocation3 + $0x18] sm:$0xff] %v853
        %861 = vst [vmem:[#allocation3 + $0x20] sm:$0xff] %v854
        %862 = vst.msk [vmem:[#allocation3 + $0x28] sm:$0xff] %vm858, %v855
        %v863 = vld [vmem:[#allocation2] sm:$0xff]
        %v864 = vld [vmem:[#allocation2 + $0x8] sm:$0xff]
        %v865 = vld [vmem:[#allocation2 + $0x10] sm:$0xff]
        %v866 = vld [vmem:[#allocation2 + $0x18] sm:$0xff]
        %v867 = vld [vmem:[#allocation2 + $0x20] sm:$0xff]
        %v868 = vld [vmem:[#allocation2 + $0x28] sm:$0xff]
        %875 = vrot.lane.b32.xlu0 %v863, 127
        %v876 = vpop.permute.xlu0 %875
        %877 = vrot.lane.b32.xlu0 %v864, 127
        %v878 = vpop.permute.xlu0 %877
        %879 = vrot.lane.b32.xlu0 %v865, 127
        %v880 = vpop.permute.xlu0 %879
        %881 = vrot.lane.b32.xlu0 %v866, 127
        %v882 = vpop.permute.xlu0 %881
        %883 = vrot.lane.b32.xlu0 %v867, 127
        %v884 = vpop.permute.xlu0 %883
        %885 = vrot.lane.b32.xlu0 %v868, 127
        %v886 = vpop.permute.xlu0 %885
        %v887 = vsel %vm311, %v876, %v878
        %v888 = vsel %vm311, %v878, %v880
        %v889 = vsel %vm311, %v882, %v884
        %v890 = vsel %vm311, %v884, %v886
        %897 = vst [vmem:[#allocation3 + $0x30] sm:$0xff] %v887
        %898 = vst [vmem:[#allocation3 + $0x38] sm:$0xff] %v888
        %899 = vst.msk [vmem:[#allocation3 + $0x40] sm:$0xff] %vm858, %v880
        %900 = vst [vmem:[#allocation3 + $0x48] sm:$0xff] %v889
        %901 = vst [vmem:[#allocation3 + $0x50] sm:$0xff] %v890
        %902 = vst.msk [vmem:[#allocation3 + $0x58] sm:$0xff] %vm858, %v886
        %v903 = vld [vmem:[#allocation2] sm:$0xff]
        %v904 = vld [vmem:[#allocation2 + $0x8] sm:$0xff]
        %v905 = vld [vmem:[#allocation2 + $0x10] sm:$0xff]
        %v906 = vld [vmem:[#allocation2 + $0x18] sm:$0xff]
        %v907 = vld [vmem:[#allocation2 + $0x20] sm:$0xff]
        %v908 = vld [vmem:[#allocation2 + $0x28] sm:$0xff]
        %915 = vrot.lane.b32.xlu0 %v903, 126
        %v916 = vpop.permute.xlu0 %915
        %917 = vrot.lane.b32.xlu0 %v904, 126
        %v918 = vpop.permute.xlu0 %917
        %919 = vrot.lane.b32.xlu0 %v905, 126
        %v920 = vpop.permute.xlu0 %919
        %921 = vrot.lane.b32.xlu0 %v906, 126
        %v922 = vpop.permute.xlu0 %921
        %923 = vrot.lane.b32.xlu0 %v907, 126
        %v924 = vpop.permute.xlu0 %923
        %925 = vrot.lane.b32.xlu0 %v908, 126
        %v926 = vpop.permute.xlu0 %925
        %v927 = vsel %vm336, %v916, %v918
        %v928 = vsel %vm336, %v918, %v920
        %v929 = vsel %vm336, %v922, %v924
        %v930 = vsel %vm336, %v924, %v926
        %937 = vst [vmem:[#allocation3 + $0x60] sm:$0xff] %v927
        %938 = vst [vmem:[#allocation3 + $0x68] sm:$0xff] %v928
        %939 = vst.msk [vmem:[#allocation3 + $0x70] sm:$0xff] %vm858, %v920
        %940 = vst [vmem:[#allocation3 + $0x78] sm:$0xff] %v929
        %941 = vst [vmem:[#allocation3 + $0x80] sm:$0xff] %v930
        %942 = vst.msk [vmem:[#allocation3 + $0x88] sm:$0xff] %vm858, %v926
        %v943 = vld [vmem:[#allocation2] sm:$0xff]
        %v944 = vld [vmem:[#allocation2 + $0x8] sm:$0xff]
        %v945 = vld [vmem:[#allocation2 + $0x10] sm:$0xff]
        %v946 = vld [vmem:[#allocation2 + $0x18] sm:$0xff]
        %v947 = vld [vmem:[#allocation2 + $0x20] sm:$0xff]
        %v948 = vld [vmem:[#allocation2 + $0x28] sm:$0xff]
        %955 = vrot.lane.b32.xlu0 %v943, 110
        %v956 = vpop.permute.xlu0 %955
        %957 = vrot.lane.b32.xlu0 %v944, 110
        %v958 = vpop.permute.xlu0 %957
        %959 = vrot.lane.b32.xlu0 %v945, 110
        %v960 = vpop.permute.xlu0 %959
        %961 = vrot.lane.b32.xlu0 %v946, 110
        %v962 = vpop.permute.xlu0 %961
        %963 = vrot.lane.b32.xlu0 %v947, 110
        %v964 = vpop.permute.xlu0 %963
        %965 = vrot.lane.b32.xlu0 %v948, 110
        %v966 = vpop.permute.xlu0 %965
        %v967 = vsel %vm365, %v956, %v958
        %v968 = vsel %vm365, %v958, %v960
        %v969 = vsel %vm365, %v962, %v964
        %v970 = vsel %vm365, %v964, %v966
        %977 = vst [vmem:[#allocation3 + $0x90] sm:$0xff] %v967
        %978 = vst [vmem:[#allocation3 + $0x98] sm:$0xff] %v968
        %979 = vst.msk [vmem:[#allocation3 + $0xa0] sm:$0xff] %vm858, %v960
        %980 = vst [vmem:[#allocation3 + $0xa8] sm:$0xff] %v969
        %981 = vst [vmem:[#allocation3 + $0xb0] sm:$0xff] %v970
        %982 = vst.msk [vmem:[#allocation3 + $0xb8] sm:$0xff] %vm858, %v966
        %v983 = vld [vmem:[#allocation2] sm:$0xff]
        %v984 = vld [vmem:[#allocation2 + $0x8] sm:$0xff]
        %v985 = vld [vmem:[#allocation2 + $0x10] sm:$0xff]
        %v986 = vld [vmem:[#allocation2 + $0x18] sm:$0xff]
        %v987 = vld [vmem:[#allocation2 + $0x20] sm:$0xff]
        %v988 = vld [vmem:[#allocation2 + $0x28] sm:$0xff]
        %995 = vrot.lane.b32.xlu0 %v983, 109
        %v996 = vpop.permute.xlu0 %995
        %997 = vrot.lane.b32.xlu0 %v984, 109
        %v998 = vpop.permute.xlu0 %997
        %999 = vrot.lane.b32.xlu0 %v985, 109
        %v1000 = vpop.permute.xlu0 %999
        %1001 = vrot.lane.b32.xlu0 %v986, 109
        %v1002 = vpop.permute.xlu0 %1001
        %1003 = vrot.lane.b32.xlu0 %v987, 109
        %v1004 = vpop.permute.xlu0 %1003
        %1005 = vrot.lane.b32.xlu0 %v988, 109
        %v1006 = vpop.permute.xlu0 %1005
        %v1007 = vsel %vm390, %v996, %v998
        %v1008 = vsel %vm390, %v998, %v1000
        %v1009 = vsel %vm390, %v1002, %v1004
        %v1010 = vsel %vm390, %v1004, %v1006
        %1017 = vst [vmem:[#allocation3 + $0xc0] sm:$0xff] %v1007
        %1018 = vst [vmem:[#allocation3 + $0xc8] sm:$0xff] %v1008
        %1019 = vst.msk [vmem:[#allocation3 + $0xd0] sm:$0xff] %vm858, %v1000
        %1020 = vst [vmem:[#allocation3 + $0xd8] sm:$0xff] %v1009
        %1021 = vst [vmem:[#allocation3 + $0xe0] sm:$0xff] %v1010
        %1022 = vst.msk [vmem:[#allocation3 + $0xe8] sm:$0xff] %vm858, %v1006
        %v1023 = vld [vmem:[#allocation2] sm:$0xff]
        %v1024 = vld [vmem:[#allocation2 + $0x8] sm:$0xff]
        %v1025 = vld [vmem:[#allocation2 + $0x10] sm:$0xff]
        %v1026 = vld [vmem:[#allocation2 + $0x18] sm:$0xff]
        %v1027 = vld [vmem:[#allocation2 + $0x20] sm:$0xff]
        %v1028 = vld [vmem:[#allocation2 + $0x28] sm:$0xff]
        %1035 = vrot.lane.b32.xlu0 %v1023, 108
        %v1036 = vpop.permute.xlu0 %1035
        %1037 = vrot.lane.b32.xlu0 %v1024, 108
        %v1038 = vpop.permute.xlu0 %1037
        %1039 = vrot.lane.b32.xlu0 %v1025, 108
        %v1040 = vpop.permute.xlu0 %1039
        %1041 = vrot.lane.b32.xlu0 %v1026, 108
        %v1042 = vpop.permute.xlu0 %1041
        %1043 = vrot.lane.b32.xlu0 %v1027, 108
        %v1044 = vpop.permute.xlu0 %1043
        %1045 = vrot.lane.b32.xlu0 %v1028, 108
        %v1046 = vpop.permute.xlu0 %1045
        %v1047 = vsel %vm415, %v1036, %v1038
        %v1048 = vsel %vm415, %v1038, %v1040
        %v1049 = vsel %vm415, %v1042, %v1044
        %v1050 = vsel %vm415, %v1044, %v1046
        %1057 = vst [vmem:[#allocation3 + $0xf0] sm:$0xff] %v1047
        %1058 = vst [vmem:[#allocation3 + $0xf8] sm:$0xff] %v1048
        %1059 = vst.msk [vmem:[#allocation3 + $0x100] sm:$0xff] %vm858, %v1040
        %1060 = vst [vmem:[#allocation3 + $0x108] sm:$0xff] %v1049
        %1061 = vst [vmem:[#allocation3 + $0x110] sm:$0xff] %v1050
        %1062 = vst.msk [vmem:[#allocation3 + $0x118] sm:$0xff] %vm858, %v1046
        %v1063 = vld [vmem:[#allocation2] sm:$0xff]
        %v1064 = vld [vmem:[#allocation2 + $0x8] sm:$0xff]
        %v1065 = vld [vmem:[#allocation2 + $0x10] sm:$0xff]
        %v1066 = vld [vmem:[#allocation2 + $0x18] sm:$0xff]
        %v1067 = vld [vmem:[#allocation2 + $0x20] sm:$0xff]
        %v1068 = vld [vmem:[#allocation2 + $0x28] sm:$0xff]
        %1075 = vrot.lane.b32.xlu0 %v1063, 92
        %v1076 = vpop.permute.xlu0 %1075
        %1077 = vrot.lane.b32.xlu0 %v1064, 92
        %v1078 = vpop.permute.xlu0 %1077
        %1079 = vrot.lane.b32.xlu0 %v1065, 92
        %v1080 = vpop.permute.xlu0 %1079
        %1081 = vrot.lane.b32.xlu0 %v1066, 92
        %v1082 = vpop.permute.xlu0 %1081
        %1083 = vrot.lane.b32.xlu0 %v1067, 92
        %v1084 = vpop.permute.xlu0 %1083
        %1085 = vrot.lane.b32.xlu0 %v1068, 92
        %v1086 = vpop.permute.xlu0 %1085
        %v1087 = vsel %vm444, %v1076, %v1078
        %v1088 = vsel %vm444, %v1078, %v1080
        %v1089 = vsel %vm444, %v1082, %v1084
        %v1090 = vsel %vm444, %v1084, %v1086
        %1097 = vst [vmem:[#allocation3 + $0x120] sm:$0xff] %v1087
        %1098 = vst [vmem:[#allocation3 + $0x128] sm:$0xff] %v1088
        %1099 = vst.msk [vmem:[#allocation3 + $0x130] sm:$0xff] %vm858, %v1080
        %1100 = vst [vmem:[#allocation3 + $0x138] sm:$0xff] %v1089
        %1101 = vst [vmem:[#allocation3 + $0x140] sm:$0xff] %v1090
        %1102 = vst.msk [vmem:[#allocation3 + $0x148] sm:$0xff] %vm858, %v1086
        %v1103 = vld [vmem:[#allocation2] sm:$0xff]
        %v1104 = vld [vmem:[#allocation2 + $0x8] sm:$0xff]
        %v1105 = vld [vmem:[#allocation2 + $0x10] sm:$0xff]
        %v1106 = vld [vmem:[#allocation2 + $0x18] sm:$0xff]
        %v1107 = vld [vmem:[#allocation2 + $0x20] sm:$0xff]
        %v1108 = vld [vmem:[#allocation2 + $0x28] sm:$0xff]
        %1115 = vrot.lane.b32.xlu0 %v1103, 91
        %v1116 = vpop.permute.xlu0 %1115
        %1117 = vrot.lane.b32.xlu0 %v1104, 91
        %v1118 = vpop.permute.xlu0 %1117
        %1119 = vrot.lane.b32.xlu0 %v1105, 91
        %v1120 = vpop.permute.xlu0 %1119
        %1121 = vrot.lane.b32.xlu0 %v1106, 91
        %v1122 = vpop.permute.xlu0 %1121
        %1123 = vrot.lane.b32.xlu0 %v1107, 91
        %v1124 = vpop.permute.xlu0 %1123
        %1125 = vrot.lane.b32.xlu0 %v1108, 91
        %v1126 = vpop.permute.xlu0 %1125
        %v1127 = vsel %vm469, %v1116, %v1118
        %v1128 = vsel %vm469, %v1118, %v1120
        %v1129 = vsel %vm469, %v1122, %v1124
        %v1130 = vsel %vm469, %v1124, %v1126
        %1137 = vst [vmem:[#allocation3 + $0x150] sm:$0xff] %v1127
        %1138 = vst [vmem:[#allocation3 + $0x158] sm:$0xff] %v1128
        %1139 = vst.msk [vmem:[#allocation3 + $0x160] sm:$0xff] %vm858, %v1120
        %1140 = vst [vmem:[#allocation3 + $0x168] sm:$0xff] %v1129
        %1141 = vst [vmem:[#allocation3 + $0x170] sm:$0xff] %v1130
        %1142 = vst.msk [vmem:[#allocation3 + $0x178] sm:$0xff] %vm858, %v1126
        %v1143 = vld [vmem:[#allocation2] sm:$0xff]
        %v1144 = vld [vmem:[#allocation2 + $0x8] sm:$0xff]
        %v1145 = vld [vmem:[#allocation2 + $0x10] sm:$0xff]
        %v1146 = vld [vmem:[#allocation2 + $0x18] sm:$0xff]
        %v1147 = vld [vmem:[#allocation2 + $0x20] sm:$0xff]
        %v1148 = vld [vmem:[#allocation2 + $0x28] sm:$0xff]
        %1155 = vrot.lane.b32.xlu0 %v1143, 90
        %v1156 = vpop.permute.xlu0 %1155
        %1157 = vrot.lane.b32.xlu0 %v1144, 90
        %v1158 = vpop.permute.xlu0 %1157
        %1159 = vrot.lane.b32.xlu0 %v1145, 90
        %v1160 = vpop.permute.xlu0 %1159
        %1161 = vrot.lane.b32.xlu0 %v1146, 90
        %v1162 = vpop.permute.xlu0 %1161
        %1163 = vrot.lane.b32.xlu0 %v1147, 90
        %v1164 = vpop.permute.xlu0 %1163
        %1165 = vrot.lane.b32.xlu0 %v1148, 90
        %v1166 = vpop.permute.xlu0 %1165
        %v1167 = vsel %vm491, %v1156, %v1158
        %v1168 = vsel %vm491, %v1158, %v1160
        %v1169 = vsel %vm491, %v1162, %v1164
        %v1170 = vsel %vm491, %v1164, %v1166
        %1177 = vst [vmem:[#allocation3 + $0x180] sm:$0xff] %v1167
        %1178 = vst [vmem:[#allocation3 + $0x188] sm:$0xff] %v1168
        %1179 = vst.msk [vmem:[#allocation3 + $0x190] sm:$0xff] %vm858, %v1160
        %1180 = vst [vmem:[#allocation3 + $0x198] sm:$0xff] %v1169
        %1181 = vst [vmem:[#allocation3 + $0x1a0] sm:$0xff] %v1170
        %1182 = vst.msk [vmem:[#allocation3 + $0x1a8] sm:$0xff] %vm858, %v1166
        %v1183 = vld [vmem:[#allocation3] sm:$0xff]
        %v1184 = vld [vmem:[#allocation3 + $0x8] sm:$0xff]
        %v1185 = vld [vmem:[#allocation3 + $0x10] sm:$0xff]
        %v1186 = vld [vmem:[#allocation3 + $0x18] sm:$0xff]
        %v1187 = vld [vmem:[#allocation3 + $0x20] sm:$0xff]
        %v1188 = vld [vmem:[#allocation3 + $0x28] sm:$0xff]
        %v1189 = vld [vmem:[#allocation3 + $0x30] sm:$0xff]
        %v1190 = vld [vmem:[#allocation3 + $0x38] sm:$0xff]
        %v1191 = vld [vmem:[#allocation3 + $0x40] sm:$0xff]
        %v1192 = vld [vmem:[#allocation3 + $0x48] sm:$0xff]
        %v1193 = vld [vmem:[#allocation3 + $0x50] sm:$0xff]
        %v1194 = vld [vmem:[#allocation3 + $0x58] sm:$0xff]
        %v1195 = vld [vmem:[#allocation3 + $0x60] sm:$0xff]
        %v1196 = vld [vmem:[#allocation3 + $0x68] sm:$0xff]
        %v1197 = vld [vmem:[#allocation3 + $0x70] sm:$0xff]
        %v1198 = vld [vmem:[#allocation3 + $0x78] sm:$0xff]
        %v1199 = vld [vmem:[#allocation3 + $0x80] sm:$0xff]
        %v1200 = vld [vmem:[#allocation3 + $0x88] sm:$0xff]
        %v1201 = vld [vmem:[#allocation3 + $0x90] sm:$0xff]
        %v1202 = vld [vmem:[#allocation3 + $0x98] sm:$0xff]
        %v1203 = vld [vmem:[#allocation3 + $0xa0] sm:$0xff]
        %v1204 = vld [vmem:[#allocation3 + $0xa8] sm:$0xff]
        %v1205 = vld [vmem:[#allocation3 + $0xb0] sm:$0xff]
        %v1206 = vld [vmem:[#allocation3 + $0xb8] sm:$0xff]
        %v1207 = vld [vmem:[#allocation3 + $0xc0] sm:$0xff]
        %v1208 = vld [vmem:[#allocation3 + $0xc8] sm:$0xff]
        %v1209 = vld [vmem:[#allocation3 + $0xd0] sm:$0xff]
        %v1210 = vld [vmem:[#allocation3 + $0xd8] sm:$0xff]
        %v1211 = vld [vmem:[#allocation3 + $0xe0] sm:$0xff]
        %v1212 = vld [vmem:[#allocation3 + $0xe8] sm:$0xff]
        %v1213 = vld [vmem:[#allocation3 + $0xf0] sm:$0xff]
        %v1214 = vld [vmem:[#allocation3 + $0xf8] sm:$0xff]
        %v1215 = vld [vmem:[#allocation3 + $0x100] sm:$0xff]
        %v1216 = vld [vmem:[#allocation3 + $0x108] sm:$0xff]
        %v1217 = vld [vmem:[#allocation3 + $0x110] sm:$0xff]
        %v1218 = vld [vmem:[#allocation3 + $0x118] sm:$0xff]
        %v1219 = vld [vmem:[#allocation3 + $0x120] sm:$0xff]
        %v1220 = vld [vmem:[#allocation3 + $0x128] sm:$0xff]
        %v1221 = vld [vmem:[#allocation3 + $0x130] sm:$0xff]
        %v1222 = vld [vmem:[#allocation3 + $0x138] sm:$0xff]
        %v1223 = vld [vmem:[#allocation3 + $0x140] sm:$0xff]
        %v1224 = vld [vmem:[#allocation3 + $0x148] sm:$0xff]
        %v1225 = vld [vmem:[#allocation3 + $0x150] sm:$0xff]
        %v1226 = vld [vmem:[#allocation3 + $0x158] sm:$0xff]
        %v1227 = vld [vmem:[#allocation3 + $0x160] sm:$0xff]
        %v1228 = vld [vmem:[#allocation3 + $0x168] sm:$0xff]
        %v1229 = vld [vmem:[#allocation3 + $0x170] sm:$0xff]
        %v1230 = vld [vmem:[#allocation3 + $0x178] sm:$0xff]
        %v1231 = vld [vmem:[#allocation3 + $0x180] sm:$0xff]
        %v1232 = vld [vmem:[#allocation3 + $0x188] sm:$0xff]
        %v1233 = vld [vmem:[#allocation3 + $0x190] sm:$0xff]
        %v1234 = vld [vmem:[#allocation3 + $0x198] sm:$0xff]
        %v1235 = vld [vmem:[#allocation3 + $0x1a0] sm:$0xff]
        %v1236 = vld [vmem:[#allocation3 + $0x1a8] sm:$0xff]
        %v1237 = vld [vmem:[%s1 + $0x30] sm:$0xff]
        %v1238 = vld [vmem:[%s1 + $0x38] sm:$0xff]
        %v1239 = vld [vmem:[%s1 + $0x48] sm:$0xff]
        %v1240 = vld [vmem:[%s1 + $0x50] sm:$0xff]
        %v1241 = vld [vmem:[%s1 + $0x40] sm:$0xff]
        %v1242 = vld [vmem:[%s1 + $0x58] sm:$0xff]
        %1244 = vset.pattern.permute.xlu0 32
        %1245 = vperm.xlu0 %1244, %v1241
        %v1246 = vpop.permute.xlu0 %1245
        %1249 = vset.pattern.permute.xlu0 32
        %1250 = vperm.xlu0 %1249, %v1242
        %v1251 = vpop.permute.xlu0 %1250
        %vm1253 = vcmask 130048
        %v1255 = vsel %vm1253, %v1238, 0
        %v1258 = vsel %vm1253, %v1240, 0
        %1260 = vmatprep.subr.mxu0 %v1229
        %1261 = vmatpush1.msra.mxu0 %v1228
        %1262 = vmatprep.subr.mxu0 %v1226
        %1263 = vmatpush1.msra.mxu0 %v1225
        %1264 = vmatprep.subr.mxu0 %v1223
        %1265 = vmatpush1.msra.mxu0 %v1222
        %1266 = vmatprep.subr.mxu0 %v1220
        %1267 = vmatpush1.msra.mxu0 %v1219
        %1268 = vmatprep.subr.mxu0 %v1217
        %1269 = vmatpush1.msra.mxu0 %v1216
        %1270 = vmatprep.subr.mxu0 %v1214
        %1271 = vmatpush1.msra.mxu0 %v1213
        %1272 = vmatprep.subr.mxu0 %v1211
        %1273 = vmatpush1.msra.mxu0 %v1210
        %1274 = vmatprep.subr.mxu0 %v1208
        %1275 = vmatpush1.msra.mxu0 %v1207
        %1276 = vmatprep.subr.mxu0 %v1205
        %1277 = vmatpush1.msra.mxu0 %v1204
        %1278 = vmatprep.subr.mxu0 %v1202
        %1279 = vmatpush1.msra.mxu0 %v1201
        %1280 = vmatprep.subr.mxu0 %v1199
        %1281 = vmatpush1.msra.mxu0 %v1198
        %1282 = vmatprep.subr.mxu0 %v1196
        %1283 = vmatpush1.msra.mxu0 %v1195
        %1284 = vmatprep.subr.mxu0 %v1193
        %1285 = vmatpush1.msra.mxu0 %v1192
        %1286 = vmatprep.subr.mxu0 %v1190
        %1287 = vmatpush1.msra.mxu0 %v1189
        %1288 = vmatprep.subr.mxu0 %v1187
        %1289 = vmatpush1.msra.mxu0 %v1186
        %1290 = vmatprep.subr.mxu0 %v1184
        %1291 = vmatpush1.msra.mxu0 %v1183
        %1292 = vmatprep.subr.mxu0 0.0
        %1293 = vmatpush2.msra.mxu0 0.0
        %1294 = vmatprep.subr.mxu0 0.0
        %1295 = vmatpush2.msra.mxu0 0.0
        %1296 = vmatprep.subr.mxu0 0.0
        %1297 = vmatpush2.msra.mxu0 0.0
        %1298 = vmatprep.subr.mxu0 0.0
        %1299 = vmatpush2.msra.mxu0 0.0
        %1300 = vmatprep.subr.mxu0 0.0
        %1301 = vmatpush2.msra.mxu0 0.0
        %1302 = vmatprep.subr.mxu0 0.0
        %1303 = vmatpush2.msra.mxu0 0.0
        %1304 = vmatprep.subr.mxu0 0.0
        %1305 = vmatpush2.msra.mxu0 0.0
        %1306 = vmatprep.subr.mxu0 0.0
        %1307 = vmatpush2.msra.mxu0 0.0
        %1308 = vmatprep.subr.mxu0 0.0
        %1309 = vmatpush2.msra.mxu0 0.0
        %1310 = vmatprep.subr.mxu0 0.0
        %1311 = vmatpush2.msra.mxu0 0.0
        %1312 = vmatprep.subr.mxu0 0.0
        %1313 = vmatpush2.msra.mxu0 0.0
        %1314 = vmatprep.subr.mxu0 0.0
        %1315 = vmatpush2.msra.mxu0 0.0
        %1316 = vmatprep.subr.mxu0 0.0
        %1317 = vmatpush2.msra.mxu0 0.0
        %1318 = vmatprep.subr.mxu0 0.0
        %1319 = vmatpush2.msra.mxu0 0.0
        %1320 = vmatprep.subr.mxu0 %v1235
        %1321 = vmatpush2.msra.mxu0 %v1234
        %1322 = vmatprep.subr.mxu0 %v1232
        %1323 = vmatpush2.msra.mxu0 %v1231
        %1324 = vmatprep.mubr.f32.mxu0 %v1255
        %1325 = vmatmul.mubr.f32.gmra.mxu0 %v1237
        %v1326 = vpop.f32.mrf.mxu0
        %v1327 = vadd.f32 %v1246, %v1326
        %v1328 = vpop.f32.mrf.mxu0
        %v1329 = vadd.f32 %v1246, %v1328
        %1330 = vmatprep.mubr.f32.mxu0 %v1258
        %1331 = vmatmul.mubr.f32.gmra.mxu0 %v1239
        %v1332 = vpop.f32.mrf.mxu0
        %v1333 = vadd.f32 %v1251, %v1332
        %v1334 = vpop.f32.mrf.mxu0
        %v1335 = vadd.f32 %v1251, %v1334
        %1336 = vdwg.mxu0
        %1337 = vmatprep.subr.mxu0 0.0
        %1338 = vmatpush1.msra.mxu0 %v1230
        %1339 = vmatprep.subr.mxu0 0.0
        %1340 = vmatpush1.msra.mxu0 %v1227
        %1341 = vmatprep.subr.mxu0 0.0
        %1342 = vmatpush1.msra.mxu0 %v1224
        %1343 = vmatprep.subr.mxu0 0.0
        %1344 = vmatpush1.msra.mxu0 %v1221
        %1345 = vmatprep.subr.mxu0 0.0
        %1346 = vmatpush1.msra.mxu0 %v1218
        %1347 = vmatprep.subr.mxu0 0.0
        %1348 = vmatpush1.msra.mxu0 %v1215
        %1349 = vmatprep.subr.mxu0 0.0
        %1350 = vmatpush1.msra.mxu0 %v1212
        %1351 = vmatprep.subr.mxu0 0.0
        %1352 = vmatpush1.msra.mxu0 %v1209
        %1353 = vmatprep.subr.mxu0 0.0
        %1354 = vmatpush1.msra.mxu0 %v1206
        %1355 = vmatprep.subr.mxu0 0.0
        %1356 = vmatpush1.msra.mxu0 %v1203
        %1357 = vmatprep.subr.mxu0 0.0
        %1358 = vmatpush1.msra.mxu0 %v1200
        %1359 = vmatprep.subr.mxu0 0.0
        %1360 = vmatpush1.msra.mxu0 %v1197
        %1361 = vmatprep.subr.mxu0 0.0
        %1362 = vmatpush1.msra.mxu0 %v1194
        %1363 = vmatprep.subr.mxu0 0.0
        %1364 = vmatpush1.msra.mxu0 %v1191
        %1365 = vmatprep.subr.mxu0 0.0
        %1366 = vmatpush1.msra.mxu0 %v1188
        %1367 = vmatprep.subr.mxu0 0.0
        %1368 = vmatpush1.msra.mxu0 %v1185
        %1369 = vmatprep.subr.mxu0 0.0
        %1370 = vmatpush2.msra.mxu0 0.0
        %1371 = vmatprep.subr.mxu0 0.0
        %1372 = vmatpush2.msra.mxu0 0.0
        %1373 = vmatprep.subr.mxu0 0.0
        %1374 = vmatpush2.msra.mxu0 0.0
        %1375 = vmatprep.subr.mxu0 0.0
        %1376 = vmatpush2.msra.mxu0 0.0
        %1377 = vmatprep.subr.mxu0 0.0
        %1378 = vmatpush2.msra.mxu0 0.0
        %1379 = vmatprep.subr.mxu0 0.0
        %1380 = vmatpush2.msra.mxu0 0.0
        %1381 = vmatprep.subr.mxu0 0.0
        %1382 = vmatpush2.msra.mxu0 0.0
        %1383 = vmatprep.subr.mxu0 0.0
        %1384 = vmatpush2.msra.mxu0 0.0
        %1385 = vmatprep.subr.mxu0 0.0
        %1386 = vmatpush2.msra.mxu0 0.0
        %1387 = vmatprep.subr.mxu0 0.0
        %1388 = vmatpush2.msra.mxu0 0.0
        %1389 = vmatprep.subr.mxu0 0.0
        %1390 = vmatpush2.msra.mxu0 0.0
        %1391 = vmatprep.subr.mxu0 0.0
        %1392 = vmatpush2.msra.mxu0 0.0
        %1393 = vmatprep.subr.mxu0 0.0
        %1394 = vmatpush2.msra.mxu0 0.0
        %1395 = vmatprep.subr.mxu0 0.0
        %1396 = vmatpush2.msra.mxu0 0.0
        %1397 = vmatprep.subr.mxu0 0.0
        %1398 = vmatpush2.msra.mxu0 %v1236
        %1399 = vmatprep.subr.mxu0 0.0
        %1400 = vmatpush2.msra.mxu0 %v1233
        %1401 = vmatprep.mubr.f32.mxu0 %v1255
        %1402 = vmatmul.mubr.f32.gmra.mxu0 %v1237
        %v1403 = vpop.f32.mrf.mxu0
        %v1404 = vadd.f32 %v1246, %v1403
        %v1405 = vpop.f32.mrf.mxu0
        %1406 = vmatprep.mubr.f32.mxu0 %v1258
        %1407 = vmatmul.mubr.f32.gmra.mxu0 %v1239
        %v1408 = vpop.f32.mrf.mxu0
        %v1409 = vadd.f32 %v1251, %v1408
        %v1410 = vpop.f32.mrf.mxu0
        %1411 = vdwg.mxu0
        %vm1412 = vcmp.gt.f32.partialorder %v1327, 0.0
        %vm1413 = vcmp.gt.f32.partialorder %v1329, 0.0
        %vm1414 = vcmp.gt.f32.partialorder %v1404, 0.0
        %vm1415 = vcmp.gt.f32.partialorder %v1333, 0.0
        %vm1416 = vcmp.gt.f32.partialorder %v1335, 0.0
        %vm1417 = vcmp.gt.f32.partialorder %v1409, 0.0
        %v1418 = vmul.f32 %v1327, 0.1
        %v1419 = vmul.f32 %v1329, 0.1
        %v1420 = vmul.f32 %v1404, 0.1
        %v1421 = vmul.f32 %v1333, 0.1
        %v1422 = vmul.f32 %v1335, 0.1
        %v1423 = vmul.f32 %v1409, 0.1
        %v1424 = vsel %vm1412, %v1327, %v1418
        %v1425 = vsel %vm1413, %v1329, %v1419
        %v1426 = vsel %vm1414, %v1404, %v1420
        %v1427 = vsel %vm1415, %v1333, %v1421
        %v1428 = vsel %vm1416, %v1335, %v1422
        %v1429 = vsel %vm1417, %v1409, %v1423
        %1432 = vrot.lane.b32.xlu0 %v1424, 19
        %v1433 = vpop.permute.xlu0 %1432
        %1434 = vrot.lane.b32.xlu0 %v1427, 19
        %v1435 = vpop.permute.xlu0 %1434
        %1438 = vst.msk [vmem:[#allocation2] sm:$0xff] %vm721, %v1433
        %1439 = vst.msk [vmem:[#allocation2 + $0x18] sm:$0xff] %vm721, %v1435
        %1440 = vst.msk [vmem:[#allocation2] sm:$0xff] %vm724, %v1433
        %1441 = vst.msk [vmem:[#allocation2 + $0x18] sm:$0xff] %vm724, %v1435
        %1442 = vst.msk [vmem:[#allocation2] sm:$0xff] %vm727, %v1433
        %1443 = vst.msk [vmem:[#allocation2 + $0x18] sm:$0xff] %vm727, %v1435
        %1444 = vst.msk [vmem:[#allocation2] sm:$0xff] %vm730, %v1433
        %1445 = vst.msk [vmem:[#allocation2 + $0x18] sm:$0xff] %vm730, %v1435
        %1446 = vst.msk [vmem:[#allocation2] sm:$0xff] %vm733, %v1433
        %1447 = vst.msk [vmem:[#allocation2 + $0x18] sm:$0xff] %vm733, %v1435
        %1448 = vst.msk [vmem:[#allocation2] sm:$0xff] %vm736, %v1433
        %1449 = vst.msk [vmem:[#allocation2 + $0x18] sm:$0xff] %vm736, %v1435
        %1450 = vst.msk [vmem:[#allocation2] sm:$0xff] %vm739, %v1433
        %1451 = vst.msk [vmem:[#allocation2 + $0x8] sm:$0xff] %vm741, %v1433
        %1452 = vst.msk [vmem:[#allocation2 + $0x18] sm:$0xff] %vm739, %v1435
        %1453 = vst.msk [vmem:[#allocation2 + $0x20] sm:$0xff] %vm741, %v1435
        %1456 = vrot.lane.b32.xlu0 %v1425, 19
        %v1457 = vpop.permute.xlu0 %1456
        %1458 = vrot.lane.b32.xlu0 %v1428, 19
        %v1459 = vpop.permute.xlu0 %1458
        %v1460 = vsel %vm751, %v1433, %v1457
        %v1461 = vsel %vm751, %v1435, %v1459
        %1464 = vst.msk [vmem:[#allocation2 + $0x8] sm:$0xff] %vm756, %v1460
        %1465 = vst.msk [vmem:[#allocation2 + $0x20] sm:$0xff] %vm756, %v1461
        %1468 = vst.msk [vmem:[#allocation2 + $0x8] sm:$0xff] %vm761, %v1457
        %1469 = vst.msk [vmem:[#allocation2 + $0x20] sm:$0xff] %vm761, %v1459
        %1470 = vst.msk [vmem:[#allocation2 + $0x8] sm:$0xff] %vm764, %v1457
        %1471 = vst.msk [vmem:[#allocation2 + $0x20] sm:$0xff] %vm764, %v1459
        %1472 = vst.msk [vmem:[#allocation2 + $0x8] sm:$0xff] %vm767, %v1457
        %1473 = vst.msk [vmem:[#allocation2 + $0x20] sm:$0xff] %vm767, %v1459
        %1474 = vst.msk [vmem:[#allocation2 + $0x8] sm:$0xff] %vm770, %v1457
        %1475 = vst.msk [vmem:[#allocation2 + $0x20] sm:$0xff] %vm770, %v1459
        %1476 = vst.msk [vmem:[#allocation2 + $0x8] sm:$0xff] %vm773, %v1457
        %1477 = vst.msk [vmem:[#allocation2 + $0x20] sm:$0xff] %vm773, %v1459
        %1478 = vst.msk [vmem:[#allocation2 + $0x8] sm:$0xff] %vm776, %v1457
        %1479 = vst.msk [vmem:[#allocation2 + $0x10] sm:$0xff] %vm778, %v1457
        %1480 = vst.msk [vmem:[#allocation2 + $0x20] sm:$0xff] %vm776, %v1459
        %1481 = vst.msk [vmem:[#allocation2 + $0x28] sm:$0xff] %vm778, %v1459
        %1484 = vrot.lane.b32.xlu0 %v1426, 19
        %v1485 = vpop.permute.xlu0 %1484
        %1486 = vrot.lane.b32.xlu0 %v1429, 19
        %v1487 = vpop.permute.xlu0 %1486
        %v1488 = vsel %vm751, %v1457, %v1485
        %v1489 = vsel %vm751, %v1459, %v1487
        %1492 = vst.msk [vmem:[#allocation2 + $0x10] sm:$0xff] %vm792, %v1488
        %1493 = vst.msk [vmem:[#allocation2 + $0x28] sm:$0xff] %vm792, %v1489
        %1496 = vst.msk [vmem:[#allocation2 + $0x10] sm:$0xff] %vm797, %v1485
        %1497 = vst.msk [vmem:[#allocation2 + $0x28] sm:$0xff] %vm797, %v1487
        %1498 = vst.msk [vmem:[#allocation2] sm:$0xff] %vm751, 0.0
        %1499 = vst.msk [vmem:[#allocation2 + $0x18] sm:$0xff] %vm751, 0.0
        %1500 = vst.msk [vmem:[#allocation2 + $0x10] sm:$0xff] %vm802, 0.0
        %1501 = vst.msk [vmem:[#allocation2 + $0x28] sm:$0xff] %vm802, 0.0
        %1502 = vst.msk [vmem:[#allocation2] sm:$0xff] %vm805, 0.0
        %1503 = vst.msk [vmem:[#allocation2 + $0x18] sm:$0xff] %vm805, 0.0
        %1504 = vst.msk [vmem:[#allocation2] sm:$0xff] %vm808, 0.0
        %1505 = vst.msk [vmem:[#allocation2 + $0x18] sm:$0xff] %vm808, 0.0
        %1506 = vst.msk [vmem:[#allocation2] sm:$0xff] %vm811, 0.0
        %1507 = vst.msk [vmem:[#allocation2 + $0x18] sm:$0xff] %vm811, 0.0
        %1508 = vst.msk [vmem:[#allocation2] sm:$0xff] %vm814, 0.0
        %1509 = vst.msk [vmem:[#allocation2 + $0x18] sm:$0xff] %vm814, 0.0
        %1510 = vst.msk [vmem:[#allocation2] sm:$0xff] %vm817, 0.0
        %1511 = vst.msk [vmem:[#allocation2 + $0x18] sm:$0xff] %vm817, 0.0
        %1512 = vst.msk [vmem:[#allocation2] sm:$0xff] %vm820, 0.0
        %1513 = vst.msk [vmem:[#allocation2 + $0x18] sm:$0xff] %vm820, 0.0
        %1514 = vst.msk [vmem:[#allocation2 + $0x8] sm:$0xff] %vm823, 0.0
        %1515 = vst.msk [vmem:[#allocation2 + $0x20] sm:$0xff] %vm823, 0.0
        %1516 = vst.msk [vmem:[#allocation2 + $0x8] sm:$0xff] %vm826, 0.0
        %1517 = vst.msk [vmem:[#allocation2 + $0x20] sm:$0xff] %vm826, 0.0
        %1518 = vst.msk [vmem:[#allocation2 + $0x8] sm:$0xff] %vm829, 0.0
        %1519 = vst.msk [vmem:[#allocation2 + $0x20] sm:$0xff] %vm829, 0.0
        %1520 = vst.msk [vmem:[#allocation2 + $0x8] sm:$0xff] %vm832, 0.0
        %1521 = vst.msk [vmem:[#allocation2 + $0x20] sm:$0xff] %vm832, 0.0
        %1522 = vst.msk [vmem:[#allocation2 + $0x8] sm:$0xff] %vm835, 0.0
        %1523 = vst.msk [vmem:[#allocation2 + $0x20] sm:$0xff] %vm835, 0.0
        %1524 = vst.msk [vmem:[#allocation2 + $0x8] sm:$0xff] %vm838, 0.0
        %1525 = vst.msk [vmem:[#allocation2 + $0x20] sm:$0xff] %vm838, 0.0
        %1526 = vst.msk [vmem:[#allocation2 + $0x8] sm:$0xff] %vm841, 0.0
        %1527 = vst.msk [vmem:[#allocation2 + $0x20] sm:$0xff] %vm841, 0.0
        %1528 = vst.msk [vmem:[#allocation2 + $0x10] sm:$0xff] %vm844, 0.0
        %1529 = vst.msk [vmem:[#allocation2 + $0x28] sm:$0xff] %vm844, 0.0
        %1530 = vst.msk [vmem:[#allocation2 + $0x10] sm:$0xff] %vm847, 0.0
        %1531 = vst.msk [vmem:[#allocation2 + $0x28] sm:$0xff] %vm847, 0.0
        %v1532 = vld [vmem:[#allocation2] sm:$0xff]
        %v1533 = vld [vmem:[#allocation2 + $0x8] sm:$0xff]
        %v1534 = vld [vmem:[#allocation2 + $0x10] sm:$0xff]
        %v1535 = vld [vmem:[#allocation2 + $0x18] sm:$0xff]
        %v1536 = vld [vmem:[#allocation2 + $0x20] sm:$0xff]
        %v1537 = vld [vmem:[#allocation2 + $0x28] sm:$0xff]
        %1538 = vst [vmem:[#allocation3] sm:$0xff] %v1532
        %1539 = vst [vmem:[#allocation3 + $0x8] sm:$0xff] %v1533
        %1540 = vst.msk [vmem:[#allocation3 + $0x10] sm:$0xff] %vm858, %v1534
        %1541 = vst [vmem:[#allocation3 + $0x18] sm:$0xff] %v1535
        %1542 = vst [vmem:[#allocation3 + $0x20] sm:$0xff] %v1536
        %1543 = vst.msk [vmem:[#allocation3 + $0x28] sm:$0xff] %vm858, %v1537
        %v1544 = vld [vmem:[#allocation2] sm:$0xff]
        %v1545 = vld [vmem:[#allocation2 + $0x8] sm:$0xff]
        %v1546 = vld [vmem:[#allocation2 + $0x10] sm:$0xff]
        %v1547 = vld [vmem:[#allocation2 + $0x18] sm:$0xff]
        %v1548 = vld [vmem:[#allocation2 + $0x20] sm:$0xff]
        %v1549 = vld [vmem:[#allocation2 + $0x28] sm:$0xff]
        %1556 = vrot.lane.b32.xlu0 %v1544, 127
        %v1557 = vpop.permute.xlu0 %1556
        %1558 = vrot.lane.b32.xlu0 %v1545, 127
        %v1559 = vpop.permute.xlu0 %1558
        %1560 = vrot.lane.b32.xlu0 %v1546, 127
        %v1561 = vpop.permute.xlu0 %1560
        %1562 = vrot.lane.b32.xlu0 %v1547, 127
        %v1563 = vpop.permute.xlu0 %1562
        %1564 = vrot.lane.b32.xlu0 %v1548, 127
        %v1565 = vpop.permute.xlu0 %1564
        %1566 = vrot.lane.b32.xlu0 %v1549, 127
        %v1567 = vpop.permute.xlu0 %1566
        %v1568 = vsel %vm311, %v1557, %v1559
        %v1569 = vsel %vm311, %v1559, %v1561
        %v1570 = vsel %vm311, %v1563, %v1565
        %v1571 = vsel %vm311, %v1565, %v1567
        %1578 = vst [vmem:[#allocation3 + $0x30] sm:$0xff] %v1568
        %1579 = vst [vmem:[#allocation3 + $0x38] sm:$0xff] %v1569
        %1580 = vst.msk [vmem:[#allocation3 + $0x40] sm:$0xff] %vm858, %v1561
        %1581 = vst [vmem:[#allocation3 + $0x48] sm:$0xff] %v1570
        %1582 = vst [vmem:[#allocation3 + $0x50] sm:$0xff] %v1571
        %1583 = vst.msk [vmem:[#allocation3 + $0x58] sm:$0xff] %vm858, %v1567
        %v1584 = vld [vmem:[#allocation2] sm:$0xff]
        %v1585 = vld [vmem:[#allocation2 + $0x8] sm:$0xff]
        %v1586 = vld [vmem:[#allocation2 + $0x10] sm:$0xff]
        %v1587 = vld [vmem:[#allocation2 + $0x18] sm:$0xff]
        %v1588 = vld [vmem:[#allocation2 + $0x20] sm:$0xff]
        %v1589 = vld [vmem:[#allocation2 + $0x28] sm:$0xff]
        %1596 = vrot.lane.b32.xlu0 %v1584, 126
        %v1597 = vpop.permute.xlu0 %1596
        %1598 = vrot.lane.b32.xlu0 %v1585, 126
        %v1599 = vpop.permute.xlu0 %1598
        %1600 = vrot.lane.b32.xlu0 %v1586, 126
        %v1601 = vpop.permute.xlu0 %1600
        %1602 = vrot.lane.b32.xlu0 %v1587, 126
        %v1603 = vpop.permute.xlu0 %1602
        %1604 = vrot.lane.b32.xlu0 %v1588, 126
        %v1605 = vpop.permute.xlu0 %1604
        %1606 = vrot.lane.b32.xlu0 %v1589, 126
        %v1607 = vpop.permute.xlu0 %1606
        %v1608 = vsel %vm336, %v1597, %v1599
        %v1609 = vsel %vm336, %v1599, %v1601
        %v1610 = vsel %vm336, %v1603, %v1605
        %v1611 = vsel %vm336, %v1605, %v1607
        %1618 = vst [vmem:[#allocation3 + $0x60] sm:$0xff] %v1608
        %1619 = vst [vmem:[#allocation3 + $0x68] sm:$0xff] %v1609
        %1620 = vst.msk [vmem:[#allocation3 + $0x70] sm:$0xff] %vm858, %v1601
        %1621 = vst [vmem:[#allocation3 + $0x78] sm:$0xff] %v1610
        %1622 = vst [vmem:[#allocation3 + $0x80] sm:$0xff] %v1611
        %1623 = vst.msk [vmem:[#allocation3 + $0x88] sm:$0xff] %vm858, %v1607
        %v1624 = vld [vmem:[#allocation2] sm:$0xff]
        %v1625 = vld [vmem:[#allocation2 + $0x8] sm:$0xff]
        %v1626 = vld [vmem:[#allocation2 + $0x10] sm:$0xff]
        %v1627 = vld [vmem:[#allocation2 + $0x18] sm:$0xff]
        %v1628 = vld [vmem:[#allocation2 + $0x20] sm:$0xff]
        %v1629 = vld [vmem:[#allocation2 + $0x28] sm:$0xff]
        %1636 = vrot.lane.b32.xlu0 %v1624, 110
        %v1637 = vpop.permute.xlu0 %1636
        %1638 = vrot.lane.b32.xlu0 %v1625, 110
        %v1639 = vpop.permute.xlu0 %1638
        %1640 = vrot.lane.b32.xlu0 %v1626, 110
        %v1641 = vpop.permute.xlu0 %1640
        %1642 = vrot.lane.b32.xlu0 %v1627, 110
        %v1643 = vpop.permute.xlu0 %1642
        %1644 = vrot.lane.b32.xlu0 %v1628, 110
        %v1645 = vpop.permute.xlu0 %1644
        %1646 = vrot.lane.b32.xlu0 %v1629, 110
        %v1647 = vpop.permute.xlu0 %1646
        %v1648 = vsel %vm365, %v1637, %v1639
        %v1649 = vsel %vm365, %v1639, %v1641
        %v1650 = vsel %vm365, %v1643, %v1645
        %v1651 = vsel %vm365, %v1645, %v1647
        %1658 = vst [vmem:[#allocation3 + $0x90] sm:$0xff] %v1648
        %1659 = vst [vmem:[#allocation3 + $0x98] sm:$0xff] %v1649
        %1660 = vst.msk [vmem:[#allocation3 + $0xa0] sm:$0xff] %vm858, %v1641
        %1661 = vst [vmem:[#allocation3 + $0xa8] sm:$0xff] %v1650
        %1662 = vst [vmem:[#allocation3 + $0xb0] sm:$0xff] %v1651
        %1663 = vst.msk [vmem:[#allocation3 + $0xb8] sm:$0xff] %vm858, %v1647
        %v1664 = vld [vmem:[#allocation2] sm:$0xff]
        %v1665 = vld [vmem:[#allocation2 + $0x8] sm:$0xff]
        %v1666 = vld [vmem:[#allocation2 + $0x10] sm:$0xff]
        %v1667 = vld [vmem:[#allocation2 + $0x18] sm:$0xff]
        %v1668 = vld [vmem:[#allocation2 + $0x20] sm:$0xff]
        %v1669 = vld [vmem:[#allocation2 + $0x28] sm:$0xff]
        %1676 = vrot.lane.b32.xlu0 %v1664, 109
        %v1677 = vpop.permute.xlu0 %1676
        %1678 = vrot.lane.b32.xlu0 %v1665, 109
        %v1679 = vpop.permute.xlu0 %1678
        %1680 = vrot.lane.b32.xlu0 %v1666, 109
        %v1681 = vpop.permute.xlu0 %1680
        %1682 = vrot.lane.b32.xlu0 %v1667, 109
        %v1683 = vpop.permute.xlu0 %1682
        %1684 = vrot.lane.b32.xlu0 %v1668, 109
        %v1685 = vpop.permute.xlu0 %1684
        %1686 = vrot.lane.b32.xlu0 %v1669, 109
        %v1687 = vpop.permute.xlu0 %1686
        %v1688 = vsel %vm390, %v1677, %v1679
        %v1689 = vsel %vm390, %v1679, %v1681
        %v1690 = vsel %vm390, %v1683, %v1685
        %v1691 = vsel %vm390, %v1685, %v1687
        %1698 = vst [vmem:[#allocation3 + $0xc0] sm:$0xff] %v1688
        %1699 = vst [vmem:[#allocation3 + $0xc8] sm:$0xff] %v1689
        %1700 = vst.msk [vmem:[#allocation3 + $0xd0] sm:$0xff] %vm858, %v1681
        %1701 = vst [vmem:[#allocation3 + $0xd8] sm:$0xff] %v1690
        %1702 = vst [vmem:[#allocation3 + $0xe0] sm:$0xff] %v1691
        %1703 = vst.msk [vmem:[#allocation3 + $0xe8] sm:$0xff] %vm858, %v1687
        %v1704 = vld [vmem:[#allocation2] sm:$0xff]
        %v1705 = vld [vmem:[#allocation2 + $0x8] sm:$0xff]
        %v1706 = vld [vmem:[#allocation2 + $0x10] sm:$0xff]
        %v1707 = vld [vmem:[#allocation2 + $0x18] sm:$0xff]
        %v1708 = vld [vmem:[#allocation2 + $0x20] sm:$0xff]
        %v1709 = vld [vmem:[#allocation2 + $0x28] sm:$0xff]
        %1716 = vrot.lane.b32.xlu0 %v1704, 108
        %v1717 = vpop.permute.xlu0 %1716
        %1718 = vrot.lane.b32.xlu0 %v1705, 108
        %v1719 = vpop.permute.xlu0 %1718
        %1720 = vrot.lane.b32.xlu0 %v1706, 108
        %v1721 = vpop.permute.xlu0 %1720
        %1722 = vrot.lane.b32.xlu0 %v1707, 108
        %v1723 = vpop.permute.xlu0 %1722
        %1724 = vrot.lane.b32.xlu0 %v1708, 108
        %v1725 = vpop.permute.xlu0 %1724
        %1726 = vrot.lane.b32.xlu0 %v1709, 108
        %v1727 = vpop.permute.xlu0 %1726
        %v1728 = vsel %vm415, %v1717, %v1719
        %v1729 = vsel %vm415, %v1719, %v1721
        %v1730 = vsel %vm415, %v1723, %v1725
        %v1731 = vsel %vm415, %v1725, %v1727
        %1738 = vst [vmem:[#allocation3 + $0xf0] sm:$0xff] %v1728
        %1739 = vst [vmem:[#allocation3 + $0xf8] sm:$0xff] %v1729
        %1740 = vst.msk [vmem:[#allocation3 + $0x100] sm:$0xff] %vm858, %v1721
        %1741 = vst [vmem:[#allocation3 + $0x108] sm:$0xff] %v1730
        %1742 = vst [vmem:[#allocation3 + $0x110] sm:$0xff] %v1731
        %1743 = vst.msk [vmem:[#allocation3 + $0x118] sm:$0xff] %vm858, %v1727
        %v1744 = vld [vmem:[#allocation2] sm:$0xff]
        %v1745 = vld [vmem:[#allocation2 + $0x8] sm:$0xff]
        %v1746 = vld [vmem:[#allocation2 + $0x10] sm:$0xff]
        %v1747 = vld [vmem:[#allocation2 + $0x18] sm:$0xff]
        %v1748 = vld [vmem:[#allocation2 + $0x20] sm:$0xff]
        %v1749 = vld [vmem:[#allocation2 + $0x28] sm:$0xff]
        %1756 = vrot.lane.b32.xlu0 %v1744, 92
        %v1757 = vpop.permute.xlu0 %1756
        %1758 = vrot.lane.b32.xlu0 %v1745, 92
        %v1759 = vpop.permute.xlu0 %1758
        %1760 = vrot.lane.b32.xlu0 %v1746, 92
        %v1761 = vpop.permute.xlu0 %1760
        %1762 = vrot.lane.b32.xlu0 %v1747, 92
        %v1763 = vpop.permute.xlu0 %1762
        %1764 = vrot.lane.b32.xlu0 %v1748, 92
        %v1765 = vpop.permute.xlu0 %1764
        %1766 = vrot.lane.b32.xlu0 %v1749, 92
        %v1767 = vpop.permute.xlu0 %1766
        %v1768 = vsel %vm444, %v1757, %v1759
        %v1769 = vsel %vm444, %v1759, %v1761
        %v1770 = vsel %vm444, %v1763, %v1765
        %v1771 = vsel %vm444, %v1765, %v1767
        %1778 = vst [vmem:[#allocation3 + $0x120] sm:$0xff] %v1768
        %1779 = vst [vmem:[#allocation3 + $0x128] sm:$0xff] %v1769
        %1780 = vst.msk [vmem:[#allocation3 + $0x130] sm:$0xff] %vm858, %v1761
        %1781 = vst [vmem:[#allocation3 + $0x138] sm:$0xff] %v1770
        %1782 = vst [vmem:[#allocation3 + $0x140] sm:$0xff] %v1771
        %1783 = vst.msk [vmem:[#allocation3 + $0x148] sm:$0xff] %vm858, %v1767
        %v1784 = vld [vmem:[#allocation2] sm:$0xff]
        %v1785 = vld [vmem:[#allocation2 + $0x8] sm:$0xff]
        %v1786 = vld [vmem:[#allocation2 + $0x10] sm:$0xff]
        %v1787 = vld [vmem:[#allocation2 + $0x18] sm:$0xff]
        %v1788 = vld [vmem:[#allocation2 + $0x20] sm:$0xff]
        %v1789 = vld [vmem:[#allocation2 + $0x28] sm:$0xff]
        %1796 = vrot.lane.b32.xlu0 %v1784, 91
        %v1797 = vpop.permute.xlu0 %1796
        %1798 = vrot.lane.b32.xlu0 %v1785, 91
        %v1799 = vpop.permute.xlu0 %1798
        %1800 = vrot.lane.b32.xlu0 %v1786, 91
        %v1801 = vpop.permute.xlu0 %1800
        %1802 = vrot.lane.b32.xlu0 %v1787, 91
        %v1803 = vpop.permute.xlu0 %1802
        %1804 = vrot.lane.b32.xlu0 %v1788, 91
        %v1805 = vpop.permute.xlu0 %1804
        %1806 = vrot.lane.b32.xlu0 %v1789, 91
        %v1807 = vpop.permute.xlu0 %1806
        %v1808 = vsel %vm469, %v1797, %v1799
        %v1809 = vsel %vm469, %v1799, %v1801
        %v1810 = vsel %vm469, %v1803, %v1805
        %v1811 = vsel %vm469, %v1805, %v1807
        %1818 = vst [vmem:[#allocation3 + $0x150] sm:$0xff] %v1808
        %1819 = vst [vmem:[#allocation3 + $0x158] sm:$0xff] %v1809
        %1820 = vst.msk [vmem:[#allocation3 + $0x160] sm:$0xff] %vm858, %v1801
        %1821 = vst [vmem:[#allocation3 + $0x168] sm:$0xff] %v1810
        %1822 = vst [vmem:[#allocation3 + $0x170] sm:$0xff] %v1811
        %1823 = vst.msk [vmem:[#allocation3 + $0x178] sm:$0xff] %vm858, %v1807
        %v1824 = vld [vmem:[#allocation2] sm:$0xff]
        %v1825 = vld [vmem:[#allocation2 + $0x8] sm:$0xff]
        %v1826 = vld [vmem:[#allocation2 + $0x10] sm:$0xff]
        %v1827 = vld [vmem:[#allocation2 + $0x18] sm:$0xff]
        %v1828 = vld [vmem:[#allocation2 + $0x20] sm:$0xff]
        %v1829 = vld [vmem:[#allocation2 + $0x28] sm:$0xff]
        %1836 = vrot.lane.b32.xlu0 %v1824, 90
        %v1837 = vpop.permute.xlu0 %1836
        %1838 = vrot.lane.b32.xlu0 %v1825, 90
        %v1839 = vpop.permute.xlu0 %1838
        %1840 = vrot.lane.b32.xlu0 %v1826, 90
        %v1841 = vpop.permute.xlu0 %1840
        %1842 = vrot.lane.b32.xlu0 %v1827, 90
        %v1843 = vpop.permute.xlu0 %1842
        %1844 = vrot.lane.b32.xlu0 %v1828, 90
        %v1845 = vpop.permute.xlu0 %1844
        %1846 = vrot.lane.b32.xlu0 %v1829, 90
        %v1847 = vpop.permute.xlu0 %1846
        %v1848 = vsel %vm491, %v1837, %v1839
        %v1849 = vsel %vm491, %v1839, %v1841
        %v1850 = vsel %vm491, %v1843, %v1845
        %v1851 = vsel %vm491, %v1845, %v1847
        %1858 = vst [vmem:[#allocation3 + $0x180] sm:$0xff] %v1848
        %1859 = vst [vmem:[#allocation3 + $0x188] sm:$0xff] %v1849
        %1860 = vst.msk [vmem:[#allocation3 + $0x190] sm:$0xff] %vm858, %v1841
        %1861 = vst [vmem:[#allocation3 + $0x198] sm:$0xff] %v1850
        %1862 = vst [vmem:[#allocation3 + $0x1a0] sm:$0xff] %v1851
        %1863 = vst.msk [vmem:[#allocation3 + $0x1a8] sm:$0xff] %vm858, %v1847
        %v1864 = vld [vmem:[#allocation3] sm:$0xff]
        %v1865 = vld [vmem:[#allocation3 + $0x8] sm:$0xff]
        %v1866 = vld [vmem:[#allocation3 + $0x10] sm:$0xff]
        %v1867 = vld [vmem:[#allocation3 + $0x18] sm:$0xff]
        %v1868 = vld [vmem:[#allocation3 + $0x20] sm:$0xff]
        %v1869 = vld [vmem:[#allocation3 + $0x28] sm:$0xff]
        %v1870 = vld [vmem:[#allocation3 + $0x30] sm:$0xff]
        %v1871 = vld [vmem:[#allocation3 + $0x38] sm:$0xff]
        %v1872 = vld [vmem:[#allocation3 + $0x40] sm:$0xff]
        %v1873 = vld [vmem:[#allocation3 + $0x48] sm:$0xff]
        %v1874 = vld [vmem:[#allocation3 + $0x50] sm:$0xff]
        %v1875 = vld [vmem:[#allocation3 + $0x58] sm:$0xff]
        %v1876 = vld [vmem:[#allocation3 + $0x60] sm:$0xff]
        %v1877 = vld [vmem:[#allocation3 + $0x68] sm:$0xff]
        %v1878 = vld [vmem:[#allocation3 + $0x70] sm:$0xff]
        %v1879 = vld [vmem:[#allocation3 + $0x78] sm:$0xff]
        %v1880 = vld [vmem:[#allocation3 + $0x80] sm:$0xff]
        %v1881 = vld [vmem:[#allocation3 + $0x88] sm:$0xff]
        %v1882 = vld [vmem:[#allocation3 + $0x90] sm:$0xff]
        %v1883 = vld [vmem:[#allocation3 + $0x98] sm:$0xff]
        %v1884 = vld [vmem:[#allocation3 + $0xa0] sm:$0xff]
        %v1885 = vld [vmem:[#allocation3 + $0xa8] sm:$0xff]
        %v1886 = vld [vmem:[#allocation3 + $0xb0] sm:$0xff]
        %v1887 = vld [vmem:[#allocation3 + $0xb8] sm:$0xff]
        %v1888 = vld [vmem:[#allocation3 + $0xc0] sm:$0xff]
        %v1889 = vld [vmem:[#allocation3 + $0xc8] sm:$0xff]
        %v1890 = vld [vmem:[#allocation3 + $0xd0] sm:$0xff]
        %v1891 = vld [vmem:[#allocation3 + $0xd8] sm:$0xff]
        %v1892 = vld [vmem:[#allocation3 + $0xe0] sm:$0xff]
        %v1893 = vld [vmem:[#allocation3 + $0xe8] sm:$0xff]
        %v1894 = vld [vmem:[#allocation3 + $0xf0] sm:$0xff]
        %v1895 = vld [vmem:[#allocation3 + $0xf8] sm:$0xff]
        %v1896 = vld [vmem:[#allocation3 + $0x100] sm:$0xff]
        %v1897 = vld [vmem:[#allocation3 + $0x108] sm:$0xff]
        %v1898 = vld [vmem:[#allocation3 + $0x110] sm:$0xff]
        %v1899 = vld [vmem:[#allocation3 + $0x118] sm:$0xff]
        %v1900 = vld [vmem:[#allocation3 + $0x120] sm:$0xff]
        %v1901 = vld [vmem:[#allocation3 + $0x128] sm:$0xff]
        %v1902 = vld [vmem:[#allocation3 + $0x130] sm:$0xff]
        %v1903 = vld [vmem:[#allocation3 + $0x138] sm:$0xff]
        %v1904 = vld [vmem:[#allocation3 + $0x140] sm:$0xff]
        %v1905 = vld [vmem:[#allocation3 + $0x148] sm:$0xff]
        %v1906 = vld [vmem:[#allocation3 + $0x150] sm:$0xff]
        %v1907 = vld [vmem:[#allocation3 + $0x158] sm:$0xff]
        %v1908 = vld [vmem:[#allocation3 + $0x160] sm:$0xff]
        %v1909 = vld [vmem:[#allocation3 + $0x168] sm:$0xff]
        %v1910 = vld [vmem:[#allocation3 + $0x170] sm:$0xff]
        %v1911 = vld [vmem:[#allocation3 + $0x178] sm:$0xff]
        %v1912 = vld [vmem:[#allocation3 + $0x180] sm:$0xff]
        %v1913 = vld [vmem:[#allocation3 + $0x188] sm:$0xff]
        %v1914 = vld [vmem:[#allocation3 + $0x190] sm:$0xff]
        %v1915 = vld [vmem:[#allocation3 + $0x198] sm:$0xff]
        %v1916 = vld [vmem:[#allocation3 + $0x1a0] sm:$0xff]
        %v1917 = vld [vmem:[#allocation3 + $0x1a8] sm:$0xff]
        %v1918 = vld [vmem:[%s1 + $0x60] sm:$0xff]
        %v1919 = vld [vmem:[%s1 + $0x68] sm:$0xff]
        %v1920 = vld [vmem:[%s1 + $0x78] sm:$0xff]
        %v1921 = vld [vmem:[%s1 + $0x80] sm:$0xff]
        %v1922 = vld [vmem:[%s1 + $0x70] sm:$0xff]
        %v1923 = vld [vmem:[%s1 + $0x88] sm:$0xff]
        %1925 = vset.pattern.permute.xlu0 32
        %1926 = vperm.xlu0 %1925, %v1922
        %v1927 = vpop.permute.xlu0 %1926
        %1930 = vset.pattern.permute.xlu0 32
        %1931 = vperm.xlu0 %1930, %v1923
        %v1932 = vpop.permute.xlu0 %1931
        %v1935 = vsel %vm1253, %v1919, 0
        %v1938 = vsel %vm1253, %v1921, 0
        %1940 = vmatprep.subr.mxu0 %v1910
        %1941 = vmatpush1.msra.mxu0 %v1909
        %1942 = vmatprep.subr.mxu0 %v1907
        %1943 = vmatpush1.msra.mxu0 %v1906
        %1944 = vmatprep.subr.mxu0 %v1904
        %1945 = vmatpush1.msra.mxu0 %v1903
        %1946 = vmatprep.subr.mxu0 %v1901
        %1947 = vmatpush1.msra.mxu0 %v1900
        %1948 = vmatprep.subr.mxu0 %v1898
        %1949 = vmatpush1.msra.mxu0 %v1897
        %1950 = vmatprep.subr.mxu0 %v1895
        %1951 = vmatpush1.msra.mxu0 %v1894
        %1952 = vmatprep.subr.mxu0 %v1892
        %1953 = vmatpush1.msra.mxu0 %v1891
        %1954 = vmatprep.subr.mxu0 %v1889
        %1955 = vmatpush1.msra.mxu0 %v1888
        %1956 = vmatprep.subr.mxu0 %v1886
        %1957 = vmatpush1.msra.mxu0 %v1885
        %1958 = vmatprep.subr.mxu0 %v1883
        %1959 = vmatpush1.msra.mxu0 %v1882
        %1960 = vmatprep.subr.mxu0 %v1880
        %1961 = vmatpush1.msra.mxu0 %v1879
        %1962 = vmatprep.subr.mxu0 %v1877
        %1963 = vmatpush1.msra.mxu0 %v1876
        %1964 = vmatprep.subr.mxu0 %v1874
        %1965 = vmatpush1.msra.mxu0 %v1873
        %1966 = vmatprep.subr.mxu0 %v1871
        %1967 = vmatpush1.msra.mxu0 %v1870
        %1968 = vmatprep.subr.mxu0 %v1868
        %1969 = vmatpush1.msra.mxu0 %v1867
        %1970 = vmatprep.subr.mxu0 %v1865
        %1971 = vmatpush1.msra.mxu0 %v1864
        %1972 = vmatprep.subr.mxu0 0.0
        %1973 = vmatpush2.msra.mxu0 0.0
        %1974 = vmatprep.subr.mxu0 0.0
        %1975 = vmatpush2.msra.mxu0 0.0
        %1976 = vmatprep.subr.mxu0 0.0
        %1977 = vmatpush2.msra.mxu0 0.0
        %1978 = vmatprep.subr.mxu0 0.0
        %1979 = vmatpush2.msra.mxu0 0.0
        %1980 = vmatprep.subr.mxu0 0.0
        %1981 = vmatpush2.msra.mxu0 0.0
        %1982 = vmatprep.subr.mxu0 0.0
        %1983 = vmatpush2.msra.mxu0 0.0
        %1984 = vmatprep.subr.mxu0 0.0
        %1985 = vmatpush2.msra.mxu0 0.0
        %1986 = vmatprep.subr.mxu0 0.0
        %1987 = vmatpush2.msra.mxu0 0.0
        %1988 = vmatprep.subr.mxu0 0.0
        %1989 = vmatpush2.msra.mxu0 0.0
        %1990 = vmatprep.subr.mxu0 0.0
        %1991 = vmatpush2.msra.mxu0 0.0
        %1992 = vmatprep.subr.mxu0 0.0
        %1993 = vmatpush2.msra.mxu0 0.0
        %1994 = vmatprep.subr.mxu0 0.0
        %1995 = vmatpush2.msra.mxu0 0.0
        %1996 = vmatprep.subr.mxu0 0.0
        %1997 = vmatpush2.msra.mxu0 0.0
        %1998 = vmatprep.subr.mxu0 0.0
        %1999 = vmatpush2.msra.mxu0 0.0
        %2000 = vmatprep.subr.mxu0 %v1916
        %2001 = vmatpush2.msra.mxu0 %v1915
        %2002 = vmatprep.subr.mxu0 %v1913
        %2003 = vmatpush2.msra.mxu0 %v1912
        %2004 = vmatprep.mubr.f32.mxu0 %v1935
        %2005 = vmatmul.mubr.f32.gmra.mxu0 %v1918
        %v2006 = vpop.f32.mrf.mxu0
        %v2007 = vadd.f32 %v1927, %v2006
        %v2008 = vpop.f32.mrf.mxu0
        %v2009 = vadd.f32 %v1927, %v2008
        %2010 = vmatprep.mubr.f32.mxu0 %v1938
        %2011 = vmatmul.mubr.f32.gmra.mxu0 %v1920
        %v2012 = vpop.f32.mrf.mxu0
        %v2013 = vadd.f32 %v1932, %v2012
        %v2014 = vpop.f32.mrf.mxu0
        %v2015 = vadd.f32 %v1932, %v2014
        %2016 = vdwg.mxu0
        %2017 = vmatprep.subr.mxu0 0.0
        %2018 = vmatpush1.msra.mxu0 %v1911
        %2019 = vmatprep.subr.mxu0 0.0
        %2020 = vmatpush1.msra.mxu0 %v1908
        %2021 = vmatprep.subr.mxu0 0.0
        %2022 = vmatpush1.msra.mxu0 %v1905
        %2023 = vmatprep.subr.mxu0 0.0
        %2024 = vmatpush1.msra.mxu0 %v1902
        %2025 = vmatprep.subr.mxu0 0.0
        %2026 = vmatpush1.msra.mxu0 %v1899
        %2027 = vmatprep.subr.mxu0 0.0
        %2028 = vmatpush1.msra.mxu0 %v1896
        %2029 = vmatprep.subr.mxu0 0.0
        %2030 = vmatpush1.msra.mxu0 %v1893
        %2031 = vmatprep.subr.mxu0 0.0
        %2032 = vmatpush1.msra.mxu0 %v1890
        %2033 = vmatprep.subr.mxu0 0.0
        %2034 = vmatpush1.msra.mxu0 %v1887
        %2035 = vmatprep.subr.mxu0 0.0
        %2036 = vmatpush1.msra.mxu0 %v1884
        %2037 = vmatprep.subr.mxu0 0.0
        %2038 = vmatpush1.msra.mxu0 %v1881
        %2039 = vmatprep.subr.mxu0 0.0
        %2040 = vmatpush1.msra.mxu0 %v1878
        %2041 = vmatprep.subr.mxu0 0.0
        %2042 = vmatpush1.msra.mxu0 %v1875
        %2043 = vmatprep.subr.mxu0 0.0
        %2044 = vmatpush1.msra.mxu0 %v1872
        %2045 = vmatprep.subr.mxu0 0.0
        %2046 = vmatpush1.msra.mxu0 %v1869
        %2047 = vmatprep.subr.mxu0 0.0
        %2048 = vmatpush1.msra.mxu0 %v1866
        %2049 = vmatprep.subr.mxu0 0.0
        %2050 = vmatpush2.msra.mxu0 0.0
        %2051 = vmatprep.subr.mxu0 0.0
        %2052 = vmatpush2.msra.mxu0 0.0
        %2053 = vmatprep.subr.mxu0 0.0
        %2054 = vmatpush2.msra.mxu0 0.0
        %2055 = vmatprep.subr.mxu0 0.0
        %2056 = vmatpush2.msra.mxu0 0.0
        %2057 = vmatprep.subr.mxu0 0.0
        %2058 = vmatpush2.msra.mxu0 0.0
        %2059 = vmatprep.subr.mxu0 0.0
        %2060 = vmatpush2.msra.mxu0 0.0
        %2061 = vmatprep.subr.mxu0 0.0
        %2062 = vmatpush2.msra.mxu0 0.0
        %2063 = vmatprep.subr.mxu0 0.0
        %2064 = vmatpush2.msra.mxu0 0.0
        %2065 = vmatprep.subr.mxu0 0.0
        %2066 = vmatpush2.msra.mxu0 0.0
        %2067 = vmatprep.subr.mxu0 0.0
        %2068 = vmatpush2.msra.mxu0 0.0
        %2069 = vmatprep.subr.mxu0 0.0
        %2070 = vmatpush2.msra.mxu0 0.0
        %2071 = vmatprep.subr.mxu0 0.0
        %2072 = vmatpush2.msra.mxu0 0.0
        %2073 = vmatprep.subr.mxu0 0.0
        %2074 = vmatpush2.msra.mxu0 0.0
        %2075 = vmatprep.subr.mxu0 0.0
        %2076 = vmatpush2.msra.mxu0 0.0
        %2077 = vmatprep.subr.mxu0 0.0
        %2078 = vmatpush2.msra.mxu0 %v1917
        %2079 = vmatprep.subr.mxu0 0.0
        %2080 = vmatpush2.msra.mxu0 %v1914
        %2081 = vmatprep.mubr.f32.mxu0 %v1935
        %2082 = vmatmul.mubr.f32.gmra.mxu0 %v1918
        %v2083 = vpop.f32.mrf.mxu0
        %v2084 = vadd.f32 %v1927, %v2083
        %v2085 = vpop.f32.mrf.mxu0
        %2086 = vmatprep.mubr.f32.mxu0 %v1938
        %2087 = vmatmul.mubr.f32.gmra.mxu0 %v1920
        %v2088 = vpop.f32.mrf.mxu0
        %v2089 = vadd.f32 %v1932, %v2088
        %v2090 = vpop.f32.mrf.mxu0
        %2091 = vdwg.mxu0
        %vm2092 = vcmp.gt.f32.partialorder %v2007, 0.0
        %vm2093 = vcmp.gt.f32.partialorder %v2009, 0.0
        %vm2094 = vcmp.gt.f32.partialorder %v2084, 0.0
        %vm2095 = vcmp.gt.f32.partialorder %v2013, 0.0
        %vm2096 = vcmp.gt.f32.partialorder %v2015, 0.0
        %vm2097 = vcmp.gt.f32.partialorder %v2089, 0.0
        %v2098 = vmul.f32 %v2007, 0.1
        %v2099 = vmul.f32 %v2009, 0.1
        %v2100 = vmul.f32 %v2084, 0.1
        %v2101 = vmul.f32 %v2013, 0.1
        %v2102 = vmul.f32 %v2015, 0.1
        %v2103 = vmul.f32 %v2089, 0.1
        %v2104 = vsel %vm2092, %v2007, %v2098
        %v2105 = vsel %vm2093, %v2009, %v2099
        %v2106 = vsel %vm2094, %v2084, %v2100
        %v2107 = vsel %vm2095, %v2013, %v2101
        %v2108 = vsel %vm2096, %v2015, %v2102
        %v2109 = vsel %vm2097, %v2089, %v2103
        %2112 = vrot.lane.b32.xlu0 %v2104, 19
        %v2113 = vpop.permute.xlu0 %2112
        %2114 = vrot.lane.b32.xlu0 %v2107, 19
        %v2115 = vpop.permute.xlu0 %2114
        %2118 = vst.msk [vmem:[#allocation2] sm:$0xff] %vm721, %v2113
        %2119 = vst.msk [vmem:[#allocation2 + $0x18] sm:$0xff] %vm721, %v2115
        %2120 = vst.msk [vmem:[#allocation2] sm:$0xff] %vm724, %v2113
        %2121 = vst.msk [vmem:[#allocation2 + $0x18] sm:$0xff] %vm724, %v2115
        %2122 = vst.msk [vmem:[#allocation2] sm:$0xff] %vm727, %v2113
        %2123 = vst.msk [vmem:[#allocation2 + $0x18] sm:$0xff] %vm727, %v2115
        %2124 = vst.msk [vmem:[#allocation2] sm:$0xff] %vm730, %v2113
        %2125 = vst.msk [vmem:[#allocation2 + $0x18] sm:$0xff] %vm730, %v2115
        %2126 = vst.msk [vmem:[#allocation2] sm:$0xff] %vm733, %v2113
        %2127 = vst.msk [vmem:[#allocation2 + $0x18] sm:$0xff] %vm733, %v2115
        %2128 = vst.msk [vmem:[#allocation2] sm:$0xff] %vm736, %v2113
        %2129 = vst.msk [vmem:[#allocation2 + $0x18] sm:$0xff] %vm736, %v2115
        %2130 = vst.msk [vmem:[#allocation2] sm:$0xff] %vm739, %v2113
        %2131 = vst.msk [vmem:[#allocation2 + $0x8] sm:$0xff] %vm741, %v2113
        %2132 = vst.msk [vmem:[#allocation2 + $0x18] sm:$0xff] %vm739, %v2115
        %2133 = vst.msk [vmem:[#allocation2 + $0x20] sm:$0xff] %vm741, %v2115
        %2136 = vrot.lane.b32.xlu0 %v2105, 19
        %v2137 = vpop.permute.xlu0 %2136
        %2138 = vrot.lane.b32.xlu0 %v2108, 19
        %v2139 = vpop.permute.xlu0 %2138
        %v2140 = vsel %vm751, %v2113, %v2137
        %v2141 = vsel %vm751, %v2115, %v2139
        %2144 = vst.msk [vmem:[#allocation2 + $0x8] sm:$0xff] %vm756, %v2140
        %2145 = vst.msk [vmem:[#allocation2 + $0x20] sm:$0xff] %vm756, %v2141
        %2148 = vst.msk [vmem:[#allocation2 + $0x8] sm:$0xff] %vm761, %v2137
        %2149 = vst.msk [vmem:[#allocation2 + $0x20] sm:$0xff] %vm761, %v2139
        %2150 = vst.msk [vmem:[#allocation2 + $0x8] sm:$0xff] %vm764, %v2137
        %2151 = vst.msk [vmem:[#allocation2 + $0x20] sm:$0xff] %vm764, %v2139
        %2152 = vst.msk [vmem:[#allocation2 + $0x8] sm:$0xff] %vm767, %v2137
        %2153 = vst.msk [vmem:[#allocation2 + $0x20] sm:$0xff] %vm767, %v2139
        %2154 = vst.msk [vmem:[#allocation2 + $0x8] sm:$0xff] %vm770, %v2137
        %2155 = vst.msk [vmem:[#allocation2 + $0x20] sm:$0xff] %vm770, %v2139
        %2156 = vst.msk [vmem:[#allocation2 + $0x8] sm:$0xff] %vm773, %v2137
        %2157 = vst.msk [vmem:[#allocation2 + $0x20] sm:$0xff] %vm773, %v2139
        %2158 = vst.msk [vmem:[#allocation2 + $0x8] sm:$0xff] %vm776, %v2137
        %2159 = vst.msk [vmem:[#allocation2 + $0x10] sm:$0xff] %vm778, %v2137
        %2160 = vst.msk [vmem:[#allocation2 + $0x20] sm:$0xff] %vm776, %v2139
        %2161 = vst.msk [vmem:[#allocation2 + $0x28] sm:$0xff] %vm778, %v2139
        %2164 = vrot.lane.b32.xlu0 %v2106, 19
        %v2165 = vpop.permute.xlu0 %2164
        %2166 = vrot.lane.b32.xlu0 %v2109, 19
        %v2167 = vpop.permute.xlu0 %2166
        %v2168 = vsel %vm751, %v2137, %v2165
        %v2169 = vsel %vm751, %v2139, %v2167
        %2172 = vst.msk [vmem:[#allocation2 + $0x10] sm:$0xff] %vm792, %v2168
        %2173 = vst.msk [vmem:[#allocation2 + $0x28] sm:$0xff] %vm792, %v2169
        %2176 = vst.msk [vmem:[#allocation2 + $0x10] sm:$0xff] %vm797, %v2165
        %2177 = vst.msk [vmem:[#allocation2 + $0x28] sm:$0xff] %vm797, %v2167
        %2178 = vst.msk [vmem:[#allocation2] sm:$0xff] %vm751, -1e+30
        %2179 = vst.msk [vmem:[#allocation2 + $0x18] sm:$0xff] %vm751, -1e+30
        %2180 = vst.msk [vmem:[#allocation2 + $0x10] sm:$0xff] %vm802, -1e+30
        %2181 = vst.msk [vmem:[#allocation2 + $0x28] sm:$0xff] %vm802, -1e+30
        %2182 = vst.msk [vmem:[#allocation2] sm:$0xff] %vm805, -1e+30
        %2183 = vst.msk [vmem:[#allocation2 + $0x18] sm:$0xff] %vm805, -1e+30
        %2184 = vst.msk [vmem:[#allocation2] sm:$0xff] %vm808, -1e+30
        %2185 = vst.msk [vmem:[#allocation2 + $0x18] sm:$0xff] %vm808, -1e+30
        %2186 = vst.msk [vmem:[#allocation2] sm:$0xff] %vm811, -1e+30
        %2187 = vst.msk [vmem:[#allocation2 + $0x18] sm:$0xff] %vm811, -1e+30
        %2188 = vst.msk [vmem:[#allocation2] sm:$0xff] %vm814, -1e+30
        %2189 = vst.msk [vmem:[#allocation2 + $0x18] sm:$0xff] %vm814, -1e+30
        %2190 = vst.msk [vmem:[#allocation2] sm:$0xff] %vm817, -1e+30
        %2191 = vst.msk [vmem:[#allocation2 + $0x18] sm:$0xff] %vm817, -1e+30
        %2192 = vst.msk [vmem:[#allocation2] sm:$0xff] %vm820, -1e+30
        %2193 = vst.msk [vmem:[#allocation2 + $0x18] sm:$0xff] %vm820, -1e+30
        %2194 = vst.msk [vmem:[#allocation2 + $0x8] sm:$0xff] %vm823, -1e+30
        %2195 = vst.msk [vmem:[#allocation2 + $0x20] sm:$0xff] %vm823, -1e+30
        %2196 = vst.msk [vmem:[#allocation2 + $0x8] sm:$0xff] %vm826, -1e+30
        %2197 = vst.msk [vmem:[#allocation2 + $0x20] sm:$0xff] %vm826, -1e+30
        %2198 = vst.msk [vmem:[#allocation2 + $0x8] sm:$0xff] %vm829, -1e+30
        %2199 = vst.msk [vmem:[#allocation2 + $0x20] sm:$0xff] %vm829, -1e+30
        %2200 = vst.msk [vmem:[#allocation2 + $0x8] sm:$0xff] %vm832, -1e+30
        %2201 = vst.msk [vmem:[#allocation2 + $0x20] sm:$0xff] %vm832, -1e+30
        %2202 = vst.msk [vmem:[#allocation2 + $0x8] sm:$0xff] %vm835, -1e+30
        %2203 = vst.msk [vmem:[#allocation2 + $0x20] sm:$0xff] %vm835, -1e+30
        %2204 = vst.msk [vmem:[#allocation2 + $0x8] sm:$0xff] %vm838, -1e+30
        %2205 = vst.msk [vmem:[#allocation2 + $0x20] sm:$0xff] %vm838, -1e+30
        %2206 = vst.msk [vmem:[#allocation2 + $0x8] sm:$0xff] %vm841, -1e+30
        %2207 = vst.msk [vmem:[#allocation2 + $0x20] sm:$0xff] %vm841, -1e+30
        %2208 = vst.msk [vmem:[#allocation2 + $0x10] sm:$0xff] %vm844, -1e+30
        %2209 = vst.msk [vmem:[#allocation2 + $0x28] sm:$0xff] %vm844, -1e+30
        %2210 = vst.msk [vmem:[#allocation2 + $0x10] sm:$0xff] %vm847, -1e+30
        %2211 = vst.msk [vmem:[#allocation2 + $0x28] sm:$0xff] %vm847, -1e+30
        %v2212 = vlaneseq
        %v2213 = vshrl.u32 %v2212, 7
        %v2214 = vadd.s32 %v2213, 8
        %v2215 = vadd.s32 %v2213, 16
        %v2216 = vlaneseq
        %v2217 = vand.u32 %v2216, 127
        %v2218 = vmul.u32 %v2217, 2
        %vm2219 = vcmp.eq.s32.totalorder %v2213, %v2218
        %vm2220 = vcmp.eq.s32.totalorder %v2214, %v2218
        %vm2221 = vcmp.eq.s32.totalorder %v2215, %v2218
        %v2222 = vsel %vm2219, 1, 0
        %v2223 = vsel %vm2220, 1, 0
        %v2224 = vsel %vm2221, 1, 0
        %v2225 = vcvt.s32.f32 %v2222
        %v2226 = vcvt.s32.f32 %v2223
        %v2227 = vcvt.s32.f32 %v2224
        %v2228 = vld [vmem:[#allocation2] sm:$0xff]
        %v2229 = vld [vmem:[#allocation2 + $0x18] sm:$0xff]
        %2232 = vrot.lane.b32.xlu0 %v2228, 127
        %v2233 = vpop.permute.xlu0 %2232
        %2234 = vrot.lane.b32.xlu0 %v2229, 127
        %v2235 = vpop.permute.xlu0 %2234
        %v2238 = vmax.f32 %v2228, %v2233
        %v2239 = vmax.f32 %v2229, %v2235
        %2242 = vrot.lane.b32.xlu0 %v2238, 110
        %v2243 = vpop.permute.xlu0 %2242
        %2244 = vrot.lane.b32.xlu0 %v2239, 110
        %v2245 = vpop.permute.xlu0 %2244
        %v2248 = vmax.f32 %v2238, %v2243
        %v2249 = vmax.f32 %v2239, %v2245
        %vm2250 = vcmask 138240
        %v2252 = vsel %vm2250, %v2248, 0
        %v2255 = vsel %vm2250, %v2249, 0
        %vm2257 = vcmask 1040384
        %v2259 = vsel %vm2257, %v2227, 0
        %2261 = vmatprep.subr.mxu0 0.0
        %2262 = vmatpush1.msra.mxu0 0.0
        %2263 = vmatprep.subr.mxu0 0.0
        %2264 = vmatpush1.msra.mxu0 0.0
        %2265 = vmatprep.subr.mxu0 0.0
        %2266 = vmatpush1.msra.mxu0 0.0
        %2267 = vmatprep.subr.mxu0 0.0
        %2268 = vmatpush1.msra.mxu0 0.0
        %2269 = vmatprep.subr.mxu0 0.0
        %2270 = vmatpush1.msra.mxu0 0.0
        %2271 = vmatprep.subr.mxu0 0.0
        %2272 = vmatpush1.msra.mxu0 0.0
        %2273 = vmatprep.subr.mxu0 0.0
        %2274 = vmatpush1.msra.mxu0 0.0
        %2275 = vmatprep.subr.mxu0 0.0
        %2276 = vmatpush1.msra.mxu0 0.0
        %2277 = vmatprep.subr.mxu0 0.0
        %2278 = vmatpush1.msra.mxu0 0.0
        %2279 = vmatprep.subr.mxu0 0.0
        %2280 = vmatpush1.msra.mxu0 0.0
        %2281 = vmatprep.subr.mxu0 0.0
        %2282 = vmatpush1.msra.mxu0 0.0
        %2283 = vmatprep.subr.mxu0 0.0
        %2284 = vmatpush1.msra.mxu0 0.0
        %2285 = vmatprep.subr.mxu0 0.0
        %2286 = vmatpush1.msra.mxu0 0.0
        %2287 = vmatprep.subr.mxu0 0.0
        %2288 = vmatpush1.msra.mxu0 %v2259
        %2289 = vmatprep.subr.mxu0 0.0
        %2290 = vmatpush1.msra.mxu0 %v2226
        %2291 = vmatprep.subr.mxu0 0.0
        %2292 = vmatpush1.msra.mxu0 %v2225
        %2293 = vmatprep.subr.mxu0 0.0
        %2294 = vmatpush2.msra.mxu0 0.0
        %2295 = vmatprep.subr.mxu0 0.0
        %2296 = vmatpush2.msra.mxu0 0.0
        %2297 = vmatprep.subr.mxu0 0.0
        %2298 = vmatpush2.msra.mxu0 0.0
        %2299 = vmatprep.subr.mxu0 0.0
        %2300 = vmatpush2.msra.mxu0 0.0
        %2301 = vmatprep.subr.mxu0 0.0
        %2302 = vmatpush2.msra.mxu0 0.0
        %2303 = vmatprep.subr.mxu0 0.0
        %2304 = vmatpush2.msra.mxu0 0.0
        %2305 = vmatprep.subr.mxu0 0.0
        %2306 = vmatpush2.msra.mxu0 0.0
        %2307 = vmatprep.subr.mxu0 0.0
        %2308 = vmatpush2.msra.mxu0 0.0
        %2309 = vmatprep.subr.mxu0 0.0
        %2310 = vmatpush2.msra.mxu0 0.0
        %2311 = vmatprep.subr.mxu0 0.0
        %2312 = vmatpush2.msra.mxu0 0.0
        %2313 = vmatprep.subr.mxu0 0.0
        %2314 = vmatpush2.msra.mxu0 0.0
        %2315 = vmatprep.subr.mxu0 0.0
        %2316 = vmatpush2.msra.mxu0 0.0
        %2317 = vmatprep.subr.mxu0 0.0
        %2318 = vmatpush2.msra.mxu0 0.0
        %2319 = vmatprep.subr.mxu0 0.0
        %2320 = vmatpush2.msra.mxu0 0.0
        %2321 = vmatprep.subr.mxu0 0.0
        %2322 = vmatpush2.msra.mxu0 0.0
        %2323 = vmatprep.subr.mxu0 0.0
        %2324 = vmatpush2.msra.mxu0 0.0
        %2325 = vmatprep.mubr.f32.mxu0 0.0
        %2326 = vmatmul.mubr.f32.gmra.mxu0 %v2252
        %v2327 = vpop.f32.mrf.mxu0
        %v2328 = vadd.f32 0.0, %v2327
        %v2329 = vpop.f32.mrf.mxu0
        %2330 = vmatprep.mubr.f32.mxu0 0.0
        %2331 = vmatmul.mubr.f32.gmra.mxu0 %v2255
        %v2332 = vpop.f32.mrf.mxu0
        %v2333 = vadd.f32 0.0, %v2332
        %v2334 = vpop.f32.mrf.mxu0
        %2335 = vdwg.mxu0
        %2338 = vrot.lane.b32.xlu0 %v2328, 12
        %v2339 = vpop.permute.xlu0 %2338
        %2340 = vrot.lane.b32.xlu0 %v2333, 12
        %v2341 = vpop.permute.xlu0 %2340
        %vm2344 = vcmask 171104
        %2345 = vst.msk [vmem:[#allocation2] sm:$0xff] %vm2344, %v2339
        %2346 = vst.msk [vmem:[#allocation2 + $0x18] sm:$0xff] %vm2344, %v2341
        %v2347 = vld [vmem:[#allocation2] sm:$0xff]
        %v2348 = vld [vmem:[#allocation2 + $0x18] sm:$0xff]
        %2351 = vrot.lane.b32.xlu0 %v2347, 127
        %v2352 = vpop.permute.xlu0 %2351
        %2353 = vrot.lane.b32.xlu0 %v2348, 127
        %v2354 = vpop.permute.xlu0 %2353
        %v2357 = vmax.f32 %v2347, %v2352
        %v2358 = vmax.f32 %v2348, %v2354
        %2361 = vrot.lane.b32.xlu0 %v2357, 110
        %v2362 = vpop.permute.xlu0 %2361
        %2363 = vrot.lane.b32.xlu0 %v2358, 110
        %v2364 = vpop.permute.xlu0 %2363
        %v2367 = vmax.f32 %v2357, %v2362
        %v2368 = vmax.f32 %v2358, %v2364
        %2371 = vrot.lane.b32.xlu0 %v2367, 92
        %v2372 = vpop.permute.xlu0 %2371
        %2373 = vrot.lane.b32.xlu0 %v2368, 92
        %v2374 = vpop.permute.xlu0 %2373
        %v2375 = vsel %vm2250, %v2372, 0
        %v2377 = vsel %vm2250, %v2374, 0
        %2379 = vmatprep.subr.mxu0 0.0
        %2380 = vmatpush1.msra.mxu0 0.0
        %2381 = vmatprep.subr.mxu0 0.0
        %2382 = vmatpush1.msra.mxu0 0.0
        %2383 = vmatprep.subr.mxu0 0.0
        %2384 = vmatpush1.msra.mxu0 0.0
        %2385 = vmatprep.subr.mxu0 0.0
        %2386 = vmatpush1.msra.mxu0 0.0
        %2387 = vmatprep.subr.mxu0 0.0
        %2388 = vmatpush1.msra.mxu0 0.0
        %2389 = vmatprep.subr.mxu0 0.0
        %2390 = vmatpush1.msra.mxu0 0.0
        %2391 = vmatprep.subr.mxu0 0.0
        %2392 = vmatpush1.msra.mxu0 0.0
        %2393 = vmatprep.subr.mxu0 0.0
        %2394 = vmatpush1.msra.mxu0 0.0
        %2395 = vmatprep.subr.mxu0 0.0
        %2396 = vmatpush1.msra.mxu0 0.0
        %2397 = vmatprep.subr.mxu0 0.0
        %2398 = vmatpush1.msra.mxu0 0.0
        %2399 = vmatprep.subr.mxu0 0.0
        %2400 = vmatpush1.msra.mxu0 0.0
        %2401 = vmatprep.subr.mxu0 0.0
        %2402 = vmatpush1.msra.mxu0 0.0
        %2403 = vmatprep.subr.mxu0 0.0
        %2404 = vmatpush1.msra.mxu0 0.0
        %2405 = vmatprep.subr.mxu0 0.0
        %2406 = vmatpush1.msra.mxu0 %v2259
        %2407 = vmatprep.subr.mxu0 0.0
        %2408 = vmatpush1.msra.mxu0 %v2226
        %2409 = vmatprep.subr.mxu0 0.0
        %2410 = vmatpush1.msra.mxu0 %v2225
        %2411 = vmatprep.subr.mxu0 0.0
        %2412 = vmatpush2.msra.mxu0 0.0
        %2413 = vmatprep.subr.mxu0 0.0
        %2414 = vmatpush2.msra.mxu0 0.0
        %2415 = vmatprep.subr.mxu0 0.0
        %2416 = vmatpush2.msra.mxu0 0.0
        %2417 = vmatprep.subr.mxu0 0.0
        %2418 = vmatpush2.msra.mxu0 0.0
        %2419 = vmatprep.subr.mxu0 0.0
        %2420 = vmatpush2.msra.mxu0 0.0
        %2421 = vmatprep.subr.mxu0 0.0
        %2422 = vmatpush2.msra.mxu0 0.0
        %2423 = vmatprep.subr.mxu0 0.0
        %2424 = vmatpush2.msra.mxu0 0.0
        %2425 = vmatprep.subr.mxu0 0.0
        %2426 = vmatpush2.msra.mxu0 0.0
        %2427 = vmatprep.subr.mxu0 0.0
        %2428 = vmatpush2.msra.mxu0 0.0
        %2429 = vmatprep.subr.mxu0 0.0
        %2430 = vmatpush2.msra.mxu0 0.0
        %2431 = vmatprep.subr.mxu0 0.0
        %2432 = vmatpush2.msra.mxu0 0.0
        %2433 = vmatprep.subr.mxu0 0.0
        %2434 = vmatpush2.msra.mxu0 0.0
        %2435 = vmatprep.subr.mxu0 0.0
        %2436 = vmatpush2.msra.mxu0 0.0
        %2437 = vmatprep.subr.mxu0 0.0
        %2438 = vmatpush2.msra.mxu0 0.0
        %2439 = vmatprep.subr.mxu0 0.0
        %2440 = vmatpush2.msra.mxu0 0.0
        %2441 = vmatprep.subr.mxu0 0.0
        %2442 = vmatpush2.msra.mxu0 0.0
        %2443 = vmatprep.mubr.f32.mxu0 0.0
        %2444 = vmatmul.mubr.f32.gmra.mxu0 %v2375
        %v2445 = vpop.f32.mrf.mxu0
        %v2446 = vadd.f32 0.0, %v2445
        %v2447 = vpop.f32.mrf.mxu0
        %2448 = vmatprep.mubr.f32.mxu0 0.0
        %2449 = vmatmul.mubr.f32.gmra.mxu0 %v2377
        %v2450 = vpop.f32.mrf.mxu0
        %v2451 = vadd.f32 0.0, %v2450
        %v2452 = vpop.f32.mrf.mxu0
        %2453 = vdwg.mxu0
        %2456 = vrot.lane.b32.xlu0 %v2446, 23
        %v2457 = vpop.permute.xlu0 %2456
        %2458 = vrot.lane.b32.xlu0 %v2451, 23
        %v2459 = vpop.permute.xlu0 %2458
        %vm2462 = vcmask 261304
        %2463 = vst.msk [vmem:[#allocation2] sm:$0xff] %vm2462, %v2457
        %2464 = vst.msk [vmem:[#allocation2 + $0x18] sm:$0xff] %vm2462, %v2459
        %v2465 = vld [vmem:[#allocation2] sm:$0xff]
        %v2466 = vld [vmem:[#allocation2 + $0x18] sm:$0xff]
        %2469 = vrot.lane.b32.xlu0 %v2465, 127
        %v2470 = vpop.permute.xlu0 %2469
        %2471 = vrot.lane.b32.xlu0 %v2466, 127
        %v2472 = vpop.permute.xlu0 %2471
        %v2475 = vmax.f32 %v2465, %v2470
        %v2476 = vmax.f32 %v2466, %v2472
        %2479 = vrot.lane.b32.xlu0 %v2475, 110
        %v2480 = vpop.permute.xlu0 %2479
        %2481 = vrot.lane.b32.xlu0 %v2476, 110
        %v2482 = vpop.permute.xlu0 %2481
        %v2485 = vmax.f32 %v2475, %v2480
        %v2486 = vmax.f32 %v2476, %v2482
        %2489 = vrot.lane.b32.xlu0 %v2485, 56
        %v2490 = vpop.permute.xlu0 %2489
        %2491 = vrot.lane.b32.xlu0 %v2486, 56
        %v2492 = vpop.permute.xlu0 %2491
        %v2493 = vsel %vm2250, %v2490, 0
        %v2495 = vsel %vm2250, %v2492, 0
        %2497 = vmatprep.subr.mxu0 0.0
        %2498 = vmatpush1.msra.mxu0 0.0
        %2499 = vmatprep.subr.mxu0 0.0
        %2500 = vmatpush1.msra.mxu0 0.0
        %2501 = vmatprep.subr.mxu0 0.0
        %2502 = vmatpush1.msra.mxu0 0.0
        %2503 = vmatprep.subr.mxu0 0.0
        %2504 = vmatpush1.msra.mxu0 0.0
        %2505 = vmatprep.subr.mxu0 0.0
        %2506 = vmatpush1.msra.mxu0 0.0
        %2507 = vmatprep.subr.mxu0 0.0
        %2508 = vmatpush1.msra.mxu0 0.0
        %2509 = vmatprep.subr.mxu0 0.0
        %2510 = vmatpush1.msra.mxu0 0.0
        %2511 = vmatprep.subr.mxu0 0.0
        %2512 = vmatpush1.msra.mxu0 0.0
        %2513 = vmatprep.subr.mxu0 0.0
        %2514 = vmatpush1.msra.mxu0 0.0
        %2515 = vmatprep.subr.mxu0 0.0
        %2516 = vmatpush1.msra.mxu0 0.0
        %2517 = vmatprep.subr.mxu0 0.0
        %2518 = vmatpush1.msra.mxu0 0.0
        %2519 = vmatprep.subr.mxu0 0.0
        %2520 = vmatpush1.msra.mxu0 0.0
        %2521 = vmatprep.subr.mxu0 0.0
        %2522 = vmatpush1.msra.mxu0 0.0
        %2523 = vmatprep.subr.mxu0 0.0
        %2524 = vmatpush1.msra.mxu0 %v2259
        %2525 = vmatprep.subr.mxu0 0.0
        %2526 = vmatpush1.msra.mxu0 %v2226
        %2527 = vmatprep.subr.mxu0 0.0
        %2528 = vmatpush1.msra.mxu0 %v2225
        %2529 = vmatprep.subr.mxu0 0.0
        %2530 = vmatpush2.msra.mxu0 0.0
        %2531 = vmatprep.subr.mxu0 0.0
        %2532 = vmatpush2.msra.mxu0 0.0
        %2533 = vmatprep.subr.mxu0 0.0
        %2534 = vmatpush2.msra.mxu0 0.0
        %2535 = vmatprep.subr.mxu0 0.0
        %2536 = vmatpush2.msra.mxu0 0.0
        %2537 = vmatprep.subr.mxu0 0.0
        %2538 = vmatpush2.msra.mxu0 0.0
        %2539 = vmatprep.subr.mxu0 0.0
        %2540 = vmatpush2.msra.mxu0 0.0
        %2541 = vmatprep.subr.mxu0 0.0
        %2542 = vmatpush2.msra.mxu0 0.0
        %2543 = vmatprep.subr.mxu0 0.0
        %2544 = vmatpush2.msra.mxu0 0.0
        %2545 = vmatprep.subr.mxu0 0.0
        %2546 = vmatpush2.msra.mxu0 0.0
        %2547 = vmatprep.subr.mxu0 0.0
        %2548 = vmatpush2.msra.mxu0 0.0
        %2549 = vmatprep.subr.mxu0 0.0
        %2550 = vmatpush2.msra.mxu0 0.0
        %2551 = vmatprep.subr.mxu0 0.0
        %2552 = vmatpush2.msra.mxu0 0.0
        %2553 = vmatprep.subr.mxu0 0.0
        %2554 = vmatpush2.msra.mxu0 0.0
        %2555 = vmatprep.subr.mxu0 0.0
        %2556 = vmatpush2.msra.mxu0 0.0
        %2557 = vmatprep.subr.mxu0 0.0
        %2558 = vmatpush2.msra.mxu0 0.0
        %2559 = vmatprep.subr.mxu0 0.0
        %2560 = vmatpush2.msra.mxu0 0.0
        %2561 = vmatprep.mubr.f32.mxu0 0.0
        %2562 = vmatmul.mubr.f32.gmra.mxu0 %v2493
        %v2563 = vpop.f32.mrf.mxu0
        %v2564 = vadd.f32 0.0, %v2563
        %v2565 = vpop.f32.mrf.mxu0
        %2566 = vmatprep.mubr.f32.mxu0 0.0
        %2567 = vmatmul.mubr.f32.gmra.mxu0 %v2495
        %v2568 = vpop.f32.mrf.mxu0
        %v2569 = vadd.f32 0.0, %v2568
        %v2570 = vpop.f32.mrf.mxu0
        %2571 = vdwg.mxu0
        %2574 = vrot.lane.b32.xlu0 %v2564, 34
        %v2575 = vpop.permute.xlu0 %2574
        %2576 = vrot.lane.b32.xlu0 %v2569, 34
        %v2577 = vpop.permute.xlu0 %2576
        %vm2580 = vcmask 351504
        %2581 = vst.msk [vmem:[#allocation2] sm:$0xff] %vm2580, %v2575
        %2582 = vst.msk [vmem:[#allocation2 + $0x18] sm:$0xff] %vm2580, %v2577
        %v2583 = vld [vmem:[#allocation2] sm:$0xff]
        %v2584 = vld [vmem:[#allocation2 + $0x18] sm:$0xff]
        %2587 = vrot.lane.b32.xlu0 %v2583, 127
        %v2588 = vpop.permute.xlu0 %2587
        %2589 = vrot.lane.b32.xlu0 %v2584, 127
        %v2590 = vpop.permute.xlu0 %2589
        %v2593 = vmax.f32 %v2583, %v2588
        %v2594 = vmax.f32 %v2584, %v2590
        %v2595 = vld [vmem:[#allocation2 + $0x8] sm:$0xff]
        %v2596 = vld [vmem:[#allocation2 + $0x20] sm:$0xff]
        %2599 = vrot.lane.b32.xlu0 %v2595, 127
        %v2600 = vpop.permute.xlu0 %2599
        %2601 = vrot.lane.b32.xlu0 %v2596, 127
        %v2602 = vpop.permute.xlu0 %2601
        %v2603 = vsel %vm311, %v2588, %v2600
        %v2604 = vsel %vm311, %v2590, %v2602
        %v2609 = vmax.f32 %v2583, %v2603
        %v2610 = vmax.f32 %v2595, %v2600
        %v2611 = vmax.f32 %v2584, %v2604
        %v2612 = vmax.f32 %v2596, %v2602
        %2617 = vrot.lane.b32.xlu0 %v2609, 110
        %v2618 = vpop.permute.xlu0 %2617
        %2619 = vrot.lane.b32.xlu0 %v2610, 110
        %v2620 = vpop.permute.xlu0 %2619
        %2621 = vrot.lane.b32.xlu0 %v2611, 110
        %v2622 = vpop.permute.xlu0 %2621
        %2623 = vrot.lane.b32.xlu0 %v2612, 110
        %v2624 = vpop.permute.xlu0 %2623
        %v2625 = vsel %vm365, %v2618, %v2620
        %v2626 = vsel %vm365, %v2622, %v2624
        %v2629 = vmax.f32 %v2593, %v2625
        %v2630 = vmax.f32 %v2594, %v2626
        %2633 = vrot.lane.b32.xlu0 %v2629, 20
        %v2634 = vpop.permute.xlu0 %2633
        %2635 = vrot.lane.b32.xlu0 %v2630, 20
        %v2636 = vpop.permute.xlu0 %2635
        %v2637 = vsel %vm2250, %v2634, 0
        %v2639 = vsel %vm2250, %v2636, 0
        %2641 = vmatprep.subr.mxu0 0.0
        %2642 = vmatpush1.msra.mxu0 0.0
        %2643 = vmatprep.subr.mxu0 0.0
        %2644 = vmatpush1.msra.mxu0 0.0
        %2645 = vmatprep.subr.mxu0 0.0
        %2646 = vmatpush1.msra.mxu0 0.0
        %2647 = vmatprep.subr.mxu0 0.0
        %2648 = vmatpush1.msra.mxu0 0.0
        %2649 = vmatprep.subr.mxu0 0.0
        %2650 = vmatpush1.msra.mxu0 0.0
        %2651 = vmatprep.subr.mxu0 0.0
        %2652 = vmatpush1.msra.mxu0 0.0
        %2653 = vmatprep.subr.mxu0 0.0
        %2654 = vmatpush1.msra.mxu0 0.0
        %2655 = vmatprep.subr.mxu0 0.0
        %2656 = vmatpush1.msra.mxu0 0.0
        %2657 = vmatprep.subr.mxu0 0.0
        %2658 = vmatpush1.msra.mxu0 0.0
        %2659 = vmatprep.subr.mxu0 0.0
        %2660 = vmatpush1.msra.mxu0 0.0
        %2661 = vmatprep.subr.mxu0 0.0
        %2662 = vmatpush1.msra.mxu0 0.0
        %2663 = vmatprep.subr.mxu0 0.0
        %2664 = vmatpush1.msra.mxu0 0.0
        %2665 = vmatprep.subr.mxu0 0.0
        %2666 = vmatpush1.msra.mxu0 0.0
        %2667 = vmatprep.subr.mxu0 0.0
        %2668 = vmatpush1.msra.mxu0 %v2259
        %2669 = vmatprep.subr.mxu0 0.0
        %2670 = vmatpush1.msra.mxu0 %v2226
        %2671 = vmatprep.subr.mxu0 0.0
        %2672 = vmatpush1.msra.mxu0 %v2225
        %2673 = vmatprep.subr.mxu0 0.0
        %2674 = vmatpush2.msra.mxu0 0.0
        %2675 = vmatprep.subr.mxu0 0.0
        %2676 = vmatpush2.msra.mxu0 0.0
        %2677 = vmatprep.subr.mxu0 0.0
        %2678 = vmatpush2.msra.mxu0 0.0
        %2679 = vmatprep.subr.mxu0 0.0
        %2680 = vmatpush2.msra.mxu0 0.0
        %2681 = vmatprep.subr.mxu0 0.0
        %2682 = vmatpush2.msra.mxu0 0.0
        %2683 = vmatprep.subr.mxu0 0.0
        %2684 = vmatpush2.msra.mxu0 0.0
        %2685 = vmatprep.subr.mxu0 0.0
        %2686 = vmatpush2.msra.mxu0 0.0
        %2687 = vmatprep.subr.mxu0 0.0
        %2688 = vmatpush2.msra.mxu0 0.0
        %2689 = vmatprep.subr.mxu0 0.0
        %2690 = vmatpush2.msra.mxu0 0.0
        %2691 = vmatprep.subr.mxu0 0.0
        %2692 = vmatpush2.msra.mxu0 0.0
        %2693 = vmatprep.subr.mxu0 0.0
        %2694 = vmatpush2.msra.mxu0 0.0
        %2695 = vmatprep.subr.mxu0 0.0
        %2696 = vmatpush2.msra.mxu0 0.0
        %2697 = vmatprep.subr.mxu0 0.0
        %2698 = vmatpush2.msra.mxu0 0.0
        %2699 = vmatprep.subr.mxu0 0.0
        %2700 = vmatpush2.msra.mxu0 0.0
        %2701 = vmatprep.subr.mxu0 0.0
        %2702 = vmatpush2.msra.mxu0 0.0
        %2703 = vmatprep.subr.mxu0 0.0
        %2704 = vmatpush2.msra.mxu0 0.0
        %2705 = vmatprep.mubr.f32.mxu0 0.0
        %2706 = vmatmul.mubr.f32.gmra.mxu0 %v2637
        %v2707 = vpop.f32.mrf.mxu0
        %v2708 = vadd.f32 0.0, %v2707
        %v2709 = vpop.f32.mrf.mxu0
        %2710 = vmatprep.mubr.f32.mxu0 0.0
        %2711 = vmatmul.mubr.f32.gmra.mxu0 %v2639
        %v2712 = vpop.f32.mrf.mxu0
        %v2713 = vadd.f32 0.0, %v2712
        %v2714 = vpop.f32.mrf.mxu0
        %2715 = vdwg.mxu0
        %2718 = vrot.lane.b32.xlu0 %v2708, 45
        %v2719 = vpop.permute.xlu0 %2718
        %2720 = vrot.lane.b32.xlu0 %v2713, 45
        %v2721 = vpop.permute.xlu0 %2720
        %vm2724 = vcmask 441704
        %2725 = vst.msk [vmem:[#allocation2] sm:$0xff] %vm2724, %v2719
        %2726 = vst.msk [vmem:[#allocation2 + $0x18] sm:$0xff] %vm2724, %v2721
        %v2727 = vld [vmem:[#allocation2 + $0x8] sm:$0xff]
        %v2728 = vld [vmem:[#allocation2 + $0x20] sm:$0xff]
        %2731 = vrot.lane.b32.xlu0 %v2727, 127
        %v2732 = vpop.permute.xlu0 %2731
        %2733 = vrot.lane.b32.xlu0 %v2728, 127
        %v2734 = vpop.permute.xlu0 %2733
        %v2737 = vmax.f32 %v2727, %v2732
        %v2738 = vmax.f32 %v2728, %v2734
        %2741 = vrot.lane.b32.xlu0 %v2737, 110
        %v2742 = vpop.permute.xlu0 %2741
        %2743 = vrot.lane.b32.xlu0 %v2738, 110
        %v2744 = vpop.permute.xlu0 %2743
        %v2747 = vmax.f32 %v2737, %v2742
        %v2748 = vmax.f32 %v2738, %v2744
        %2751 = vrot.lane.b32.xlu0 %v2747, 112
        %v2752 = vpop.permute.xlu0 %2751
        %2753 = vrot.lane.b32.xlu0 %v2748, 112
        %v2754 = vpop.permute.xlu0 %2753
        %v2755 = vsel %vm2250, %v2752, 0
        %v2757 = vsel %vm2250, %v2754, 0
        %2759 = vmatprep.subr.mxu0 0.0
        %2760 = vmatpush1.msra.mxu0 0.0
        %2761 = vmatprep.subr.mxu0 0.0
        %2762 = vmatpush1.msra.mxu0 0.0
        %2763 = vmatprep.subr.mxu0 0.0
        %2764 = vmatpush1.msra.mxu0 0.0
        %2765 = vmatprep.subr.mxu0 0.0
        %2766 = vmatpush1.msra.mxu0 0.0
        %2767 = vmatprep.subr.mxu0 0.0
        %2768 = vmatpush1.msra.mxu0 0.0
        %2769 = vmatprep.subr.mxu0 0.0
        %2770 = vmatpush1.msra.mxu0 0.0
        %2771 = vmatprep.subr.mxu0 0.0
        %2772 = vmatpush1.msra.mxu0 0.0
        %2773 = vmatprep.subr.mxu0 0.0
        %2774 = vmatpush1.msra.mxu0 0.0
        %2775 = vmatprep.subr.mxu0 0.0
        %2776 = vmatpush1.msra.mxu0 0.0
        %2777 = vmatprep.subr.mxu0 0.0
        %2778 = vmatpush1.msra.mxu0 0.0
        %2779 = vmatprep.subr.mxu0 0.0
        %2780 = vmatpush1.msra.mxu0 0.0
        %2781 = vmatprep.subr.mxu0 0.0
        %2782 = vmatpush1.msra.mxu0 0.0
        %2783 = vmatprep.subr.mxu0 0.0
        %2784 = vmatpush1.msra.mxu0 0.0
        %2785 = vmatprep.subr.mxu0 0.0
        %2786 = vmatpush1.msra.mxu0 %v2259
        %2787 = vmatprep.subr.mxu0 0.0
        %2788 = vmatpush1.msra.mxu0 %v2226
        %2789 = vmatprep.subr.mxu0 0.0
        %2790 = vmatpush1.msra.mxu0 %v2225
        %2791 = vmatprep.subr.mxu0 0.0
        %2792 = vmatpush2.msra.mxu0 0.0
        %2793 = vmatprep.subr.mxu0 0.0
        %2794 = vmatpush2.msra.mxu0 0.0
        %2795 = vmatprep.subr.mxu0 0.0
        %2796 = vmatpush2.msra.mxu0 0.0
        %2797 = vmatprep.subr.mxu0 0.0
        %2798 = vmatpush2.msra.mxu0 0.0
        %2799 = vmatprep.subr.mxu0 0.0
        %2800 = vmatpush2.msra.mxu0 0.0
        %2801 = vmatprep.subr.mxu0 0.0
        %2802 = vmatpush2.msra.mxu0 0.0
        %2803 = vmatprep.subr.mxu0 0.0
        %2804 = vmatpush2.msra.mxu0 0.0
        %2805 = vmatprep.subr.mxu0 0.0
        %2806 = vmatpush2.msra.mxu0 0.0
        %2807 = vmatprep.subr.mxu0 0.0
        %2808 = vmatpush2.msra.mxu0 0.0
        %2809 = vmatprep.subr.mxu0 0.0
        %2810 = vmatpush2.msra.mxu0 0.0
        %2811 = vmatprep.subr.mxu0 0.0
        %2812 = vmatpush2.msra.mxu0 0.0
        %2813 = vmatprep.subr.mxu0 0.0
        %2814 = vmatpush2.msra.mxu0 0.0
        %2815 = vmatprep.subr.mxu0 0.0
        %2816 = vmatpush2.msra.mxu0 0.0
        %2817 = vmatprep.subr.mxu0 0.0
        %2818 = vmatpush2.msra.mxu0 0.0
        %2819 = vmatprep.subr.mxu0 0.0
        %2820 = vmatpush2.msra.mxu0 0.0
        %2821 = vmatprep.subr.mxu0 0.0
        %2822 = vmatpush2.msra.mxu0 0.0
        %2823 = vmatprep.mubr.f32.mxu0 0.0
        %2824 = vmatmul.mubr.f32.gmra.mxu0 %v2755
        %v2825 = vpop.f32.mrf.mxu0
        %v2826 = vadd.f32 0.0, %v2825
        %v2827 = vpop.f32.mrf.mxu0
        %2828 = vmatprep.mubr.f32.mxu0 0.0
        %2829 = vmatmul.mubr.f32.gmra.mxu0 %v2757
        %v2830 = vpop.f32.mrf.mxu0
        %v2831 = vadd.f32 0.0, %v2830
        %v2832 = vpop.f32.mrf.mxu0
        %2833 = vdwg.mxu0
        %2836 = vrot.lane.b32.xlu0 %v2826, 56
        %v2837 = vpop.permute.xlu0 %2836
        %2838 = vrot.lane.b32.xlu0 %v2831, 56
        %v2839 = vpop.permute.xlu0 %2838
        %vm2842 = vcmask 531904
        %2843 = vst.msk [vmem:[#allocation2] sm:$0xff] %vm2842, %v2837
        %2844 = vst.msk [vmem:[#allocation2 + $0x18] sm:$0xff] %vm2842, %v2839
        %v2845 = vld [vmem:[#allocation2 + $0x8] sm:$0xff]
        %v2846 = vld [vmem:[#allocation2 + $0x20] sm:$0xff]
        %2849 = vrot.lane.b32.xlu0 %v2845, 127
        %v2850 = vpop.permute.xlu0 %2849
        %2851 = vrot.lane.b32.xlu0 %v2846, 127
        %v2852 = vpop.permute.xlu0 %2851
        %v2855 = vmax.f32 %v2845, %v2850
        %v2856 = vmax.f32 %v2846, %v2852
        %2859 = vrot.lane.b32.xlu0 %v2855, 110
        %v2860 = vpop.permute.xlu0 %2859
        %2861 = vrot.lane.b32.xlu0 %v2856, 110
        %v2862 = vpop.permute.xlu0 %2861
        %v2865 = vmax.f32 %v2855, %v2860
        %v2866 = vmax.f32 %v2856, %v2862
        %2869 = vrot.lane.b32.xlu0 %v2865, 76
        %v2870 = vpop.permute.xlu0 %2869
        %2871 = vrot.lane.b32.xlu0 %v2866, 76
        %v2872 = vpop.permute.xlu0 %2871
        %v2873 = vsel %vm2250, %v2870, 0
        %v2875 = vsel %vm2250, %v2872, 0
        %2877 = vmatprep.subr.mxu0 0.0
        %2878 = vmatpush1.msra.mxu0 0.0
        %2879 = vmatprep.subr.mxu0 0.0
        %2880 = vmatpush1.msra.mxu0 0.0
        %2881 = vmatprep.subr.mxu0 0.0
        %2882 = vmatpush1.msra.mxu0 0.0
        %2883 = vmatprep.subr.mxu0 0.0
        %2884 = vmatpush1.msra.mxu0 0.0
        %2885 = vmatprep.subr.mxu0 0.0
        %2886 = vmatpush1.msra.mxu0 0.0
        %2887 = vmatprep.subr.mxu0 0.0
        %2888 = vmatpush1.msra.mxu0 0.0
        %2889 = vmatprep.subr.mxu0 0.0
        %2890 = vmatpush1.msra.mxu0 0.0
        %2891 = vmatprep.subr.mxu0 0.0
        %2892 = vmatpush1.msra.mxu0 0.0
        %2893 = vmatprep.subr.mxu0 0.0
        %2894 = vmatpush1.msra.mxu0 0.0
        %2895 = vmatprep.subr.mxu0 0.0
        %2896 = vmatpush1.msra.mxu0 0.0
        %2897 = vmatprep.subr.mxu0 0.0
        %2898 = vmatpush1.msra.mxu0 0.0
        %2899 = vmatprep.subr.mxu0 0.0
        %2900 = vmatpush1.msra.mxu0 0.0
        %2901 = vmatprep.subr.mxu0 0.0
        %2902 = vmatpush1.msra.mxu0 0.0
        %2903 = vmatprep.subr.mxu0 0.0
        %2904 = vmatpush1.msra.mxu0 %v2259
        %2905 = vmatprep.subr.mxu0 0.0
        %2906 = vmatpush1.msra.mxu0 %v2226
        %2907 = vmatprep.subr.mxu0 0.0
        %2908 = vmatpush1.msra.mxu0 %v2225
        %2909 = vmatprep.subr.mxu0 0.0
        %2910 = vmatpush2.msra.mxu0 0.0
        %2911 = vmatprep.subr.mxu0 0.0
        %2912 = vmatpush2.msra.mxu0 0.0
        %2913 = vmatprep.subr.mxu0 0.0
        %2914 = vmatpush2.msra.mxu0 0.0
        %2915 = vmatprep.subr.mxu0 0.0
        %2916 = vmatpush2.msra.mxu0 0.0
        %2917 = vmatprep.subr.mxu0 0.0
        %2918 = vmatpush2.msra.mxu0 0.0
        %2919 = vmatprep.subr.mxu0 0.0
        %2920 = vmatpush2.msra.mxu0 0.0
        %2921 = vmatprep.subr.mxu0 0.0
        %2922 = vmatpush2.msra.mxu0 0.0
        %2923 = vmatprep.subr.mxu0 0.0
        %2924 = vmatpush2.msra.mxu0 0.0
        %2925 = vmatprep.subr.mxu0 0.0
        %2926 = vmatpush2.msra.mxu0 0.0
        %2927 = vmatprep.subr.mxu0 0.0
        %2928 = vmatpush2.msra.mxu0 0.0
        %2929 = vmatprep.subr.mxu0 0.0
        %2930 = vmatpush2.msra.mxu0 0.0
        %2931 = vmatprep.subr.mxu0 0.0
        %2932 = vmatpush2.msra.mxu0 0.0
        %2933 = vmatprep.subr.mxu0 0.0
        %2934 = vmatpush2.msra.mxu0 0.0
        %2935 = vmatprep.subr.mxu0 0.0
        %2936 = vmatpush2.msra.mxu0 0.0
        %2937 = vmatprep.subr.mxu0 0.0
        %2938 = vmatpush2.msra.mxu0 0.0
        %2939 = vmatprep.subr.mxu0 0.0
        %2940 = vmatpush2.msra.mxu0 0.0
        %2941 = vmatprep.mubr.f32.mxu0 0.0
        %2942 = vmatmul.mubr.f32.gmra.mxu0 %v2873
        %v2943 = vpop.f32.mrf.mxu0
        %v2944 = vadd.f32 0.0, %v2943
        %v2945 = vpop.f32.mrf.mxu0
        %2946 = vmatprep.mubr.f32.mxu0 0.0
        %2947 = vmatmul.mubr.f32.gmra.mxu0 %v2875
        %v2948 = vpop.f32.mrf.mxu0
        %v2949 = vadd.f32 0.0, %v2948
        %v2950 = vpop.f32.mrf.mxu0
        %2951 = vdwg.mxu0
        %2954 = vrot.lane.b32.xlu0 %v2944, 67
        %v2955 = vpop.permute.xlu0 %2954
        %2956 = vrot.lane.b32.xlu0 %v2949, 67
        %v2957 = vpop.permute.xlu0 %2956
        %vm2960 = vcmask 622104
        %2961 = vst.msk [vmem:[#allocation2] sm:$0xff] %vm2960, %v2955
        %2962 = vst.msk [vmem:[#allocation2 + $0x18] sm:$0xff] %vm2960, %v2957
        %v2963 = vld [vmem:[#allocation2 + $0x8] sm:$0xff]
        %v2964 = vld [vmem:[#allocation2 + $0x20] sm:$0xff]
        %2967 = vrot.lane.b32.xlu0 %v2963, 127
        %v2968 = vpop.permute.xlu0 %2967
        %2969 = vrot.lane.b32.xlu0 %v2964, 127
        %v2970 = vpop.permute.xlu0 %2969
        %v2973 = vmax.f32 %v2963, %v2968
        %v2974 = vmax.f32 %v2964, %v2970
        %2977 = vrot.lane.b32.xlu0 %v2973, 110
        %v2978 = vpop.permute.xlu0 %2977
        %2979 = vrot.lane.b32.xlu0 %v2974, 110
        %v2980 = vpop.permute.xlu0 %2979
        %v2983 = vmax.f32 %v2973, %v2978
        %v2984 = vmax.f32 %v2974, %v2980
        %2987 = vrot.lane.b32.xlu0 %v2983, 40
        %v2988 = vpop.permute.xlu0 %2987
        %2989 = vrot.lane.b32.xlu0 %v2984, 40
        %v2990 = vpop.permute.xlu0 %2989
        %v2991 = vsel %vm2250, %v2988, 0
        %v2993 = vsel %vm2250, %v2990, 0
        %2995 = vmatprep.subr.mxu0 0.0
        %2996 = vmatpush1.msra.mxu0 0.0
        %2997 = vmatprep.subr.mxu0 0.0
        %2998 = vmatpush1.msra.mxu0 0.0
        %2999 = vmatprep.subr.mxu0 0.0
        %3000 = vmatpush1.msra.mxu0 0.0
        %3001 = vmatprep.subr.mxu0 0.0
        %3002 = vmatpush1.msra.mxu0 0.0
        %3003 = vmatprep.subr.mxu0 0.0
        %3004 = vmatpush1.msra.mxu0 0.0
        %3005 = vmatprep.subr.mxu0 0.0
        %3006 = vmatpush1.msra.mxu0 0.0
        %3007 = vmatprep.subr.mxu0 0.0
        %3008 = vmatpush1.msra.mxu0 0.0
        %3009 = vmatprep.subr.mxu0 0.0
        %3010 = vmatpush1.msra.mxu0 0.0
        %3011 = vmatprep.subr.mxu0 0.0
        %3012 = vmatpush1.msra.mxu0 0.0
        %3013 = vmatprep.subr.mxu0 0.0
        %3014 = vmatpush1.msra.mxu0 0.0
        %3015 = vmatprep.subr.mxu0 0.0
        %3016 = vmatpush1.msra.mxu0 0.0
        %3017 = vmatprep.subr.mxu0 0.0
        %3018 = vmatpush1.msra.mxu0 0.0
        %3019 = vmatprep.subr.mxu0 0.0
        %3020 = vmatpush1.msra.mxu0 0.0
        %3021 = vmatprep.subr.mxu0 0.0
        %3022 = vmatpush1.msra.mxu0 %v2259
        %3023 = vmatprep.subr.mxu0 0.0
        %3024 = vmatpush1.msra.mxu0 %v2226
        %3025 = vmatprep.subr.mxu0 0.0
        %3026 = vmatpush1.msra.mxu0 %v2225
        %3027 = vmatprep.subr.mxu0 0.0
        %3028 = vmatpush2.msra.mxu0 0.0
        %3029 = vmatprep.subr.mxu0 0.0
        %3030 = vmatpush2.msra.mxu0 0.0
        %3031 = vmatprep.subr.mxu0 0.0
        %3032 = vmatpush2.msra.mxu0 0.0
        %3033 = vmatprep.subr.mxu0 0.0
        %3034 = vmatpush2.msra.mxu0 0.0
        %3035 = vmatprep.subr.mxu0 0.0
        %3036 = vmatpush2.msra.mxu0 0.0
        %3037 = vmatprep.subr.mxu0 0.0
        %3038 = vmatpush2.msra.mxu0 0.0
        %3039 = vmatprep.subr.mxu0 0.0
        %3040 = vmatpush2.msra.mxu0 0.0
        %3041 = vmatprep.subr.mxu0 0.0
        %3042 = vmatpush2.msra.mxu0 0.0
        %3043 = vmatprep.subr.mxu0 0.0
        %3044 = vmatpush2.msra.mxu0 0.0
        %3045 = vmatprep.subr.mxu0 0.0
        %3046 = vmatpush2.msra.mxu0 0.0
        %3047 = vmatprep.subr.mxu0 0.0
        %3048 = vmatpush2.msra.mxu0 0.0
        %3049 = vmatprep.subr.mxu0 0.0
        %3050 = vmatpush2.msra.mxu0 0.0
        %3051 = vmatprep.subr.mxu0 0.0
        %3052 = vmatpush2.msra.mxu0 0.0
        %3053 = vmatprep.subr.mxu0 0.0
        %3054 = vmatpush2.msra.mxu0 0.0
        %3055 = vmatprep.subr.mxu0 0.0
        %3056 = vmatpush2.msra.mxu0 0.0
        %3057 = vmatprep.subr.mxu0 0.0
        %3058 = vmatpush2.msra.mxu0 0.0
        %3059 = vmatprep.mubr.f32.mxu0 0.0
        %3060 = vmatmul.mubr.f32.gmra.mxu0 %v2991
        %v3061 = vpop.f32.mrf.mxu0
        %v3062 = vadd.f32 0.0, %v3061
        %v3063 = vpop.f32.mrf.mxu0
        %3064 = vmatprep.mubr.f32.mxu0 0.0
        %3065 = vmatmul.mubr.f32.gmra.mxu0 %v2993
        %v3066 = vpop.f32.mrf.mxu0
        %v3067 = vadd.f32 0.0, %v3066
        %v3068 = vpop.f32.mrf.mxu0
        %3069 = vdwg.mxu0
        %3072 = vrot.lane.b32.xlu0 %v3062, 78
        %v3073 = vpop.permute.xlu0 %3072
        %3074 = vrot.lane.b32.xlu0 %v3067, 78
        %v3075 = vpop.permute.xlu0 %3074
        %vm3078 = vcmask 712304
        %3079 = vst.msk [vmem:[#allocation2] sm:$0xff] %vm3078, %v3073
        %3080 = vst.msk [vmem:[#allocation2 + $0x18] sm:$0xff] %vm3078, %v3075
        %v3081 = vld [vmem:[#allocation2 + $0x8] sm:$0xff]
        %v3082 = vld [vmem:[#allocation2 + $0x10] sm:$0xff]
        %v3083 = vld [vmem:[#allocation2 + $0x20] sm:$0xff]
        %v3084 = vld [vmem:[#allocation2 + $0x28] sm:$0xff]
        %3089 = vrot.lane.b32.xlu0 %v3081, 127
        %v3090 = vpop.permute.xlu0 %3089
        %3091 = vrot.lane.b32.xlu0 %v3082, 127
        %v3092 = vpop.permute.xlu0 %3091
        %3093 = vrot.lane.b32.xlu0 %v3083, 127
        %v3094 = vpop.permute.xlu0 %3093
        %3095 = vrot.lane.b32.xlu0 %v3084, 127
        %v3096 = vpop.permute.xlu0 %3095
        %v3097 = vsel %vm311, %v3090, %v3092
        %v3098 = vsel %vm311, %v3094, %v3096
        %v3103 = vmax.f32 %v3081, %v3097
        %v3104 = vmax.f32 %v3082, %v3092
        %v3105 = vmax.f32 %v3083, %v3098
        %v3106 = vmax.f32 %v3084, %v3096
        %3109 = vrot.lane.b32.xlu0 %v3104, 110
        %v3110 = vpop.permute.xlu0 %3109
        %3111 = vrot.lane.b32.xlu0 %v3106, 110
        %v3112 = vpop.permute.xlu0 %3111
        %v3115 = vmax.f32 %v3103, %v3110
        %v3116 = vmax.f32 %v3104, %v3110
        %v3117 = vmax.f32 %v3105, %v3112
        %v3118 = vmax.f32 %v3106, %v3112
        %3123 = vrot.lane.b32.xlu0 %v3115, 4
        %v3124 = vpop.permute.xlu0 %3123
        %3125 = vrot.lane.b32.xlu0 %v3116, 4
        %v3126 = vpop.permute.xlu0 %3125
        %3127 = vrot.lane.b32.xlu0 %v3117, 4
        %v3128 = vpop.permute.xlu0 %3127
        %3129 = vrot.lane.b32.xlu0 %v3118, 4
        %v3130 = vpop.permute.xlu0 %3129
        %vm3131 = vcmask 31744
        %v3132 = vsel %vm3131, %v3124, %v3126
        %v3133 = vsel %vm3131, %v3128, %v3130
        %v3134 = vsel %vm2250, %v3132, 0
        %v3136 = vsel %vm2250, %v3133, 0
        %3138 = vmatprep.subr.mxu0 0.0
        %3139 = vmatpush1.msra.mxu0 0.0
        %3140 = vmatprep.subr.mxu0 0.0
        %3141 = vmatpush1.msra.mxu0 0.0
        %3142 = vmatprep.subr.mxu0 0.0
        %3143 = vmatpush1.msra.mxu0 0.0
        %3144 = vmatprep.subr.mxu0 0.0
        %3145 = vmatpush1.msra.mxu0 0.0
        %3146 = vmatprep.subr.mxu0 0.0
        %3147 = vmatpush1.msra.mxu0 0.0
        %3148 = vmatprep.subr.mxu0 0.0
        %3149 = vmatpush1.msra.mxu0 0.0
        %3150 = vmatprep.subr.mxu0 0.0
        %3151 = vmatpush1.msra.mxu0 0.0
        %3152 = vmatprep.subr.mxu0 0.0
        %3153 = vmatpush1.msra.mxu0 0.0
        %3154 = vmatprep.subr.mxu0 0.0
        %3155 = vmatpush1.msra.mxu0 0.0
        %3156 = vmatprep.subr.mxu0 0.0
        %3157 = vmatpush1.msra.mxu0 0.0
        %3158 = vmatprep.subr.mxu0 0.0
        %3159 = vmatpush1.msra.mxu0 0.0
        %3160 = vmatprep.subr.mxu0 0.0
        %3161 = vmatpush1.msra.mxu0 0.0
        %3162 = vmatprep.subr.mxu0 0.0
        %3163 = vmatpush1.msra.mxu0 0.0
        %3164 = vmatprep.subr.mxu0 0.0
        %3165 = vmatpush1.msra.mxu0 %v2259
        %3166 = vmatprep.subr.mxu0 0.0
        %3167 = vmatpush1.msra.mxu0 %v2226
        %3168 = vmatprep.subr.mxu0 0.0
        %3169 = vmatpush1.msra.mxu0 %v2225
        %3170 = vmatprep.subr.mxu0 0.0
        %3171 = vmatpush2.msra.mxu0 0.0
        %3172 = vmatprep.subr.mxu0 0.0
        %3173 = vmatpush2.msra.mxu0 0.0
        %3174 = vmatprep.subr.mxu0 0.0
        %3175 = vmatpush2.msra.mxu0 0.0
        %3176 = vmatprep.subr.mxu0 0.0
        %3177 = vmatpush2.msra.mxu0 0.0
        %3178 = vmatprep.subr.mxu0 0.0
        %3179 = vmatpush2.msra.mxu0 0.0
        %3180 = vmatprep.subr.mxu0 0.0
        %3181 = vmatpush2.msra.mxu0 0.0
        %3182 = vmatprep.subr.mxu0 0.0
        %3183 = vmatpush2.msra.mxu0 0.0
        %3184 = vmatprep.subr.mxu0 0.0
        %3185 = vmatpush2.msra.mxu0 0.0
        %3186 = vmatprep.subr.mxu0 0.0
        %3187 = vmatpush2.msra.mxu0 0.0
        %3188 = vmatprep.subr.mxu0 0.0
        %3189 = vmatpush2.msra.mxu0 0.0
        %3190 = vmatprep.subr.mxu0 0.0
        %3191 = vmatpush2.msra.mxu0 0.0
        %3192 = vmatprep.subr.mxu0 0.0
        %3193 = vmatpush2.msra.mxu0 0.0
        %3194 = vmatprep.subr.mxu0 0.0
        %3195 = vmatpush2.msra.mxu0 0.0
        %3196 = vmatprep.subr.mxu0 0.0
        %3197 = vmatpush2.msra.mxu0 0.0
        %3198 = vmatprep.subr.mxu0 0.0
        %3199 = vmatpush2.msra.mxu0 0.0
        %3200 = vmatprep.subr.mxu0 0.0
        %3201 = vmatpush2.msra.mxu0 0.0
        %3202 = vmatprep.mubr.f32.mxu0 0.0
        %3203 = vmatmul.mubr.f32.gmra.mxu0 %v3134
        %v3204 = vpop.f32.mrf.mxu0
        %v3205 = vadd.f32 0.0, %v3204
        %v3206 = vpop.f32.mrf.mxu0
        %3207 = vmatprep.mubr.f32.mxu0 0.0
        %3208 = vmatmul.mubr.f32.gmra.mxu0 %v3136
        %v3209 = vpop.f32.mrf.mxu0
        %v3210 = vadd.f32 0.0, %v3209
        %v3211 = vpop.f32.mrf.mxu0
        %3212 = vdwg.mxu0
        %3215 = vrot.lane.b32.xlu0 %v3205, 89
        %v3216 = vpop.permute.xlu0 %3215
        %3217 = vrot.lane.b32.xlu0 %v3210, 89
        %v3218 = vpop.permute.xlu0 %3217
        %vm3221 = vcmask 802504
        %3222 = vst.msk [vmem:[#allocation2] sm:$0xff] %vm3221, %v3216
        %3223 = vst.msk [vmem:[#allocation2 + $0x18] sm:$0xff] %vm3221, %v3218
        %v3224 = vld [vmem:[#allocation2 + $0x10] sm:$0xff]
        %v3225 = vld [vmem:[#allocation2 + $0x28] sm:$0xff]
        %3228 = vrot.lane.b32.xlu0 %v3224, 127
        %v3229 = vpop.permute.xlu0 %3228
        %3230 = vrot.lane.b32.xlu0 %v3225, 127
        %v3231 = vpop.permute.xlu0 %3230
        %v3234 = vmax.f32 %v3224, %v3229
        %v3235 = vmax.f32 %v3225, %v3231
        %3238 = vrot.lane.b32.xlu0 %v3234, 110
        %v3239 = vpop.permute.xlu0 %3238
        %3240 = vrot.lane.b32.xlu0 %v3235, 110
        %v3241 = vpop.permute.xlu0 %3240
        %v3244 = vmax.f32 %v3234, %v3239
        %v3245 = vmax.f32 %v3235, %v3241
        %3248 = vrot.lane.b32.xlu0 %v3244, 96
        %v3249 = vpop.permute.xlu0 %3248
        %3250 = vrot.lane.b32.xlu0 %v3245, 96
        %v3251 = vpop.permute.xlu0 %3250
        %v3252 = vsel %vm2250, %v3249, 0
        %v3254 = vsel %vm2250, %v3251, 0
        %3256 = vmatprep.subr.mxu0 0.0
        %3257 = vmatpush1.msra.mxu0 0.0
        %3258 = vmatprep.subr.mxu0 0.0
        %3259 = vmatpush1.msra.mxu0 0.0
        %3260 = vmatprep.subr.mxu0 0.0
        %3261 = vmatpush1.msra.mxu0 0.0
        %3262 = vmatprep.subr.mxu0 0.0
        %3263 = vmatpush1.msra.mxu0 0.0
        %3264 = vmatprep.subr.mxu0 0.0
        %3265 = vmatpush1.msra.mxu0 0.0
        %3266 = vmatprep.subr.mxu0 0.0
        %3267 = vmatpush1.msra.mxu0 0.0
        %3268 = vmatprep.subr.mxu0 0.0
        %3269 = vmatpush1.msra.mxu0 0.0
        %3270 = vmatprep.subr.mxu0 0.0
        %3271 = vmatpush1.msra.mxu0 0.0
        %3272 = vmatprep.subr.mxu0 0.0
        %3273 = vmatpush1.msra.mxu0 0.0
        %3274 = vmatprep.subr.mxu0 0.0
        %3275 = vmatpush1.msra.mxu0 0.0
        %3276 = vmatprep.subr.mxu0 0.0
        %3277 = vmatpush1.msra.mxu0 0.0
        %3278 = vmatprep.subr.mxu0 0.0
        %3279 = vmatpush1.msra.mxu0 0.0
        %3280 = vmatprep.subr.mxu0 0.0
        %3281 = vmatpush1.msra.mxu0 0.0
        %3282 = vmatprep.subr.mxu0 0.0
        %3283 = vmatpush1.msra.mxu0 %v2259
        %3284 = vmatprep.subr.mxu0 0.0
        %3285 = vmatpush1.msra.mxu0 %v2226
        %3286 = vmatprep.subr.mxu0 0.0
        %3287 = vmatpush1.msra.mxu0 %v2225
        %3288 = vmatprep.subr.mxu0 0.0
        %3289 = vmatpush2.msra.mxu0 0.0
        %3290 = vmatprep.subr.mxu0 0.0
        %3291 = vmatpush2.msra.mxu0 0.0
        %3292 = vmatprep.subr.mxu0 0.0
        %3293 = vmatpush2.msra.mxu0 0.0
        %3294 = vmatprep.subr.mxu0 0.0
        %3295 = vmatpush2.msra.mxu0 0.0
        %3296 = vmatprep.subr.mxu0 0.0
        %3297 = vmatpush2.msra.mxu0 0.0
        %3298 = vmatprep.subr.mxu0 0.0
        %3299 = vmatpush2.msra.mxu0 0.0
        %3300 = vmatprep.subr.mxu0 0.0
        %3301 = vmatpush2.msra.mxu0 0.0
        %3302 = vmatprep.subr.mxu0 0.0
        %3303 = vmatpush2.msra.mxu0 0.0
        %3304 = vmatprep.subr.mxu0 0.0
        %3305 = vmatpush2.msra.mxu0 0.0
        %3306 = vmatprep.subr.mxu0 0.0
        %3307 = vmatpush2.msra.mxu0 0.0
        %3308 = vmatprep.subr.mxu0 0.0
        %3309 = vmatpush2.msra.mxu0 0.0
        %3310 = vmatprep.subr.mxu0 0.0
        %3311 = vmatpush2.msra.mxu0 0.0
        %3312 = vmatprep.subr.mxu0 0.0
        %3313 = vmatpush2.msra.mxu0 0.0
        %3314 = vmatprep.subr.mxu0 0.0
        %3315 = vmatpush2.msra.mxu0 0.0
        %3316 = vmatprep.subr.mxu0 0.0
        %3317 = vmatpush2.msra.mxu0 0.0
        %3318 = vmatprep.subr.mxu0 0.0
        %3319 = vmatpush2.msra.mxu0 0.0
        %3320 = vmatprep.mubr.f32.mxu0 0.0
        %3321 = vmatmul.mubr.f32.gmra.mxu0 %v3252
        %v3322 = vpop.f32.mrf.mxu0
        %v3323 = vadd.f32 0.0, %v3322
        %v3324 = vpop.f32.mrf.mxu0
        %3325 = vmatprep.mubr.f32.mxu0 0.0
        %3326 = vmatmul.mubr.f32.gmra.mxu0 %v3254
        %v3327 = vpop.f32.mrf.mxu0
        %v3328 = vadd.f32 0.0, %v3327
        %v3329 = vpop.f32.mrf.mxu0
        %3330 = vdwg.mxu0
        %3333 = vrot.lane.b32.xlu0 %v3323, 100
        %v3334 = vpop.permute.xlu0 %3333
        %3335 = vrot.lane.b32.xlu0 %v3328, 100
        %v3336 = vpop.permute.xlu0 %3335
        %vm3339 = vcmask 892704
        %3340 = vst.msk [vmem:[#allocation2] sm:$0xff] %vm3339, %v3334
        %3341 = vst.msk [vmem:[#allocation2 + $0x18] sm:$0xff] %vm3339, %v3336
        %vm3342 = vcmask 97280
        %3343 = vst.msk [vmem:[#allocation2] sm:$0xff] %vm3342, 0.0
        %3344 = vst.msk [vmem:[#allocation2 + $0x18] sm:$0xff] %vm3342, 0.0
        %vm3345 = vcmask 991080
        %3346 = vst.msk [vmem:[#allocation2] sm:$0xff] %vm3345, 0.0
        %3347 = vst.msk [vmem:[#allocation2 + $0x18] sm:$0xff] %vm3345, 0.0
        %vm3348 = vcmask 187560
        %3349 = vst.msk [vmem:[#allocation2] sm:$0xff] %vm3348, 0.0
        %3350 = vst.msk [vmem:[#allocation2 + $0x18] sm:$0xff] %vm3348, 0.0
        %vm3351 = vcmask 277760
        %3352 = vst.msk [vmem:[#allocation2] sm:$0xff] %vm3351, 0.0
        %3353 = vst.msk [vmem:[#allocation2 + $0x18] sm:$0xff] %vm3351, 0.0
        %vm3354 = vcmask 367960
        %3355 = vst.msk [vmem:[#allocation2] sm:$0xff] %vm3354, 0.0
        %3356 = vst.msk [vmem:[#allocation2 + $0x18] sm:$0xff] %vm3354, 0.0
        %vm3357 = vcmask 458160
        %3358 = vst.msk [vmem:[#allocation2] sm:$0xff] %vm3357, 0.0
        %3359 = vst.msk [vmem:[#allocation2 + $0x18] sm:$0xff] %vm3357, 0.0
        %vm3360 = vcmask 548360
        %3361 = vst.msk [vmem:[#allocation2] sm:$0xff] %vm3360, 0.0
        %3362 = vst.msk [vmem:[#allocation2 + $0x18] sm:$0xff] %vm3360, 0.0
        %vm3363 = vcmask 638560
        %3364 = vst.msk [vmem:[#allocation2] sm:$0xff] %vm3363, 0.0
        %3365 = vst.msk [vmem:[#allocation2 + $0x18] sm:$0xff] %vm3363, 0.0
        %3366 = vst.msk [vmem:[#allocation2] sm:$0xff] %vm835, 0.0
        %3367 = vst.msk [vmem:[#allocation2 + $0x18] sm:$0xff] %vm835, 0.0
        %vm3368 = vcmask 818960
        %3369 = vst.msk [vmem:[#allocation2] sm:$0xff] %vm3368, 0.0
        %3370 = vst.msk [vmem:[#allocation2 + $0x18] sm:$0xff] %vm3368, 0.0
        %v3371 = vld [vmem:[#allocation2] sm:$0xff]
        %v3372 = vld [vmem:[#allocation2 + $0x18] sm:$0xff]
        %vm3373 = vcmask 793600
        %3374 = vst.msk [vmem:[#allocation3] sm:$0xff] %vm3373, %v3371
        %3375 = vst.msk [vmem:[#allocation3 + $0x18] sm:$0xff] %vm3373, %v3372
        %v3376 = vld [vmem:[#allocation2] sm:$0xff]
        %v3377 = vld [vmem:[#allocation2 + $0x18] sm:$0xff]
        %3380 = vrot.lane.b32.xlu0 %v3376, 127
        %v3381 = vpop.permute.xlu0 %3380
        %3382 = vrot.lane.b32.xlu0 %v3377, 127
        %v3383 = vpop.permute.xlu0 %3382
        %3386 = vst.msk [vmem:[#allocation3 + $0x30] sm:$0xff] %vm3373, %v3381
        %3387 = vst.msk [vmem:[#allocation3 + $0x48] sm:$0xff] %vm3373, %v3383
        %v3388 = vld [vmem:[#allocation2] sm:$0xff]
        %v3389 = vld [vmem:[#allocation2 + $0x18] sm:$0xff]
        %3392 = vrot.lane.b32.xlu0 %v3388, 126
        %v3393 = vpop.permute.xlu0 %3392
        %3394 = vrot.lane.b32.xlu0 %v3389, 126
        %v3395 = vpop.permute.xlu0 %3394
        %3398 = vst.msk [vmem:[#allocation3 + $0x60] sm:$0xff] %vm3373, %v3393
        %3399 = vst.msk [vmem:[#allocation3 + $0x78] sm:$0xff] %vm3373, %v3395
        %v3400 = vld [vmem:[#allocation2] sm:$0xff]
        %v3401 = vld [vmem:[#allocation2 + $0x18] sm:$0xff]
        %3404 = vrot.lane.b32.xlu0 %v3400, 117
        %v3405 = vpop.permute.xlu0 %3404
        %3406 = vrot.lane.b32.xlu0 %v3401, 117
        %v3407 = vpop.permute.xlu0 %3406
        %3410 = vst.msk [vmem:[#allocation3 + $0x90] sm:$0xff] %vm3373, %v3405
        %3411 = vst.msk [vmem:[#allocation3 + $0xa8] sm:$0xff] %vm3373, %v3407
        %v3412 = vld [vmem:[#allocation2] sm:$0xff]
        %v3413 = vld [vmem:[#allocation2 + $0x18] sm:$0xff]
        %3416 = vrot.lane.b32.xlu0 %v3412, 116
        %v3417 = vpop.permute.xlu0 %3416
        %3418 = vrot.lane.b32.xlu0 %v3413, 116
        %v3419 = vpop.permute.xlu0 %3418
        %3422 = vst.msk [vmem:[#allocation3 + $0xc0] sm:$0xff] %vm3373, %v3417
        %3423 = vst.msk [vmem:[#allocation3 + $0xd8] sm:$0xff] %vm3373, %v3419
        %v3424 = vld [vmem:[#allocation2] sm:$0xff]
        %v3425 = vld [vmem:[#allocation2 + $0x18] sm:$0xff]
        %3428 = vrot.lane.b32.xlu0 %v3424, 115
        %v3429 = vpop.permute.xlu0 %3428
        %3430 = vrot.lane.b32.xlu0 %v3425, 115
        %v3431 = vpop.permute.xlu0 %3430
        %3434 = vst.msk [vmem:[#allocation3 + $0xf0] sm:$0xff] %vm3373, %v3429
        %3435 = vst.msk [vmem:[#allocation3 + $0x108] sm:$0xff] %vm3373, %v3431
        %v3436 = vld [vmem:[#allocation2] sm:$0xff]
        %v3437 = vld [vmem:[#allocation2 + $0x18] sm:$0xff]
        %3440 = vrot.lane.b32.xlu0 %v3436, 106
        %v3441 = vpop.permute.xlu0 %3440
        %3442 = vrot.lane.b32.xlu0 %v3437, 106
        %v3443 = vpop.permute.xlu0 %3442
        %3446 = vst.msk [vmem:[#allocation3 + $0x120] sm:$0xff] %vm3373, %v3441
        %3447 = vst.msk [vmem:[#allocation3 + $0x138] sm:$0xff] %vm3373, %v3443
        %v3448 = vld [vmem:[#allocation2] sm:$0xff]
        %v3449 = vld [vmem:[#allocation2 + $0x18] sm:$0xff]
        %3452 = vrot.lane.b32.xlu0 %v3448, 105
        %v3453 = vpop.permute.xlu0 %3452
        %3454 = vrot.lane.b32.xlu0 %v3449, 105
        %v3455 = vpop.permute.xlu0 %3454
        %3458 = vst.msk [vmem:[#allocation3 + $0x150] sm:$0xff] %vm3373, %v3453
        %3459 = vst.msk [vmem:[#allocation3 + $0x168] sm:$0xff] %vm3373, %v3455
        %v3460 = vld [vmem:[#allocation2] sm:$0xff]
        %v3461 = vld [vmem:[#allocation2 + $0x18] sm:$0xff]
        %3464 = vrot.lane.b32.xlu0 %v3460, 104
        %v3465 = vpop.permute.xlu0 %3464
        %3466 = vrot.lane.b32.xlu0 %v3461, 104
        %v3467 = vpop.permute.xlu0 %3466
        %3470 = vst.msk [vmem:[#allocation3 + $0x180] sm:$0xff] %vm3373, %v3465
        %3471 = vst.msk [vmem:[#allocation3 + $0x198] sm:$0xff] %vm3373, %v3467
        %v3472 = vld [vmem:[#allocation3] sm:$0xff]
        %v3473 = vld [vmem:[#allocation3 + $0x18] sm:$0xff]
        %v3474 = vld [vmem:[#allocation3 + $0x30] sm:$0xff]
        %v3475 = vld [vmem:[#allocation3 + $0x48] sm:$0xff]
        %v3476 = vld [vmem:[#allocation3 + $0x60] sm:$0xff]
        %v3477 = vld [vmem:[#allocation3 + $0x78] sm:$0xff]
        %v3478 = vld [vmem:[#allocation3 + $0x90] sm:$0xff]
        %v3479 = vld [vmem:[#allocation3 + $0xa8] sm:$0xff]
        %v3480 = vld [vmem:[#allocation3 + $0xc0] sm:$0xff]
        %v3481 = vld [vmem:[#allocation3 + $0xd8] sm:$0xff]
        %v3482 = vld [vmem:[#allocation3 + $0xf0] sm:$0xff]
        %v3483 = vld [vmem:[#allocation3 + $0x108] sm:$0xff]
        %v3484 = vld [vmem:[#allocation3 + $0x120] sm:$0xff]
        %v3485 = vld [vmem:[#allocation3 + $0x138] sm:$0xff]
        %v3486 = vld [vmem:[#allocation3 + $0x150] sm:$0xff]
        %v3487 = vld [vmem:[#allocation3 + $0x168] sm:$0xff]
        %v3488 = vld [vmem:[#allocation3 + $0x180] sm:$0xff]
        %v3489 = vld [vmem:[#allocation3 + $0x198] sm:$0xff]
        %v3490 = vld [vmem:[%s1 + $0x90] sm:$0xff]
        %v3491 = vld [vmem:[%s1 + $0x98] sm:$0xff]
        %v3492 = vld [vmem:[%s1 + $0xa8] sm:$0xff]
        %v3493 = vld [vmem:[%s1 + $0xb0] sm:$0xff]
        %v3494 = vld [vmem:[%s1 + $0xc0] sm:$0xff]
        %v3495 = vld [vmem:[%s1 + $0xc8] sm:$0xff]
        %v3496 = vld [vmem:[%s1 + $0xd8] sm:$0xff]
        %v3497 = vld [vmem:[%s1 + $0xe0] sm:$0xff]
        %v3498 = vld [vmem:[%s1 + $0xa0] sm:$0xff]
        %v3499 = vld [vmem:[%s1 + $0xb8] sm:$0xff]
        %v3500 = vld [vmem:[%s1 + $0xd0] sm:$0xff]
        %v3501 = vld [vmem:[%s1 + $0xe8] sm:$0xff]
        %3503 = vset.pattern.permute.xlu0 32
        %3504 = vperm.xlu0 %3503, %v3498
        %v3505 = vpop.permute.xlu0 %3504
        %3508 = vset.pattern.permute.xlu0 32
        %3509 = vperm.xlu0 %3508, %v3499
        %v3510 = vpop.permute.xlu0 %3509
        %3513 = vset.pattern.permute.xlu0 32
        %3514 = vperm.xlu0 %3513, %v3500
        %v3515 = vpop.permute.xlu0 %3514
        %3518 = vset.pattern.permute.xlu0 32
        %3519 = vperm.xlu0 %3518, %v3501
        %v3520 = vpop.permute.xlu0 %3519
        %v3523 = vsel %vm1253, %v3491, 0
        %v3526 = vsel %vm1253, %v3493, 0
        %v3529 = vsel %vm1253, %v3495, 0
        %v3532 = vsel %vm1253, %v3497, 0
        %3534 = vmatprep.subr.mxu0 0.0
        %3535 = vmatpush1.msra.mxu0 %v3487
        %3536 = vmatprep.subr.mxu0 0.0
        %3537 = vmatpush1.msra.mxu0 %v3486
        %3538 = vmatprep.subr.mxu0 0.0
        %3539 = vmatpush1.msra.mxu0 %v3485
        %3540 = vmatprep.subr.mxu0 0.0
        %3541 = vmatpush1.msra.mxu0 %v3484
        %3542 = vmatprep.subr.mxu0 0.0
        %3543 = vmatpush1.msra.mxu0 %v3483
        %3544 = vmatprep.subr.mxu0 0.0
        %3545 = vmatpush1.msra.mxu0 %v3482
        %3546 = vmatprep.subr.mxu0 0.0
        %3547 = vmatpush1.msra.mxu0 %v3481
        %3548 = vmatprep.subr.mxu0 0.0
        %3549 = vmatpush1.msra.mxu0 %v3480
        %3550 = vmatprep.subr.mxu0 0.0
        %3551 = vmatpush1.msra.mxu0 %v3479
        %3552 = vmatprep.subr.mxu0 0.0
        %3553 = vmatpush1.msra.mxu0 %v3478
        %3554 = vmatprep.subr.mxu0 0.0
        %3555 = vmatpush1.msra.mxu0 %v3477
        %3556 = vmatprep.subr.mxu0 0.0
        %3557 = vmatpush1.msra.mxu0 %v3476
        %3558 = vmatprep.subr.mxu0 0.0
        %3559 = vmatpush1.msra.mxu0 %v3475
        %3560 = vmatprep.subr.mxu0 0.0
        %3561 = vmatpush1.msra.mxu0 %v3474
        %3562 = vmatprep.subr.mxu0 0.0
        %3563 = vmatpush1.msra.mxu0 %v3473
        %3564 = vmatprep.subr.mxu0 0.0
        %3565 = vmatpush1.msra.mxu0 %v3472
        %3566 = vmatprep.subr.mxu0 0.0
        %3567 = vmatpush2.msra.mxu0 0.0
        %3568 = vmatprep.subr.mxu0 0.0
        %3569 = vmatpush2.msra.mxu0 0.0
        %3570 = vmatprep.subr.mxu0 0.0
        %3571 = vmatpush2.msra.mxu0 0.0
        %3572 = vmatprep.subr.mxu0 0.0
        %3573 = vmatpush2.msra.mxu0 0.0
        %3574 = vmatprep.subr.mxu0 0.0
        %3575 = vmatpush2.msra.mxu0 0.0
        %3576 = vmatprep.subr.mxu0 0.0
        %3577 = vmatpush2.msra.mxu0 0.0
        %3578 = vmatprep.subr.mxu0 0.0
        %3579 = vmatpush2.msra.mxu0 0.0
        %3580 = vmatprep.subr.mxu0 0.0
        %3581 = vmatpush2.msra.mxu0 0.0
        %3582 = vmatprep.subr.mxu0 0.0
        %3583 = vmatpush2.msra.mxu0 0.0
        %3584 = vmatprep.subr.mxu0 0.0
        %3585 = vmatpush2.msra.mxu0 0.0
        %3586 = vmatprep.subr.mxu0 0.0
        %3587 = vmatpush2.msra.mxu0 0.0
        %3588 = vmatprep.subr.mxu0 0.0
        %3589 = vmatpush2.msra.mxu0 0.0
        %3590 = vmatprep.subr.mxu0 0.0
        %3591 = vmatpush2.msra.mxu0 0.0
        %3592 = vmatprep.subr.mxu0 0.0
        %3593 = vmatpush2.msra.mxu0 0.0
        %3594 = vmatprep.subr.mxu0 0.0
        %3595 = vmatpush2.msra.mxu0 %v3489
        %3596 = vmatprep.subr.mxu0 0.0
        %3597 = vmatpush2.msra.mxu0 %v3488
        %3598 = vmatprep.mubr.f32.mxu0 %v3523
        %3599 = vmatmul.mubr.f32.gmra.mxu0 %v3490
        %v3600 = vpop.f32.mrf.mxu0
        %v3601 = vadd.f32 %v3505, %v3600
        %v3602 = vpop.f32.mrf.mxu0
        %3603 = vmatprep.mubr.f32.mxu0 %v3526
        %3604 = vmatmul.mubr.f32.gmra.mxu0 %v3492
        %v3605 = vpop.f32.mrf.mxu0
        %v3606 = vadd.f32 %v3510, %v3605
        %v3607 = vpop.f32.mrf.mxu0
        %3608 = vmatprep.mubr.f32.mxu0 %v3529
        %3609 = vmatmul.mubr.f32.gmra.mxu0 %v3494
        %v3610 = vpop.f32.mrf.mxu0
        %v3611 = vadd.f32 %v3515, %v3610
        %v3612 = vpop.f32.mrf.mxu0
        %3613 = vmatprep.mubr.f32.mxu0 %v3532
        %3614 = vmatmul.mubr.f32.gmra.mxu0 %v3496
        %v3615 = vpop.f32.mrf.mxu0
        %v3616 = vadd.f32 %v3520, %v3615
        %v3617 = vpop.f32.mrf.mxu0
        %3618 = vdwg.mxu0
        %vm3619 = vcmp.gt.f32.partialorder %v3601, 0.0
        %vm3620 = vcmp.gt.f32.partialorder %v3606, 0.0
        %vm3621 = vcmp.gt.f32.partialorder %v3611, 0.0
        %vm3622 = vcmp.gt.f32.partialorder %v3616, 0.0
        %v3623 = vmul.f32 %v3601, 0.1
        %v3624 = vmul.f32 %v3606, 0.1
        %v3625 = vmul.f32 %v3611, 0.1
        %v3626 = vmul.f32 %v3616, 0.1
        %v3627 = vsel %vm3619, %v3601, %v3623
        %v3628 = vsel %vm3620, %v3606, %v3624
        %v3629 = vsel %vm3621, %v3611, %v3625
        %v3630 = vsel %vm3622, %v3616, %v3626
        %3635 = vrot.lane.b32.xlu0 %v3627, 12
        %v3636 = vpop.permute.xlu0 %3635
        %3637 = vrot.lane.b32.xlu0 %v3628, 12
        %v3638 = vpop.permute.xlu0 %3637
        %3639 = vrot.lane.b32.xlu0 %v3629, 12
        %v3640 = vpop.permute.xlu0 %3639
        %3641 = vrot.lane.b32.xlu0 %v3630, 12
        %v3642 = vpop.permute.xlu0 %3641
        %3647 = vst.msk [vmem:[#allocation2] sm:$0xff] %vm2344, %v3636
        %3648 = vst.msk [vmem:[#allocation2 + $0x18] sm:$0xff] %vm2344, %v3638
        %3649 = vst.msk [vmem:[#allocation2 + $0x30] sm:$0xff] %vm2344, %v3640
        %3650 = vst.msk [vmem:[#allocation2 + $0x48] sm:$0xff] %vm2344, %v3642
        %3651 = vst.msk [vmem:[#allocation2] sm:$0xff] %vm2462, %v3636
        %3652 = vst.msk [vmem:[#allocation2 + $0x18] sm:$0xff] %vm2462, %v3638
        %3653 = vst.msk [vmem:[#allocation2 + $0x30] sm:$0xff] %vm2462, %v3640
        %3654 = vst.msk [vmem:[#allocation2 + $0x48] sm:$0xff] %vm2462, %v3642
        %3655 = vst.msk [vmem:[#allocation2] sm:$0xff] %vm2580, %v3636
        %3656 = vst.msk [vmem:[#allocation2 + $0x18] sm:$0xff] %vm2580, %v3638
        %3657 = vst.msk [vmem:[#allocation2 + $0x30] sm:$0xff] %vm2580, %v3640
        %3658 = vst.msk [vmem:[#allocation2 + $0x48] sm:$0xff] %vm2580, %v3642
        %3659 = vst.msk [vmem:[#allocation2] sm:$0xff] %vm2724, %v3636
        %3660 = vst.msk [vmem:[#allocation2 + $0x18] sm:$0xff] %vm2724, %v3638
        %3661 = vst.msk [vmem:[#allocation2 + $0x30] sm:$0xff] %vm2724, %v3640
        %3662 = vst.msk [vmem:[#allocation2 + $0x48] sm:$0xff] %vm2724, %v3642
        %3663 = vst.msk [vmem:[#allocation2] sm:$0xff] %vm2842, %v3636
        %3664 = vst.msk [vmem:[#allocation2 + $0x18] sm:$0xff] %vm2842, %v3638
        %3665 = vst.msk [vmem:[#allocation2 + $0x30] sm:$0xff] %vm2842, %v3640
        %3666 = vst.msk [vmem:[#allocation2 + $0x48] sm:$0xff] %vm2842, %v3642
        %3667 = vst.msk [vmem:[#allocation2] sm:$0xff] %vm2960, %v3636
        %3668 = vst.msk [vmem:[#allocation2 + $0x18] sm:$0xff] %vm2960, %v3638
        %3669 = vst.msk [vmem:[#allocation2 + $0x30] sm:$0xff] %vm2960, %v3640
        %3670 = vst.msk [vmem:[#allocation2 + $0x48] sm:$0xff] %vm2960, %v3642
        %3671 = vst.msk [vmem:[#allocation2] sm:$0xff] %vm3078, %v3636
        %3672 = vst.msk [vmem:[#allocation2 + $0x18] sm:$0xff] %vm3078, %v3638
        %3673 = vst.msk [vmem:[#allocation2 + $0x30] sm:$0xff] %vm3078, %v3640
        %3674 = vst.msk [vmem:[#allocation2 + $0x48] sm:$0xff] %vm3078, %v3642
        %3675 = vst.msk [vmem:[#allocation2] sm:$0xff] %vm3221, %v3636
        %3676 = vst.msk [vmem:[#allocation2 + $0x18] sm:$0xff] %vm3221, %v3638
        %3677 = vst.msk [vmem:[#allocation2 + $0x30] sm:$0xff] %vm3221, %v3640
        %3678 = vst.msk [vmem:[#allocation2 + $0x48] sm:$0xff] %vm3221, %v3642
        %3679 = vst.msk [vmem:[#allocation2] sm:$0xff] %vm3339, %v3636
        %3680 = vst.msk [vmem:[#allocation2 + $0x18] sm:$0xff] %vm3339, %v3638
        %3681 = vst.msk [vmem:[#allocation2 + $0x30] sm:$0xff] %vm3339, %v3640
        %3682 = vst.msk [vmem:[#allocation2 + $0x48] sm:$0xff] %vm3339, %v3642
        %3683 = vst.msk [vmem:[#allocation2] sm:$0xff] %vm3342, 0.0
        %3684 = vst.msk [vmem:[#allocation2 + $0x18] sm:$0xff] %vm3342, 0.0
        %3685 = vst.msk [vmem:[#allocation2 + $0x30] sm:$0xff] %vm3342, 0.0
        %3686 = vst.msk [vmem:[#allocation2 + $0x48] sm:$0xff] %vm3342, 0.0
        %3687 = vst.msk [vmem:[#allocation2] sm:$0xff] %vm3345, 0.0
        %3688 = vst.msk [vmem:[#allocation2 + $0x18] sm:$0xff] %vm3345, 0.0
        %3689 = vst.msk [vmem:[#allocation2 + $0x30] sm:$0xff] %vm3345, 0.0
        %3690 = vst.msk [vmem:[#allocation2 + $0x48] sm:$0xff] %vm3345, 0.0
        %3691 = vst.msk [vmem:[#allocation2] sm:$0xff] %vm3348, 0.0
        %3692 = vst.msk [vmem:[#allocation2 + $0x18] sm:$0xff] %vm3348, 0.0
        %3693 = vst.msk [vmem:[#allocation2 + $0x30] sm:$0xff] %vm3348, 0.0
        %3694 = vst.msk [vmem:[#allocation2 + $0x48] sm:$0xff] %vm3348, 0.0
        %3695 = vst.msk [vmem:[#allocation2] sm:$0xff] %vm3351, 0.0
        %3696 = vst.msk [vmem:[#allocation2 + $0x18] sm:$0xff] %vm3351, 0.0
        %3697 = vst.msk [vmem:[#allocation2 + $0x30] sm:$0xff] %vm3351, 0.0
        %3698 = vst.msk [vmem:[#allocation2 + $0x48] sm:$0xff] %vm3351, 0.0
        %3699 = vst.msk [vmem:[#allocation2] sm:$0xff] %vm3354, 0.0
        %3700 = vst.msk [vmem:[#allocation2 + $0x18] sm:$0xff] %vm3354, 0.0
        %3701 = vst.msk [vmem:[#allocation2 + $0x30] sm:$0xff] %vm3354, 0.0
        %3702 = vst.msk [vmem:[#allocation2 + $0x48] sm:$0xff] %vm3354, 0.0
        %3703 = vst.msk [vmem:[#allocation2] sm:$0xff] %vm3357, 0.0
        %3704 = vst.msk [vmem:[#allocation2 + $0x18] sm:$0xff] %vm3357, 0.0
        %3705 = vst.msk [vmem:[#allocation2 + $0x30] sm:$0xff] %vm3357, 0.0
        %3706 = vst.msk [vmem:[#allocation2 + $0x48] sm:$0xff] %vm3357, 0.0
        %3707 = vst.msk [vmem:[#allocation2] sm:$0xff] %vm3360, 0.0
        %3708 = vst.msk [vmem:[#allocation2 + $0x18] sm:$0xff] %vm3360, 0.0
        %3709 = vst.msk [vmem:[#allocation2 + $0x30] sm:$0xff] %vm3360, 0.0
        %3710 = vst.msk [vmem:[#allocation2 + $0x48] sm:$0xff] %vm3360, 0.0
        %3711 = vst.msk [vmem:[#allocation2] sm:$0xff] %vm3363, 0.0
        %3712 = vst.msk [vmem:[#allocation2 + $0x18] sm:$0xff] %vm3363, 0.0
        %3713 = vst.msk [vmem:[#allocation2 + $0x30] sm:$0xff] %vm3363, 0.0
        %3714 = vst.msk [vmem:[#allocation2 + $0x48] sm:$0xff] %vm3363, 0.0
        %3715 = vst.msk [vmem:[#allocation2] sm:$0xff] %vm835, 0.0
        %3716 = vst.msk [vmem:[#allocation2 + $0x18] sm:$0xff] %vm835, 0.0
        %3717 = vst.msk [vmem:[#allocation2 + $0x30] sm:$0xff] %vm835, 0.0
        %3718 = vst.msk [vmem:[#allocation2 + $0x48] sm:$0xff] %vm835, 0.0
        %3719 = vst.msk [vmem:[#allocation2] sm:$0xff] %vm3368, 0.0
        %3720 = vst.msk [vmem:[#allocation2 + $0x18] sm:$0xff] %vm3368, 0.0
        %3721 = vst.msk [vmem:[#allocation2 + $0x30] sm:$0xff] %vm3368, 0.0
        %3722 = vst.msk [vmem:[#allocation2 + $0x48] sm:$0xff] %vm3368, 0.0
        %v3723 = vld [vmem:[#allocation2] sm:$0xff]
        %v3724 = vld [vmem:[#allocation2 + $0x18] sm:$0xff]
        %v3725 = vld [vmem:[#allocation2 + $0x30] sm:$0xff]
        %v3726 = vld [vmem:[#allocation2 + $0x48] sm:$0xff]
        %3727 = vst.msk [vmem:[#allocation3] sm:$0xff] %vm3373, %v3723
        %3728 = vst.msk [vmem:[#allocation3 + $0x18] sm:$0xff] %vm3373, %v3724
        %3729 = vst.msk [vmem:[#allocation3 + $0x30] sm:$0xff] %vm3373, %v3725
        %3730 = vst.msk [vmem:[#allocation3 + $0x48] sm:$0xff] %vm3373, %v3726
        %v3731 = vld [vmem:[#allocation2] sm:$0xff]
        %v3732 = vld [vmem:[#allocation2 + $0x18] sm:$0xff]
        %v3733 = vld [vmem:[#allocation2 + $0x30] sm:$0xff]
        %v3734 = vld [vmem:[#allocation2 + $0x48] sm:$0xff]
        %3739 = vrot.lane.b32.xlu0 %v3731, 127
        %v3740 = vpop.permute.xlu0 %3739
        %3741 = vrot.lane.b32.xlu0 %v3732, 127
        %v3742 = vpop.permute.xlu0 %3741
        %3743 = vrot.lane.b32.xlu0 %v3733, 127
        %v3744 = vpop.permute.xlu0 %3743
        %3745 = vrot.lane.b32.xlu0 %v3734, 127
        %v3746 = vpop.permute.xlu0 %3745
        %3751 = vst.msk [vmem:[#allocation3 + $0x60] sm:$0xff] %vm3373, %v3740
        %3752 = vst.msk [vmem:[#allocation3 + $0x78] sm:$0xff] %vm3373, %v3742
        %3753 = vst.msk [vmem:[#allocation3 + $0x90] sm:$0xff] %vm3373, %v3744
        %3754 = vst.msk [vmem:[#allocation3 + $0xa8] sm:$0xff] %vm3373, %v3746
        %v3755 = vld [vmem:[#allocation2] sm:$0xff]
        %v3756 = vld [vmem:[#allocation2 + $0x18] sm:$0xff]
        %v3757 = vld [vmem:[#allocation2 + $0x30] sm:$0xff]
        %v3758 = vld [vmem:[#allocation2 + $0x48] sm:$0xff]
        %3763 = vrot.lane.b32.xlu0 %v3755, 126
        %v3764 = vpop.permute.xlu0 %3763
        %3765 = vrot.lane.b32.xlu0 %v3756, 126
        %v3766 = vpop.permute.xlu0 %3765
        %3767 = vrot.lane.b32.xlu0 %v3757, 126
        %v3768 = vpop.permute.xlu0 %3767
        %3769 = vrot.lane.b32.xlu0 %v3758, 126
        %v3770 = vpop.permute.xlu0 %3769
        %3775 = vst.msk [vmem:[#allocation3 + $0xc0] sm:$0xff] %vm3373, %v3764
        %3776 = vst.msk [vmem:[#allocation3 + $0xd8] sm:$0xff] %vm3373, %v3766
        %3777 = vst.msk [vmem:[#allocation3 + $0xf0] sm:$0xff] %vm3373, %v3768
        %3778 = vst.msk [vmem:[#allocation3 + $0x108] sm:$0xff] %vm3373, %v3770
        %v3779 = vld [vmem:[#allocation2] sm:$0xff]
        %v3780 = vld [vmem:[#allocation2 + $0x18] sm:$0xff]
        %v3781 = vld [vmem:[#allocation2 + $0x30] sm:$0xff]
        %v3782 = vld [vmem:[#allocation2 + $0x48] sm:$0xff]
        %3787 = vrot.lane.b32.xlu0 %v3779, 117
        %v3788 = vpop.permute.xlu0 %3787
        %3789 = vrot.lane.b32.xlu0 %v3780, 117
        %v3790 = vpop.permute.xlu0 %3789
        %3791 = vrot.lane.b32.xlu0 %v3781, 117
        %v3792 = vpop.permute.xlu0 %3791
        %3793 = vrot.lane.b32.xlu0 %v3782, 117
        %v3794 = vpop.permute.xlu0 %3793
        %3799 = vst.msk [vmem:[#allocation3 + $0x120] sm:$0xff] %vm3373, %v3788
        %3800 = vst.msk [vmem:[#allocation3 + $0x138] sm:$0xff] %vm3373, %v3790
        %3801 = vst.msk [vmem:[#allocation3 + $0x150] sm:$0xff] %vm3373, %v3792
        %3802 = vst.msk [vmem:[#allocation3 + $0x168] sm:$0xff] %vm3373, %v3794
        %v3803 = vld [vmem:[#allocation2] sm:$0xff]
        %v3804 = vld [vmem:[#allocation2 + $0x18] sm:$0xff]
        %v3805 = vld [vmem:[#allocation2 + $0x30] sm:$0xff]
        %v3806 = vld [vmem:[#allocation2 + $0x48] sm:$0xff]
        %3811 = vrot.lane.b32.xlu0 %v3803, 116
        %v3812 = vpop.permute.xlu0 %3811
        %3813 = vrot.lane.b32.xlu0 %v3804, 116
        %v3814 = vpop.permute.xlu0 %3813
        %3815 = vrot.lane.b32.xlu0 %v3805, 116
        %v3816 = vpop.permute.xlu0 %3815
        %3817 = vrot.lane.b32.xlu0 %v3806, 116
        %v3818 = vpop.permute.xlu0 %3817
        %3823 = vst.msk [vmem:[#allocation3 + $0x180] sm:$0xff] %vm3373, %v3812
        %3824 = vst.msk [vmem:[#allocation3 + $0x198] sm:$0xff] %vm3373, %v3814
        %3825 = vst.msk [vmem:[#allocation3 + $0x1b0] sm:$0xff] %vm3373, %v3816
        %3826 = vst.msk [vmem:[#allocation3 + $0x1c8] sm:$0xff] %vm3373, %v3818
        %v3827 = vld [vmem:[#allocation2] sm:$0xff]
        %v3828 = vld [vmem:[#allocation2 + $0x18] sm:$0xff]
        %v3829 = vld [vmem:[#allocation2 + $0x30] sm:$0xff]
        %v3830 = vld [vmem:[#allocation2 + $0x48] sm:$0xff]
        %3835 = vrot.lane.b32.xlu0 %v3827, 115
        %v3836 = vpop.permute.xlu0 %3835
        %3837 = vrot.lane.b32.xlu0 %v3828, 115
        %v3838 = vpop.permute.xlu0 %3837
        %3839 = vrot.lane.b32.xlu0 %v3829, 115
        %v3840 = vpop.permute.xlu0 %3839
        %3841 = vrot.lane.b32.xlu0 %v3830, 115
        %v3842 = vpop.permute.xlu0 %3841
        %3847 = vst.msk [vmem:[#allocation3 + $0x1e0] sm:$0xff] %vm3373, %v3836
        %3848 = vst.msk [vmem:[#allocation3 + $0x1f8] sm:$0xff] %vm3373, %v3838
        %3849 = vst.msk [vmem:[#allocation3 + $0x210] sm:$0xff] %vm3373, %v3840
        %3850 = vst.msk [vmem:[#allocation3 + $0x228] sm:$0xff] %vm3373, %v3842
        %v3851 = vld [vmem:[#allocation2] sm:$0xff]
        %v3852 = vld [vmem:[#allocation2 + $0x18] sm:$0xff]
        %v3853 = vld [vmem:[#allocation2 + $0x30] sm:$0xff]
        %v3854 = vld [vmem:[#allocation2 + $0x48] sm:$0xff]
        %3859 = vrot.lane.b32.xlu0 %v3851, 106
        %v3860 = vpop.permute.xlu0 %3859
        %3861 = vrot.lane.b32.xlu0 %v3852, 106
        %v3862 = vpop.permute.xlu0 %3861
        %3863 = vrot.lane.b32.xlu0 %v3853, 106
        %v3864 = vpop.permute.xlu0 %3863
        %3865 = vrot.lane.b32.xlu0 %v3854, 106
        %v3866 = vpop.permute.xlu0 %3865
        %3871 = vst.msk [vmem:[#allocation3 + $0x240] sm:$0xff] %vm3373, %v3860
        %3872 = vst.msk [vmem:[#allocation3 + $0x258] sm:$0xff] %vm3373, %v3862
        %3873 = vst.msk [vmem:[#allocation3 + $0x270] sm:$0xff] %vm3373, %v3864
        %3874 = vst.msk [vmem:[#allocation3 + $0x288] sm:$0xff] %vm3373, %v3866
        %v3875 = vld [vmem:[#allocation2] sm:$0xff]
        %v3876 = vld [vmem:[#allocation2 + $0x18] sm:$0xff]
        %v3877 = vld [vmem:[#allocation2 + $0x30] sm:$0xff]
        %v3878 = vld [vmem:[#allocation2 + $0x48] sm:$0xff]
        %3883 = vrot.lane.b32.xlu0 %v3875, 105
        %v3884 = vpop.permute.xlu0 %3883
        %3885 = vrot.lane.b32.xlu0 %v3876, 105
        %v3886 = vpop.permute.xlu0 %3885
        %3887 = vrot.lane.b32.xlu0 %v3877, 105
        %v3888 = vpop.permute.xlu0 %3887
        %3889 = vrot.lane.b32.xlu0 %v3878, 105
        %v3890 = vpop.permute.xlu0 %3889
        %3895 = vst.msk [vmem:[#allocation3 + $0x2a0] sm:$0xff] %vm3373, %v3884
        %3896 = vst.msk [vmem:[#allocation3 + $0x2b8] sm:$0xff] %vm3373, %v3886
        %3897 = vst.msk [vmem:[#allocation3 + $0x2d0] sm:$0xff] %vm3373, %v3888
        %3898 = vst.msk [vmem:[#allocation3 + $0x2e8] sm:$0xff] %vm3373, %v3890
        %v3899 = vld [vmem:[#allocation2] sm:$0xff]
        %v3900 = vld [vmem:[#allocation2 + $0x18] sm:$0xff]
        %v3901 = vld [vmem:[#allocation2 + $0x30] sm:$0xff]
        %v3902 = vld [vmem:[#allocation2 + $0x48] sm:$0xff]
        %3907 = vrot.lane.b32.xlu0 %v3899, 104
        %v3908 = vpop.permute.xlu0 %3907
        %3909 = vrot.lane.b32.xlu0 %v3900, 104
        %v3910 = vpop.permute.xlu0 %3909
        %3911 = vrot.lane.b32.xlu0 %v3901, 104
        %v3912 = vpop.permute.xlu0 %3911
        %3913 = vrot.lane.b32.xlu0 %v3902, 104
        %v3914 = vpop.permute.xlu0 %3913
        %3919 = vst.msk [vmem:[#allocation3 + $0x300] sm:$0xff] %vm3373, %v3908
        %3920 = vst.msk [vmem:[#allocation3 + $0x318] sm:$0xff] %vm3373, %v3910
        %3921 = vst.msk [vmem:[#allocation3 + $0x330] sm:$0xff] %vm3373, %v3912
        %3922 = vst.msk [vmem:[#allocation3 + $0x348] sm:$0xff] %vm3373, %v3914
        %v3923 = vld [vmem:[#allocation3] sm:$0xff]
        %v3924 = vld [vmem:[#allocation3 + $0x18] sm:$0xff]
        %v3925 = vld [vmem:[#allocation3 + $0x30] sm:$0xff]
        %v3926 = vld [vmem:[#allocation3 + $0x48] sm:$0xff]
        %v3927 = vld [vmem:[#allocation3 + $0x60] sm:$0xff]
        %v3928 = vld [vmem:[#allocation3 + $0x78] sm:$0xff]
        %v3929 = vld [vmem:[#allocation3 + $0x90] sm:$0xff]
        %v3930 = vld [vmem:[#allocation3 + $0xa8] sm:$0xff]
        %v3931 = vld [vmem:[#allocation3 + $0xc0] sm:$0xff]
        %v3932 = vld [vmem:[#allocation3 + $0xd8] sm:$0xff]
        %v3933 = vld [vmem:[#allocation3 + $0xf0] sm:$0xff]
        %v3934 = vld [vmem:[#allocation3 + $0x108] sm:$0xff]
        %v3935 = vld [vmem:[#allocation3 + $0x120] sm:$0xff]
        %v3936 = vld [vmem:[#allocation3 + $0x138] sm:$0xff]
        %v3937 = vld [vmem:[#allocation3 + $0x150] sm:$0xff]
        %v3938 = vld [vmem:[#allocation3 + $0x168] sm:$0xff]
        %v3939 = vld [vmem:[#allocation3 + $0x180] sm:$0xff]
        %v3940 = vld [vmem:[#allocation3 + $0x198] sm:$0xff]
        %v3941 = vld [vmem:[#allocation3 + $0x1b0] sm:$0xff]
        %v3942 = vld [vmem:[#allocation3 + $0x1c8] sm:$0xff]
        %v3943 = vld [vmem:[#allocation3 + $0x1e0] sm:$0xff]
        %v3944 = vld [vmem:[#allocation3 + $0x1f8] sm:$0xff]
        %v3945 = vld [vmem:[#allocation3 + $0x210] sm:$0xff]
        %v3946 = vld [vmem:[#allocation3 + $0x228] sm:$0xff]
        %v3947 = vld [vmem:[#allocation3 + $0x240] sm:$0xff]
        %v3948 = vld [vmem:[#allocation3 + $0x258] sm:$0xff]
        %v3949 = vld [vmem:[#allocation3 + $0x270] sm:$0xff]
        %v3950 = vld [vmem:[#allocation3 + $0x288] sm:$0xff]
        %v3951 = vld [vmem:[#allocation3 + $0x2a0] sm:$0xff]
        %v3952 = vld [vmem:[#allocation3 + $0x2b8] sm:$0xff]
        %v3953 = vld [vmem:[#allocation3 + $0x2d0] sm:$0xff]
        %v3954 = vld [vmem:[#allocation3 + $0x2e8] sm:$0xff]
        %v3955 = vld [vmem:[#allocation3 + $0x300] sm:$0xff]
        %v3956 = vld [vmem:[#allocation3 + $0x318] sm:$0xff]
        %v3957 = vld [vmem:[#allocation3 + $0x330] sm:$0xff]
        %v3958 = vld [vmem:[#allocation3 + $0x348] sm:$0xff]
        %v3959 = vld [vmem:[%s1 + $0xf0] sm:$0xff]
        %v3960 = vld [vmem:[%s1 + $0xf8] sm:$0xff]
        %v3961 = vld [vmem:[%s1 + $0x100] sm:$0xff]
        %v3962 = vld [vmem:[%s1 + $0x108] sm:$0xff]
        %v3963 = vld [vmem:[%s1 + $0x110] sm:$0xff]
        %v3964 = vld [vmem:[%s1 + $0x118] sm:$0xff]
        %v3965 = vld [vmem:[%s1 + $0x120] sm:$0xff]
        %v3966 = vld [vmem:[%s1 + $0x128] sm:$0xff]
        %v3967 = vld [vmem:[%s1 + $0x130] sm:$0xff]
        %v3968 = vld [vmem:[%s1 + $0x138] sm:$0xff]
        %v3969 = vld [vmem:[%s1 + $0x140] sm:$0xff]
        %v3970 = vld [vmem:[%s1 + $0x148] sm:$0xff]
        %3972 = vset.pattern.permute.xlu0 32
        %3973 = vperm.xlu0 %3972, %v3961
        %v3974 = vpop.permute.xlu0 %3973
        %3977 = vset.pattern.permute.xlu0 32
        %3978 = vperm.xlu0 %3977, %v3964
        %v3979 = vpop.permute.xlu0 %3978
        %3982 = vset.pattern.permute.xlu0 32
        %3983 = vperm.xlu0 %3982, %v3967
        %v3984 = vpop.permute.xlu0 %3983
        %3987 = vset.pattern.permute.xlu0 32
        %3988 = vperm.xlu0 %3987, %v3970
        %v3989 = vpop.permute.xlu0 %3988
        %vm3991 = vcmask 261120
        %v3992 = vsel %vm3991, %v3961, 0
        %v3994 = vsel %vm3991, %v3964, 0
        %v3996 = vsel %vm3991, %v3967, 0
        %v3998 = vsel %vm3991, %v3970, 0
        %4000 = vmatprep.subr.mxu0 0.0
        %4001 = vmatpush1.msra.mxu0 %v3938
        %4002 = vmatprep.subr.mxu0 0.0
        %4003 = vmatpush1.msra.mxu0 %v3937
        %4004 = vmatprep.subr.mxu0 0.0
        %4005 = vmatpush1.msra.mxu0 %v3936
        %4006 = vmatprep.subr.mxu0 0.0
        %4007 = vmatpush1.msra.mxu0 %v3935
        %4008 = vmatprep.subr.mxu0 0.0
        %4009 = vmatpush1.msra.mxu0 %v3934
        %4010 = vmatprep.subr.mxu0 0.0
        %4011 = vmatpush1.msra.mxu0 %v3933
        %4012 = vmatprep.subr.mxu0 0.0
        %4013 = vmatpush1.msra.mxu0 %v3932
        %4014 = vmatprep.subr.mxu0 0.0
        %4015 = vmatpush1.msra.mxu0 %v3931
        %4016 = vmatprep.subr.mxu0 0.0
        %4017 = vmatpush1.msra.mxu0 %v3930
        %4018 = vmatprep.subr.mxu0 0.0
        %4019 = vmatpush1.msra.mxu0 %v3929
        %4020 = vmatprep.subr.mxu0 0.0
        %4021 = vmatpush1.msra.mxu0 %v3928
        %4022 = vmatprep.subr.mxu0 0.0
        %4023 = vmatpush1.msra.mxu0 %v3927
        %4024 = vmatprep.subr.mxu0 0.0
        %4025 = vmatpush1.msra.mxu0 %v3926
        %4026 = vmatprep.subr.mxu0 0.0
        %4027 = vmatpush1.msra.mxu0 %v3925
        %4028 = vmatprep.subr.mxu0 0.0
        %4029 = vmatpush1.msra.mxu0 %v3924
        %4030 = vmatprep.subr.mxu0 0.0
        %4031 = vmatpush1.msra.mxu0 %v3923
        %4032 = vmatprep.subr.mxu0 0.0
        %4033 = vmatpush2.msra.mxu0 %v3954
        %4034 = vmatprep.subr.mxu0 0.0
        %4035 = vmatpush2.msra.mxu0 %v3953
        %4036 = vmatprep.subr.mxu0 0.0
        %4037 = vmatpush2.msra.mxu0 %v3952
        %4038 = vmatprep.subr.mxu0 0.0
        %4039 = vmatpush2.msra.mxu0 %v3951
        %4040 = vmatprep.subr.mxu0 0.0
        %4041 = vmatpush2.msra.mxu0 %v3950
        %4042 = vmatprep.subr.mxu0 0.0
        %4043 = vmatpush2.msra.mxu0 %v3949
        %4044 = vmatprep.subr.mxu0 0.0
        %4045 = vmatpush2.msra.mxu0 %v3948
        %4046 = vmatprep.subr.mxu0 0.0
        %4047 = vmatpush2.msra.mxu0 %v3947
        %4048 = vmatprep.subr.mxu0 0.0
        %4049 = vmatpush2.msra.mxu0 %v3946
        %4050 = vmatprep.subr.mxu0 0.0
        %4051 = vmatpush2.msra.mxu0 %v3945
        %4052 = vmatprep.subr.mxu0 0.0
        %4053 = vmatpush2.msra.mxu0 %v3944
        %4054 = vmatprep.subr.mxu0 0.0
        %4055 = vmatpush2.msra.mxu0 %v3943
        %4056 = vmatprep.subr.mxu0 0.0
        %4057 = vmatpush2.msra.mxu0 %v3942
        %4058 = vmatprep.subr.mxu0 0.0
        %4059 = vmatpush2.msra.mxu0 %v3941
        %4060 = vmatprep.subr.mxu0 0.0
        %4061 = vmatpush2.msra.mxu0 %v3940
        %4062 = vmatprep.subr.mxu0 0.0
        %4063 = vmatpush2.msra.mxu0 %v3939
        %4064 = vmatprep.mubr.f32.mxu0 %v3960
        %4065 = vmatmul.mubr.f32.gmra.mxu0 %v3959
        %v4066 = vpop.f32.mrf.mxu0
        %v4067 = vadd.f32 %v3974, %v4066
        %v4068 = vpop.f32.mrf.mxu0
        %4069 = vmatprep.mubr.f32.mxu0 %v3963
        %4070 = vmatmul.mubr.f32.gmra.mxu0 %v3962
        %v4071 = vpop.f32.mrf.mxu0
        %v4072 = vadd.f32 %v3979, %v4071
        %v4073 = vpop.f32.mrf.mxu0
        %4074 = vmatprep.mubr.f32.mxu0 %v3966
        %4075 = vmatmul.mubr.f32.gmra.mxu0 %v3965
        %v4076 = vpop.f32.mrf.mxu0
        %v4077 = vadd.f32 %v3984, %v4076
        %v4078 = vpop.f32.mrf.mxu0
        %4079 = vmatprep.mubr.f32.mxu0 %v3969
        %4080 = vmatmul.mubr.f32.gmra.mxu0 %v3968
        %v4081 = vpop.f32.mrf.mxu0
        %v4082 = vadd.f32 %v3989, %v4081
        %v4083 = vpop.f32.mrf.mxu0
        %4084 = vdwg.mxu0
        %4085 = vmatprep.subr.mxu0 0.0
        %4086 = vmatpush1.msra.mxu0 0.0
        %4087 = vmatprep.subr.mxu0 0.0
        %4088 = vmatpush1.msra.mxu0 0.0
        %4089 = vmatprep.subr.mxu0 0.0
        %4090 = vmatpush1.msra.mxu0 0.0
        %4091 = vmatprep.subr.mxu0 0.0
        %4092 = vmatpush1.msra.mxu0 0.0
        %4093 = vmatprep.subr.mxu0 0.0
        %4094 = vmatpush1.msra.mxu0 0.0
        %4095 = vmatprep.subr.mxu0 0.0
        %4096 = vmatpush1.msra.mxu0 0.0
        %4097 = vmatprep.subr.mxu0 0.0
        %4098 = vmatpush1.msra.mxu0 0.0
        %4099 = vmatprep.subr.mxu0 0.0
        %4100 = vmatpush1.msra.mxu0 0.0
        %4101 = vmatprep.subr.mxu0 0.0
        %4102 = vmatpush1.msra.mxu0 0.0
        %4103 = vmatprep.subr.mxu0 0.0
        %4104 = vmatpush1.msra.mxu0 0.0
        %4105 = vmatprep.subr.mxu0 0.0
        %4106 = vmatpush1.msra.mxu0 0.0
        %4107 = vmatprep.subr.mxu0 0.0
        %4108 = vmatpush1.msra.mxu0 0.0
        %4109 = vmatprep.subr.mxu0 0.0
        %4110 = vmatpush1.msra.mxu0 %v3958
        %4111 = vmatprep.subr.mxu0 0.0
        %4112 = vmatpush1.msra.mxu0 %v3957
        %4113 = vmatprep.subr.mxu0 0.0
        %4114 = vmatpush1.msra.mxu0 %v3956
        %4115 = vmatprep.subr.mxu0 0.0
        %4116 = vmatpush1.msra.mxu0 %v3955
        %4117 = vmatprep.subr.mxu0 0.0
        %4118 = vmatpush2.msra.mxu0 0.0
        %4119 = vmatprep.subr.mxu0 0.0
        %4120 = vmatpush2.msra.mxu0 0.0
        %4121 = vmatprep.subr.mxu0 0.0
        %4122 = vmatpush2.msra.mxu0 0.0
        %4123 = vmatprep.subr.mxu0 0.0
        %4124 = vmatpush2.msra.mxu0 0.0
        %4125 = vmatprep.subr.mxu0 0.0
        %4126 = vmatpush2.msra.mxu0 0.0
        %4127 = vmatprep.subr.mxu0 0.0
        %4128 = vmatpush2.msra.mxu0 0.0
        %4129 = vmatprep.subr.mxu0 0.0
        %4130 = vmatpush2.msra.mxu0 0.0
        %4131 = vmatprep.subr.mxu0 0.0
        %4132 = vmatpush2.msra.mxu0 0.0
        %4133 = vmatprep.subr.mxu0 0.0
        %4134 = vmatpush2.msra.mxu0 0.0
        %4135 = vmatprep.subr.mxu0 0.0
        %4136 = vmatpush2.msra.mxu0 0.0
        %4137 = vmatprep.subr.mxu0 0.0
        %4138 = vmatpush2.msra.mxu0 0.0
        %4139 = vmatprep.subr.mxu0 0.0
        %4140 = vmatpush2.msra.mxu0 0.0
        %4141 = vmatprep.subr.mxu0 0.0
        %4142 = vmatpush2.msra.mxu0 0.0
        %4143 = vmatprep.subr.mxu0 0.0
        %4144 = vmatpush2.msra.mxu0 0.0
        %4145 = vmatprep.subr.mxu0 0.0
        %4146 = vmatpush2.msra.mxu0 0.0
        %4147 = vmatprep.subr.mxu0 0.0
        %4148 = vmatpush2.msra.mxu0 0.0
        %4149 = vmatprep.mubr.f32.mxu0 0.0
        %4150 = vmatmul.mubr.f32.gmra.mxu0 %v3992
        %v4151 = vpop.f32.mrf.mxu0
        %v4152 = vadd.f32 %v4067, %v4151
        %v4153 = vpop.f32.mrf.mxu0
        %4154 = vmatprep.mubr.f32.mxu0 0.0
        %4155 = vmatmul.mubr.f32.gmra.mxu0 %v3994
        %v4156 = vpop.f32.mrf.mxu0
        %v4157 = vadd.f32 %v4072, %v4156
        %v4158 = vpop.f32.mrf.mxu0
        %4159 = vmatprep.mubr.f32.mxu0 0.0
        %4160 = vmatmul.mubr.f32.gmra.mxu0 %v3996
        %v4161 = vpop.f32.mrf.mxu0
        %v4162 = vadd.f32 %v4077, %v4161
        %v4163 = vpop.f32.mrf.mxu0
        %4164 = vmatprep.mubr.f32.mxu0 0.0
        %4165 = vmatmul.mubr.f32.gmra.mxu0 %v3998
        %v4166 = vpop.f32.mrf.mxu0
        %v4167 = vadd.f32 %v4082, %v4166
        %v4168 = vpop.f32.mrf.mxu0
        %4169 = vdwg.mxu0
        %vm4170 = vcmp.gt.f32.partialorder %v4152, 0.0
        %vm4171 = vcmp.gt.f32.partialorder %v4157, 0.0
        %vm4172 = vcmp.gt.f32.partialorder %v4162, 0.0
        %vm4173 = vcmp.gt.f32.partialorder %v4167, 0.0
        %v4174 = vmul.f32 %v4152, 0.1
        %v4175 = vmul.f32 %v4157, 0.1
        %v4176 = vmul.f32 %v4162, 0.1
        %v4177 = vmul.f32 %v4167, 0.1
        %v4178 = vsel %vm4170, %v4152, %v4174
        %v4179 = vsel %vm4171, %v4157, %v4175
        %v4180 = vsel %vm4172, %v4162, %v4176
        %v4181 = vsel %vm4173, %v4167, %v4177
        %4186 = vrot.lane.b32.xlu0 %v4178, 12
        %v4187 = vpop.permute.xlu0 %4186
        %4188 = vrot.lane.b32.xlu0 %v4179, 12
        %v4189 = vpop.permute.xlu0 %4188
        %4190 = vrot.lane.b32.xlu0 %v4180, 12
        %v4191 = vpop.permute.xlu0 %4190
        %4192 = vrot.lane.b32.xlu0 %v4181, 12
        %v4193 = vpop.permute.xlu0 %4192
        %4198 = vst.msk [vmem:[#allocation2] sm:$0xff] %vm2344, %v4187
        %4199 = vst.msk [vmem:[#allocation2 + $0x18] sm:$0xff] %vm2344, %v4189
        %4200 = vst.msk [vmem:[#allocation2 + $0x30] sm:$0xff] %vm2344, %v4191
        %4201 = vst.msk [vmem:[#allocation2 + $0x48] sm:$0xff] %vm2344, %v4193
        %4202 = vst.msk [vmem:[#allocation2] sm:$0xff] %vm2462, %v4187
        %4203 = vst.msk [vmem:[#allocation2 + $0x18] sm:$0xff] %vm2462, %v4189
        %4204 = vst.msk [vmem:[#allocation2 + $0x30] sm:$0xff] %vm2462, %v4191
        %4205 = vst.msk [vmem:[#allocation2 + $0x48] sm:$0xff] %vm2462, %v4193
        %4206 = vst.msk [vmem:[#allocation2] sm:$0xff] %vm2580, %v4187
        %4207 = vst.msk [vmem:[#allocation2 + $0x18] sm:$0xff] %vm2580, %v4189
        %4208 = vst.msk [vmem:[#allocation2 + $0x30] sm:$0xff] %vm2580, %v4191
        %4209 = vst.msk [vmem:[#allocation2 + $0x48] sm:$0xff] %vm2580, %v4193
        %4210 = vst.msk [vmem:[#allocation2] sm:$0xff] %vm2724, %v4187
        %4211 = vst.msk [vmem:[#allocation2 + $0x18] sm:$0xff] %vm2724, %v4189
        %4212 = vst.msk [vmem:[#allocation2 + $0x30] sm:$0xff] %vm2724, %v4191
        %4213 = vst.msk [vmem:[#allocation2 + $0x48] sm:$0xff] %vm2724, %v4193
        %4214 = vst.msk [vmem:[#allocation2] sm:$0xff] %vm2842, %v4187
        %4215 = vst.msk [vmem:[#allocation2 + $0x18] sm:$0xff] %vm2842, %v4189
        %4216 = vst.msk [vmem:[#allocation2 + $0x30] sm:$0xff] %vm2842, %v4191
        %4217 = vst.msk [vmem:[#allocation2 + $0x48] sm:$0xff] %vm2842, %v4193
        %4218 = vst.msk [vmem:[#allocation2] sm:$0xff] %vm2960, %v4187
        %4219 = vst.msk [vmem:[#allocation2 + $0x18] sm:$0xff] %vm2960, %v4189
        %4220 = vst.msk [vmem:[#allocation2 + $0x30] sm:$0xff] %vm2960, %v4191
        %4221 = vst.msk [vmem:[#allocation2 + $0x48] sm:$0xff] %vm2960, %v4193
        %4222 = vst.msk [vmem:[#allocation2] sm:$0xff] %vm3078, %v4187
        %4223 = vst.msk [vmem:[#allocation2 + $0x18] sm:$0xff] %vm3078, %v4189
        %4224 = vst.msk [vmem:[#allocation2 + $0x30] sm:$0xff] %vm3078, %v4191
        %4225 = vst.msk [vmem:[#allocation2 + $0x48] sm:$0xff] %vm3078, %v4193
        %4226 = vst.msk [vmem:[#allocation2] sm:$0xff] %vm3221, %v4187
        %4227 = vst.msk [vmem:[#allocation2 + $0x18] sm:$0xff] %vm3221, %v4189
        %4228 = vst.msk [vmem:[#allocation2 + $0x30] sm:$0xff] %vm3221, %v4191
        %4229 = vst.msk [vmem:[#allocation2 + $0x48] sm:$0xff] %vm3221, %v4193
        %4230 = vst.msk [vmem:[#allocation2] sm:$0xff] %vm3339, %v4187
        %4231 = vst.msk [vmem:[#allocation2 + $0x18] sm:$0xff] %vm3339, %v4189
        %4232 = vst.msk [vmem:[#allocation2 + $0x30] sm:$0xff] %vm3339, %v4191
        %4233 = vst.msk [vmem:[#allocation2 + $0x48] sm:$0xff] %vm3339, %v4193
        %4234 = vst.msk [vmem:[#allocation2] sm:$0xff] %vm3342, 0.0
        %4235 = vst.msk [vmem:[#allocation2 + $0x18] sm:$0xff] %vm3342, 0.0
        %4236 = vst.msk [vmem:[#allocation2 + $0x30] sm:$0xff] %vm3342, 0.0
        %4237 = vst.msk [vmem:[#allocation2 + $0x48] sm:$0xff] %vm3342, 0.0
        %4238 = vst.msk [vmem:[#allocation2] sm:$0xff] %vm3345, 0.0
        %4239 = vst.msk [vmem:[#allocation2 + $0x18] sm:$0xff] %vm3345, 0.0
        %4240 = vst.msk [vmem:[#allocation2 + $0x30] sm:$0xff] %vm3345, 0.0
        %4241 = vst.msk [vmem:[#allocation2 + $0x48] sm:$0xff] %vm3345, 0.0
        %4242 = vst.msk [vmem:[#allocation2] sm:$0xff] %vm3348, 0.0
        %4243 = vst.msk [vmem:[#allocation2 + $0x18] sm:$0xff] %vm3348, 0.0
        %4244 = vst.msk [vmem:[#allocation2 + $0x30] sm:$0xff] %vm3348, 0.0
        %4245 = vst.msk [vmem:[#allocation2 + $0x48] sm:$0xff] %vm3348, 0.0
        %4246 = vst.msk [vmem:[#allocation2] sm:$0xff] %vm3351, 0.0
        %4247 = vst.msk [vmem:[#allocation2 + $0x18] sm:$0xff] %vm3351, 0.0
        %4248 = vst.msk [vmem:[#allocation2 + $0x30] sm:$0xff] %vm3351, 0.0
        %4249 = vst.msk [vmem:[#allocation2 + $0x48] sm:$0xff] %vm3351, 0.0
        %4250 = vst.msk [vmem:[#allocation2] sm:$0xff] %vm3354, 0.0
        %4251 = vst.msk [vmem:[#allocation2 + $0x18] sm:$0xff] %vm3354, 0.0
        %4252 = vst.msk [vmem:[#allocation2 + $0x30] sm:$0xff] %vm3354, 0.0
        %4253 = vst.msk [vmem:[#allocation2 + $0x48] sm:$0xff] %vm3354, 0.0
        %4254 = vst.msk [vmem:[#allocation2] sm:$0xff] %vm3357, 0.0
        %4255 = vst.msk [vmem:[#allocation2 + $0x18] sm:$0xff] %vm3357, 0.0
        %4256 = vst.msk [vmem:[#allocation2 + $0x30] sm:$0xff] %vm3357, 0.0
        %4257 = vst.msk [vmem:[#allocation2 + $0x48] sm:$0xff] %vm3357, 0.0
        %4258 = vst.msk [vmem:[#allocation2] sm:$0xff] %vm3360, 0.0
        %4259 = vst.msk [vmem:[#allocation2 + $0x18] sm:$0xff] %vm3360, 0.0
        %4260 = vst.msk [vmem:[#allocation2 + $0x30] sm:$0xff] %vm3360, 0.0
        %4261 = vst.msk [vmem:[#allocation2 + $0x48] sm:$0xff] %vm3360, 0.0
        %4262 = vst.msk [vmem:[#allocation2] sm:$0xff] %vm3363, 0.0
        %4263 = vst.msk [vmem:[#allocation2 + $0x18] sm:$0xff] %vm3363, 0.0
        %4264 = vst.msk [vmem:[#allocation2 + $0x30] sm:$0xff] %vm3363, 0.0
        %4265 = vst.msk [vmem:[#allocation2 + $0x48] sm:$0xff] %vm3363, 0.0
        %4266 = vst.msk [vmem:[#allocation2] sm:$0xff] %vm835, 0.0
        %4267 = vst.msk [vmem:[#allocation2 + $0x18] sm:$0xff] %vm835, 0.0
        %4268 = vst.msk [vmem:[#allocation2 + $0x30] sm:$0xff] %vm835, 0.0
        %4269 = vst.msk [vmem:[#allocation2 + $0x48] sm:$0xff] %vm835, 0.0
        %4270 = vst.msk [vmem:[#allocation2] sm:$0xff] %vm3368, 0.0
        %4271 = vst.msk [vmem:[#allocation2 + $0x18] sm:$0xff] %vm3368, 0.0
        %4272 = vst.msk [vmem:[#allocation2 + $0x30] sm:$0xff] %vm3368, 0.0
        %4273 = vst.msk [vmem:[#allocation2 + $0x48] sm:$0xff] %vm3368, 0.0
        %v4274 = vld [vmem:[#allocation2] sm:$0xff]
        %v4275 = vld [vmem:[#allocation2 + $0x18] sm:$0xff]
        %v4276 = vld [vmem:[#allocation2 + $0x30] sm:$0xff]
        %v4277 = vld [vmem:[#allocation2 + $0x48] sm:$0xff]
        %4278 = vst.msk [vmem:[#allocation3] sm:$0xff] %vm3373, %v4274
        %4279 = vst.msk [vmem:[#allocation3 + $0x18] sm:$0xff] %vm3373, %v4275
        %4280 = vst.msk [vmem:[#allocation3 + $0x30] sm:$0xff] %vm3373, %v4276
        %4281 = vst.msk [vmem:[#allocation3 + $0x48] sm:$0xff] %vm3373, %v4277
        %v4282 = vld [vmem:[#allocation2] sm:$0xff]
        %v4283 = vld [vmem:[#allocation2 + $0x18] sm:$0xff]
        %v4284 = vld [vmem:[#allocation2 + $0x30] sm:$0xff]
        %v4285 = vld [vmem:[#allocation2 + $0x48] sm:$0xff]
        %4290 = vrot.lane.b32.xlu0 %v4282, 127
        %v4291 = vpop.permute.xlu0 %4290
        %4292 = vrot.lane.b32.xlu0 %v4283, 127
        %v4293 = vpop.permute.xlu0 %4292
        %4294 = vrot.lane.b32.xlu0 %v4284, 127
        %v4295 = vpop.permute.xlu0 %4294
        %4296 = vrot.lane.b32.xlu0 %v4285, 127
        %v4297 = vpop.permute.xlu0 %4296
        %4302 = vst.msk [vmem:[#allocation3 + $0x60] sm:$0xff] %vm3373, %v4291
        %4303 = vst.msk [vmem:[#allocation3 + $0x78] sm:$0xff] %vm3373, %v4293
        %4304 = vst.msk [vmem:[#allocation3 + $0x90] sm:$0xff] %vm3373, %v4295
        %4305 = vst.msk [vmem:[#allocation3 + $0xa8] sm:$0xff] %vm3373, %v4297
        %v4306 = vld [vmem:[#allocation2] sm:$0xff]
        %v4307 = vld [vmem:[#allocation2 + $0x18] sm:$0xff]
        %v4308 = vld [vmem:[#allocation2 + $0x30] sm:$0xff]
        %v4309 = vld [vmem:[#allocation2 + $0x48] sm:$0xff]
        %4314 = vrot.lane.b32.xlu0 %v4306, 126
        %v4315 = vpop.permute.xlu0 %4314
        %4316 = vrot.lane.b32.xlu0 %v4307, 126
        %v4317 = vpop.permute.xlu0 %4316
        %4318 = vrot.lane.b32.xlu0 %v4308, 126
        %v4319 = vpop.permute.xlu0 %4318
        %4320 = vrot.lane.b32.xlu0 %v4309, 126
        %v4321 = vpop.permute.xlu0 %4320
        %4326 = vst.msk [vmem:[#allocation3 + $0xc0] sm:$0xff] %vm3373, %v4315
        %4327 = vst.msk [vmem:[#allocation3 + $0xd8] sm:$0xff] %vm3373, %v4317
        %4328 = vst.msk [vmem:[#allocation3 + $0xf0] sm:$0xff] %vm3373, %v4319
        %4329 = vst.msk [vmem:[#allocation3 + $0x108] sm:$0xff] %vm3373, %v4321
        %v4330 = vld [vmem:[#allocation2] sm:$0xff]
        %v4331 = vld [vmem:[#allocation2 + $0x18] sm:$0xff]
        %v4332 = vld [vmem:[#allocation2 + $0x30] sm:$0xff]
        %v4333 = vld [vmem:[#allocation2 + $0x48] sm:$0xff]
        %4338 = vrot.lane.b32.xlu0 %v4330, 117
        %v4339 = vpop.permute.xlu0 %4338
        %4340 = vrot.lane.b32.xlu0 %v4331, 117
        %v4341 = vpop.permute.xlu0 %4340
        %4342 = vrot.lane.b32.xlu0 %v4332, 117
        %v4343 = vpop.permute.xlu0 %4342
        %4344 = vrot.lane.b32.xlu0 %v4333, 117
        %v4345 = vpop.permute.xlu0 %4344
        %4350 = vst.msk [vmem:[#allocation3 + $0x120] sm:$0xff] %vm3373, %v4339
        %4351 = vst.msk [vmem:[#allocation3 + $0x138] sm:$0xff] %vm3373, %v4341
        %4352 = vst.msk [vmem:[#allocation3 + $0x150] sm:$0xff] %vm3373, %v4343
        %4353 = vst.msk [vmem:[#allocation3 + $0x168] sm:$0xff] %vm3373, %v4345
        %v4354 = vld [vmem:[#allocation2] sm:$0xff]
        %v4355 = vld [vmem:[#allocation2 + $0x18] sm:$0xff]
        %v4356 = vld [vmem:[#allocation2 + $0x30] sm:$0xff]
        %v4357 = vld [vmem:[#allocation2 + $0x48] sm:$0xff]
        %4362 = vrot.lane.b32.xlu0 %v4354, 116
        %v4363 = vpop.permute.xlu0 %4362
        %4364 = vrot.lane.b32.xlu0 %v4355, 116
        %v4365 = vpop.permute.xlu0 %4364
        %4366 = vrot.lane.b32.xlu0 %v4356, 116
        %v4367 = vpop.permute.xlu0 %4366
        %4368 = vrot.lane.b32.xlu0 %v4357, 116
        %v4369 = vpop.permute.xlu0 %4368
        %4374 = vst.msk [vmem:[#allocation3 + $0x180] sm:$0xff] %vm3373, %v4363
        %4375 = vst.msk [vmem:[#allocation3 + $0x198] sm:$0xff] %vm3373, %v4365
        %4376 = vst.msk [vmem:[#allocation3 + $0x1b0] sm:$0xff] %vm3373, %v4367
        %4377 = vst.msk [vmem:[#allocation3 + $0x1c8] sm:$0xff] %vm3373, %v4369
        %v4378 = vld [vmem:[#allocation2] sm:$0xff]
        %v4379 = vld [vmem:[#allocation2 + $0x18] sm:$0xff]
        %v4380 = vld [vmem:[#allocation2 + $0x30] sm:$0xff]
        %v4381 = vld [vmem:[#allocation2 + $0x48] sm:$0xff]
        %4386 = vrot.lane.b32.xlu0 %v4378, 115
        %v4387 = vpop.permute.xlu0 %4386
        %4388 = vrot.lane.b32.xlu0 %v4379, 115
        %v4389 = vpop.permute.xlu0 %4388
        %4390 = vrot.lane.b32.xlu0 %v4380, 115
        %v4391 = vpop.permute.xlu0 %4390
        %4392 = vrot.lane.b32.xlu0 %v4381, 115
        %v4393 = vpop.permute.xlu0 %4392
        %4398 = vst.msk [vmem:[#allocation3 + $0x1e0] sm:$0xff] %vm3373, %v4387
        %4399 = vst.msk [vmem:[#allocation3 + $0x1f8] sm:$0xff] %vm3373, %v4389
        %4400 = vst.msk [vmem:[#allocation3 + $0x210] sm:$0xff] %vm3373, %v4391
        %4401 = vst.msk [vmem:[#allocation3 + $0x228] sm:$0xff] %vm3373, %v4393
        %v4402 = vld [vmem:[#allocation2] sm:$0xff]
        %v4403 = vld [vmem:[#allocation2 + $0x18] sm:$0xff]
        %v4404 = vld [vmem:[#allocation2 + $0x30] sm:$0xff]
        %v4405 = vld [vmem:[#allocation2 + $0x48] sm:$0xff]
        %4410 = vrot.lane.b32.xlu0 %v4402, 106
        %v4411 = vpop.permute.xlu0 %4410
        %4412 = vrot.lane.b32.xlu0 %v4403, 106
        %v4413 = vpop.permute.xlu0 %4412
        %4414 = vrot.lane.b32.xlu0 %v4404, 106
        %v4415 = vpop.permute.xlu0 %4414
        %4416 = vrot.lane.b32.xlu0 %v4405, 106
        %v4417 = vpop.permute.xlu0 %4416
        %4422 = vst.msk [vmem:[#allocation3 + $0x240] sm:$0xff] %vm3373, %v4411
        %4423 = vst.msk [vmem:[#allocation3 + $0x258] sm:$0xff] %vm3373, %v4413
        %4424 = vst.msk [vmem:[#allocation3 + $0x270] sm:$0xff] %vm3373, %v4415
        %4425 = vst.msk [vmem:[#allocation3 + $0x288] sm:$0xff] %vm3373, %v4417
        %v4426 = vld [vmem:[#allocation2] sm:$0xff]
        %v4427 = vld [vmem:[#allocation2 + $0x18] sm:$0xff]
        %v4428 = vld [vmem:[#allocation2 + $0x30] sm:$0xff]
        %v4429 = vld [vmem:[#allocation2 + $0x48] sm:$0xff]
        %4434 = vrot.lane.b32.xlu0 %v4426, 105
        %v4435 = vpop.permute.xlu0 %4434
        %4436 = vrot.lane.b32.xlu0 %v4427, 105
        %v4437 = vpop.permute.xlu0 %4436
        %4438 = vrot.lane.b32.xlu0 %v4428, 105
        %v4439 = vpop.permute.xlu0 %4438
        %4440 = vrot.lane.b32.xlu0 %v4429, 105
        %v4441 = vpop.permute.xlu0 %4440
        %4446 = vst.msk [vmem:[#allocation3 + $0x2a0] sm:$0xff] %vm3373, %v4435
        %4447 = vst.msk [vmem:[#allocation3 + $0x2b8] sm:$0xff] %vm3373, %v4437
        %4448 = vst.msk [vmem:[#allocation3 + $0x2d0] sm:$0xff] %vm3373, %v4439
        %4449 = vst.msk [vmem:[#allocation3 + $0x2e8] sm:$0xff] %vm3373, %v4441
        %v4450 = vld [vmem:[#allocation2] sm:$0xff]
        %v4451 = vld [vmem:[#allocation2 + $0x18] sm:$0xff]
        %v4452 = vld [vmem:[#allocation2 + $0x30] sm:$0xff]
        %v4453 = vld [vmem:[#allocation2 + $0x48] sm:$0xff]
        %4458 = vrot.lane.b32.xlu0 %v4450, 104
        %v4459 = vpop.permute.xlu0 %4458
        %4460 = vrot.lane.b32.xlu0 %v4451, 104
        %v4461 = vpop.permute.xlu0 %4460
        %4462 = vrot.lane.b32.xlu0 %v4452, 104
        %v4463 = vpop.permute.xlu0 %4462
        %4464 = vrot.lane.b32.xlu0 %v4453, 104
        %v4465 = vpop.permute.xlu0 %4464
        %4470 = vst.msk [vmem:[#allocation3 + $0x300] sm:$0xff] %vm3373, %v4459
        %4471 = vst.msk [vmem:[#allocation3 + $0x318] sm:$0xff] %vm3373, %v4461
        %4472 = vst.msk [vmem:[#allocation3 + $0x330] sm:$0xff] %vm3373, %v4463
        %4473 = vst.msk [vmem:[#allocation3 + $0x348] sm:$0xff] %vm3373, %v4465
        %v4474 = vld [vmem:[#allocation3] sm:$0xff]
        %v4475 = vld [vmem:[#allocation3 + $0x18] sm:$0xff]
        %v4476 = vld [vmem:[#allocation3 + $0x30] sm:$0xff]
        %v4477 = vld [vmem:[#allocation3 + $0x48] sm:$0xff]
        %v4478 = vld [vmem:[#allocation3 + $0x60] sm:$0xff]
        %v4479 = vld [vmem:[#allocation3 + $0x78] sm:$0xff]
        %v4480 = vld [vmem:[#allocation3 + $0x90] sm:$0xff]
        %v4481 = vld [vmem:[#allocation3 + $0xa8] sm:$0xff]
        %v4482 = vld [vmem:[#allocation3 + $0xc0] sm:$0xff]
        %v4483 = vld [vmem:[#allocation3 + $0xd8] sm:$0xff]
        %v4484 = vld [vmem:[#allocation3 + $0xf0] sm:$0xff]
        %v4485 = vld [vmem:[#allocation3 + $0x108] sm:$0xff]
        %v4486 = vld [vmem:[#allocation3 + $0x120] sm:$0xff]
        %v4487 = vld [vmem:[#allocation3 + $0x138] sm:$0xff]
        %v4488 = vld [vmem:[#allocation3 + $0x150] sm:$0xff]
        %v4489 = vld [vmem:[#allocation3 + $0x168] sm:$0xff]
        %v4490 = vld [vmem:[#allocation3 + $0x180] sm:$0xff]
        %v4491 = vld [vmem:[#allocation3 + $0x198] sm:$0xff]
        %v4492 = vld [vmem:[#allocation3 + $0x1b0] sm:$0xff]
        %v4493 = vld [vmem:[#allocation3 + $0x1c8] sm:$0xff]
        %v4494 = vld [vmem:[#allocation3 + $0x1e0] sm:$0xff]
        %v4495 = vld [vmem:[#allocation3 + $0x1f8] sm:$0xff]
        %v4496 = vld [vmem:[#allocation3 + $0x210] sm:$0xff]
        %v4497 = vld [vmem:[#allocation3 + $0x228] sm:$0xff]
        %v4498 = vld [vmem:[#allocation3 + $0x240] sm:$0xff]
        %v4499 = vld [vmem:[#allocation3 + $0x258] sm:$0xff]
        %v4500 = vld [vmem:[#allocation3 + $0x270] sm:$0xff]
        %v4501 = vld [vmem:[#allocation3 + $0x288] sm:$0xff]
        %v4502 = vld [vmem:[#allocation3 + $0x2a0] sm:$0xff]
        %v4503 = vld [vmem:[#allocation3 + $0x2b8] sm:$0xff]
        %v4504 = vld [vmem:[#allocation3 + $0x2d0] sm:$0xff]
        %v4505 = vld [vmem:[#allocation3 + $0x2e8] sm:$0xff]
        %v4506 = vld [vmem:[#allocation3 + $0x300] sm:$0xff]
        %v4507 = vld [vmem:[#allocation3 + $0x318] sm:$0xff]
        %v4508 = vld [vmem:[#allocation3 + $0x330] sm:$0xff]
        %v4509 = vld [vmem:[#allocation3 + $0x348] sm:$0xff]
        %v4510 = vld [vmem:[%s1 + $0x150] sm:$0xff]
        %v4511 = vld [vmem:[%s1 + $0x158] sm:$0xff]
        %v4512 = vld [vmem:[%s1 + $0x160] sm:$0xff]
        %v4513 = vld [vmem:[%s1 + $0x168] sm:$0xff]
        %v4514 = vld [vmem:[%s1 + $0x170] sm:$0xff]
        %v4515 = vld [vmem:[%s1 + $0x178] sm:$0xff]
        %v4516 = vld [vmem:[%s1 + $0x180] sm:$0xff]
        %v4517 = vld [vmem:[%s1 + $0x188] sm:$0xff]
        %v4518 = vld [vmem:[%s1 + $0x190] sm:$0xff]
        %v4519 = vld [vmem:[%s1 + $0x198] sm:$0xff]
        %v4520 = vld [vmem:[%s1 + $0x1a0] sm:$0xff]
        %v4521 = vld [vmem:[%s1 + $0x1a8] sm:$0xff]
        %4523 = vset.pattern.permute.xlu0 32
        %4524 = vperm.xlu0 %4523, %v4512
        %v4525 = vpop.permute.xlu0 %4524
        %4528 = vset.pattern.permute.xlu0 32
        %4529 = vperm.xlu0 %4528, %v4515
        %v4530 = vpop.permute.xlu0 %4529
        %4533 = vset.pattern.permute.xlu0 32
        %4534 = vperm.xlu0 %4533, %v4518
        %v4535 = vpop.permute.xlu0 %4534
        %4538 = vset.pattern.permute.xlu0 32
        %4539 = vperm.xlu0 %4538, %v4521
        %v4540 = vpop.permute.xlu0 %4539
        %v4542 = vsel %vm3991, %v4512, 0
        %v4544 = vsel %vm3991, %v4515, 0
        %v4546 = vsel %vm3991, %v4518, 0
        %v4548 = vsel %vm3991, %v4521, 0
        %4550 = vmatprep.subr.mxu0 0.0
        %4551 = vmatpush1.msra.mxu0 %v4489
        %4552 = vmatprep.subr.mxu0 0.0
        %4553 = vmatpush1.msra.mxu0 %v4488
        %4554 = vmatprep.subr.mxu0 0.0
        %4555 = vmatpush1.msra.mxu0 %v4487
        %4556 = vmatprep.subr.mxu0 0.0
        %4557 = vmatpush1.msra.mxu0 %v4486
        %4558 = vmatprep.subr.mxu0 0.0
        %4559 = vmatpush1.msra.mxu0 %v4485
        %4560 = vmatprep.subr.mxu0 0.0
        %4561 = vmatpush1.msra.mxu0 %v4484
        %4562 = vmatprep.subr.mxu0 0.0
        %4563 = vmatpush1.msra.mxu0 %v4483
        %4564 = vmatprep.subr.mxu0 0.0
        %4565 = vmatpush1.msra.mxu0 %v4482
        %4566 = vmatprep.subr.mxu0 0.0
        %4567 = vmatpush1.msra.mxu0 %v4481
        %4568 = vmatprep.subr.mxu0 0.0
        %4569 = vmatpush1.msra.mxu0 %v4480
        %4570 = vmatprep.subr.mxu0 0.0
        %4571 = vmatpush1.msra.mxu0 %v4479
        %4572 = vmatprep.subr.mxu0 0.0
        %4573 = vmatpush1.msra.mxu0 %v4478
        %4574 = vmatprep.subr.mxu0 0.0
        %4575 = vmatpush1.msra.mxu0 %v4477
        %4576 = vmatprep.subr.mxu0 0.0
        %4577 = vmatpush1.msra.mxu0 %v4476
        %4578 = vmatprep.subr.mxu0 0.0
        %4579 = vmatpush1.msra.mxu0 %v4475
        %4580 = vmatprep.subr.mxu0 0.0
        %4581 = vmatpush1.msra.mxu0 %v4474
        %4582 = vmatprep.subr.mxu0 0.0
        %4583 = vmatpush2.msra.mxu0 %v4505
        %4584 = vmatprep.subr.mxu0 0.0
        %4585 = vmatpush2.msra.mxu0 %v4504
        %4586 = vmatprep.subr.mxu0 0.0
        %4587 = vmatpush2.msra.mxu0 %v4503
        %4588 = vmatprep.subr.mxu0 0.0
        %4589 = vmatpush2.msra.mxu0 %v4502
        %4590 = vmatprep.subr.mxu0 0.0
        %4591 = vmatpush2.msra.mxu0 %v4501
        %4592 = vmatprep.subr.mxu0 0.0
        %4593 = vmatpush2.msra.mxu0 %v4500
        %4594 = vmatprep.subr.mxu0 0.0
        %4595 = vmatpush2.msra.mxu0 %v4499
        %4596 = vmatprep.subr.mxu0 0.0
        %4597 = vmatpush2.msra.mxu0 %v4498
        %4598 = vmatprep.subr.mxu0 0.0
        %4599 = vmatpush2.msra.mxu0 %v4497
        %4600 = vmatprep.subr.mxu0 0.0
        %4601 = vmatpush2.msra.mxu0 %v4496
        %4602 = vmatprep.subr.mxu0 0.0
        %4603 = vmatpush2.msra.mxu0 %v4495
        %4604 = vmatprep.subr.mxu0 0.0
        %4605 = vmatpush2.msra.mxu0 %v4494
        %4606 = vmatprep.subr.mxu0 0.0
        %4607 = vmatpush2.msra.mxu0 %v4493
        %4608 = vmatprep.subr.mxu0 0.0
        %4609 = vmatpush2.msra.mxu0 %v4492
        %4610 = vmatprep.subr.mxu0 0.0
        %4611 = vmatpush2.msra.mxu0 %v4491
        %4612 = vmatprep.subr.mxu0 0.0
        %4613 = vmatpush2.msra.mxu0 %v4490
        %4614 = vmatprep.mubr.f32.mxu0 %v4511
        %4615 = vmatmul.mubr.f32.gmra.mxu0 %v4510
        %v4616 = vpop.f32.mrf.mxu0
        %v4617 = vadd.f32 %v4525, %v4616
        %v4618 = vpop.f32.mrf.mxu0
        %4619 = vmatprep.mubr.f32.mxu0 %v4514
        %4620 = vmatmul.mubr.f32.gmra.mxu0 %v4513
        %v4621 = vpop.f32.mrf.mxu0
        %v4622 = vadd.f32 %v4530, %v4621
        %v4623 = vpop.f32.mrf.mxu0
        %4624 = vmatprep.mubr.f32.mxu0 %v4517
        %4625 = vmatmul.mubr.f32.gmra.mxu0 %v4516
        %v4626 = vpop.f32.mrf.mxu0
        %v4627 = vadd.f32 %v4535, %v4626
        %v4628 = vpop.f32.mrf.mxu0
        %4629 = vmatprep.mubr.f32.mxu0 %v4520
        %4630 = vmatmul.mubr.f32.gmra.mxu0 %v4519
        %v4631 = vpop.f32.mrf.mxu0
        %v4632 = vadd.f32 %v4540, %v4631
        %v4633 = vpop.f32.mrf.mxu0
        %4634 = vdwg.mxu0
        %4635 = vmatprep.subr.mxu0 0.0
        %4636 = vmatpush1.msra.mxu0 0.0
        %4637 = vmatprep.subr.mxu0 0.0
        %4638 = vmatpush1.msra.mxu0 0.0
        %4639 = vmatprep.subr.mxu0 0.0
        %4640 = vmatpush1.msra.mxu0 0.0
        %4641 = vmatprep.subr.mxu0 0.0
        %4642 = vmatpush1.msra.mxu0 0.0
        %4643 = vmatprep.subr.mxu0 0.0
        %4644 = vmatpush1.msra.mxu0 0.0
        %4645 = vmatprep.subr.mxu0 0.0
        %4646 = vmatpush1.msra.mxu0 0.0
        %4647 = vmatprep.subr.mxu0 0.0
        %4648 = vmatpush1.msra.mxu0 0.0
        %4649 = vmatprep.subr.mxu0 0.0
        %4650 = vmatpush1.msra.mxu0 0.0
        %4651 = vmatprep.subr.mxu0 0.0
        %4652 = vmatpush1.msra.mxu0 0.0
        %4653 = vmatprep.subr.mxu0 0.0
        %4654 = vmatpush1.msra.mxu0 0.0
        %4655 = vmatprep.subr.mxu0 0.0
        %4656 = vmatpush1.msra.mxu0 0.0
        %4657 = vmatprep.subr.mxu0 0.0
        %4658 = vmatpush1.msra.mxu0 0.0
        %4659 = vmatprep.subr.mxu0 0.0
        %4660 = vmatpush1.msra.mxu0 %v4509
        %4661 = vmatprep.subr.mxu0 0.0
        %4662 = vmatpush1.msra.mxu0 %v4508
        %4663 = vmatprep.subr.mxu0 0.0
        %4664 = vmatpush1.msra.mxu0 %v4507
        %4665 = vmatprep.subr.mxu0 0.0
        %4666 = vmatpush1.msra.mxu0 %v4506
        %4667 = vmatprep.subr.mxu0 0.0
        %4668 = vmatpush2.msra.mxu0 0.0
        %4669 = vmatprep.subr.mxu0 0.0
        %4670 = vmatpush2.msra.mxu0 0.0
        %4671 = vmatprep.subr.mxu0 0.0
        %4672 = vmatpush2.msra.mxu0 0.0
        %4673 = vmatprep.subr.mxu0 0.0
        %4674 = vmatpush2.msra.mxu0 0.0
        %4675 = vmatprep.subr.mxu0 0.0
        %4676 = vmatpush2.msra.mxu0 0.0
        %4677 = vmatprep.subr.mxu0 0.0
        %4678 = vmatpush2.msra.mxu0 0.0
        %4679 = vmatprep.subr.mxu0 0.0
        %4680 = vmatpush2.msra.mxu0 0.0
        %4681 = vmatprep.subr.mxu0 0.0
        %4682 = vmatpush2.msra.mxu0 0.0
        %4683 = vmatprep.subr.mxu0 0.0
        %4684 = vmatpush2.msra.mxu0 0.0
        %4685 = vmatprep.subr.mxu0 0.0
        %4686 = vmatpush2.msra.mxu0 0.0
        %4687 = vmatprep.subr.mxu0 0.0
        %4688 = vmatpush2.msra.mxu0 0.0
        %4689 = vmatprep.subr.mxu0 0.0
        %4690 = vmatpush2.msra.mxu0 0.0
        %4691 = vmatprep.subr.mxu0 0.0
        %4692 = vmatpush2.msra.mxu0 0.0
        %4693 = vmatprep.subr.mxu0 0.0
        %4694 = vmatpush2.msra.mxu0 0.0
        %4695 = vmatprep.subr.mxu0 0.0
        %4696 = vmatpush2.msra.mxu0 0.0
        %4697 = vmatprep.subr.mxu0 0.0
        %4698 = vmatpush2.msra.mxu0 0.0
        %4699 = vmatprep.mubr.f32.mxu0 0.0
        %4700 = vmatmul.mubr.f32.gmra.mxu0 %v4542
        %v4701 = vpop.f32.mrf.mxu0
        %v4702 = vadd.f32 %v4617, %v4701
        %v4703 = vpop.f32.mrf.mxu0
        %4704 = vmatprep.mubr.f32.mxu0 0.0
        %4705 = vmatmul.mubr.f32.gmra.mxu0 %v4544
        %v4706 = vpop.f32.mrf.mxu0
        %v4707 = vadd.f32 %v4622, %v4706
        %v4708 = vpop.f32.mrf.mxu0
        %4709 = vmatprep.mubr.f32.mxu0 0.0
        %4710 = vmatmul.mubr.f32.gmra.mxu0 %v4546
        %v4711 = vpop.f32.mrf.mxu0
        %v4712 = vadd.f32 %v4627, %v4711
        %v4713 = vpop.f32.mrf.mxu0
        %4714 = vmatprep.mubr.f32.mxu0 0.0
        %4715 = vmatmul.mubr.f32.gmra.mxu0 %v4548
        %v4716 = vpop.f32.mrf.mxu0
        %v4717 = vadd.f32 %v4632, %v4716
        %v4718 = vpop.f32.mrf.mxu0
        %4719 = vdwg.mxu0
        %vm4720 = vcmp.gt.f32.partialorder %v4702, 0.0
        %vm4721 = vcmp.gt.f32.partialorder %v4707, 0.0
        %vm4722 = vcmp.gt.f32.partialorder %v4712, 0.0
        %vm4723 = vcmp.gt.f32.partialorder %v4717, 0.0
        %v4724 = vmul.f32 %v4702, 0.1
        %v4725 = vmul.f32 %v4707, 0.1
        %v4726 = vmul.f32 %v4712, 0.1
        %v4727 = vmul.f32 %v4717, 0.1
        %v4728 = vsel %vm4720, %v4702, %v4724
        %v4729 = vsel %vm4721, %v4707, %v4725
        %v4730 = vsel %vm4722, %v4712, %v4726
        %v4731 = vsel %vm4723, %v4717, %v4727
        %4736 = vrot.lane.b32.xlu0 %v4728, 12
        %v4737 = vpop.permute.xlu0 %4736
        %4738 = vrot.lane.b32.xlu0 %v4729, 12
        %v4739 = vpop.permute.xlu0 %4738
        %4740 = vrot.lane.b32.xlu0 %v4730, 12
        %v4741 = vpop.permute.xlu0 %4740
        %4742 = vrot.lane.b32.xlu0 %v4731, 12
        %v4743 = vpop.permute.xlu0 %4742
        %4748 = vst.msk [vmem:[#allocation2] sm:$0xff] %vm2344, %v4737
        %4749 = vst.msk [vmem:[#allocation2 + $0x18] sm:$0xff] %vm2344, %v4739
        %4750 = vst.msk [vmem:[#allocation2 + $0x30] sm:$0xff] %vm2344, %v4741
        %4751 = vst.msk [vmem:[#allocation2 + $0x48] sm:$0xff] %vm2344, %v4743
        %4752 = vst.msk [vmem:[#allocation2] sm:$0xff] %vm2462, %v4737
        %4753 = vst.msk [vmem:[#allocation2 + $0x18] sm:$0xff] %vm2462, %v4739
        %4754 = vst.msk [vmem:[#allocation2 + $0x30] sm:$0xff] %vm2462, %v4741
        %4755 = vst.msk [vmem:[#allocation2 + $0x48] sm:$0xff] %vm2462, %v4743
        %4756 = vst.msk [vmem:[#allocation2] sm:$0xff] %vm2580, %v4737
        %4757 = vst.msk [vmem:[#allocation2 + $0x18] sm:$0xff] %vm2580, %v4739
        %4758 = vst.msk [vmem:[#allocation2 + $0x30] sm:$0xff] %vm2580, %v4741
        %4759 = vst.msk [vmem:[#allocation2 + $0x48] sm:$0xff] %vm2580, %v4743
        %4760 = vst.msk [vmem:[#allocation2] sm:$0xff] %vm2724, %v4737
        %4761 = vst.msk [vmem:[#allocation2 + $0x18] sm:$0xff] %vm2724, %v4739
        %4762 = vst.msk [vmem:[#allocation2 + $0x30] sm:$0xff] %vm2724, %v4741
        %4763 = vst.msk [vmem:[#allocation2 + $0x48] sm:$0xff] %vm2724, %v4743
        %4764 = vst.msk [vmem:[#allocation2] sm:$0xff] %vm2842, %v4737
        %4765 = vst.msk [vmem:[#allocation2 + $0x18] sm:$0xff] %vm2842, %v4739
        %4766 = vst.msk [vmem:[#allocation2 + $0x30] sm:$0xff] %vm2842, %v4741
        %4767 = vst.msk [vmem:[#allocation2 + $0x48] sm:$0xff] %vm2842, %v4743
        %4768 = vst.msk [vmem:[#allocation2] sm:$0xff] %vm2960, %v4737
        %4769 = vst.msk [vmem:[#allocation2 + $0x18] sm:$0xff] %vm2960, %v4739
        %4770 = vst.msk [vmem:[#allocation2 + $0x30] sm:$0xff] %vm2960, %v4741
        %4771 = vst.msk [vmem:[#allocation2 + $0x48] sm:$0xff] %vm2960, %v4743
        %4772 = vst.msk [vmem:[#allocation2] sm:$0xff] %vm3078, %v4737
        %4773 = vst.msk [vmem:[#allocation2 + $0x18] sm:$0xff] %vm3078, %v4739
        %4774 = vst.msk [vmem:[#allocation2 + $0x30] sm:$0xff] %vm3078, %v4741
        %4775 = vst.msk [vmem:[#allocation2 + $0x48] sm:$0xff] %vm3078, %v4743
        %4776 = vst.msk [vmem:[#allocation2] sm:$0xff] %vm3221, %v4737
        %4777 = vst.msk [vmem:[#allocation2 + $0x18] sm:$0xff] %vm3221, %v4739
        %4778 = vst.msk [vmem:[#allocation2 + $0x30] sm:$0xff] %vm3221, %v4741
        %4779 = vst.msk [vmem:[#allocation2 + $0x48] sm:$0xff] %vm3221, %v4743
        %4780 = vst.msk [vmem:[#allocation2] sm:$0xff] %vm3339, %v4737
        %4781 = vst.msk [vmem:[#allocation2 + $0x18] sm:$0xff] %vm3339, %v4739
        %4782 = vst.msk [vmem:[#allocation2 + $0x30] sm:$0xff] %vm3339, %v4741
        %4783 = vst.msk [vmem:[#allocation2 + $0x48] sm:$0xff] %vm3339, %v4743
        %4784 = vst.msk [vmem:[#allocation2] sm:$0xff] %vm3342, -1e+30
        %4785 = vst.msk [vmem:[#allocation2 + $0x18] sm:$0xff] %vm3342, -1e+30
        %4786 = vst.msk [vmem:[#allocation2 + $0x30] sm:$0xff] %vm3342, -1e+30
        %4787 = vst.msk [vmem:[#allocation2 + $0x48] sm:$0xff] %vm3342, -1e+30
        %4788 = vst.msk [vmem:[#allocation2] sm:$0xff] %vm3345, -1e+30
        %4789 = vst.msk [vmem:[#allocation2 + $0x18] sm:$0xff] %vm3345, -1e+30
        %4790 = vst.msk [vmem:[#allocation2 + $0x30] sm:$0xff] %vm3345, -1e+30
        %4791 = vst.msk [vmem:[#allocation2 + $0x48] sm:$0xff] %vm3345, -1e+30
        %4792 = vst.msk [vmem:[#allocation2] sm:$0xff] %vm3348, -1e+30
        %4793 = vst.msk [vmem:[#allocation2 + $0x18] sm:$0xff] %vm3348, -1e+30
        %4794 = vst.msk [vmem:[#allocation2 + $0x30] sm:$0xff] %vm3348, -1e+30
        %4795 = vst.msk [vmem:[#allocation2 + $0x48] sm:$0xff] %vm3348, -1e+30
        %4796 = vst.msk [vmem:[#allocation2] sm:$0xff] %vm3351, -1e+30
        %4797 = vst.msk [vmem:[#allocation2 + $0x18] sm:$0xff] %vm3351, -1e+30
        %4798 = vst.msk [vmem:[#allocation2 + $0x30] sm:$0xff] %vm3351, -1e+30
        %4799 = vst.msk [vmem:[#allocation2 + $0x48] sm:$0xff] %vm3351, -1e+30
        %4800 = vst.msk [vmem:[#allocation2] sm:$0xff] %vm3354, -1e+30
        %4801 = vst.msk [vmem:[#allocation2 + $0x18] sm:$0xff] %vm3354, -1e+30
        %4802 = vst.msk [vmem:[#allocation2 + $0x30] sm:$0xff] %vm3354, -1e+30
        %4803 = vst.msk [vmem:[#allocation2 + $0x48] sm:$0xff] %vm3354, -1e+30
        %4804 = vst.msk [vmem:[#allocation2] sm:$0xff] %vm3357, -1e+30
        %4805 = vst.msk [vmem:[#allocation2 + $0x18] sm:$0xff] %vm3357, -1e+30
        %4806 = vst.msk [vmem:[#allocation2 + $0x30] sm:$0xff] %vm3357, -1e+30
        %4807 = vst.msk [vmem:[#allocation2 + $0x48] sm:$0xff] %vm3357, -1e+30
        %4808 = vst.msk [vmem:[#allocation2] sm:$0xff] %vm3360, -1e+30
        %4809 = vst.msk [vmem:[#allocation2 + $0x18] sm:$0xff] %vm3360, -1e+30
        %4810 = vst.msk [vmem:[#allocation2 + $0x30] sm:$0xff] %vm3360, -1e+30
        %4811 = vst.msk [vmem:[#allocation2 + $0x48] sm:$0xff] %vm3360, -1e+30
        %4812 = vst.msk [vmem:[#allocation2] sm:$0xff] %vm3363, -1e+30
        %4813 = vst.msk [vmem:[#allocation2 + $0x18] sm:$0xff] %vm3363, -1e+30
        %4814 = vst.msk [vmem:[#allocation2 + $0x30] sm:$0xff] %vm3363, -1e+30
        %4815 = vst.msk [vmem:[#allocation2 + $0x48] sm:$0xff] %vm3363, -1e+30
        %4816 = vst.msk [vmem:[#allocation2] sm:$0xff] %vm835, -1e+30
        %4817 = vst.msk [vmem:[#allocation2 + $0x18] sm:$0xff] %vm835, -1e+30
        %4818 = vst.msk [vmem:[#allocation2 + $0x30] sm:$0xff] %vm835, -1e+30
        %4819 = vst.msk [vmem:[#allocation2 + $0x48] sm:$0xff] %vm835, -1e+30
        %4820 = vst.msk [vmem:[#allocation2] sm:$0xff] %vm3368, -1e+30
        %4821 = vst.msk [vmem:[#allocation2 + $0x18] sm:$0xff] %vm3368, -1e+30
        %4822 = vst.msk [vmem:[#allocation2 + $0x30] sm:$0xff] %vm3368, -1e+30
        %4823 = vst.msk [vmem:[#allocation2 + $0x48] sm:$0xff] %vm3368, -1e+30
        %v4824 = vld [vmem:[#allocation2] sm:$0xff]
        %v4825 = vld [vmem:[#allocation2 + $0x18] sm:$0xff]
        %v4826 = vld [vmem:[#allocation2 + $0x30] sm:$0xff]
        %v4827 = vld [vmem:[#allocation2 + $0x48] sm:$0xff]
        %4832 = vrot.lane.b32.xlu0 %v4824, 127
        %v4833 = vpop.permute.xlu0 %4832
        %4834 = vrot.lane.b32.xlu0 %v4825, 127
        %v4835 = vpop.permute.xlu0 %4834
        %4836 = vrot.lane.b32.xlu0 %v4826, 127
        %v4837 = vpop.permute.xlu0 %4836
        %4838 = vrot.lane.b32.xlu0 %v4827, 127
        %v4839 = vpop.permute.xlu0 %4838
        %v4844 = vmax.f32 %v4824, %v4833
        %v4845 = vmax.f32 %v4825, %v4835
        %v4846 = vmax.f32 %v4826, %v4837
        %v4847 = vmax.f32 %v4827, %v4839
        %4852 = vrot.lane.b32.xlu0 %v4844, 117
        %v4853 = vpop.permute.xlu0 %4852
        %4854 = vrot.lane.b32.xlu0 %v4845, 117
        %v4855 = vpop.permute.xlu0 %4854
        %4856 = vrot.lane.b32.xlu0 %v4846, 117
        %v4857 = vpop.permute.xlu0 %4856
        %4858 = vrot.lane.b32.xlu0 %v4847, 117
        %v4859 = vpop.permute.xlu0 %4858
        %v4864 = vmax.f32 %v4844, %v4853
        %v4865 = vmax.f32 %v4845, %v4855
        %v4866 = vmax.f32 %v4846, %v4857
        %v4867 = vmax.f32 %v4847, %v4859
        %vm4868 = vcmask 72704
        %v4870 = vsel %vm4868, %v4864, 0
        %v4873 = vsel %vm4868, %v4865, 0
        %v4876 = vsel %vm4868, %v4866, 0
        %v4879 = vsel %vm4868, %v4867, 0
        %v4882 = vsel %vm2257, %v2226, 0
        %4884 = vmatprep.subr.mxu0 0.0
        %4885 = vmatpush1.msra.mxu0 0.0
        %4886 = vmatprep.subr.mxu0 0.0
        %4887 = vmatpush1.msra.mxu0 0.0
        %4888 = vmatprep.subr.mxu0 0.0
        %4889 = vmatpush1.msra.mxu0 0.0
        %4890 = vmatprep.subr.mxu0 0.0
        %4891 = vmatpush1.msra.mxu0 0.0
        %4892 = vmatprep.subr.mxu0 0.0
        %4893 = vmatpush1.msra.mxu0 0.0
        %4894 = vmatprep.subr.mxu0 0.0
        %4895 = vmatpush1.msra.mxu0 0.0
        %4896 = vmatprep.subr.mxu0 0.0
        %4897 = vmatpush1.msra.mxu0 0.0
        %4898 = vmatprep.subr.mxu0 0.0
        %4899 = vmatpush1.msra.mxu0 0.0
        %4900 = vmatprep.subr.mxu0 0.0
        %4901 = vmatpush1.msra.mxu0 0.0
        %4902 = vmatprep.subr.mxu0 0.0
        %4903 = vmatpush1.msra.mxu0 0.0
        %4904 = vmatprep.subr.mxu0 0.0
        %4905 = vmatpush1.msra.mxu0 0.0
        %4906 = vmatprep.subr.mxu0 0.0
        %4907 = vmatpush1.msra.mxu0 0.0
        %4908 = vmatprep.subr.mxu0 0.0
        %4909 = vmatpush1.msra.mxu0 0.0
        %4910 = vmatprep.subr.mxu0 0.0
        %4911 = vmatpush1.msra.mxu0 0.0
        %4912 = vmatprep.subr.mxu0 0.0
        %4913 = vmatpush1.msra.mxu0 %v4882
        %4914 = vmatprep.subr.mxu0 0.0
        %4915 = vmatpush1.msra.mxu0 %v2225
        %4916 = vmatprep.subr.mxu0 0.0
        %4917 = vmatpush2.msra.mxu0 0.0
        %4918 = vmatprep.subr.mxu0 0.0
        %4919 = vmatpush2.msra.mxu0 0.0
        %4920 = vmatprep.subr.mxu0 0.0
        %4921 = vmatpush2.msra.mxu0 0.0
        %4922 = vmatprep.subr.mxu0 0.0
        %4923 = vmatpush2.msra.mxu0 0.0
        %4924 = vmatprep.subr.mxu0 0.0
        %4925 = vmatpush2.msra.mxu0 0.0
        %4926 = vmatprep.subr.mxu0 0.0
        %4927 = vmatpush2.msra.mxu0 0.0
        %4928 = vmatprep.subr.mxu0 0.0
        %4929 = vmatpush2.msra.mxu0 0.0
        %4930 = vmatprep.subr.mxu0 0.0
        %4931 = vmatpush2.msra.mxu0 0.0
        %4932 = vmatprep.subr.mxu0 0.0
        %4933 = vmatpush2.msra.mxu0 0.0
        %4934 = vmatprep.subr.mxu0 0.0
        %4935 = vmatpush2.msra.mxu0 0.0
        %4936 = vmatprep.subr.mxu0 0.0
        %4937 = vmatpush2.msra.mxu0 0.0
        %4938 = vmatprep.subr.mxu0 0.0
        %4939 = vmatpush2.msra.mxu0 0.0
        %4940 = vmatprep.subr.mxu0 0.0
        %4941 = vmatpush2.msra.mxu0 0.0
        %4942 = vmatprep.subr.mxu0 0.0
        %4943 = vmatpush2.msra.mxu0 0.0
        %4944 = vmatprep.subr.mxu0 0.0
        %4945 = vmatpush2.msra.mxu0 0.0
        %4946 = vmatprep.subr.mxu0 0.0
        %4947 = vmatpush2.msra.mxu0 0.0
        %4948 = vmatprep.mubr.f32.mxu0 0.0
        %4949 = vmatmul.mubr.f32.gmra.mxu0 %v4870
        %v4950 = vpop.f32.mrf.mxu0
        %v4951 = vadd.f32 0.0, %v4950
        %v4952 = vpop.f32.mrf.mxu0
        %4953 = vmatprep.mubr.f32.mxu0 0.0
        %4954 = vmatmul.mubr.f32.gmra.mxu0 %v4873
        %v4955 = vpop.f32.mrf.mxu0
        %v4956 = vadd.f32 0.0, %v4955
        %v4957 = vpop.f32.mrf.mxu0
        %4958 = vmatprep.mubr.f32.mxu0 0.0
        %4959 = vmatmul.mubr.f32.gmra.mxu0 %v4876
        %v4960 = vpop.f32.mrf.mxu0
        %v4961 = vadd.f32 0.0, %v4960
        %v4962 = vpop.f32.mrf.mxu0
        %4963 = vmatprep.mubr.f32.mxu0 0.0
        %4964 = vmatmul.mubr.f32.gmra.mxu0 %v4879
        %v4965 = vpop.f32.mrf.mxu0
        %v4966 = vadd.f32 0.0, %v4965
        %v4967 = vpop.f32.mrf.mxu0
        %4968 = vdwg.mxu0
        %vm4969 = vcmask 39936
        %4970 = vst.msk [vmem:[#allocation2] sm:$0xff] %vm4969, %v4951
        %4971 = vst.msk [vmem:[#allocation2 + $0x18] sm:$0xff] %vm4969, %v4956
        %4972 = vst.msk [vmem:[#allocation2 + $0x30] sm:$0xff] %vm4969, %v4961
        %4973 = vst.msk [vmem:[#allocation2 + $0x48] sm:$0xff] %vm4969, %v4966
        %v4974 = vld [vmem:[#allocation2] sm:$0xff]
        %v4975 = vld [vmem:[#allocation2 + $0x18] sm:$0xff]
        %v4976 = vld [vmem:[#allocation2 + $0x30] sm:$0xff]
        %v4977 = vld [vmem:[#allocation2 + $0x48] sm:$0xff]
        %4982 = vrot.lane.b32.xlu0 %v4974, 127
        %v4983 = vpop.permute.xlu0 %4982
        %4984 = vrot.lane.b32.xlu0 %v4975, 127
        %v4985 = vpop.permute.xlu0 %4984
        %4986 = vrot.lane.b32.xlu0 %v4976, 127
        %v4987 = vpop.permute.xlu0 %4986
        %4988 = vrot.lane.b32.xlu0 %v4977, 127
        %v4989 = vpop.permute.xlu0 %4988
        %v4994 = vmax.f32 %v4974, %v4983
        %v4995 = vmax.f32 %v4975, %v4985
        %v4996 = vmax.f32 %v4976, %v4987
        %v4997 = vmax.f32 %v4977, %v4989
        %5002 = vrot.lane.b32.xlu0 %v4994, 117
        %v5003 = vpop.permute.xlu0 %5002
        %5004 = vrot.lane.b32.xlu0 %v4995, 117
        %v5005 = vpop.permute.xlu0 %5004
        %5006 = vrot.lane.b32.xlu0 %v4996, 117
        %v5007 = vpop.permute.xlu0 %5006
        %5008 = vrot.lane.b32.xlu0 %v4997, 117
        %v5009 = vpop.permute.xlu0 %5008
        %v5014 = vmax.f32 %v4994, %v5003
        %v5015 = vmax.f32 %v4995, %v5005
        %v5016 = vmax.f32 %v4996, %v5007
        %v5017 = vmax.f32 %v4997, %v5009
        %5022 = vrot.lane.b32.xlu0 %v5014, 106
        %v5023 = vpop.permute.xlu0 %5022
        %5024 = vrot.lane.b32.xlu0 %v5015, 106
        %v5025 = vpop.permute.xlu0 %5024
        %5026 = vrot.lane.b32.xlu0 %v5016, 106
        %v5027 = vpop.permute.xlu0 %5026
        %5028 = vrot.lane.b32.xlu0 %v5017, 106
        %v5029 = vpop.permute.xlu0 %5028
        %v5030 = vsel %vm4868, %v5023, 0
        %v5032 = vsel %vm4868, %v5025, 0
        %v5034 = vsel %vm4868, %v5027, 0
        %v5036 = vsel %vm4868, %v5029, 0
        %5038 = vmatprep.subr.mxu0 0.0
        %5039 = vmatpush1.msra.mxu0 0.0
        %5040 = vmatprep.subr.mxu0 0.0
        %5041 = vmatpush1.msra.mxu0 0.0
        %5042 = vmatprep.subr.mxu0 0.0
        %5043 = vmatpush1.msra.mxu0 0.0
        %5044 = vmatprep.subr.mxu0 0.0
        %5045 = vmatpush1.msra.mxu0 0.0
        %5046 = vmatprep.subr.mxu0 0.0
        %5047 = vmatpush1.msra.mxu0 0.0
        %5048 = vmatprep.subr.mxu0 0.0
        %5049 = vmatpush1.msra.mxu0 0.0
        %5050 = vmatprep.subr.mxu0 0.0
        %5051 = vmatpush1.msra.mxu0 0.0
        %5052 = vmatprep.subr.mxu0 0.0
        %5053 = vmatpush1.msra.mxu0 0.0
        %5054 = vmatprep.subr.mxu0 0.0
        %5055 = vmatpush1.msra.mxu0 0.0
        %5056 = vmatprep.subr.mxu0 0.0
        %5057 = vmatpush1.msra.mxu0 0.0
        %5058 = vmatprep.subr.mxu0 0.0
        %5059 = vmatpush1.msra.mxu0 0.0
        %5060 = vmatprep.subr.mxu0 0.0
        %5061 = vmatpush1.msra.mxu0 0.0
        %5062 = vmatprep.subr.mxu0 0.0
        %5063 = vmatpush1.msra.mxu0 0.0
        %5064 = vmatprep.subr.mxu0 0.0
        %5065 = vmatpush1.msra.mxu0 0.0
        %5066 = vmatprep.subr.mxu0 0.0
        %5067 = vmatpush1.msra.mxu0 %v4882
        %5068 = vmatprep.subr.mxu0 0.0
        %5069 = vmatpush1.msra.mxu0 %v2225
        %5070 = vmatprep.subr.mxu0 0.0
        %5071 = vmatpush2.msra.mxu0 0.0
        %5072 = vmatprep.subr.mxu0 0.0
        %5073 = vmatpush2.msra.mxu0 0.0
        %5074 = vmatprep.subr.mxu0 0.0
        %5075 = vmatpush2.msra.mxu0 0.0
        %5076 = vmatprep.subr.mxu0 0.0
        %5077 = vmatpush2.msra.mxu0 0.0
        %5078 = vmatprep.subr.mxu0 0.0
        %5079 = vmatpush2.msra.mxu0 0.0
        %5080 = vmatprep.subr.mxu0 0.0
        %5081 = vmatpush2.msra.mxu0 0.0
        %5082 = vmatprep.subr.mxu0 0.0
        %5083 = vmatpush2.msra.mxu0 0.0
        %5084 = vmatprep.subr.mxu0 0.0
        %5085 = vmatpush2.msra.mxu0 0.0
        %5086 = vmatprep.subr.mxu0 0.0
        %5087 = vmatpush2.msra.mxu0 0.0
        %5088 = vmatprep.subr.mxu0 0.0
        %5089 = vmatpush2.msra.mxu0 0.0
        %5090 = vmatprep.subr.mxu0 0.0
        %5091 = vmatpush2.msra.mxu0 0.0
        %5092 = vmatprep.subr.mxu0 0.0
        %5093 = vmatpush2.msra.mxu0 0.0
        %5094 = vmatprep.subr.mxu0 0.0
        %5095 = vmatpush2.msra.mxu0 0.0
        %5096 = vmatprep.subr.mxu0 0.0
        %5097 = vmatpush2.msra.mxu0 0.0
        %5098 = vmatprep.subr.mxu0 0.0
        %5099 = vmatpush2.msra.mxu0 0.0
        %5100 = vmatprep.subr.mxu0 0.0
        %5101 = vmatpush2.msra.mxu0 0.0
        %5102 = vmatprep.mubr.f32.mxu0 0.0
        %5103 = vmatmul.mubr.f32.gmra.mxu0 %v5030
        %v5104 = vpop.f32.mrf.mxu0
        %v5105 = vadd.f32 0.0, %v5104
        %v5106 = vpop.f32.mrf.mxu0
        %5107 = vmatprep.mubr.f32.mxu0 0.0
        %5108 = vmatmul.mubr.f32.gmra.mxu0 %v5032
        %v5109 = vpop.f32.mrf.mxu0
        %v5110 = vadd.f32 0.0, %v5109
        %v5111 = vpop.f32.mrf.mxu0
        %5112 = vmatprep.mubr.f32.mxu0 0.0
        %5113 = vmatmul.mubr.f32.gmra.mxu0 %v5034
        %v5114 = vpop.f32.mrf.mxu0
        %v5115 = vadd.f32 0.0, %v5114
        %v5116 = vpop.f32.mrf.mxu0
        %5117 = vmatprep.mubr.f32.mxu0 0.0
        %5118 = vmatmul.mubr.f32.gmra.mxu0 %v5036
        %v5119 = vpop.f32.mrf.mxu0
        %v5120 = vadd.f32 0.0, %v5119
        %v5121 = vpop.f32.mrf.mxu0
        %5122 = vdwg.mxu0
        %5127 = vrot.lane.b32.xlu0 %v5105, 5
        %v5128 = vpop.permute.xlu0 %5127
        %5129 = vrot.lane.b32.xlu0 %v5110, 5
        %v5130 = vpop.permute.xlu0 %5129
        %5131 = vrot.lane.b32.xlu0 %v5115, 5
        %v5132 = vpop.permute.xlu0 %5131
        %5133 = vrot.lane.b32.xlu0 %v5120, 5
        %v5134 = vpop.permute.xlu0 %5133
        %vm5139 = vcmask 80936
        %5140 = vst.msk [vmem:[#allocation2] sm:$0xff] %vm5139, %v5128
        %5141 = vst.msk [vmem:[#allocation2 + $0x18] sm:$0xff] %vm5139, %v5130
        %5142 = vst.msk [vmem:[#allocation2 + $0x30] sm:$0xff] %vm5139, %v5132
        %5143 = vst.msk [vmem:[#allocation2 + $0x48] sm:$0xff] %vm5139, %v5134
        %v5144 = vld [vmem:[#allocation2] sm:$0xff]
        %v5145 = vld [vmem:[#allocation2 + $0x18] sm:$0xff]
        %v5146 = vld [vmem:[#allocation2 + $0x30] sm:$0xff]
        %v5147 = vld [vmem:[#allocation2 + $0x48] sm:$0xff]
        %5152 = vrot.lane.b32.xlu0 %v5144, 127
        %v5153 = vpop.permute.xlu0 %5152
        %5154 = vrot.lane.b32.xlu0 %v5145, 127
        %v5155 = vpop.permute.xlu0 %5154
        %5156 = vrot.lane.b32.xlu0 %v5146, 127
        %v5157 = vpop.permute.xlu0 %5156
        %5158 = vrot.lane.b32.xlu0 %v5147, 127
        %v5159 = vpop.permute.xlu0 %5158
        %v5164 = vmax.f32 %v5144, %v5153
        %v5165 = vmax.f32 %v5145, %v5155
        %v5166 = vmax.f32 %v5146, %v5157
        %v5167 = vmax.f32 %v5147, %v5159
        %5172 = vrot.lane.b32.xlu0 %v5164, 117
        %v5173 = vpop.permute.xlu0 %5172
        %5174 = vrot.lane.b32.xlu0 %v5165, 117
        %v5175 = vpop.permute.xlu0 %5174
        %5176 = vrot.lane.b32.xlu0 %v5166, 117
        %v5177 = vpop.permute.xlu0 %5176
        %5178 = vrot.lane.b32.xlu0 %v5167, 117
        %v5179 = vpop.permute.xlu0 %5178
        %v5184 = vmax.f32 %v5164, %v5173
        %v5185 = vmax.f32 %v5165, %v5175
        %v5186 = vmax.f32 %v5166, %v5177
        %v5187 = vmax.f32 %v5167, %v5179
        %5192 = vrot.lane.b32.xlu0 %v5184, 84
        %v5193 = vpop.permute.xlu0 %5192
        %5194 = vrot.lane.b32.xlu0 %v5185, 84
        %v5195 = vpop.permute.xlu0 %5194
        %5196 = vrot.lane.b32.xlu0 %v5186, 84
        %v5197 = vpop.permute.xlu0 %5196
        %5198 = vrot.lane.b32.xlu0 %v5187, 84
        %v5199 = vpop.permute.xlu0 %5198
        %v5200 = vsel %vm4868, %v5193, 0
        %v5202 = vsel %vm4868, %v5195, 0
        %v5204 = vsel %vm4868, %v5197, 0
        %v5206 = vsel %vm4868, %v5199, 0
        %5208 = vmatprep.subr.mxu0 0.0
        %5209 = vmatpush1.msra.mxu0 0.0
        %5210 = vmatprep.subr.mxu0 0.0
        %5211 = vmatpush1.msra.mxu0 0.0
        %5212 = vmatprep.subr.mxu0 0.0
        %5213 = vmatpush1.msra.mxu0 0.0
        %5214 = vmatprep.subr.mxu0 0.0
        %5215 = vmatpush1.msra.mxu0 0.0
        %5216 = vmatprep.subr.mxu0 0.0
        %5217 = vmatpush1.msra.mxu0 0.0
        %5218 = vmatprep.subr.mxu0 0.0
        %5219 = vmatpush1.msra.mxu0 0.0
        %5220 = vmatprep.subr.mxu0 0.0
        %5221 = vmatpush1.msra.mxu0 0.0
        %5222 = vmatprep.subr.mxu0 0.0
        %5223 = vmatpush1.msra.mxu0 0.0
        %5224 = vmatprep.subr.mxu0 0.0
        %5225 = vmatpush1.msra.mxu0 0.0
        %5226 = vmatprep.subr.mxu0 0.0
        %5227 = vmatpush1.msra.mxu0 0.0
        %5228 = vmatprep.subr.mxu0 0.0
        %5229 = vmatpush1.msra.mxu0 0.0
        %5230 = vmatprep.subr.mxu0 0.0
        %5231 = vmatpush1.msra.mxu0 0.0
        %5232 = vmatprep.subr.mxu0 0.0
        %5233 = vmatpush1.msra.mxu0 0.0
        %5234 = vmatprep.subr.mxu0 0.0
        %5235 = vmatpush1.msra.mxu0 0.0
        %5236 = vmatprep.subr.mxu0 0.0
        %5237 = vmatpush1.msra.mxu0 %v4882
        %5238 = vmatprep.subr.mxu0 0.0
        %5239 = vmatpush1.msra.mxu0 %v2225
        %5240 = vmatprep.subr.mxu0 0.0
        %5241 = vmatpush2.msra.mxu0 0.0
        %5242 = vmatprep.subr.mxu0 0.0
        %5243 = vmatpush2.msra.mxu0 0.0
        %5244 = vmatprep.subr.mxu0 0.0
        %5245 = vmatpush2.msra.mxu0 0.0
        %5246 = vmatprep.subr.mxu0 0.0
        %5247 = vmatpush2.msra.mxu0 0.0
        %5248 = vmatprep.subr.mxu0 0.0
        %5249 = vmatpush2.msra.mxu0 0.0
        %5250 = vmatprep.subr.mxu0 0.0
        %5251 = vmatpush2.msra.mxu0 0.0
        %5252 = vmatprep.subr.mxu0 0.0
        %5253 = vmatpush2.msra.mxu0 0.0
        %5254 = vmatprep.subr.mxu0 0.0
        %5255 = vmatpush2.msra.mxu0 0.0
        %5256 = vmatprep.subr.mxu0 0.0
        %5257 = vmatpush2.msra.mxu0 0.0
        %5258 = vmatprep.subr.mxu0 0.0
        %5259 = vmatpush2.msra.mxu0 0.0
        %5260 = vmatprep.subr.mxu0 0.0
        %5261 = vmatpush2.msra.mxu0 0.0
        %5262 = vmatprep.subr.mxu0 0.0
        %5263 = vmatpush2.msra.mxu0 0.0
        %5264 = vmatprep.subr.mxu0 0.0
        %5265 = vmatpush2.msra.mxu0 0.0
        %5266 = vmatprep.subr.mxu0 0.0
        %5267 = vmatpush2.msra.mxu0 0.0
        %5268 = vmatprep.subr.mxu0 0.0
        %5269 = vmatpush2.msra.mxu0 0.0
        %5270 = vmatprep.subr.mxu0 0.0
        %5271 = vmatpush2.msra.mxu0 0.0
        %5272 = vmatprep.mubr.f32.mxu0 0.0
        %5273 = vmatmul.mubr.f32.gmra.mxu0 %v5200
        %v5274 = vpop.f32.mrf.mxu0
        %v5275 = vadd.f32 0.0, %v5274
        %v5276 = vpop.f32.mrf.mxu0
        %5277 = vmatprep.mubr.f32.mxu0 0.0
        %5278 = vmatmul.mubr.f32.gmra.mxu0 %v5202
        %v5279 = vpop.f32.mrf.mxu0
        %v5280 = vadd.f32 0.0, %v5279
        %v5281 = vpop.f32.mrf.mxu0
        %5282 = vmatprep.mubr.f32.mxu0 0.0
        %5283 = vmatmul.mubr.f32.gmra.mxu0 %v5204
        %v5284 = vpop.f32.mrf.mxu0
        %v5285 = vadd.f32 0.0, %v5284
        %v5286 = vpop.f32.mrf.mxu0
        %5287 = vmatprep.mubr.f32.mxu0 0.0
        %5288 = vmatmul.mubr.f32.gmra.mxu0 %v5206
        %v5289 = vpop.f32.mrf.mxu0
        %v5290 = vadd.f32 0.0, %v5289
        %v5291 = vpop.f32.mrf.mxu0
        %5292 = vdwg.mxu0
        %5297 = vrot.lane.b32.xlu0 %v5275, 10
        %v5298 = vpop.permute.xlu0 %5297
        %5299 = vrot.lane.b32.xlu0 %v5280, 10
        %v5300 = vpop.permute.xlu0 %5299
        %5301 = vrot.lane.b32.xlu0 %v5285, 10
        %v5302 = vpop.permute.xlu0 %5301
        %5303 = vrot.lane.b32.xlu0 %v5290, 10
        %v5304 = vpop.permute.xlu0 %5303
        %vm5309 = vcmask 121936
        %5310 = vst.msk [vmem:[#allocation2] sm:$0xff] %vm5309, %v5298
        %5311 = vst.msk [vmem:[#allocation2 + $0x18] sm:$0xff] %vm5309, %v5300
        %5312 = vst.msk [vmem:[#allocation2 + $0x30] sm:$0xff] %vm5309, %v5302
        %5313 = vst.msk [vmem:[#allocation2 + $0x48] sm:$0xff] %vm5309, %v5304
        %v5314 = vld [vmem:[#allocation2] sm:$0xff]
        %v5315 = vld [vmem:[#allocation2 + $0x18] sm:$0xff]
        %v5316 = vld [vmem:[#allocation2 + $0x30] sm:$0xff]
        %v5317 = vld [vmem:[#allocation2 + $0x48] sm:$0xff]
        %5322 = vrot.lane.b32.xlu0 %v5314, 127
        %v5323 = vpop.permute.xlu0 %5322
        %5324 = vrot.lane.b32.xlu0 %v5315, 127
        %v5325 = vpop.permute.xlu0 %5324
        %5326 = vrot.lane.b32.xlu0 %v5316, 127
        %v5327 = vpop.permute.xlu0 %5326
        %5328 = vrot.lane.b32.xlu0 %v5317, 127
        %v5329 = vpop.permute.xlu0 %5328
        %v5334 = vmax.f32 %v5314, %v5323
        %v5335 = vmax.f32 %v5315, %v5325
        %v5336 = vmax.f32 %v5316, %v5327
        %v5337 = vmax.f32 %v5317, %v5329
        %5342 = vrot.lane.b32.xlu0 %v5334, 117
        %v5343 = vpop.permute.xlu0 %5342
        %5344 = vrot.lane.b32.xlu0 %v5335, 117
        %v5345 = vpop.permute.xlu0 %5344
        %5346 = vrot.lane.b32.xlu0 %v5336, 117
        %v5347 = vpop.permute.xlu0 %5346
        %5348 = vrot.lane.b32.xlu0 %v5337, 117
        %v5349 = vpop.permute.xlu0 %5348
        %v5354 = vmax.f32 %v5334, %v5343
        %v5355 = vmax.f32 %v5335, %v5345
        %v5356 = vmax.f32 %v5336, %v5347
        %v5357 = vmax.f32 %v5337, %v5349
        %5362 = vrot.lane.b32.xlu0 %v5354, 62
        %v5363 = vpop.permute.xlu0 %5362
        %5364 = vrot.lane.b32.xlu0 %v5355, 62
        %v5365 = vpop.permute.xlu0 %5364
        %5366 = vrot.lane.b32.xlu0 %v5356, 62
        %v5367 = vpop.permute.xlu0 %5366
        %5368 = vrot.lane.b32.xlu0 %v5357, 62
        %v5369 = vpop.permute.xlu0 %5368
        %v5370 = vsel %vm4868, %v5363, 0
        %v5372 = vsel %vm4868, %v5365, 0
        %v5374 = vsel %vm4868, %v5367, 0
        %v5376 = vsel %vm4868, %v5369, 0
        %5378 = vmatprep.subr.mxu0 0.0
        %5379 = vmatpush1.msra.mxu0 0.0
        %5380 = vmatprep.subr.mxu0 0.0
        %5381 = vmatpush1.msra.mxu0 0.0
        %5382 = vmatprep.subr.mxu0 0.0
        %5383 = vmatpush1.msra.mxu0 0.0
        %5384 = vmatprep.subr.mxu0 0.0
        %5385 = vmatpush1.msra.mxu0 0.0
        %5386 = vmatprep.subr.mxu0 0.0
        %5387 = vmatpush1.msra.mxu0 0.0
        %5388 = vmatprep.subr.mxu0 0.0
        %5389 = vmatpush1.msra.mxu0 0.0
        %5390 = vmatprep.subr.mxu0 0.0
        %5391 = vmatpush1.msra.mxu0 0.0
        %5392 = vmatprep.subr.mxu0 0.0
        %5393 = vmatpush1.msra.mxu0 0.0
        %5394 = vmatprep.subr.mxu0 0.0
        %5395 = vmatpush1.msra.mxu0 0.0
        %5396 = vmatprep.subr.mxu0 0.0
        %5397 = vmatpush1.msra.mxu0 0.0
        %5398 = vmatprep.subr.mxu0 0.0
        %5399 = vmatpush1.msra.mxu0 0.0
        %5400 = vmatprep.subr.mxu0 0.0
        %5401 = vmatpush1.msra.mxu0 0.0
        %5402 = vmatprep.subr.mxu0 0.0
        %5403 = vmatpush1.msra.mxu0 0.0
        %5404 = vmatprep.subr.mxu0 0.0
        %5405 = vmatpush1.msra.mxu0 0.0
        %5406 = vmatprep.subr.mxu0 0.0
        %5407 = vmatpush1.msra.mxu0 %v4882
        %5408 = vmatprep.subr.mxu0 0.0
        %5409 = vmatpush1.msra.mxu0 %v2225
        %5410 = vmatprep.subr.mxu0 0.0
        %5411 = vmatpush2.msra.mxu0 0.0
        %5412 = vmatprep.subr.mxu0 0.0
        %5413 = vmatpush2.msra.mxu0 0.0
        %5414 = vmatprep.subr.mxu0 0.0
        %5415 = vmatpush2.msra.mxu0 0.0
        %5416 = vmatprep.subr.mxu0 0.0
        %5417 = vmatpush2.msra.mxu0 0.0
        %5418 = vmatprep.subr.mxu0 0.0
        %5419 = vmatpush2.msra.mxu0 0.0
        %5420 = vmatprep.subr.mxu0 0.0
        %5421 = vmatpush2.msra.mxu0 0.0
        %5422 = vmatprep.subr.mxu0 0.0
        %5423 = vmatpush2.msra.mxu0 0.0
        %5424 = vmatprep.subr.mxu0 0.0
        %5425 = vmatpush2.msra.mxu0 0.0
        %5426 = vmatprep.subr.mxu0 0.0
        %5427 = vmatpush2.msra.mxu0 0.0
        %5428 = vmatprep.subr.mxu0 0.0
        %5429 = vmatpush2.msra.mxu0 0.0
        %5430 = vmatprep.subr.mxu0 0.0
        %5431 = vmatpush2.msra.mxu0 0.0
        %5432 = vmatprep.subr.mxu0 0.0
        %5433 = vmatpush2.msra.mxu0 0.0
        %5434 = vmatprep.subr.mxu0 0.0
        %5435 = vmatpush2.msra.mxu0 0.0
        %5436 = vmatprep.subr.mxu0 0.0
        %5437 = vmatpush2.msra.mxu0 0.0
        %5438 = vmatprep.subr.mxu0 0.0
        %5439 = vmatpush2.msra.mxu0 0.0
        %5440 = vmatprep.subr.mxu0 0.0
        %5441 = vmatpush2.msra.mxu0 0.0
        %5442 = vmatprep.mubr.f32.mxu0 0.0
        %5443 = vmatmul.mubr.f32.gmra.mxu0 %v5370
        %v5444 = vpop.f32.mrf.mxu0
        %v5445 = vadd.f32 0.0, %v5444
        %v5446 = vpop.f32.mrf.mxu0
        %5447 = vmatprep.mubr.f32.mxu0 0.0
        %5448 = vmatmul.mubr.f32.gmra.mxu0 %v5372
        %v5449 = vpop.f32.mrf.mxu0
        %v5450 = vadd.f32 0.0, %v5449
        %v5451 = vpop.f32.mrf.mxu0
        %5452 = vmatprep.mubr.f32.mxu0 0.0
        %5453 = vmatmul.mubr.f32.gmra.mxu0 %v5374
        %v5454 = vpop.f32.mrf.mxu0
        %v5455 = vadd.f32 0.0, %v5454
        %v5456 = vpop.f32.mrf.mxu0
        %5457 = vmatprep.mubr.f32.mxu0 0.0
        %5458 = vmatmul.mubr.f32.gmra.mxu0 %v5376
        %v5459 = vpop.f32.mrf.mxu0
        %v5460 = vadd.f32 0.0, %v5459
        %v5461 = vpop.f32.mrf.mxu0
        %5462 = vdwg.mxu0
        %5467 = vrot.lane.b32.xlu0 %v5445, 15
        %v5468 = vpop.permute.xlu0 %5467
        %5469 = vrot.lane.b32.xlu0 %v5450, 15
        %v5470 = vpop.permute.xlu0 %5469
        %5471 = vrot.lane.b32.xlu0 %v5455, 15
        %v5472 = vpop.permute.xlu0 %5471
        %5473 = vrot.lane.b32.xlu0 %v5460, 15
        %v5474 = vpop.permute.xlu0 %5473
        %vm5479 = vcmask 162936
        %5480 = vst.msk [vmem:[#allocation2] sm:$0xff] %vm5479, %v5468
        %5481 = vst.msk [vmem:[#allocation2 + $0x18] sm:$0xff] %vm5479, %v5470
        %5482 = vst.msk [vmem:[#allocation2 + $0x30] sm:$0xff] %vm5479, %v5472
        %5483 = vst.msk [vmem:[#allocation2 + $0x48] sm:$0xff] %vm5479, %v5474
        %v5484 = vld [vmem:[#allocation2] sm:$0xff]
        %v5485 = vld [vmem:[#allocation2 + $0x18] sm:$0xff]
        %v5486 = vld [vmem:[#allocation2 + $0x30] sm:$0xff]
        %v5487 = vld [vmem:[#allocation2 + $0x48] sm:$0xff]
        %5492 = vrot.lane.b32.xlu0 %v5484, 127
        %v5493 = vpop.permute.xlu0 %5492
        %5494 = vrot.lane.b32.xlu0 %v5485, 127
        %v5495 = vpop.permute.xlu0 %5494
        %5496 = vrot.lane.b32.xlu0 %v5486, 127
        %v5497 = vpop.permute.xlu0 %5496
        %5498 = vrot.lane.b32.xlu0 %v5487, 127
        %v5499 = vpop.permute.xlu0 %5498
        %v5504 = vmax.f32 %v5484, %v5493
        %v5505 = vmax.f32 %v5485, %v5495
        %v5506 = vmax.f32 %v5486, %v5497
        %v5507 = vmax.f32 %v5487, %v5499
        %5512 = vrot.lane.b32.xlu0 %v5504, 117
        %v5513 = vpop.permute.xlu0 %5512
        %5514 = vrot.lane.b32.xlu0 %v5505, 117
        %v5515 = vpop.permute.xlu0 %5514
        %5516 = vrot.lane.b32.xlu0 %v5506, 117
        %v5517 = vpop.permute.xlu0 %5516
        %5518 = vrot.lane.b32.xlu0 %v5507, 117
        %v5519 = vpop.permute.xlu0 %5518
        %v5524 = vmax.f32 %v5504, %v5513
        %v5525 = vmax.f32 %v5505, %v5515
        %v5526 = vmax.f32 %v5506, %v5517
        %v5527 = vmax.f32 %v5507, %v5519
        %5532 = vrot.lane.b32.xlu0 %v5524, 40
        %v5533 = vpop.permute.xlu0 %5532
        %5534 = vrot.lane.b32.xlu0 %v5525, 40
        %v5535 = vpop.permute.xlu0 %5534
        %5536 = vrot.lane.b32.xlu0 %v5526, 40
        %v5537 = vpop.permute.xlu0 %5536
        %5538 = vrot.lane.b32.xlu0 %v5527, 40
        %v5539 = vpop.permute.xlu0 %5538
        %v5540 = vsel %vm4868, %v5533, 0
        %v5542 = vsel %vm4868, %v5535, 0
        %v5544 = vsel %vm4868, %v5537, 0
        %v5546 = vsel %vm4868, %v5539, 0
        %5548 = vmatprep.subr.mxu0 0.0
        %5549 = vmatpush1.msra.mxu0 0.0
        %5550 = vmatprep.subr.mxu0 0.0
        %5551 = vmatpush1.msra.mxu0 0.0
        %5552 = vmatprep.subr.mxu0 0.0
        %5553 = vmatpush1.msra.mxu0 0.0
        %5554 = vmatprep.subr.mxu0 0.0
        %5555 = vmatpush1.msra.mxu0 0.0
        %5556 = vmatprep.subr.mxu0 0.0
        %5557 = vmatpush1.msra.mxu0 0.0
        %5558 = vmatprep.subr.mxu0 0.0
        %5559 = vmatpush1.msra.mxu0 0.0
        %5560 = vmatprep.subr.mxu0 0.0
        %5561 = vmatpush1.msra.mxu0 0.0
        %5562 = vmatprep.subr.mxu0 0.0
        %5563 = vmatpush1.msra.mxu0 0.0
        %5564 = vmatprep.subr.mxu0 0.0
        %5565 = vmatpush1.msra.mxu0 0.0
        %5566 = vmatprep.subr.mxu0 0.0
        %5567 = vmatpush1.msra.mxu0 0.0
        %5568 = vmatprep.subr.mxu0 0.0
        %5569 = vmatpush1.msra.mxu0 0.0
        %5570 = vmatprep.subr.mxu0 0.0
        %5571 = vmatpush1.msra.mxu0 0.0
        %5572 = vmatprep.subr.mxu0 0.0
        %5573 = vmatpush1.msra.mxu0 0.0
        %5574 = vmatprep.subr.mxu0 0.0
        %5575 = vmatpush1.msra.mxu0 0.0
        %5576 = vmatprep.subr.mxu0 0.0
        %5577 = vmatpush1.msra.mxu0 %v4882
        %5578 = vmatprep.subr.mxu0 0.0
        %5579 = vmatpush1.msra.mxu0 %v2225
        %5580 = vmatprep.subr.mxu0 0.0
        %5581 = vmatpush2.msra.mxu0 0.0
        %5582 = vmatprep.subr.mxu0 0.0
        %5583 = vmatpush2.msra.mxu0 0.0
        %5584 = vmatprep.subr.mxu0 0.0
        %5585 = vmatpush2.msra.mxu0 0.0
        %5586 = vmatprep.subr.mxu0 0.0
        %5587 = vmatpush2.msra.mxu0 0.0
        %5588 = vmatprep.subr.mxu0 0.0
        %5589 = vmatpush2.msra.mxu0 0.0
        %5590 = vmatprep.subr.mxu0 0.0
        %5591 = vmatpush2.msra.mxu0 0.0
        %5592 = vmatprep.subr.mxu0 0.0
        %5593 = vmatpush2.msra.mxu0 0.0
        %5594 = vmatprep.subr.mxu0 0.0
        %5595 = vmatpush2.msra.mxu0 0.0
        %5596 = vmatprep.subr.mxu0 0.0
        %5597 = vmatpush2.msra.mxu0 0.0
        %5598 = vmatprep.subr.mxu0 0.0
        %5599 = vmatpush2.msra.mxu0 0.0
        %5600 = vmatprep.subr.mxu0 0.0
        %5601 = vmatpush2.msra.mxu0 0.0
        %5602 = vmatprep.subr.mxu0 0.0
        %5603 = vmatpush2.msra.mxu0 0.0
        %5604 = vmatprep.subr.mxu0 0.0
        %5605 = vmatpush2.msra.mxu0 0.0
        %5606 = vmatprep.subr.mxu0 0.0
        %5607 = vmatpush2.msra.mxu0 0.0
        %5608 = vmatprep.subr.mxu0 0.0
        %5609 = vmatpush2.msra.mxu0 0.0
        %5610 = vmatprep.subr.mxu0 0.0
        %5611 = vmatpush2.msra.mxu0 0.0
        %5612 = vmatprep.mubr.f32.mxu0 0.0
        %5613 = vmatmul.mubr.f32.gmra.mxu0 %v5540
        %v5614 = vpop.f32.mrf.mxu0
        %v5615 = vadd.f32 0.0, %v5614
        %v5616 = vpop.f32.mrf.mxu0
        %5617 = vmatprep.mubr.f32.mxu0 0.0
        %5618 = vmatmul.mubr.f32.gmra.mxu0 %v5542
        %v5619 = vpop.f32.mrf.mxu0
        %v5620 = vadd.f32 0.0, %v5619
        %v5621 = vpop.f32.mrf.mxu0
        %5622 = vmatprep.mubr.f32.mxu0 0.0
        %5623 = vmatmul.mubr.f32.gmra.mxu0 %v5544
        %v5624 = vpop.f32.mrf.mxu0
        %v5625 = vadd.f32 0.0, %v5624
        %v5626 = vpop.f32.mrf.mxu0
        %5627 = vmatprep.mubr.f32.mxu0 0.0
        %5628 = vmatmul.mubr.f32.gmra.mxu0 %v5546
        %v5629 = vpop.f32.mrf.mxu0
        %v5630 = vadd.f32 0.0, %v5629
        %v5631 = vpop.f32.mrf.mxu0
        %5632 = vdwg.mxu0
        %5637 = vrot.lane.b32.xlu0 %v5615, 20
        %v5638 = vpop.permute.xlu0 %5637
        %5639 = vrot.lane.b32.xlu0 %v5620, 20
        %v5640 = vpop.permute.xlu0 %5639
        %5641 = vrot.lane.b32.xlu0 %v5625, 20
        %v5642 = vpop.permute.xlu0 %5641
        %5643 = vrot.lane.b32.xlu0 %v5630, 20
        %v5644 = vpop.permute.xlu0 %5643
        %vm5649 = vcmask 203936
        %5650 = vst.msk [vmem:[#allocation2] sm:$0xff] %vm5649, %v5638
        %5651 = vst.msk [vmem:[#allocation2 + $0x18] sm:$0xff] %vm5649, %v5640
        %5652 = vst.msk [vmem:[#allocation2 + $0x30] sm:$0xff] %vm5649, %v5642
        %5653 = vst.msk [vmem:[#allocation2 + $0x48] sm:$0xff] %vm5649, %v5644
        %v5654 = vld [vmem:[#allocation2] sm:$0xff]
        %v5655 = vld [vmem:[#allocation2 + $0x18] sm:$0xff]
        %v5656 = vld [vmem:[#allocation2 + $0x30] sm:$0xff]
        %v5657 = vld [vmem:[#allocation2 + $0x48] sm:$0xff]
        %5658 = vst.msk [vmem:[#allocation3] sm:$0xff] %vm778, %v5654
        %5659 = vst.msk [vmem:[#allocation3 + $0x18] sm:$0xff] %vm778, %v5655
        %5660 = vst.msk [vmem:[#allocation3 + $0x30] sm:$0xff] %vm778, %v5656
        %5661 = vst.msk [vmem:[#allocation3 + $0x48] sm:$0xff] %vm778, %v5657
        %v5662 = vld [vmem:[#allocation2] sm:$0xff]
        %v5663 = vld [vmem:[#allocation2 + $0x18] sm:$0xff]
        %v5664 = vld [vmem:[#allocation2 + $0x30] sm:$0xff]
        %v5665 = vld [vmem:[#allocation2 + $0x48] sm:$0xff]
        %5670 = vrot.lane.b32.xlu0 %v5662, 127
        %v5671 = vpop.permute.xlu0 %5670
        %5672 = vrot.lane.b32.xlu0 %v5663, 127
        %v5673 = vpop.permute.xlu0 %5672
        %5674 = vrot.lane.b32.xlu0 %v5664, 127
        %v5675 = vpop.permute.xlu0 %5674
        %5676 = vrot.lane.b32.xlu0 %v5665, 127
        %v5677 = vpop.permute.xlu0 %5676
        %5682 = vst.msk [vmem:[#allocation3 + $0x60] sm:$0xff] %vm778, %v5671
        %5683 = vst.msk [vmem:[#allocation3 + $0x78] sm:$0xff] %vm778, %v5673
        %5684 = vst.msk [vmem:[#allocation3 + $0x90] sm:$0xff] %vm778, %v5675
        %5685 = vst.msk [vmem:[#allocation3 + $0xa8] sm:$0xff] %vm778, %v5677
        %v5686 = vld [vmem:[#allocation2] sm:$0xff]
        %v5687 = vld [vmem:[#allocation2 + $0x18] sm:$0xff]
        %v5688 = vld [vmem:[#allocation2 + $0x30] sm:$0xff]
        %v5689 = vld [vmem:[#allocation2 + $0x48] sm:$0xff]
        %5694 = vrot.lane.b32.xlu0 %v5686, 126
        %v5695 = vpop.permute.xlu0 %5694
        %5696 = vrot.lane.b32.xlu0 %v5687, 126
        %v5697 = vpop.permute.xlu0 %5696
        %5698 = vrot.lane.b32.xlu0 %v5688, 126
        %v5699 = vpop.permute.xlu0 %5698
        %5700 = vrot.lane.b32.xlu0 %v5689, 126
        %v5701 = vpop.permute.xlu0 %5700
        %5706 = vst.msk [vmem:[#allocation3 + $0xc0] sm:$0xff] %vm778, %v5695
        %5707 = vst.msk [vmem:[#allocation3 + $0xd8] sm:$0xff] %vm778, %v5697
        %5708 = vst.msk [vmem:[#allocation3 + $0xf0] sm:$0xff] %vm778, %v5699
        %5709 = vst.msk [vmem:[#allocation3 + $0x108] sm:$0xff] %vm778, %v5701
        %v5710 = vld [vmem:[#allocation2] sm:$0xff]
        %v5711 = vld [vmem:[#allocation2 + $0x18] sm:$0xff]
        %v5712 = vld [vmem:[#allocation2 + $0x30] sm:$0xff]
        %v5713 = vld [vmem:[#allocation2 + $0x48] sm:$0xff]
        %5718 = vrot.lane.b32.xlu0 %v5710, 123
        %v5719 = vpop.permute.xlu0 %5718
        %5720 = vrot.lane.b32.xlu0 %v5711, 123
        %v5721 = vpop.permute.xlu0 %5720
        %5722 = vrot.lane.b32.xlu0 %v5712, 123
        %v5723 = vpop.permute.xlu0 %5722
        %5724 = vrot.lane.b32.xlu0 %v5713, 123
        %v5725 = vpop.permute.xlu0 %5724
        %5730 = vst.msk [vmem:[#allocation3 + $0x120] sm:$0xff] %vm778, %v5719
        %5731 = vst.msk [vmem:[#allocation3 + $0x138] sm:$0xff] %vm778, %v5721
        %5732 = vst.msk [vmem:[#allocation3 + $0x150] sm:$0xff] %vm778, %v5723
        %5733 = vst.msk [vmem:[#allocation3 + $0x168] sm:$0xff] %vm778, %v5725
        %v5734 = vld [vmem:[#allocation2] sm:$0xff]
        %v5735 = vld [vmem:[#allocation2 + $0x18] sm:$0xff]
        %v5736 = vld [vmem:[#allocation2 + $0x30] sm:$0xff]
        %v5737 = vld [vmem:[#allocation2 + $0x48] sm:$0xff]
        %5742 = vrot.lane.b32.xlu0 %v5734, 122
        %v5743 = vpop.permute.xlu0 %5742
        %5744 = vrot.lane.b32.xlu0 %v5735, 122
        %v5745 = vpop.permute.xlu0 %5744
        %5746 = vrot.lane.b32.xlu0 %v5736, 122
        %v5747 = vpop.permute.xlu0 %5746
        %5748 = vrot.lane.b32.xlu0 %v5737, 122
        %v5749 = vpop.permute.xlu0 %5748
        %5754 = vst.msk [vmem:[#allocation3 + $0x180] sm:$0xff] %vm778, %v5743
        %5755 = vst.msk [vmem:[#allocation3 + $0x198] sm:$0xff] %vm778, %v5745
        %5756 = vst.msk [vmem:[#allocation3 + $0x1b0] sm:$0xff] %vm778, %v5747
        %5757 = vst.msk [vmem:[#allocation3 + $0x1c8] sm:$0xff] %vm778, %v5749
        %v5758 = vld [vmem:[#allocation2] sm:$0xff]
        %v5759 = vld [vmem:[#allocation2 + $0x18] sm:$0xff]
        %v5760 = vld [vmem:[#allocation2 + $0x30] sm:$0xff]
        %v5761 = vld [vmem:[#allocation2 + $0x48] sm:$0xff]
        %5766 = vrot.lane.b32.xlu0 %v5758, 121
        %v5767 = vpop.permute.xlu0 %5766
        %5768 = vrot.lane.b32.xlu0 %v5759, 121
        %v5769 = vpop.permute.xlu0 %5768
        %5770 = vrot.lane.b32.xlu0 %v5760, 121
        %v5771 = vpop.permute.xlu0 %5770
        %5772 = vrot.lane.b32.xlu0 %v5761, 121
        %v5773 = vpop.permute.xlu0 %5772
        %5778 = vst.msk [vmem:[#allocation3 + $0x1e0] sm:$0xff] %vm778, %v5767
        %5779 = vst.msk [vmem:[#allocation3 + $0x1f8] sm:$0xff] %vm778, %v5769
        %5780 = vst.msk [vmem:[#allocation3 + $0x210] sm:$0xff] %vm778, %v5771
        %5781 = vst.msk [vmem:[#allocation3 + $0x228] sm:$0xff] %vm778, %v5773
        %v5782 = vld [vmem:[#allocation2] sm:$0xff]
        %v5783 = vld [vmem:[#allocation2 + $0x18] sm:$0xff]
        %v5784 = vld [vmem:[#allocation2 + $0x30] sm:$0xff]
        %v5785 = vld [vmem:[#allocation2 + $0x48] sm:$0xff]
        %5790 = vrot.lane.b32.xlu0 %v5782, 118
        %v5791 = vpop.permute.xlu0 %5790
        %5792 = vrot.lane.b32.xlu0 %v5783, 118
        %v5793 = vpop.permute.xlu0 %5792
        %5794 = vrot.lane.b32.xlu0 %v5784, 118
        %v5795 = vpop.permute.xlu0 %5794
        %5796 = vrot.lane.b32.xlu0 %v5785, 118
        %v5797 = vpop.permute.xlu0 %5796
        %5802 = vst.msk [vmem:[#allocation3 + $0x240] sm:$0xff] %vm778, %v5791
        %5803 = vst.msk [vmem:[#allocation3 + $0x258] sm:$0xff] %vm778, %v5793
        %5804 = vst.msk [vmem:[#allocation3 + $0x270] sm:$0xff] %vm778, %v5795
        %5805 = vst.msk [vmem:[#allocation3 + $0x288] sm:$0xff] %vm778, %v5797
        %v5806 = vld [vmem:[#allocation2] sm:$0xff]
        %v5807 = vld [vmem:[#allocation2 + $0x18] sm:$0xff]
        %v5808 = vld [vmem:[#allocation2 + $0x30] sm:$0xff]
        %v5809 = vld [vmem:[#allocation2 + $0x48] sm:$0xff]
        %5814 = vrot.lane.b32.xlu0 %v5806, 117
        %v5815 = vpop.permute.xlu0 %5814
        %5816 = vrot.lane.b32.xlu0 %v5807, 117
        %v5817 = vpop.permute.xlu0 %5816
        %5818 = vrot.lane.b32.xlu0 %v5808, 117
        %v5819 = vpop.permute.xlu0 %5818
        %5820 = vrot.lane.b32.xlu0 %v5809, 117
        %v5821 = vpop.permute.xlu0 %5820
        %5826 = vst.msk [vmem:[#allocation3 + $0x2a0] sm:$0xff] %vm778, %v5815
        %5827 = vst.msk [vmem:[#allocation3 + $0x2b8] sm:$0xff] %vm778, %v5817
        %5828 = vst.msk [vmem:[#allocation3 + $0x2d0] sm:$0xff] %vm778, %v5819
        %5829 = vst.msk [vmem:[#allocation3 + $0x2e8] sm:$0xff] %vm778, %v5821
        %v5830 = vld [vmem:[#allocation2] sm:$0xff]
        %v5831 = vld [vmem:[#allocation2 + $0x18] sm:$0xff]
        %v5832 = vld [vmem:[#allocation2 + $0x30] sm:$0xff]
        %v5833 = vld [vmem:[#allocation2 + $0x48] sm:$0xff]
        %5838 = vrot.lane.b32.xlu0 %v5830, 116
        %v5839 = vpop.permute.xlu0 %5838
        %5840 = vrot.lane.b32.xlu0 %v5831, 116
        %v5841 = vpop.permute.xlu0 %5840
        %5842 = vrot.lane.b32.xlu0 %v5832, 116
        %v5843 = vpop.permute.xlu0 %5842
        %5844 = vrot.lane.b32.xlu0 %v5833, 116
        %v5845 = vpop.permute.xlu0 %5844
        %5850 = vst.msk [vmem:[#allocation3 + $0x300] sm:$0xff] %vm778, %v5839
        %5851 = vst.msk [vmem:[#allocation3 + $0x318] sm:$0xff] %vm778, %v5841
        %5852 = vst.msk [vmem:[#allocation3 + $0x330] sm:$0xff] %vm778, %v5843
        %5853 = vst.msk [vmem:[#allocation3 + $0x348] sm:$0xff] %vm778, %v5845
        %v5854 = vld [vmem:[#allocation3] sm:$0xff]
        %v5855 = vld [vmem:[#allocation3 + $0x18] sm:$0xff]
        %v5856 = vld [vmem:[#allocation3 + $0x30] sm:$0xff]
        %v5857 = vld [vmem:[#allocation3 + $0x48] sm:$0xff]
        %v5858 = vld [vmem:[#allocation3 + $0x60] sm:$0xff]
        %v5859 = vld [vmem:[#allocation3 + $0x78] sm:$0xff]
        %v5860 = vld [vmem:[#allocation3 + $0x90] sm:$0xff]
        %v5861 = vld [vmem:[#allocation3 + $0xa8] sm:$0xff]
        %v5862 = vld [vmem:[#allocation3 + $0xc0] sm:$0xff]
        %v5863 = vld [vmem:[#allocation3 + $0xd8] sm:$0xff]
        %v5864 = vld [vmem:[#allocation3 + $0xf0] sm:$0xff]
        %v5865 = vld [vmem:[#allocation3 + $0x108] sm:$0xff]
        %v5866 = vld [vmem:[#allocation3 + $0x120] sm:$0xff]
        %v5867 = vld [vmem:[#allocation3 + $0x138] sm:$0xff]
        %v5868 = vld [vmem:[#allocation3 + $0x150] sm:$0xff]
        %v5869 = vld [vmem:[#allocation3 + $0x168] sm:$0xff]
        %v5870 = vld [vmem:[#allocation3 + $0x180] sm:$0xff]
        %v5871 = vld [vmem:[#allocation3 + $0x198] sm:$0xff]
        %v5872 = vld [vmem:[#allocation3 + $0x1b0] sm:$0xff]
        %v5873 = vld [vmem:[#allocation3 + $0x1c8] sm:$0xff]
        %v5874 = vld [vmem:[#allocation3 + $0x1e0] sm:$0xff]
        %v5875 = vld [vmem:[#allocation3 + $0x1f8] sm:$0xff]
        %v5876 = vld [vmem:[#allocation3 + $0x210] sm:$0xff]
        %v5877 = vld [vmem:[#allocation3 + $0x228] sm:$0xff]
        %v5878 = vld [vmem:[#allocation3 + $0x240] sm:$0xff]
        %v5879 = vld [vmem:[#allocation3 + $0x258] sm:$0xff]
        %v5880 = vld [vmem:[#allocation3 + $0x270] sm:$0xff]
        %v5881 = vld [vmem:[#allocation3 + $0x288] sm:$0xff]
        %v5882 = vld [vmem:[#allocation3 + $0x2a0] sm:$0xff]
        %v5883 = vld [vmem:[#allocation3 + $0x2b8] sm:$0xff]
        %v5884 = vld [vmem:[#allocation3 + $0x2d0] sm:$0xff]
        %v5885 = vld [vmem:[#allocation3 + $0x2e8] sm:$0xff]
        %v5886 = vld [vmem:[#allocation3 + $0x300] sm:$0xff]
        %v5887 = vld [vmem:[#allocation3 + $0x318] sm:$0xff]
        %v5888 = vld [vmem:[#allocation3 + $0x330] sm:$0xff]
        %v5889 = vld [vmem:[#allocation3 + $0x348] sm:$0xff]
        %v5890 = vld [vmem:[%s1 + $0x1b0] sm:$0xff]
        %v5891 = vld [vmem:[%s1 + $0x1b8] sm:$0xff]
        %v5892 = vld [vmem:[%s1 + $0x1c0] sm:$0xff]
        %v5893 = vld [vmem:[%s1 + $0x1c8] sm:$0xff]
        %v5894 = vld [vmem:[%s1 + $0x1d0] sm:$0xff]
        %v5895 = vld [vmem:[%s1 + $0x1d8] sm:$0xff]
        %v5896 = vld [vmem:[%s1 + $0x1e0] sm:$0xff]
        %v5897 = vld [vmem:[%s1 + $0x1e8] sm:$0xff]
        %v5898 = vld [vmem:[%s1 + $0x1f0] sm:$0xff]
        %v5899 = vld [vmem:[%s1 + $0x1f8] sm:$0xff]
        %v5900 = vld [vmem:[%s1 + $0x200] sm:$0xff]
        %v5901 = vld [vmem:[%s1 + $0x208] sm:$0xff]
        %5903 = vset.pattern.permute.xlu0 32
        %5904 = vperm.xlu0 %5903, %v5892
        %v5905 = vpop.permute.xlu0 %5904
        %5908 = vset.pattern.permute.xlu0 32
        %5909 = vperm.xlu0 %5908, %v5895
        %v5910 = vpop.permute.xlu0 %5909
        %5913 = vset.pattern.permute.xlu0 32
        %5914 = vperm.xlu0 %5913, %v5898
        %v5915 = vpop.permute.xlu0 %5914
        %5918 = vset.pattern.permute.xlu0 32
        %5919 = vperm.xlu0 %5918, %v5901
        %v5920 = vpop.permute.xlu0 %5919
        %v5922 = vsel %vm3991, %v5892, 0
        %v5924 = vsel %vm3991, %v5895, 0
        %v5926 = vsel %vm3991, %v5898, 0
        %v5928 = vsel %vm3991, %v5901, 0
        %5930 = vmatprep.subr.mxu0 0.0
        %5931 = vmatpush1.msra.mxu0 %v5869
        %5932 = vmatprep.subr.mxu0 0.0
        %5933 = vmatpush1.msra.mxu0 %v5868
        %5934 = vmatprep.subr.mxu0 0.0
        %5935 = vmatpush1.msra.mxu0 %v5867
        %5936 = vmatprep.subr.mxu0 0.0
        %5937 = vmatpush1.msra.mxu0 %v5866
        %5938 = vmatprep.subr.mxu0 0.0
        %5939 = vmatpush1.msra.mxu0 %v5865
        %5940 = vmatprep.subr.mxu0 0.0
        %5941 = vmatpush1.msra.mxu0 %v5864
        %5942 = vmatprep.subr.mxu0 0.0
        %5943 = vmatpush1.msra.mxu0 %v5863
        %5944 = vmatprep.subr.mxu0 0.0
        %5945 = vmatpush1.msra.mxu0 %v5862
        %5946 = vmatprep.subr.mxu0 0.0
        %5947 = vmatpush1.msra.mxu0 %v5861
        %5948 = vmatprep.subr.mxu0 0.0
        %5949 = vmatpush1.msra.mxu0 %v5860
        %5950 = vmatprep.subr.mxu0 0.0
        %5951 = vmatpush1.msra.mxu0 %v5859
        %5952 = vmatprep.subr.mxu0 0.0
        %5953 = vmatpush1.msra.mxu0 %v5858
        %5954 = vmatprep.subr.mxu0 0.0
        %5955 = vmatpush1.msra.mxu0 %v5857
        %5956 = vmatprep.subr.mxu0 0.0
        %5957 = vmatpush1.msra.mxu0 %v5856
        %5958 = vmatprep.subr.mxu0 0.0
        %5959 = vmatpush1.msra.mxu0 %v5855
        %5960 = vmatprep.subr.mxu0 0.0
        %5961 = vmatpush1.msra.mxu0 %v5854
        %5962 = vmatprep.subr.mxu0 0.0
        %5963 = vmatpush2.msra.mxu0 %v5885
        %5964 = vmatprep.subr.mxu0 0.0
        %5965 = vmatpush2.msra.mxu0 %v5884
        %5966 = vmatprep.subr.mxu0 0.0
        %5967 = vmatpush2.msra.mxu0 %v5883
        %5968 = vmatprep.subr.mxu0 0.0
        %5969 = vmatpush2.msra.mxu0 %v5882
        %5970 = vmatprep.subr.mxu0 0.0
        %5971 = vmatpush2.msra.mxu0 %v5881
        %5972 = vmatprep.subr.mxu0 0.0
        %5973 = vmatpush2.msra.mxu0 %v5880
        %5974 = vmatprep.subr.mxu0 0.0
        %5975 = vmatpush2.msra.mxu0 %v5879
        %5976 = vmatprep.subr.mxu0 0.0
        %5977 = vmatpush2.msra.mxu0 %v5878
        %5978 = vmatprep.subr.mxu0 0.0
        %5979 = vmatpush2.msra.mxu0 %v5877
        %5980 = vmatprep.subr.mxu0 0.0
        %5981 = vmatpush2.msra.mxu0 %v5876
        %5982 = vmatprep.subr.mxu0 0.0
        %5983 = vmatpush2.msra.mxu0 %v5875
        %5984 = vmatprep.subr.mxu0 0.0
        %5985 = vmatpush2.msra.mxu0 %v5874
        %5986 = vmatprep.subr.mxu0 0.0
        %5987 = vmatpush2.msra.mxu0 %v5873
        %5988 = vmatprep.subr.mxu0 0.0
        %5989 = vmatpush2.msra.mxu0 %v5872
        %5990 = vmatprep.subr.mxu0 0.0
        %5991 = vmatpush2.msra.mxu0 %v5871
        %5992 = vmatprep.subr.mxu0 0.0
        %5993 = vmatpush2.msra.mxu0 %v5870
        %5994 = vmatprep.mubr.f32.mxu0 %v5891
        %5995 = vmatmul.mubr.f32.gmra.mxu0 %v5890
        %v5996 = vpop.f32.mrf.mxu0
        %v5997 = vadd.f32 %v5905, %v5996
        %v5998 = vpop.f32.mrf.mxu0
        %5999 = vmatprep.mubr.f32.mxu0 %v5894
        %6000 = vmatmul.mubr.f32.gmra.mxu0 %v5893
        %v6001 = vpop.f32.mrf.mxu0
        %v6002 = vadd.f32 %v5910, %v6001
        %v6003 = vpop.f32.mrf.mxu0
        %6004 = vmatprep.mubr.f32.mxu0 %v5897
        %6005 = vmatmul.mubr.f32.gmra.mxu0 %v5896
        %v6006 = vpop.f32.mrf.mxu0
        %v6007 = vadd.f32 %v5915, %v6006
        %v6008 = vpop.f32.mrf.mxu0
        %6009 = vmatprep.mubr.f32.mxu0 %v5900
        %6010 = vmatmul.mubr.f32.gmra.mxu0 %v5899
        %v6011 = vpop.f32.mrf.mxu0
        %v6012 = vadd.f32 %v5920, %v6011
        %v6013 = vpop.f32.mrf.mxu0
        %6014 = vdwg.mxu0
        %6015 = vmatprep.subr.mxu0 0.0
        %6016 = vmatpush1.msra.mxu0 0.0
        %6017 = vmatprep.subr.mxu0 0.0
        %6018 = vmatpush1.msra.mxu0 0.0
        %6019 = vmatprep.subr.mxu0 0.0
        %6020 = vmatpush1.msra.mxu0 0.0
        %6021 = vmatprep.subr.mxu0 0.0
        %6022 = vmatpush1.msra.mxu0 0.0
        %6023 = vmatprep.subr.mxu0 0.0
        %6024 = vmatpush1.msra.mxu0 0.0
        %6025 = vmatprep.subr.mxu0 0.0
        %6026 = vmatpush1.msra.mxu0 0.0
        %6027 = vmatprep.subr.mxu0 0.0
        %6028 = vmatpush1.msra.mxu0 0.0
        %6029 = vmatprep.subr.mxu0 0.0
        %6030 = vmatpush1.msra.mxu0 0.0
        %6031 = vmatprep.subr.mxu0 0.0
        %6032 = vmatpush1.msra.mxu0 0.0
        %6033 = vmatprep.subr.mxu0 0.0
        %6034 = vmatpush1.msra.mxu0 0.0
        %6035 = vmatprep.subr.mxu0 0.0
        %6036 = vmatpush1.msra.mxu0 0.0
        %6037 = vmatprep.subr.mxu0 0.0
        %6038 = vmatpush1.msra.mxu0 0.0
        %6039 = vmatprep.subr.mxu0 0.0
        %6040 = vmatpush1.msra.mxu0 %v5889
        %6041 = vmatprep.subr.mxu0 0.0
        %6042 = vmatpush1.msra.mxu0 %v5888
        %6043 = vmatprep.subr.mxu0 0.0
        %6044 = vmatpush1.msra.mxu0 %v5887
        %6045 = vmatprep.subr.mxu0 0.0
        %6046 = vmatpush1.msra.mxu0 %v5886
        %6047 = vmatprep.subr.mxu0 0.0
        %6048 = vmatpush2.msra.mxu0 0.0
        %6049 = vmatprep.subr.mxu0 0.0
        %6050 = vmatpush2.msra.mxu0 0.0
        %6051 = vmatprep.subr.mxu0 0.0
        %6052 = vmatpush2.msra.mxu0 0.0
        %6053 = vmatprep.subr.mxu0 0.0
        %6054 = vmatpush2.msra.mxu0 0.0
        %6055 = vmatprep.subr.mxu0 0.0
        %6056 = vmatpush2.msra.mxu0 0.0
        %6057 = vmatprep.subr.mxu0 0.0
        %6058 = vmatpush2.msra.mxu0 0.0
        %6059 = vmatprep.subr.mxu0 0.0
        %6060 = vmatpush2.msra.mxu0 0.0
        %6061 = vmatprep.subr.mxu0 0.0
        %6062 = vmatpush2.msra.mxu0 0.0
        %6063 = vmatprep.subr.mxu0 0.0
        %6064 = vmatpush2.msra.mxu0 0.0
        %6065 = vmatprep.subr.mxu0 0.0
        %6066 = vmatpush2.msra.mxu0 0.0
        %6067 = vmatprep.subr.mxu0 0.0
        %6068 = vmatpush2.msra.mxu0 0.0
        %6069 = vmatprep.subr.mxu0 0.0
        %6070 = vmatpush2.msra.mxu0 0.0
        %6071 = vmatprep.subr.mxu0 0.0
        %6072 = vmatpush2.msra.mxu0 0.0
        %6073 = vmatprep.subr.mxu0 0.0
        %6074 = vmatpush2.msra.mxu0 0.0
        %6075 = vmatprep.subr.mxu0 0.0
        %6076 = vmatpush2.msra.mxu0 0.0
        %6077 = vmatprep.subr.mxu0 0.0
        %6078 = vmatpush2.msra.mxu0 0.0
        %6079 = vmatprep.mubr.f32.mxu0 0.0
        %6080 = vmatmul.mubr.f32.gmra.mxu0 %v5922
        %v6081 = vpop.f32.mrf.mxu0
        %v6082 = vadd.f32 %v5997, %v6081
        %v6083 = vpop.f32.mrf.mxu0
        %6084 = vmatprep.mubr.f32.mxu0 0.0
        %6085 = vmatmul.mubr.f32.gmra.mxu0 %v5924
        %v6086 = vpop.f32.mrf.mxu0
        %v6087 = vadd.f32 %v6002, %v6086
        %v6088 = vpop.f32.mrf.mxu0
        %6089 = vmatprep.mubr.f32.mxu0 0.0
        %6090 = vmatmul.mubr.f32.gmra.mxu0 %v5926
        %v6091 = vpop.f32.mrf.mxu0
        %v6092 = vadd.f32 %v6007, %v6091
        %v6093 = vpop.f32.mrf.mxu0
        %6094 = vmatprep.mubr.f32.mxu0 0.0
        %6095 = vmatmul.mubr.f32.gmra.mxu0 %v5928
        %v6096 = vpop.f32.mrf.mxu0
        %v6097 = vadd.f32 %v6012, %v6096
        %v6098 = vpop.f32.mrf.mxu0
        %6099 = vdwg.mxu0
        %vm6100 = vcmp.gt.f32.partialorder %v6082, 0.0
        %vm6101 = vcmp.gt.f32.partialorder %v6087, 0.0
        %vm6102 = vcmp.gt.f32.partialorder %v6092, 0.0
        %vm6103 = vcmp.gt.f32.partialorder %v6097, 0.0
        %v6104 = vmul.f32 %v6082, 0.1
        %v6105 = vmul.f32 %v6087, 0.1
        %v6106 = vmul.f32 %v6092, 0.1
        %v6107 = vmul.f32 %v6097, 0.1
        %v6108 = vsel %vm6100, %v6082, %v6104
        %v6109 = vsel %vm6101, %v6087, %v6105
        %v6110 = vsel %vm6102, %v6092, %v6106
        %v6111 = vsel %vm6103, %v6097, %v6107
        %6116 = vrot.lane.b32.xlu0 %v6108, 6
        %v6117 = vpop.permute.xlu0 %6116
        %6118 = vrot.lane.b32.xlu0 %v6109, 6
        %v6119 = vpop.permute.xlu0 %6118
        %6120 = vrot.lane.b32.xlu0 %v6110, 6
        %v6121 = vpop.permute.xlu0 %6120
        %6122 = vrot.lane.b32.xlu0 %v6111, 6
        %v6123 = vpop.permute.xlu0 %6122
        %vm6128 = vcmask 72752
        %6129 = vst.msk [vmem:[#allocation2] sm:$0xff] %vm6128, %v6117
        %6130 = vst.msk [vmem:[#allocation2 + $0x18] sm:$0xff] %vm6128, %v6119
        %6131 = vst.msk [vmem:[#allocation2 + $0x30] sm:$0xff] %vm6128, %v6121
        %6132 = vst.msk [vmem:[#allocation2 + $0x48] sm:$0xff] %vm6128, %v6123
        %vm6133 = vcmask 113752
        %6134 = vst.msk [vmem:[#allocation2] sm:$0xff] %vm6133, %v6117
        %6135 = vst.msk [vmem:[#allocation2 + $0x18] sm:$0xff] %vm6133, %v6119
        %6136 = vst.msk [vmem:[#allocation2 + $0x30] sm:$0xff] %vm6133, %v6121
        %6137 = vst.msk [vmem:[#allocation2 + $0x48] sm:$0xff] %vm6133, %v6123
        %vm6138 = vcmask 154752
        %6139 = vst.msk [vmem:[#allocation2] sm:$0xff] %vm6138, %v6117
        %6140 = vst.msk [vmem:[#allocation2 + $0x18] sm:$0xff] %vm6138, %v6119
        %6141 = vst.msk [vmem:[#allocation2 + $0x30] sm:$0xff] %vm6138, %v6121
        %6142 = vst.msk [vmem:[#allocation2 + $0x48] sm:$0xff] %vm6138, %v6123
        %vm6143 = vcmask 48128
        %6144 = vst.msk [vmem:[#allocation2] sm:$0xff] %vm6143, 0.0
        %6145 = vst.msk [vmem:[#allocation2 + $0x18] sm:$0xff] %vm6143, 0.0
        %6146 = vst.msk [vmem:[#allocation2 + $0x30] sm:$0xff] %vm6143, 0.0
        %6147 = vst.msk [vmem:[#allocation2 + $0x48] sm:$0xff] %vm6143, 0.0
        %vm6148 = vcmask 203928
        %6149 = vst.msk [vmem:[#allocation2] sm:$0xff] %vm6148, 0.0
        %6150 = vst.msk [vmem:[#allocation2 + $0x18] sm:$0xff] %vm6148, 0.0
        %6151 = vst.msk [vmem:[#allocation2 + $0x30] sm:$0xff] %vm6148, 0.0
        %6152 = vst.msk [vmem:[#allocation2 + $0x48] sm:$0xff] %vm6148, 0.0
        %vm6153 = vcmask 89160
        %6154 = vst.msk [vmem:[#allocation2] sm:$0xff] %vm6153, 0.0
        %6155 = vst.msk [vmem:[#allocation2 + $0x18] sm:$0xff] %vm6153, 0.0
        %6156 = vst.msk [vmem:[#allocation2 + $0x30] sm:$0xff] %vm6153, 0.0
        %6157 = vst.msk [vmem:[#allocation2 + $0x48] sm:$0xff] %vm6153, 0.0
        %vm6158 = vcmask 130160
        %6159 = vst.msk [vmem:[#allocation2] sm:$0xff] %vm6158, 0.0
        %6160 = vst.msk [vmem:[#allocation2 + $0x18] sm:$0xff] %vm6158, 0.0
        %6161 = vst.msk [vmem:[#allocation2 + $0x30] sm:$0xff] %vm6158, 0.0
        %6162 = vst.msk [vmem:[#allocation2 + $0x48] sm:$0xff] %vm6158, 0.0
        %v6163 = vld [vmem:[#allocation2] sm:$0xff]
        %v6164 = vld [vmem:[#allocation2 + $0x18] sm:$0xff]
        %v6165 = vld [vmem:[#allocation2 + $0x30] sm:$0xff]
        %v6166 = vld [vmem:[#allocation2 + $0x48] sm:$0xff]
        %v6167 = vld [vmem:[%s1 + $0x210] sm:$0xff]
        %v6168 = vld [vmem:[%s1 + $0x228] sm:$0xff]
        %v6169 = vld [vmem:[%s1 + $0x240] sm:$0xff]
        %v6170 = vld [vmem:[%s1 + $0x258] sm:$0xff]
        %v6171 = vld [vmem:[%s1 + $0x220] sm:$0xff]
        %v6172 = vld [vmem:[%s1 + $0x238] sm:$0xff]
        %v6173 = vld [vmem:[%s1 + $0x250] sm:$0xff]
        %v6174 = vld [vmem:[%s1 + $0x268] sm:$0xff]
        %6176 = vset.pattern.permute.xlu0 32
        %6177 = vperm.xlu0 %6176, %v6171
        %v6178 = vpop.permute.xlu0 %6177
        %6181 = vset.pattern.permute.xlu0 32
        %6182 = vperm.xlu0 %6181, %v6172
        %v6183 = vpop.permute.xlu0 %6182
        %6186 = vset.pattern.permute.xlu0 32
        %6187 = vperm.xlu0 %6186, %v6173
        %v6188 = vpop.permute.xlu0 %6187
        %6191 = vset.pattern.permute.xlu0 32
        %6192 = vperm.xlu0 %6191, %v6174
        %v6193 = vpop.permute.xlu0 %6192
        %v6196 = vsel %vm3991, %v6167, 0
        %v6199 = vsel %vm3991, %v6168, 0
        %v6202 = vsel %vm3991, %v6169, 0
        %v6205 = vsel %vm3991, %v6170, 0
        %6207 = vmatprep.subr.mxu0 0.0
        %6208 = vmatpush1.msra.mxu0 0.0
        %6209 = vmatprep.subr.mxu0 0.0
        %6210 = vmatpush1.msra.mxu0 0.0
        %6211 = vmatprep.subr.mxu0 0.0
        %6212 = vmatpush1.msra.mxu0 0.0
        %6213 = vmatprep.subr.mxu0 0.0
        %6214 = vmatpush1.msra.mxu0 0.0
        %6215 = vmatprep.subr.mxu0 0.0
        %6216 = vmatpush1.msra.mxu0 0.0
        %6217 = vmatprep.subr.mxu0 0.0
        %6218 = vmatpush1.msra.mxu0 0.0
        %6219 = vmatprep.subr.mxu0 0.0
        %6220 = vmatpush1.msra.mxu0 0.0
        %6221 = vmatprep.subr.mxu0 0.0
        %6222 = vmatpush1.msra.mxu0 0.0
        %6223 = vmatprep.subr.mxu0 0.0
        %6224 = vmatpush1.msra.mxu0 0.0
        %6225 = vmatprep.subr.mxu0 0.0
        %6226 = vmatpush1.msra.mxu0 0.0
        %6227 = vmatprep.subr.mxu0 0.0
        %6228 = vmatpush1.msra.mxu0 0.0
        %6229 = vmatprep.subr.mxu0 0.0
        %6230 = vmatpush1.msra.mxu0 0.0
        %6231 = vmatprep.subr.mxu0 0.0
        %6232 = vmatpush1.msra.mxu0 %v6166
        %6233 = vmatprep.subr.mxu0 0.0
        %6234 = vmatpush1.msra.mxu0 %v6165
        %6235 = vmatprep.subr.mxu0 0.0
        %6236 = vmatpush1.msra.mxu0 %v6164
        %6237 = vmatprep.subr.mxu0 0.0
        %6238 = vmatpush1.msra.mxu0 %v6163
        %6239 = vmatprep.subr.mxu0 0.0
        %6240 = vmatpush2.msra.mxu0 0.0
        %6241 = vmatprep.subr.mxu0 0.0
        %6242 = vmatpush2.msra.mxu0 0.0
        %6243 = vmatprep.subr.mxu0 0.0
        %6244 = vmatpush2.msra.mxu0 0.0
        %6245 = vmatprep.subr.mxu0 0.0
        %6246 = vmatpush2.msra.mxu0 0.0
        %6247 = vmatprep.subr.mxu0 0.0
        %6248 = vmatpush2.msra.mxu0 0.0
        %6249 = vmatprep.subr.mxu0 0.0
        %6250 = vmatpush2.msra.mxu0 0.0
        %6251 = vmatprep.subr.mxu0 0.0
        %6252 = vmatpush2.msra.mxu0 0.0
        %6253 = vmatprep.subr.mxu0 0.0
        %6254 = vmatpush2.msra.mxu0 0.0
        %6255 = vmatprep.subr.mxu0 0.0
        %6256 = vmatpush2.msra.mxu0 0.0
        %6257 = vmatprep.subr.mxu0 0.0
        %6258 = vmatpush2.msra.mxu0 0.0
        %6259 = vmatprep.subr.mxu0 0.0
        %6260 = vmatpush2.msra.mxu0 0.0
        %6261 = vmatprep.subr.mxu0 0.0
        %6262 = vmatpush2.msra.mxu0 0.0
        %6263 = vmatprep.subr.mxu0 0.0
        %6264 = vmatpush2.msra.mxu0 0.0
        %6265 = vmatprep.subr.mxu0 0.0
        %6266 = vmatpush2.msra.mxu0 0.0
        %6267 = vmatprep.subr.mxu0 0.0
        %6268 = vmatpush2.msra.mxu0 0.0
        %6269 = vmatprep.subr.mxu0 0.0
        %6270 = vmatpush2.msra.mxu0 0.0
        %6271 = vmatprep.mubr.f32.mxu0 0.0
        %6272 = vmatmul.mubr.f32.gmra.mxu0 %v6196
        %v6273 = vpop.f32.mrf.mxu0
        %v6274 = vadd.f32 %v6178, %v6273
        %v6275 = vpop.f32.mrf.mxu0
        %6276 = vmatprep.mubr.f32.mxu0 0.0
        %6277 = vmatmul.mubr.f32.gmra.mxu0 %v6199
        %v6278 = vpop.f32.mrf.mxu0
        %v6279 = vadd.f32 %v6183, %v6278
        %v6280 = vpop.f32.mrf.mxu0
        %6281 = vmatprep.mubr.f32.mxu0 0.0
        %6282 = vmatmul.mubr.f32.gmra.mxu0 %v6202
        %v6283 = vpop.f32.mrf.mxu0
        %v6284 = vadd.f32 %v6188, %v6283
        %v6285 = vpop.f32.mrf.mxu0
        %6286 = vmatprep.mubr.f32.mxu0 0.0
        %6287 = vmatmul.mubr.f32.gmra.mxu0 %v6205
        %v6288 = vpop.f32.mrf.mxu0
        %v6289 = vadd.f32 %v6193, %v6288
        %v6290 = vpop.f32.mrf.mxu0
        %6291 = vdwg.mxu0
        %vm6292 = vcmp.gt.f32.partialorder %v6274, 0.0
        %vm6293 = vcmp.gt.f32.partialorder %v6279, 0.0
        %vm6294 = vcmp.gt.f32.partialorder %v6284, 0.0
        %vm6295 = vcmp.gt.f32.partialorder %v6289, 0.0
        %v6296 = vmul.f32 %v6274, 0.1
        %v6297 = vmul.f32 %v6279, 0.1
        %v6298 = vmul.f32 %v6284, 0.1
        %v6299 = vmul.f32 %v6289, 0.1
        %v6300 = vsel %vm6292, %v6274, %v6296
        %v6301 = vsel %vm6293, %v6279, %v6297
        %v6302 = vsel %vm6294, %v6284, %v6298
        %v6303 = vsel %vm6295, %v6289, %v6299
        %6308 = vrot.lane.b32.xlu0 %v6300, 8
        %v6309 = vpop.permute.xlu0 %6308
        %6310 = vrot.lane.b32.xlu0 %v6301, 8
        %v6311 = vpop.permute.xlu0 %6310
        %6312 = vrot.lane.b32.xlu0 %v6302, 8
        %v6313 = vpop.permute.xlu0 %6312
        %6314 = vrot.lane.b32.xlu0 %v6303, 8
        %v6315 = vpop.permute.xlu0 %6314
        %vm6320 = vcmask 105536
        %6321 = vst.msk [vmem:[#allocation2] sm:$0xff] %vm6320, %v6309
        %6322 = vst.msk [vmem:[#allocation2 + $0x18] sm:$0xff] %vm6320, %v6311
        %6323 = vst.msk [vmem:[#allocation2 + $0x30] sm:$0xff] %vm6320, %v6313
        %6324 = vst.msk [vmem:[#allocation2 + $0x48] sm:$0xff] %vm6320, %v6315
        %6325 = vrot.lane.b32.xlu0 %v6300, 10
        %v6326 = vpop.permute.xlu0 %6325
        %6327 = vrot.lane.b32.xlu0 %v6301, 10
        %v6328 = vpop.permute.xlu0 %6327
        %6329 = vrot.lane.b32.xlu0 %v6302, 10
        %v6330 = vpop.permute.xlu0 %6329
        %6331 = vrot.lane.b32.xlu0 %v6303, 10
        %v6332 = vpop.permute.xlu0 %6331
        %6337 = vst.msk [vmem:[#allocation2] sm:$0xff] %vm5479, %v6326
        %6338 = vst.msk [vmem:[#allocation2 + $0x18] sm:$0xff] %vm5479, %v6328
        %6339 = vst.msk [vmem:[#allocation2 + $0x30] sm:$0xff] %vm5479, %v6330
        %6340 = vst.msk [vmem:[#allocation2 + $0x48] sm:$0xff] %vm5479, %v6332
        %6341 = vrot.lane.b32.xlu0 %v6300, 12
        %v6342 = vpop.permute.xlu0 %6341
        %6343 = vrot.lane.b32.xlu0 %v6301, 12
        %v6344 = vpop.permute.xlu0 %6343
        %6345 = vrot.lane.b32.xlu0 %v6302, 12
        %v6346 = vpop.permute.xlu0 %6345
        %6347 = vrot.lane.b32.xlu0 %v6303, 12
        %v6348 = vpop.permute.xlu0 %6347
        %vm6353 = vcmask 220336
        %6354 = vst.msk [vmem:[#allocation2] sm:$0xff] %vm6353, %v6342
        %6355 = vst.msk [vmem:[#allocation2 + $0x18] sm:$0xff] %vm6353, %v6344
        %6356 = vst.msk [vmem:[#allocation2 + $0x30] sm:$0xff] %vm6353, %v6346
        %6357 = vst.msk [vmem:[#allocation2 + $0x48] sm:$0xff] %vm6353, %v6348
        %6358 = vrot.lane.b32.xlu0 %v6300, 14
        %v6359 = vpop.permute.xlu0 %6358
        %6360 = vrot.lane.b32.xlu0 %v6301, 14
        %v6361 = vpop.permute.xlu0 %6360
        %6362 = vrot.lane.b32.xlu0 %v6302, 14
        %v6363 = vpop.permute.xlu0 %6362
        %6364 = vrot.lane.b32.xlu0 %v6303, 14
        %v6365 = vpop.permute.xlu0 %6364
        %vm6370 = vcmask 277736
        %6371 = vst.msk [vmem:[#allocation2] sm:$0xff] %vm6370, %v6359
        %6372 = vst.msk [vmem:[#allocation2 + $0x18] sm:$0xff] %vm6370, %v6361
        %6373 = vst.msk [vmem:[#allocation2 + $0x30] sm:$0xff] %vm6370, %v6363
        %6374 = vst.msk [vmem:[#allocation2 + $0x48] sm:$0xff] %vm6370, %v6365
        %6375 = vrot.lane.b32.xlu0 %v6300, 16
        %v6376 = vpop.permute.xlu0 %6375
        %6377 = vrot.lane.b32.xlu0 %v6301, 16
        %v6378 = vpop.permute.xlu0 %6377
        %6379 = vrot.lane.b32.xlu0 %v6302, 16
        %v6380 = vpop.permute.xlu0 %6379
        %6381 = vrot.lane.b32.xlu0 %v6303, 16
        %v6382 = vpop.permute.xlu0 %6381
        %vm6387 = vcmask 335136
        %6388 = vst.msk [vmem:[#allocation2] sm:$0xff] %vm6387, %v6376
        %6389 = vst.msk [vmem:[#allocation2 + $0x18] sm:$0xff] %vm6387, %v6378
        %6390 = vst.msk [vmem:[#allocation2 + $0x30] sm:$0xff] %vm6387, %v6380
        %6391 = vst.msk [vmem:[#allocation2 + $0x48] sm:$0xff] %vm6387, %v6382
        %vm6392 = vcmask 64512
        %6393 = vst.msk [vmem:[#allocation2] sm:$0xff] %vm6392, 0.0
        %6394 = vst.msk [vmem:[#allocation2 + $0x18] sm:$0xff] %vm6392, 0.0
        %6395 = vst.msk [vmem:[#allocation2 + $0x30] sm:$0xff] %vm6392, 0.0
        %6396 = vst.msk [vmem:[#allocation2 + $0x48] sm:$0xff] %vm6392, 0.0
        %vm6397 = vcmask 400712
        %6398 = vst.msk [vmem:[#allocation2] sm:$0xff] %vm6397, 0.0
        %6399 = vst.msk [vmem:[#allocation2 + $0x18] sm:$0xff] %vm6397, 0.0
        %6400 = vst.msk [vmem:[#allocation2 + $0x30] sm:$0xff] %vm6397, 0.0
        %6401 = vst.msk [vmem:[#allocation2 + $0x48] sm:$0xff] %vm6397, 0.0
        %6402 = vst.msk [vmem:[#allocation2] sm:$0xff] %vm844, 0.0
        %6403 = vst.msk [vmem:[#allocation2 + $0x18] sm:$0xff] %vm844, 0.0
        %6404 = vst.msk [vmem:[#allocation2 + $0x30] sm:$0xff] %vm844, 0.0
        %6405 = vst.msk [vmem:[#allocation2 + $0x48] sm:$0xff] %vm844, 0.0
        %vm6406 = vcmask 179360
        %6407 = vst.msk [vmem:[#allocation2] sm:$0xff] %vm6406, 0.0
        %6408 = vst.msk [vmem:[#allocation2 + $0x18] sm:$0xff] %vm6406, 0.0
        %6409 = vst.msk [vmem:[#allocation2 + $0x30] sm:$0xff] %vm6406, 0.0
        %6410 = vst.msk [vmem:[#allocation2 + $0x48] sm:$0xff] %vm6406, 0.0
        %vm6411 = vcmask 236760
        %6412 = vst.msk [vmem:[#allocation2] sm:$0xff] %vm6411, 0.0
        %6413 = vst.msk [vmem:[#allocation2 + $0x18] sm:$0xff] %vm6411, 0.0
        %6414 = vst.msk [vmem:[#allocation2 + $0x30] sm:$0xff] %vm6411, 0.0
        %6415 = vst.msk [vmem:[#allocation2 + $0x48] sm:$0xff] %vm6411, 0.0
        %vm6416 = vcmask 294160
        %6417 = vst.msk [vmem:[#allocation2] sm:$0xff] %vm6416, 0.0
        %6418 = vst.msk [vmem:[#allocation2 + $0x18] sm:$0xff] %vm6416, 0.0
        %6419 = vst.msk [vmem:[#allocation2 + $0x30] sm:$0xff] %vm6416, 0.0
        %6420 = vst.msk [vmem:[#allocation2 + $0x48] sm:$0xff] %vm6416, 0.0
        %v6421 = vld [vmem:[#allocation2] sm:$0xff]
        %v6422 = vld [vmem:[#allocation2 + $0x18] sm:$0xff]
        %v6423 = vld [vmem:[#allocation2 + $0x30] sm:$0xff]
        %v6424 = vld [vmem:[#allocation2 + $0x48] sm:$0xff]
        %v6425 = vld [vmem:[%s1 + $0x270] sm:$0xff]
        %v6426 = vld [vmem:[%s1 + $0x288] sm:$0xff]
        %v6427 = vld [vmem:[%s1 + $0x2a0] sm:$0xff]
        %v6428 = vld [vmem:[%s1 + $0x2b8] sm:$0xff]
        %v6429 = vld [vmem:[%s1 + $0x2d0] sm:$0xff]
        %v6430 = vld [vmem:[%s1 + $0x2e8] sm:$0xff]
        %v6431 = vld [vmem:[%s1 + $0x300] sm:$0xff]
        %v6432 = vld [vmem:[%s1 + $0x318] sm:$0xff]
        %v6433 = vld [vmem:[%s1 + $0x330] sm:$0xff]
        %v6434 = vld [vmem:[%s1 + $0x348] sm:$0xff]
        %v6435 = vld [vmem:[%s1 + $0x360] sm:$0xff]
        %v6436 = vld [vmem:[%s1 + $0x378] sm:$0xff]
        %v6437 = vld [vmem:[%s1 + $0x390] sm:$0xff]
        %v6438 = vld [vmem:[%s1 + $0x3a8] sm:$0xff]
        %v6439 = vld [vmem:[%s1 + $0x3c0] sm:$0xff]
        %v6440 = vld [vmem:[%s1 + $0x3d8] sm:$0xff]
        %v6441 = vld [vmem:[%s1 + $0x3f0] sm:$0xff]
        %v6442 = vld [vmem:[%s1 + $0x408] sm:$0xff]
        %v6443 = vld [vmem:[%s1 + $0x420] sm:$0xff]
        %v6444 = vld [vmem:[%s1 + $0x438] sm:$0xff]
        %v6445 = vld [vmem:[%s1 + $0x450] sm:$0xff]
        %v6446 = vld [vmem:[%s1 + $0x468] sm:$0xff]
        %v6447 = vld [vmem:[%s1 + $0x480] sm:$0xff]
        %v6448 = vld [vmem:[%s1 + $0x498] sm:$0xff]
        %v6449 = vld [vmem:[%s1 + $0x280] sm:$0xff]
        %v6450 = vld [vmem:[%s1 + $0x298] sm:$0xff]
        %v6451 = vld [vmem:[%s1 + $0x2b0] sm:$0xff]
        %v6452 = vld [vmem:[%s1 + $0x2c8] sm:$0xff]
        %v6453 = vld [vmem:[%s1 + $0x2e0] sm:$0xff]
        %v6454 = vld [vmem:[%s1 + $0x2f8] sm:$0xff]
        %v6455 = vld [vmem:[%s1 + $0x310] sm:$0xff]
        %v6456 = vld [vmem:[%s1 + $0x328] sm:$0xff]
        %v6457 = vld [vmem:[%s1 + $0x340] sm:$0xff]
        %v6458 = vld [vmem:[%s1 + $0x358] sm:$0xff]
        %v6459 = vld [vmem:[%s1 + $0x370] sm:$0xff]
        %v6460 = vld [vmem:[%s1 + $0x388] sm:$0xff]
        %v6461 = vld [vmem:[%s1 + $0x3a0] sm:$0xff]
        %v6462 = vld [vmem:[%s1 + $0x3b8] sm:$0xff]
        %v6463 = vld [vmem:[%s1 + $0x3d0] sm:$0xff]
        %v6464 = vld [vmem:[%s1 + $0x3e8] sm:$0xff]
        %v6465 = vld [vmem:[%s1 + $0x400] sm:$0xff]
        %v6466 = vld [vmem:[%s1 + $0x418] sm:$0xff]
        %v6467 = vld [vmem:[%s1 + $0x430] sm:$0xff]
        %v6468 = vld [vmem:[%s1 + $0x448] sm:$0xff]
        %v6469 = vld [vmem:[%s1 + $0x460] sm:$0xff]
        %v6470 = vld [vmem:[%s1 + $0x478] sm:$0xff]
        %v6471 = vld [vmem:[%s1 + $0x490] sm:$0xff]
        %v6472 = vld [vmem:[%s1 + $0x4a8] sm:$0xff]
        %6474 = vset.pattern.permute.xlu0 32
        %6475 = vperm.xlu0 %6474, %v6449
        %v6476 = vpop.permute.xlu0 %6475
        %6479 = vset.pattern.permute.xlu0 32
        %6480 = vperm.xlu0 %6479, %v6450
        %v6481 = vpop.permute.xlu0 %6480
        %6484 = vset.pattern.permute.xlu0 32
        %6485 = vperm.xlu0 %6484, %v6451
        %v6486 = vpop.permute.xlu0 %6485
        %6489 = vset.pattern.permute.xlu0 32
        %6490 = vperm.xlu0 %6489, %v6452
        %v6491 = vpop.permute.xlu0 %6490
        %6494 = vset.pattern.permute.xlu0 32
        %6495 = vperm.xlu0 %6494, %v6453
        %v6496 = vpop.permute.xlu0 %6495
        %6499 = vset.pattern.permute.xlu0 32
        %6500 = vperm.xlu0 %6499, %v6454
        %v6501 = vpop.permute.xlu0 %6500
        %6504 = vset.pattern.permute.xlu0 32
        %6505 = vperm.xlu0 %6504, %v6455
        %v6506 = vpop.permute.xlu0 %6505
        %6509 = vset.pattern.permute.xlu0 32
        %6510 = vperm.xlu0 %6509, %v6456
        %v6511 = vpop.permute.xlu0 %6510
        %6514 = vset.pattern.permute.xlu0 32
        %6515 = vperm.xlu0 %6514, %v6457
        %v6516 = vpop.permute.xlu0 %6515
        %6519 = vset.pattern.permute.xlu0 32
        %6520 = vperm.xlu0 %6519, %v6458
        %v6521 = vpop.permute.xlu0 %6520
        %6524 = vset.pattern.permute.xlu0 32
        %6525 = vperm.xlu0 %6524, %v6459
        %v6526 = vpop.permute.xlu0 %6525
        %6529 = vset.pattern.permute.xlu0 32
        %6530 = vperm.xlu0 %6529, %v6460
        %v6531 = vpop.permute.xlu0 %6530
        %6534 = vset.pattern.permute.xlu0 32
        %6535 = vperm.xlu0 %6534, %v6461
        %v6536 = vpop.permute.xlu0 %6535
        %6539 = vset.pattern.permute.xlu0 32
        %6540 = vperm.xlu0 %6539, %v6462
        %v6541 = vpop.permute.xlu0 %6540
        %6544 = vset.pattern.permute.xlu0 32
        %6545 = vperm.xlu0 %6544, %v6463
        %v6546 = vpop.permute.xlu0 %6545
        %6549 = vset.pattern.permute.xlu0 32
        %6550 = vperm.xlu0 %6549, %v6464
        %v6551 = vpop.permute.xlu0 %6550
        %6554 = vset.pattern.permute.xlu0 32
        %6555 = vperm.xlu0 %6554, %v6465
        %v6556 = vpop.permute.xlu0 %6555
        %6559 = vset.pattern.permute.xlu0 32
        %6560 = vperm.xlu0 %6559, %v6466
        %v6561 = vpop.permute.xlu0 %6560
        %6564 = vset.pattern.permute.xlu0 32
        %6565 = vperm.xlu0 %6564, %v6467
        %v6566 = vpop.permute.xlu0 %6565
        %6569 = vset.pattern.permute.xlu0 32
        %6570 = vperm.xlu0 %6569, %v6468
        %v6571 = vpop.permute.xlu0 %6570
        %6574 = vset.pattern.permute.xlu0 32
        %6575 = vperm.xlu0 %6574, %v6469
        %v6576 = vpop.permute.xlu0 %6575
        %6579 = vset.pattern.permute.xlu0 32
        %6580 = vperm.xlu0 %6579, %v6470
        %v6581 = vpop.permute.xlu0 %6580
        %6584 = vset.pattern.permute.xlu0 32
        %6585 = vperm.xlu0 %6584, %v6471
        %v6586 = vpop.permute.xlu0 %6585
        %6589 = vset.pattern.permute.xlu0 32
        %6590 = vperm.xlu0 %6589, %v6472
        %v6591 = vpop.permute.xlu0 %6590
        %v6594 = vsel %vm3991, %v6425, 0
        %v6597 = vsel %vm3991, %v6426, 0
        %v6600 = vsel %vm3991, %v6427, 0
        %v6603 = vsel %vm3991, %v6428, 0
        %v6606 = vsel %vm3991, %v6429, 0
        %v6609 = vsel %vm3991, %v6430, 0
        %v6612 = vsel %vm3991, %v6431, 0
        %v6615 = vsel %vm3991, %v6432, 0
        %v6618 = vsel %vm3991, %v6433, 0
        %v6621 = vsel %vm3991, %v6434, 0
        %v6624 = vsel %vm3991, %v6435, 0
        %v6627 = vsel %vm3991, %v6436, 0
        %v6630 = vsel %vm3991, %v6437, 0
        %v6633 = vsel %vm3991, %v6438, 0
        %v6636 = vsel %vm3991, %v6439, 0
        %v6639 = vsel %vm3991, %v6440, 0
        %v6642 = vsel %vm3991, %v6441, 0
        %v6645 = vsel %vm3991, %v6442, 0
        %v6648 = vsel %vm3991, %v6443, 0
        %v6651 = vsel %vm3991, %v6444, 0
        %v6654 = vsel %vm3991, %v6445, 0
        %v6657 = vsel %vm3991, %v6446, 0
        %v6660 = vsel %vm3991, %v6447, 0
        %v6663 = vsel %vm3991, %v6448, 0
        %6665 = vmatprep.subr.mxu0 0.0
        %6666 = vmatpush1.msra.mxu0 0.0
        %6667 = vmatprep.subr.mxu0 0.0
        %6668 = vmatpush1.msra.mxu0 0.0
        %6669 = vmatprep.subr.mxu0 0.0
        %6670 = vmatpush1.msra.mxu0 0.0
        %6671 = vmatprep.subr.mxu0 0.0
        %6672 = vmatpush1.msra.mxu0 0.0
        %6673 = vmatprep.subr.mxu0 0.0
        %6674 = vmatpush1.msra.mxu0 0.0
        %6675 = vmatprep.subr.mxu0 0.0
        %6676 = vmatpush1.msra.mxu0 0.0
        %6677 = vmatprep.subr.mxu0 0.0
        %6678 = vmatpush1.msra.mxu0 0.0
        %6679 = vmatprep.subr.mxu0 0.0
        %6680 = vmatpush1.msra.mxu0 0.0
        %6681 = vmatprep.subr.mxu0 0.0
        %6682 = vmatpush1.msra.mxu0 0.0
        %6683 = vmatprep.subr.mxu0 0.0
        %6684 = vmatpush1.msra.mxu0 0.0
        %6685 = vmatprep.subr.mxu0 0.0
        %6686 = vmatpush1.msra.mxu0 0.0
        %6687 = vmatprep.subr.mxu0 0.0
        %6688 = vmatpush1.msra.mxu0 0.0
        %6689 = vmatprep.subr.mxu0 0.0
        %6690 = vmatpush1.msra.mxu0 %v6424
        %6691 = vmatprep.subr.mxu0 0.0
        %6692 = vmatpush1.msra.mxu0 %v6423
        %6693 = vmatprep.subr.mxu0 0.0
        %6694 = vmatpush1.msra.mxu0 %v6422
        %6695 = vmatprep.subr.mxu0 0.0
        %6696 = vmatpush1.msra.mxu0 %v6421
        %6697 = vmatprep.subr.mxu0 0.0
        %6698 = vmatpush2.msra.mxu0 0.0
        %6699 = vmatprep.subr.mxu0 0.0
        %6700 = vmatpush2.msra.mxu0 0.0
        %6701 = vmatprep.subr.mxu0 0.0
        %6702 = vmatpush2.msra.mxu0 0.0
        %6703 = vmatprep.subr.mxu0 0.0
        %6704 = vmatpush2.msra.mxu0 0.0
        %6705 = vmatprep.subr.mxu0 0.0
        %6706 = vmatpush2.msra.mxu0 0.0
        %6707 = vmatprep.subr.mxu0 0.0
        %6708 = vmatpush2.msra.mxu0 0.0
        %6709 = vmatprep.subr.mxu0 0.0
        %6710 = vmatpush2.msra.mxu0 0.0
        %6711 = vmatprep.subr.mxu0 0.0
        %6712 = vmatpush2.msra.mxu0 0.0
        %6713 = vmatprep.subr.mxu0 0.0
        %6714 = vmatpush2.msra.mxu0 0.0
        %6715 = vmatprep.subr.mxu0 0.0
        %6716 = vmatpush2.msra.mxu0 0.0
        %6717 = vmatprep.subr.mxu0 0.0
        %6718 = vmatpush2.msra.mxu0 0.0
        %6719 = vmatprep.subr.mxu0 0.0
        %6720 = vmatpush2.msra.mxu0 0.0
        %6721 = vmatprep.subr.mxu0 0.0
        %6722 = vmatpush2.msra.mxu0 0.0
        %6723 = vmatprep.subr.mxu0 0.0
        %6724 = vmatpush2.msra.mxu0 0.0
        %6725 = vmatprep.subr.mxu0 0.0
        %6726 = vmatpush2.msra.mxu0 0.0
        %6727 = vmatprep.subr.mxu0 0.0
        %6728 = vmatpush2.msra.mxu0 0.0
        %6729 = vmatprep.mubr.f32.mxu0 0.0
        %6730 = vmatmul.mubr.f32.gmra.mxu0 %v6594
        %v6731 = vpop.f32.mrf.mxu0
        %v6732 = vadd.f32 %v6476, %v6731
        %v6733 = vpop.f32.mrf.mxu0
        %6734 = vmatprep.mubr.f32.mxu0 0.0
        %6735 = vmatmul.mubr.f32.gmra.mxu0 %v6597
        %v6736 = vpop.f32.mrf.mxu0
        %v6737 = vadd.f32 %v6481, %v6736
        %v6738 = vpop.f32.mrf.mxu0
        %6739 = vmatprep.mubr.f32.mxu0 0.0
        %6740 = vmatmul.mubr.f32.gmra.mxu0 %v6600
        %v6741 = vpop.f32.mrf.mxu0
        %v6742 = vadd.f32 %v6486, %v6741
        %v6743 = vpop.f32.mrf.mxu0
        %6744 = vmatprep.mubr.f32.mxu0 0.0
        %6745 = vmatmul.mubr.f32.gmra.mxu0 %v6603
        %v6746 = vpop.f32.mrf.mxu0
        %v6747 = vadd.f32 %v6491, %v6746
        %v6748 = vpop.f32.mrf.mxu0
        %6749 = vmatprep.mubr.f32.mxu0 0.0
        %6750 = vmatmul.mubr.f32.gmra.mxu0 %v6606
        %v6751 = vpop.f32.mrf.mxu0
        %v6752 = vadd.f32 %v6496, %v6751
        %v6753 = vpop.f32.mrf.mxu0
        %6754 = vmatprep.mubr.f32.mxu0 0.0
        %6755 = vmatmul.mubr.f32.gmra.mxu0 %v6609
        %v6756 = vpop.f32.mrf.mxu0
        %v6757 = vadd.f32 %v6501, %v6756
        %v6758 = vpop.f32.mrf.mxu0
        %6759 = vmatprep.mubr.f32.mxu0 0.0
        %6760 = vmatmul.mubr.f32.gmra.mxu0 %v6612
        %v6761 = vpop.f32.mrf.mxu0
        %v6762 = vadd.f32 %v6506, %v6761
        %v6763 = vpop.f32.mrf.mxu0
        %6764 = vmatprep.mubr.f32.mxu0 0.0
        %6765 = vmatmul.mubr.f32.gmra.mxu0 %v6615
        %v6766 = vpop.f32.mrf.mxu0
        %v6767 = vadd.f32 %v6511, %v6766
        %v6768 = vpop.f32.mrf.mxu0
        %6769 = vmatprep.mubr.f32.mxu0 0.0
        %6770 = vmatmul.mubr.f32.gmra.mxu0 %v6618
        %v6771 = vpop.f32.mrf.mxu0
        %v6772 = vadd.f32 %v6516, %v6771
        %v6773 = vpop.f32.mrf.mxu0
        %6774 = vmatprep.mubr.f32.mxu0 0.0
        %6775 = vmatmul.mubr.f32.gmra.mxu0 %v6621
        %v6776 = vpop.f32.mrf.mxu0
        %v6777 = vadd.f32 %v6521, %v6776
        %v6778 = vpop.f32.mrf.mxu0
        %6779 = vmatprep.mubr.f32.mxu0 0.0
        %6780 = vmatmul.mubr.f32.gmra.mxu0 %v6624
        %v6781 = vpop.f32.mrf.mxu0
        %v6782 = vadd.f32 %v6526, %v6781
        %v6783 = vpop.f32.mrf.mxu0
        %6784 = vmatprep.mubr.f32.mxu0 0.0
        %6785 = vmatmul.mubr.f32.gmra.mxu0 %v6627
        %v6786 = vpop.f32.mrf.mxu0
        %v6787 = vadd.f32 %v6531, %v6786
        %v6788 = vpop.f32.mrf.mxu0
        %6789 = vmatprep.mubr.f32.mxu0 0.0
        %6790 = vmatmul.mubr.f32.gmra.mxu0 %v6630
        %v6791 = vpop.f32.mrf.mxu0
        %v6792 = vadd.f32 %v6536, %v6791
        %v6793 = vpop.f32.mrf.mxu0
        %6794 = vmatprep.mubr.f32.mxu0 0.0
        %6795 = vmatmul.mubr.f32.gmra.mxu0 %v6633
        %v6796 = vpop.f32.mrf.mxu0
        %v6797 = vadd.f32 %v6541, %v6796
        %v6798 = vpop.f32.mrf.mxu0
        %6799 = vmatprep.mubr.f32.mxu0 0.0
        %6800 = vmatmul.mubr.f32.gmra.mxu0 %v6636
        %v6801 = vpop.f32.mrf.mxu0
        %v6802 = vadd.f32 %v6546, %v6801
        %v6803 = vpop.f32.mrf.mxu0
        %6804 = vmatprep.mubr.f32.mxu0 0.0
        %6805 = vmatmul.mubr.f32.gmra.mxu0 %v6639
        %v6806 = vpop.f32.mrf.mxu0
        %v6807 = vadd.f32 %v6551, %v6806
        %v6808 = vpop.f32.mrf.mxu0
        %6809 = vmatprep.mubr.f32.mxu0 0.0
        %6810 = vmatmul.mubr.f32.gmra.mxu0 %v6642
        %v6811 = vpop.f32.mrf.mxu0
        %v6812 = vadd.f32 %v6556, %v6811
        %v6813 = vpop.f32.mrf.mxu0
        %6814 = vmatprep.mubr.f32.mxu0 0.0
        %6815 = vmatmul.mubr.f32.gmra.mxu0 %v6645
        %v6816 = vpop.f32.mrf.mxu0
        %v6817 = vadd.f32 %v6561, %v6816
        %v6818 = vpop.f32.mrf.mxu0
        %6819 = vmatprep.mubr.f32.mxu0 0.0
        %6820 = vmatmul.mubr.f32.gmra.mxu0 %v6648
        %v6821 = vpop.f32.mrf.mxu0
        %v6822 = vadd.f32 %v6566, %v6821
        %v6823 = vpop.f32.mrf.mxu0
        %6824 = vmatprep.mubr.f32.mxu0 0.0
        %6825 = vmatmul.mubr.f32.gmra.mxu0 %v6651
        %v6826 = vpop.f32.mrf.mxu0
        %v6827 = vadd.f32 %v6571, %v6826
        %v6828 = vpop.f32.mrf.mxu0
        %6829 = vmatprep.mubr.f32.mxu0 0.0
        %6830 = vmatmul.mubr.f32.gmra.mxu0 %v6654
        %v6831 = vpop.f32.mrf.mxu0
        %v6832 = vadd.f32 %v6576, %v6831
        %v6833 = vpop.f32.mrf.mxu0
        %6834 = vmatprep.mubr.f32.mxu0 0.0
        %6835 = vmatmul.mubr.f32.gmra.mxu0 %v6657
        %v6836 = vpop.f32.mrf.mxu0
        %v6837 = vadd.f32 %v6581, %v6836
        %v6838 = vpop.f32.mrf.mxu0
        %6839 = vmatprep.mubr.f32.mxu0 0.0
        %6840 = vmatmul.mubr.f32.gmra.mxu0 %v6660
        %v6841 = vpop.f32.mrf.mxu0
        %v6842 = vadd.f32 %v6586, %v6841
        %v6843 = vpop.f32.mrf.mxu0
        %6844 = vmatprep.mubr.f32.mxu0 0.0
        %6845 = vmatmul.mubr.f32.gmra.mxu0 %v6663
        %v6846 = vpop.f32.mrf.mxu0
        %v6847 = vadd.f32 %v6591, %v6846
        %v6848 = vpop.f32.mrf.mxu0
        %6849 = vdwg.mxu0
        %vm6850 = vcmp.gt.f32.partialorder %v6732, 0.0
        %vm6851 = vcmp.gt.f32.partialorder %v6737, 0.0
        %vm6852 = vcmp.gt.f32.partialorder %v6742, 0.0
        %vm6853 = vcmp.gt.f32.partialorder %v6747, 0.0
        %vm6854 = vcmp.gt.f32.partialorder %v6752, 0.0
        %vm6855 = vcmp.gt.f32.partialorder %v6757, 0.0
        %vm6856 = vcmp.gt.f32.partialorder %v6762, 0.0
        %vm6857 = vcmp.gt.f32.partialorder %v6767, 0.0
        %vm6858 = vcmp.gt.f32.partialorder %v6772, 0.0
        %vm6859 = vcmp.gt.f32.partialorder %v6777, 0.0
        %vm6860 = vcmp.gt.f32.partialorder %v6782, 0.0
        %vm6861 = vcmp.gt.f32.partialorder %v6787, 0.0
        %vm6862 = vcmp.gt.f32.partialorder %v6792, 0.0
        %vm6863 = vcmp.gt.f32.partialorder %v6797, 0.0
        %vm6864 = vcmp.gt.f32.partialorder %v6802, 0.0
        %vm6865 = vcmp.gt.f32.partialorder %v6807, 0.0
        %vm6866 = vcmp.gt.f32.partialorder %v6812, 0.0
        %vm6867 = vcmp.gt.f32.partialorder %v6817, 0.0
        %vm6868 = vcmp.gt.f32.partialorder %v6822, 0.0
        %vm6869 = vcmp.gt.f32.partialorder %v6827, 0.0
        %vm6870 = vcmp.gt.f32.partialorder %v6832, 0.0
        %vm6871 = vcmp.gt.f32.partialorder %v6837, 0.0
        %vm6872 = vcmp.gt.f32.partialorder %v6842, 0.0
        %vm6873 = vcmp.gt.f32.partialorder %v6847, 0.0
        %v6874 = vmul.f32 %v6732, 0.1
        %v6875 = vmul.f32 %v6737, 0.1
        %v6876 = vmul.f32 %v6742, 0.1
        %v6877 = vmul.f32 %v6747, 0.1
        %v6878 = vmul.f32 %v6752, 0.1
        %v6879 = vmul.f32 %v6757, 0.1
        %v6880 = vmul.f32 %v6762, 0.1
        %v6881 = vmul.f32 %v6767, 0.1
        %v6882 = vmul.f32 %v6772, 0.1
        %v6883 = vmul.f32 %v6777, 0.1
        %v6884 = vmul.f32 %v6782, 0.1
        %v6885 = vmul.f32 %v6787, 0.1
        %v6886 = vmul.f32 %v6792, 0.1
        %v6887 = vmul.f32 %v6797, 0.1
        %v6888 = vmul.f32 %v6802, 0.1
        %v6889 = vmul.f32 %v6807, 0.1
        %v6890 = vmul.f32 %v6812, 0.1
        %v6891 = vmul.f32 %v6817, 0.1
        %v6892 = vmul.f32 %v6822, 0.1
        %v6893 = vmul.f32 %v6827, 0.1
        %v6894 = vmul.f32 %v6832, 0.1
        %v6895 = vmul.f32 %v6837, 0.1
        %v6896 = vmul.f32 %v6842, 0.1
        %v6897 = vmul.f32 %v6847, 0.1
        %v6898 = vsel %vm6850, %v6732, %v6874
        %v6899 = vsel %vm6851, %v6737, %v6875
        %v6900 = vsel %vm6852, %v6742, %v6876
        %v6901 = vsel %vm6853, %v6747, %v6877
        %v6902 = vsel %vm6854, %v6752, %v6878
        %v6903 = vsel %vm6855, %v6757, %v6879
        %v6904 = vsel %vm6856, %v6762, %v6880
        %v6905 = vsel %vm6857, %v6767, %v6881
        %v6906 = vsel %vm6858, %v6772, %v6882
        %v6907 = vsel %vm6859, %v6777, %v6883
        %v6908 = vsel %vm6860, %v6782, %v6884
        %v6909 = vsel %vm6861, %v6787, %v6885
        %v6910 = vsel %vm6862, %v6792, %v6886
        %v6911 = vsel %vm6863, %v6797, %v6887
        %v6912 = vsel %vm6864, %v6802, %v6888
        %v6913 = vsel %vm6865, %v6807, %v6889
        %v6914 = vsel %vm6866, %v6812, %v6890
        %v6915 = vsel %vm6867, %v6817, %v6891
        %v6916 = vsel %vm6868, %v6822, %v6892
        %v6917 = vsel %vm6869, %v6827, %v6893
        %v6918 = vsel %vm6870, %v6832, %v6894
        %v6919 = vsel %vm6871, %v6837, %v6895
        %v6920 = vsel %vm6872, %v6842, %v6896
        %v6921 = vsel %vm6873, %v6847, %v6897
        %vm6922 = vcmask 400384
        %v6923 = vsel %vm6922, %v6898, 0.0
        %6924 = vadd.xlane.f32.xlu0 %v6923
        %v6925 = vpop.xlane.xlu0 %6924
        %v6926 = vsel %vm6922, %v6899, 0.0
        %6927 = vadd.xlane.f32.xlu0 %v6926
        %v6928 = vpop.xlane.xlu0 %6927
        %v6929 = vsel %vm6922, %v6900, 0.0
        %6930 = vadd.xlane.f32.xlu0 %v6929
        %v6931 = vpop.xlane.xlu0 %6930
        %v6932 = vsel %vm6922, %v6901, 0.0
        %6933 = vadd.xlane.f32.xlu0 %v6932
        %v6934 = vpop.xlane.xlu0 %6933
        %v6935 = vsel %vm6922, %v6902, 0.0
        %6936 = vadd.xlane.f32.xlu0 %v6935
        %v6937 = vpop.xlane.xlu0 %6936
        %v6938 = vsel %vm6922, %v6903, 0.0
        %6939 = vadd.xlane.f32.xlu0 %v6938
        %v6940 = vpop.xlane.xlu0 %6939
        %v6941 = vsel %vm6922, %v6904, 0.0
        %6942 = vadd.xlane.f32.xlu0 %v6941
        %v6943 = vpop.xlane.xlu0 %6942
        %v6944 = vsel %vm6922, %v6905, 0.0
        %6945 = vadd.xlane.f32.xlu0 %v6944
        %v6946 = vpop.xlane.xlu0 %6945
        %v6947 = vsel %vm6922, %v6906, 0.0
        %6948 = vadd.xlane.f32.xlu0 %v6947
        %v6949 = vpop.xlane.xlu0 %6948
        %v6950 = vsel %vm6922, %v6907, 0.0
        %6951 = vadd.xlane.f32.xlu0 %v6950
        %v6952 = vpop.xlane.xlu0 %6951
        %v6953 = vsel %vm6922, %v6908, 0.0
        %6954 = vadd.xlane.f32.xlu0 %v6953
        %v6955 = vpop.xlane.xlu0 %6954
        %v6956 = vsel %vm6922, %v6909, 0.0
        %6957 = vadd.xlane.f32.xlu0 %v6956
        %v6958 = vpop.xlane.xlu0 %6957
        %v6959 = vsel %vm6922, %v6910, 0.0
        %6960 = vadd.xlane.f32.xlu0 %v6959
        %v6961 = vpop.xlane.xlu0 %6960
        %v6962 = vsel %vm6922, %v6911, 0.0
        %6963 = vadd.xlane.f32.xlu0 %v6962
        %v6964 = vpop.xlane.xlu0 %6963
        %v6965 = vsel %vm6922, %v6912, 0.0
        %6966 = vadd.xlane.f32.xlu0 %v6965
        %v6967 = vpop.xlane.xlu0 %6966
        %v6968 = vsel %vm6922, %v6913, 0.0
        %6969 = vadd.xlane.f32.xlu0 %v6968
        %v6970 = vpop.xlane.xlu0 %6969
        %v6971 = vsel %vm6922, %v6914, 0.0
        %6972 = vadd.xlane.f32.xlu0 %v6971
        %v6973 = vpop.xlane.xlu0 %6972
        %v6974 = vsel %vm6922, %v6915, 0.0
        %6975 = vadd.xlane.f32.xlu0 %v6974
        %v6976 = vpop.xlane.xlu0 %6975
        %v6977 = vsel %vm6922, %v6916, 0.0
        %6978 = vadd.xlane.f32.xlu0 %v6977
        %v6979 = vpop.xlane.xlu0 %6978
        %v6980 = vsel %vm6922, %v6917, 0.0
        %6981 = vadd.xlane.f32.xlu0 %v6980
        %v6982 = vpop.xlane.xlu0 %6981
        %v6983 = vsel %vm6922, %v6918, 0.0
        %6984 = vadd.xlane.f32.xlu0 %v6983
        %v6985 = vpop.xlane.xlu0 %6984
        %v6986 = vsel %vm6922, %v6919, 0.0
        %6987 = vadd.xlane.f32.xlu0 %v6986
        %v6988 = vpop.xlane.xlu0 %6987
        %v6989 = vsel %vm6922, %v6920, 0.0
        %6990 = vadd.xlane.f32.xlu0 %v6989
        %v6991 = vpop.xlane.xlu0 %6990
        %v6992 = vsel %vm6922, %v6921, 0.0
        %6993 = vadd.xlane.f32.xlu0 %v6992
        %v6994 = vpop.xlane.xlu0 %6993
        %v6995 = vmul.f32 %v6925, 0.020408163
        %v6996 = vmul.f32 %v6928, 0.020408163
        %v6997 = vmul.f32 %v6931, 0.020408163
        %v6998 = vmul.f32 %v6934, 0.020408163
        %v6999 = vmul.f32 %v6937, 0.020408163
        %v7000 = vmul.f32 %v6940, 0.020408163
        %v7001 = vmul.f32 %v6943, 0.020408163
        %v7002 = vmul.f32 %v6946, 0.020408163
        %v7003 = vmul.f32 %v6949, 0.020408163
        %v7004 = vmul.f32 %v6952, 0.020408163
        %v7005 = vmul.f32 %v6955, 0.020408163
        %v7006 = vmul.f32 %v6958, 0.020408163
        %v7007 = vmul.f32 %v6961, 0.020408163
        %v7008 = vmul.f32 %v6964, 0.020408163
        %v7009 = vmul.f32 %v6967, 0.020408163
        %v7010 = vmul.f32 %v6970, 0.020408163
        %v7011 = vmul.f32 %v6973, 0.020408163
        %v7012 = vmul.f32 %v6976, 0.020408163
        %v7013 = vmul.f32 %v6979, 0.020408163
        %v7014 = vmul.f32 %v6982, 0.020408163
        %v7015 = vmul.f32 %v6985, 0.020408163
        %v7016 = vmul.f32 %v6988, 0.020408163
        %v7017 = vmul.f32 %v6991, 0.020408163
        %v7018 = vmul.f32 %v6994, 0.020408163
        %v7019 = vld [vmem:[%s2] sm:$0xff]
        %v7020 = vld [vmem:[%s2 + $0x8] sm:$0xff]
        %v7021 = vld [vmem:[%s2 + $0x10] sm:$0xff]
        %v7022 = vld [vmem:[%s2 + $0x18] sm:$0xff]
        %v7023 = vld [vmem:[%s2 + $0x20] sm:$0xff]
        %v7024 = vld [vmem:[%s2 + $0x28] sm:$0xff]
        %v7025 = vld [vmem:[%s2 + $0x30] sm:$0xff]
        %v7026 = vld [vmem:[%s2 + $0x38] sm:$0xff]
        %v7027 = vld [vmem:[%s2 + $0x40] sm:$0xff]
        %v7028 = vld [vmem:[%s2 + $0x48] sm:$0xff]
        %v7029 = vld [vmem:[%s2 + $0x50] sm:$0xff]
        %v7030 = vld [vmem:[%s2 + $0x58] sm:$0xff]
        %v7031 = vld [vmem:[%s2 + $0x60] sm:$0xff]
        %v7032 = vld [vmem:[%s2 + $0x68] sm:$0xff]
        %v7033 = vld [vmem:[%s2 + $0x70] sm:$0xff]
        %v7034 = vld [vmem:[%s2 + $0x78] sm:$0xff]
        %v7035 = vld [vmem:[%s2 + $0x80] sm:$0xff]
        %v7036 = vld [vmem:[%s2 + $0x88] sm:$0xff]
        %v7037 = vld [vmem:[%s2 + $0x90] sm:$0xff]
        %v7038 = vld [vmem:[%s2 + $0x98] sm:$0xff]
        %v7039 = vld [vmem:[%s2 + $0xa0] sm:$0xff]
        %v7040 = vld [vmem:[%s2 + $0xa8] sm:$0xff]
        %v7041 = vld [vmem:[%s2 + $0xb0] sm:$0xff]
        %v7042 = vld [vmem:[%s2 + $0xb8] sm:$0xff]
        %v7043 = vld [vmem:[%s2 + $0xc0] sm:$0x1]
        %7044 = vxpose.xlu0.b32.start [1/16] %v6995, 128
        %7045 = vxpose.xlu0.b32.cont [2/16] %v6996, 128
        %7046 = vxpose.xlu0.b32.cont [3/16] %v6997, 128
        %7047 = vxpose.xlu0.b32.cont [4/16] %v6998, 128
        %7048 = vxpose.xlu0.b32.cont [5/16] %v6999, 128
        %7049 = vxpose.xlu0.b32.cont [6/16] %v7000, 128
        %7050 = vxpose.xlu0.b32.cont [7/16] %v7001, 128
        %7051 = vxpose.xlu0.b32.cont [8/16] %v7002, 128
        %7052 = vxpose.xlu0.b32.cont [9/16] %v7003, 128
        %7053 = vxpose.xlu0.b32.cont [10/16] %v7004, 128
        %7054 = vxpose.xlu0.b32.cont [11/16] %v7005, 128
        %7055 = vxpose.xlu0.b32.cont [12/16] %v7006, 128
        %7056 = vxpose.xlu0.b32.cont [13/16] %v7007, 128
        %7057 = vxpose.xlu0.b32.cont [14/16] %v7008, 128
        %7058 = vxpose.xlu0.b32.cont [15/16] %v7009, 128
        %7059 = vxpose.xlu0.b32.end [16/16] %v7010, 128
        %v7060 = vpop.trf.xlu0
        %v7061 = vpop.trf.xlu0
        %v7062 = vpop.trf.xlu0
        %v7063 = vpop.trf.xlu0
        %v7064 = vpop.trf.xlu0
        %v7065 = vpop.trf.xlu0
        %v7066 = vpop.trf.xlu0
        %v7067 = vpop.trf.xlu0
        %v7068 = vpop.trf.xlu0
        %v7069 = vpop.trf.xlu0
        %v7070 = vpop.trf.xlu0
        %v7071 = vpop.trf.xlu0
        %v7072 = vpop.trf.xlu0
        %v7073 = vpop.trf.xlu0
        %v7074 = vpop.trf.xlu0
        %v7075 = vpop.trf.xlu0
        %7076 = vxpose.xlu0.b32.start [1/16] %v7011, 128
        %7077 = vxpose.xlu0.b32.cont [2/16] %v7012, 128
        %7078 = vxpose.xlu0.b32.cont [3/16] %v7013, 128
        %7079 = vxpose.xlu0.b32.cont [4/16] %v7014, 128
        %7080 = vxpose.xlu0.b32.cont [5/16] %v7015, 128
        %7081 = vxpose.xlu0.b32.cont [6/16] %v7016, 128
        %7082 = vxpose.xlu0.b32.cont [7/16] %v7017, 128
        %7083 = vxpose.xlu0.b32.cont [8/16] %v7018, 128
        %7084 = vxpose.xlu0.b32.cont [9/16] 0.0, 128
        %7085 = vxpose.xlu0.b32.cont [10/16] 0.0, 128
        %7086 = vxpose.xlu0.b32.cont [11/16] 0.0, 128
        %7087 = vxpose.xlu0.b32.cont [12/16] 0.0, 128
        %7088 = vxpose.xlu0.b32.cont [13/16] 0.0, 128
        %7089 = vxpose.xlu0.b32.cont [14/16] 0.0, 128
        %7090 = vxpose.xlu0.b32.cont [15/16] 0.0, 128
        %7091 = vxpose.xlu0.b32.end [16/16] 0.0, 128
        %v7092 = vpop.trf.xlu0
        %v7093 = vpop.trf.xlu0
        %v7094 = vpop.trf.xlu0
        %v7095 = vpop.trf.xlu0
        %v7096 = vpop.trf.xlu0
        %v7097 = vpop.trf.xlu0
        %v7098 = vpop.trf.xlu0
        %v7099 = vpop.trf.xlu0
        %v7100 = vpop.trf.xlu0
        %v7101 = vpop.trf.xlu0
        %v7102 = vpop.trf.xlu0
        %v7103 = vpop.trf.xlu0
        %v7104 = vpop.trf.xlu0
        %v7105 = vpop.trf.xlu0
        %v7106 = vpop.trf.xlu0
        %v7107 = vpop.trf.xlu0
        %vm7108 = vcmask 523264
        %v7110 = vsel %vm7108, %v7092, 0
        %7112 = vmatprep.subr.mxu0 0.0
        %7113 = vmatpush1.msra.mxu0 %v7034
        %7114 = vmatprep.subr.mxu0 0.0
        %7115 = vmatpush1.msra.mxu0 %v7033
        %7116 = vmatprep.subr.mxu0 0.0
        %7117 = vmatpush1.msra.mxu0 %v7032
        %7118 = vmatprep.subr.mxu0 0.0
        %7119 = vmatpush1.msra.mxu0 %v7031
        %7120 = vmatprep.subr.mxu0 0.0
        %7121 = vmatpush1.msra.mxu0 %v7030
        %7122 = vmatprep.subr.mxu0 0.0
        %7123 = vmatpush1.msra.mxu0 %v7029
        %7124 = vmatprep.subr.mxu0 0.0
        %7125 = vmatpush1.msra.mxu0 %v7028
        %7126 = vmatprep.subr.mxu0 0.0
        %7127 = vmatpush1.msra.mxu0 %v7027
        %7128 = vmatprep.subr.mxu0 0.0
        %7129 = vmatpush1.msra.mxu0 %v7026
        %7130 = vmatprep.subr.mxu0 0.0
        %7131 = vmatpush1.msra.mxu0 %v7025
        %7132 = vmatprep.subr.mxu0 0.0
        %7133 = vmatpush1.msra.mxu0 %v7024
        %7134 = vmatprep.subr.mxu0 0.0
        %7135 = vmatpush1.msra.mxu0 %v7023
        %7136 = vmatprep.subr.mxu0 0.0
        %7137 = vmatpush1.msra.mxu0 %v7022
        %7138 = vmatprep.subr.mxu0 0.0
        %7139 = vmatpush1.msra.mxu0 %v7021
        %7140 = vmatprep.subr.mxu0 0.0
        %7141 = vmatpush1.msra.mxu0 %v7020
        %7142 = vmatprep.subr.mxu0 0.0
        %7143 = vmatpush1.msra.mxu0 %v7019
        %7144 = vmatprep.subr.mxu0 0.0
        %7145 = vmatpush2.msra.mxu0 0.0
        %7146 = vmatprep.subr.mxu0 0.0
        %7147 = vmatpush2.msra.mxu0 0.0
        %7148 = vmatprep.subr.mxu0 0.0
        %7149 = vmatpush2.msra.mxu0 0.0
        %7150 = vmatprep.subr.mxu0 0.0
        %7151 = vmatpush2.msra.mxu0 0.0
        %7152 = vmatprep.subr.mxu0 0.0
        %7153 = vmatpush2.msra.mxu0 0.0
        %7154 = vmatprep.subr.mxu0 0.0
        %7155 = vmatpush2.msra.mxu0 0.0
        %7156 = vmatprep.subr.mxu0 0.0
        %7157 = vmatpush2.msra.mxu0 0.0
        %7158 = vmatprep.subr.mxu0 0.0
        %7159 = vmatpush2.msra.mxu0 0.0
        %7160 = vmatprep.subr.mxu0 0.0
        %7161 = vmatpush2.msra.mxu0 %v7042
        %7162 = vmatprep.subr.mxu0 0.0
        %7163 = vmatpush2.msra.mxu0 %v7041
        %7164 = vmatprep.subr.mxu0 0.0
        %7165 = vmatpush2.msra.mxu0 %v7040
        %7166 = vmatprep.subr.mxu0 0.0
        %7167 = vmatpush2.msra.mxu0 %v7039
        %7168 = vmatprep.subr.mxu0 0.0
        %7169 = vmatpush2.msra.mxu0 %v7038
        %7170 = vmatprep.subr.mxu0 0.0
        %7171 = vmatpush2.msra.mxu0 %v7037
        %7172 = vmatprep.subr.mxu0 0.0
        %7173 = vmatpush2.msra.mxu0 %v7036
        %7174 = vmatprep.subr.mxu0 0.0
        %7175 = vmatpush2.msra.mxu0 %v7035
        %7176 = vmatprep.mubr.f32.mxu0 %v7110
        %7177 = vmatmul.mubr.f32.gmra.mxu0 %v7060
        %v7178 = vpop.f32.mrf.mxu0
        %v7179 = vadd.f32 %v7043, %v7178
        %v7180 = vpop.f32.mrf.mxu0
        %7181 = vdwg.mxu0
        %7182 = vst [vmem:[%s162] sm:$0x1] %v7179
        %s7183 = sand.u32 %s93, 1
        %s7184 = scalar_lea.sflag [#allocation5], %s7183
        %s7185 = sand.u32 %s93, 1
        %s7186 = scalar_lea.vmem [#allocation4], %s7185
        // Predicated region
        $region33: #{cnn9b_forward.1} parent=31 // pred_check
          %p7187 = pneg %p103
        $region34: #{cnn9b_forward.1} parent=31 // pred_check_branch
          %7189 = sbr.rel (%p7187) target = $region36
        $region35: #{cnn9b_forward.1} parent=31 // pred_region
          %s7191 = ssub.s32 16, 16
          %7192 = vsyncadd %s7184, %s7191
          %s7193 = smul.addr %s17, 16
          %s7194 = scalar_lea.hbm %s3, %s7193
          %s7196 = sshll.u32 %s7186, 4
          %s7197 = int_to_ptr.vmem [resolvable:$true] %s7196
          %7199 = dma.vmem_to_hbm [thread:$0]  %s7197, 16, %s7194, %s7184
        $region36: #{cnn9b_forward.1} parent=31 // pred_fallthru
          _
      $region32: #{cnn9b_forward.1} parent=5 // pred_fallthru
        _
      %p7200 = scmp.le.s32.totalorder 2, %s12
      // Predicated region
      $region37: #{cnn9b_forward.1} parent=5 // pred_check
        %p7201 = pneg %p7200
      $region38: #{cnn9b_forward.1} parent=5 // pred_check_branch
        %7203 = sbr.rel (%p7201) target = $region40
      $region39: #{cnn9b_forward.1} parent=5 // pred_region
        %s7204 = ssub.s32 %s12, 2
        // Predicated region
        $region41: #{cnn9b_forward.1} parent=39 // pred_check
          %p7205 = pneg %p109
        $region42: #{cnn9b_forward.1} parent=39 // pred_check_branch
          %7207 = sbr.rel (%p7205) target = $region44
        $region43: #{cnn9b_forward.1} parent=39 // pred_region
          %s7208 = sand.u32 %s94, 1
          %s7209 = scalar_lea.sflag [#allocation5], %s7208
          %s7210 = sand.u32 %s94, 1
          %s7211 = scalar_lea.vmem [#allocation4], %s7210
          %7212 = dma.done %s7209, 16
        $region44: #{cnn9b_forward.1} parent=39 // pred_fallthru
          _
      $region40: #{cnn9b_forward.1} parent=5 // pred_fallthru
        _
    $region6: #{cnn9b_forward.1} parent=1 // loop_footer
      %s16 = sadd.s32 1, %s12
    $region7: #{cnn9b_forward.1} parent=1 // loop_footer_branch
      %11 = sbr.rel target = $region3
    $region8: #{cnn9b_forward.1} parent=1 // loop_exit
      _
    %7213 = vsyncpa [#allocation5], 1
    %s7214 = scalar_lea.sflag [#allocation5], 1
    %7215 = vsyncpa %s7214, 1

</llo_original>
